<compile_context>
chip_gen: v7x
topology: tpu7x:2x2x1
jax: 0.10.0
libtpu: 0.0.40
codegen_flags: <defaults>
</compile_context>

<pallas_src>
import functools

import jax
import jax.numpy as jnp
from jax.experimental import pallas as pl
from jax.experimental.pallas import tpu as pltpu

_VMEM = pl.BlockSpec(memory_space=pltpu.MemorySpace.VMEM)


# ----------------------------------------------------------------------------
# Kernel 1: fused lin1 -> lin2 -> lin3 (one pallas_call, three outputs)
# ----------------------------------------------------------------------------
def _linears_kernel(z_ref, w1_ref, b1_ref, w2_ref, b2_ref, w3_ref, b3_ref,
                    o1_ref, o2_ref, o3_ref):
    l1 = jnp.maximum(
        jnp.dot(z_ref[...], w1_ref[...], preferred_element_type=jnp.float32)
        + b1_ref[...], 0.0)
    o1_ref[...] = l1
    l2 = jnp.maximum(
        jnp.dot(l1, w2_ref[...], preferred_element_type=jnp.float32)
        + b2_ref[...], 0.0)
    o2_ref[...] = l2
    l3 = jnp.maximum(
        jnp.dot(l2, w3_ref[...], preferred_element_type=jnp.float32)
        + b3_ref[...], 0.0)
    o3_ref[...] = l3


def fused_linears(z, p):
    batch, latent = z.shape
    h1 = p["lin1_w"].shape[1]
    h2 = p["lin2_w"].shape[1]
    h3 = p["lin3_w"].shape[1]
    flops = 2 * batch * (latent * h1 + h1 * h2 + h2 * h3)
    nbytes = 4 * (batch * latent + latent * h1 + h1 * h2 + h2 * h3
                  + h1 + h2 + h3 + batch * (h1 + h2 + h3))
    return pl.pallas_call(
        _linears_kernel,
        out_shape=(jax.ShapeDtypeStruct((batch, h1), jnp.float32),
                   jax.ShapeDtypeStruct((batch, h2), jnp.float32),
                   jax.ShapeDtypeStruct((batch, h3), jnp.float32)),
        in_specs=[_VMEM] * 7,
        out_specs=(_VMEM, _VMEM, _VMEM),
        cost_estimate=pl.CostEstimate(flops=flops, transcendentals=0,
                                      bytes_accessed=nbytes),
    )(z.astype(jnp.float32),
      p["lin1_w"].astype(jnp.float32), p["lin1_b"].reshape(1, h1).astype(jnp.float32),
      p["lin2_w"].astype(jnp.float32), p["lin2_b"].reshape(1, h2).astype(jnp.float32),
      p["lin3_w"].astype(jnp.float32), p["lin3_b"].reshape(1, h3).astype(jnp.float32))


# ----------------------------------------------------------------------------
# Kernel 2: one ConvTranspose2d(k=4, stride=2, pad=1) layer (+ fused act)
#   Sub-pixel / output-phase decomposition:
#     y[co, 2i+a, 2j+b] = sum_{p,q in {0,1}} sum_ci
#         w[ci, co, 2p+1-a, 2q+1-b] * x[ci, i + (a-p), j + (b-q)]
#   i.e. each of the 4 output phases is 4 accumulated tap matmuls over
#   {-1,0,+1}-shifted copies of the RAW input.  No dilation, no zero flops.
# ----------------------------------------------------------------------------
def _convt_kernel(x_ref, w_ref, b_ref, *o_refs, uv, act):
    # x_ref : (1, 9, Cin, Nin)    9 shifted copies of the raw input, Nin=Hin*Win
    # w_ref : (16, Coutp, Cin)    per-(phase, tap) weight slices
    # b_ref : (Coutp, 1)
    # o_refs: (1, 4, Coutp, Nin)  per-phase outputs (+ second output for sigmoid)
    for s in range(4):                       # output phase (a, b) = (s//2, s%2)
        acc = None
        for t in range(4):                   # tap (p, q) within the phase
            i = 4 * s + t
            part = jnp.dot(w_ref[i], x_ref[0, uv[i]],
                           preferred_element_type=jnp.float32)   # (Coutp, Nin)
            acc = part if acc is None else acc + part
        y = acc + b_ref[...]
        if act == "relu":
            o_refs[0][0, s] = jnp.maximum(y, 0.0)
        else:  # "sigmoid": emit pre-activation and sigmoid(pre-activation)
            o_refs[0][0, s] = y
            o_refs[1][0, s] = jax.nn.sigmoid(y)


def conv_transpose2d(x_nchw, w, b, *, act):
    """ConvTranspose2d(kernel=4, stride=2, padding=1) with fused activation.

    x_nchw : (B, Cin, Hin, Win)
    w      : PyTorch layout (Cin, Cout, K, K),  b: (Cout,)
    act == "relu"    -> returns relu(convT(x))                (B, Cout, 2H, 2W)
    act == "sigmoid" -> returns (convT(x), sigmoid(convT(x)))
    """
    ksz = 4
    batch, cin, hin, win = x_nchw.shape
    cout = w.shape[1]
    hout, wout = 2 * hin, 2 * win
    nin = hin * win
    coutp = max(8, ((cout + 7) // 8) * 8)     # pad channels up to >=8 sublanes

    # -- glue (pure data movement, fused by XLA) -------------------------------
    # 9 shifted copies of the raw (not dilated!) input, zero-padded boundary:
    #   xsh[b, u*3+v, c, i*Win+j] = xpad[b, c, i+u, j+v],  u,v in {0,1,2}
    xpad = jnp.pad(x_nchw.astype(jnp.float32), ((0, 0), (0, 0), (1, 1), (1, 1)))
    xsh = jnp.stack([xpad[:, :, u:u + hin, v:v + win]
                     for u in range(3) for v in range(3)], axis=1)
    xsh = xsh.reshape(batch, 9, cin, nin)

    # -- weight / bias prep: per-(phase, tap) weight slices --------------------
    wt = jnp.transpose(w, (2, 3, 1, 0)).astype(jnp.float32)   # (K, K, Cout, Cin)
    blocks, uv = [], []
    for a in (0, 1):
        for b2 in (0, 1):
            for p in (0, 1):
                for q in (0, 1):
                    kh, kw = 2 * p + 1 - a, 2 * q + 1 - b2
                    u, v = 1 + a - p, 1 + b2 - q
                    blocks.append(wt[kh, kw])                 # (Cout, Cin)
                    uv.append(u * 3 + v)
    wstk = jnp.stack(blocks, axis=0)                          # (16, Cout, Cin)
    bt = b.reshape(cout, 1).astype(jnp.float32)
    if coutp != cout:
        wstk = jnp.pad(wstk, ((0, 0), (0, coutp - cout), (0, 0)))
        bt = jnp.pad(bt, ((0, coutp - cout), (0, 0)))

    two_outputs = act == "sigmoid"
    out_sds = jax.ShapeDtypeStruct((batch, 4, coutp, nin), jnp.float32)
    out_spec = pl.BlockSpec((1, 4, coutp, nin), lambda bi: (bi, 0, 0, 0))
    flops = 2 * batch * 16 * coutp * cin * nin
    nbytes = 4 * (xsh.size + wstk.size + bt.size
                  + (2 if two_outputs else 1) * batch * 4 * coutp * nin)

    y = pl.pallas_call(
        functools.partial(_convt_kernel, uv=tuple(uv), act=act),
        grid=(batch,),
        in_specs=[pl.BlockSpec((1, 9, cin, nin), lambda bi: (bi, 0, 0, 0)),
                  pl.BlockSpec((16, coutp, cin), lambda bi: (0, 0, 0)),
                  pl.BlockSpec((coutp, 1), lambda bi: (0, 0))],
        out_specs=(out_spec, out_spec) if two_outputs else out_spec,
        out_shape=(out_sds, out_sds) if two_outputs else out_sds,
        compiler_params=pltpu.CompilerParams(dimension_semantics=("parallel",)),
        cost_estimate=pl.CostEstimate(
            flops=flops,
            transcendentals=batch * 4 * coutp * nin if two_outputs else 0,
            bytes_accessed=nbytes),
    )(xsh, wstk, bt)

    def unpack(t):
        # (B, 4, Coutp, Nin) -> interleave phases: out[:, :, 2i+a, 2j+b]
        t = t.reshape(batch, 2, 2, coutp, hin, win)
        t = jnp.transpose(t, (0, 3, 4, 1, 5, 2))
        return t.reshape(batch, coutp, hout, wout)[:, :cout]

    if two_outputs:
        return unpack(y[0]), unpack(y[1])
    return unpack(y)


# ----------------------------------------------------------------------------
# DecoderBurgess forward
# ----------------------------------------------------------------------------
def decoder_burgess_forward(z, params, img_size):
    batch = z.shape[0]
    lin1, lin2, lin3 = fused_linears(z, params)
    x = lin3.reshape(batch, 32, 4, 4)                       # NCHW (B, 32, 4, 4)

    if img_size[1] == img_size[2] == 64:
        x = conv_transpose2d(x, params["convT64_w"], params["convT64_b"], act="relu")

    c1 = conv_transpose2d(x, params["convT1_w"], params["convT1_b"], act="relu")
    c2 = conv_transpose2d(c1, params["convT2_w"], params["convT2_b"], act="relu")
    c3, out = conv_transpose2d(c2, params["convT3_w"], params["convT3_b"], act="sigmoid")

    return (out, (lin1, lin2, lin3), (c1, c2, c3),
            (params["convT1_w"], params["convT2_w"], params["convT3_w"]))


# ----------------------------------------------------------------------------
# Pure-JAX reference (correctness check of the Pallas path)
# ----------------------------------------------------------------------------
def _ref_convT(x, w, b):
    rhs = jnp.transpose(w, (1, 0, 2, 3))[:, :, ::-1, ::-1]
    y = jax.lax.conv_general_dilated(
        x, rhs, window_strides=(1, 1), padding=[(2, 2), (2, 2)],
        lhs_dilation=(2, 2), dimension_numbers=("NCHW", "OIHW", "NCHW"))
    return y + b.reshape(1, -1, 1, 1)


def _ref_forward(z, p, img_size):
    batch = z.shape[0]
    l1 = jax.nn.relu(z @ p["lin1_w"] + p["lin1_b"])
    l2 = jax.nn.relu(l1 @ p["lin2_w"] + p["lin2_b"])
    l3 = jax.nn.relu(l2 @ p["lin3_w"] + p["lin3_b"])
    x = l3.reshape(batch, 32, 4, 4)
    if img_size[1] == img_size[2] == 64:
        x = jax.nn.relu(_ref_convT(x, p["convT64_w"], p["convT64_b"]))
    c1 = jax.nn.relu(_ref_convT(x, p["convT1_w"], p["convT1_b"]))
    c2 = jax.nn.relu(_ref_convT(c1, p["convT2_w"], p["convT2_b"]))
    c3 = _ref_convT(c2, p["convT3_w"], p["convT3_b"])
    return jax.nn.sigmoid(c3), (l1, l2, l3), (c1, c2, c3)


# ----------------------------------------------------------------------------
# Deterministic synthetic parameters
# ----------------------------------------------------------------------------
def init_params(key, img_size, latent_dim=10):
    hid_channels, ksz, hidden_dim = 32, 4, 256
    n_chan = img_size[0]
    keys = jax.random.split(key, 16)

    def unif(k, shape, fan_in):
        bound = 1.0 / jnp.sqrt(fan_in)
        return jax.random.uniform(k, shape, jnp.float32, -bound, bound)

    p = {
        "lin1_w": unif(keys[0], (latent_dim, hidden_dim), latent_dim),
        "lin1_b": unif(keys[1], (hidden_dim,), latent_dim),
        "lin2_w": unif(keys[2], (hidden_dim, hidden_dim), hidden_dim),
        "lin2_b": unif(keys[3], (hidden_dim,), hidden_dim),
        "lin3_w": unif(keys[4], (hidden_dim, hid_channels * ksz * ksz), hidden_dim),
        "lin3_b": unif(keys[5], (hid_channels * ksz * ksz,), hidden_dim),
        # ConvTranspose2d weights in PyTorch layout (Cin, Cout, K, K)
        "convT1_w": unif(keys[6], (hid_channels, hid_channels, ksz, ksz), hid_channels * ksz * ksz),
        "convT1_b": unif(keys[7], (hid_channels,), hid_channels * ksz * ksz),
        "convT2_w": unif(keys[8], (hid_channels, hid_channels, ksz, ksz), hid_channels * ksz * ksz),
        "convT2_b": unif(keys[9], (hid_channels,), hid_channels * ksz * ksz),
        "convT3_w": unif(keys[10], (hid_channels, n_chan, ksz, ksz), hid_channels * ksz * ksz),
        "convT3_b": unif(keys[11], (n_chan,), hid_channels * ksz * ksz),
    }
    if img_size[1] == img_size[2] == 64:
        p["convT64_w"] = unif(keys[12], (hid_channels, hid_channels, ksz, ksz),
                              hid_channels * ksz * ksz)
        p["convT64_b"] = unif(keys[13], (hid_channels,), hid_channels * ksz * ksz)
    return p


if __name__ == "__main__":
    fwd = jax.jit(decoder_burgess_forward, static_argnums=(2,))

    for img_size in ((1, 32, 32), (3, 64, 64)):
        latent_dim, batch = 10, 2
        key = jax.random.PRNGKey(0)
        k_param, k_z = jax.random.split(key)
        params = init_params(k_param, img_size, latent_dim)
        z = jax.random.normal(k_z, (batch, latent_dim), jnp.float32)

        out, lins, convs, weights = fwd(z, params, img_size)
        jax.block_until_ready((out, lins, convs))

        # shape checks (PyTorch NCHW semantics)
        n_chan, s = img_size[0], img_size[1]
        assert out.shape == (batch, n_chan, s, s)
        assert lins[0].shape == (batch, 256) and lins[1].shape == (batch, 256)
        assert lins[2].shape == (batch, 512)
        assert convs[0].shape == (batch, 32, s // 4, s // 4)
        assert convs[1].shape == (batch, 32, s // 2, s // 2)
        assert convs[2].shape == (batch, n_chan, s, s)
        assert weights[0].shape == (32, 32, 4, 4)
        assert weights[2].shape == (32, n_chan, 4, 4)

        # numerical check against a pure-JAX reference
        r_out, r_lins, r_convs = _ref_forward(z, params, img_size)
        for got, ref in zip((out, *lins, *convs), (r_out, *r_lins, *r_convs)):
            assert jnp.allclose(got, ref, rtol=1e-4, atol=1e-4), (
                f"mismatch vs reference for img_size={img_size}")

    print("KERNEL_OK")
</pallas_src>

<mosaic_0001>
module attributes {stable_mosaic.version = 11 : i64} {
  func.func @_linears_kernel(%arg0: memref<2x10xf32, #tpu.memory_space<vmem>>, %arg1: memref<10x256xf32, #tpu.memory_space<vmem>>, %arg2: memref<1x256xf32, #tpu.memory_space<vmem>>, %arg3: memref<256x256xf32, #tpu.memory_space<vmem>>, %arg4: memref<1x256xf32, #tpu.memory_space<vmem>>, %arg5: memref<256x512xf32, #tpu.memory_space<vmem>>, %arg6: memref<1x512xf32, #tpu.memory_space<vmem>>, %arg7: memref<2x256xf32, #tpu.memory_space<vmem>>, %arg8: memref<2x256xf32, #tpu.memory_space<vmem>>, %arg9: memref<2x512xf32, #tpu.memory_space<vmem>>) attributes {dimension_semantics = [], scalar_prefetch = 0 : i64, scratch_operands = 0 : i64, tpu.core_type = #tpu.core_type<tc>} {
    %c0 = arith.constant 0 : index
    %c0_0 = arith.constant 0 : index
    %0 = vector.load %arg0[%c0, %c0_0] : memref<2x10xf32, #tpu.memory_space<vmem>>, vector<2x10xf32>
    %c0_1 = arith.constant 0 : index
    %c0_2 = arith.constant 0 : index
    %1 = vector.load %arg1[%c0_1, %c0_2] : memref<10x256xf32, #tpu.memory_space<vmem>>, vector<10x256xf32>
    %cst = arith.constant dense<0.000000e+00> : vector<2x256xf32>
    %2 = tpu.matmul %0, %1, %cst {dimension_numbers = #tpu.dot_dimension_numbers<[1], [0], [0], [1], [0, 0, 1, 1], [], []>} : vector<2x10xf32>, vector<10x256xf32>, vector<2x256xf32> -> vector<2x256xf32>
    %c0_3 = arith.constant 0 : index
    %c0_4 = arith.constant 0 : index
    %3 = vector.load %arg2[%c0_3, %c0_4] : memref<1x256xf32, #tpu.memory_space<vmem>>, vector<1x256xf32>
    %4 = vector.broadcast %3 : vector<1x256xf32> to vector<2x256xf32>
    %5 = arith.addf %2, %4 : vector<2x256xf32>
    %cst_5 = arith.constant 0.000000e+00 : f32
    %6 = vector.broadcast %cst_5 : f32 to vector<2x256xf32>
    %7 = arith.maximumf %5, %6 : vector<2x256xf32>
    %c0_6 = arith.constant 0 : index
    %c0_7 = arith.constant 0 : index
    %8 = vector.load %arg7[%c0_6, %c0_7] : memref<2x256xf32, #tpu.memory_space<vmem>>, vector<2x256xf32>
    tpu.vector_store %arg7[%c0_6, %c0_7], %7 {strides = array<i32>} : memref<2x256xf32, #tpu.memory_space<vmem>>, vector<2x256xf32>,
    %c0_8 = arith.constant 0 : index
    %c0_9 = arith.constant 0 : index
    %9 = vector.load %arg3[%c0_8, %c0_9] : memref<256x256xf32, #tpu.memory_space<vmem>>, vector<256x256xf32>
    %cst_10 = arith.constant dense<0.000000e+00> : vector<2x256xf32>
    %10 = tpu.matmul %7, %9, %cst_10 {dimension_numbers = #tpu.dot_dimension_numbers<[1], [0], [0], [1], [0, 0, 1, 1], [], []>} : vector<2x256xf32>, vector<256x256xf32>, vector<2x256xf32> -> vector<2x256xf32>
    %c0_11 = arith.constant 0 : index
    %c0_12 = arith.constant 0 : index
    %11 = vector.load %arg4[%c0_11, %c0_12] : memref<1x256xf32, #tpu.memory_space<vmem>>, vector<1x256xf32>
    %12 = vector.broadcast %11 : vector<1x256xf32> to vector<2x256xf32>
    %13 = arith.addf %10, %12 : vector<2x256xf32>
    %cst_13 = arith.constant 0.000000e+00 : f32
    %14 = vector.broadcast %cst_13 : f32 to vector<2x256xf32>
    %15 = arith.maximumf %13, %14 : vector<2x256xf32>
    %c0_14 = arith.constant 0 : index
    %c0_15 = arith.constant 0 : index
    %16 = vector.load %arg8[%c0_14, %c0_15] : memref<2x256xf32, #tpu.memory_space<vmem>>, vector<2x256xf32>
    tpu.vector_store %arg8[%c0_14, %c0_15], %15 {strides = array<i32>} : memref<2x256xf32, #tpu.memory_space<vmem>>, vector<2x256xf32>,
    %c0_16 = arith.constant 0 : index
    %c0_17 = arith.constant 0 : index
    %17 = vector.load %arg5[%c0_16, %c0_17] : memref<256x512xf32, #tpu.memory_space<vmem>>, vector<256x512xf32>
    %cst_18 = arith.constant dense<0.000000e+00> : vector<2x512xf32>
    %18 = tpu.matmul %15, %17, %cst_18 {dimension_numbers = #tpu.dot_dimension_numbers<[1], [0], [0], [1], [0, 0, 1, 1], [], []>} : vector<2x256xf32>, vector<256x512xf32>, vector<2x512xf32> -> vector<2x512xf32>
    %c0_19 = arith.constant 0 : index
    %c0_20 = arith.constant 0 : index
    %19 = vector.load %arg6[%c0_19, %c0_20] : memref<1x512xf32, #tpu.memory_space<vmem>>, vector<1x512xf32>
    %20 = vector.broadcast %19 : vector<1x512xf32> to vector<2x512xf32>
    %21 = arith.addf %18, %20 : vector<2x512xf32>
    %cst_21 = arith.constant 0.000000e+00 : f32
    %22 = vector.broadcast %cst_21 : f32 to vector<2x512xf32>
    %23 = arith.maximumf %21, %22 : vector<2x512xf32>
    %c0_22 = arith.constant 0 : index
    %c0_23 = arith.constant 0 : index
    %24 = vector.load %arg9[%c0_22, %c0_23] : memref<2x512xf32, #tpu.memory_space<vmem>>, vector<2x512xf32>
    tpu.vector_store %arg9[%c0_22, %c0_23], %23 {strides = array<i32>} : memref<2x512xf32, #tpu.memory_space<vmem>>, vector<2x512xf32>,
    return
  }
}

module attributes {stable_mosaic.version = 11 : i64} {
  func.func @_convt_kernel(%arg0: i32, %arg1: memref<1x9x32x16xf32, #tpu.memory_space<vmem>>, %arg2: memref<16x32x32xf32, #tpu.memory_space<vmem>>, %arg3: memref<32x1xf32, #tpu.memory_space<vmem>>, %arg4: memref<1x4x32x16xf32, #tpu.memory_space<vmem>>) attributes {dimension_semantics = [#tpu.dimension_semantics<parallel>], iteration_bounds = array<i64: 2>, scalar_prefetch = 0 : i64, scratch_operands = 0 : i64, tpu.core_type = #tpu.core_type<tc>, window_params = [{transform_indices = @transform_0, window_bounds = array<i64: 1, 9, 32, 16>}, {pipeline_mode = #tpu.pipeline_mode<synchronous>, transform_indices = @transform_1, window_bounds = array<i64: 16, 32, 32>}, {pipeline_mode = #tpu.pipeline_mode<synchronous>, transform_indices = @transform_2, window_bounds = array<i64: 32, 1>}, {transform_indices = @transform_3, window_bounds = array<i64: 1, 4, 32, 16>}]} {
    %c0 = arith.constant 0 : index
    %c0_0 = arith.constant 0 : index
    %c0_1 = arith.constant 0 : index
    %0 = vector.load %arg2[%c0, %c0_0, %c0_1] : memref<16x32x32xf32, #tpu.memory_space<vmem>>, vector<1x32x32xf32>
    %1 = vector.shape_cast %0 : vector<1x32x32xf32> to vector<32x32xf32>
    %c0_2 = arith.constant 0 : index
    %c4 = arith.constant 4 : index
    %c0_3 = arith.constant 0 : index
    %c0_4 = arith.constant 0 : index
    %2 = vector.load %arg1[%c0_2, %c4, %c0_3, %c0_4] : memref<1x9x32x16xf32, #tpu.memory_space<vmem>>, vector<1x1x32x16xf32>
    %3 = vector.shape_cast %2 : vector<1x1x32x16xf32> to vector<32x16xf32>
    %cst = arith.constant dense<0.000000e+00> : vector<32x16xf32>
    %4 = tpu.matmul %1, %3, %cst {dimension_numbers = #tpu.dot_dimension_numbers<[1], [0], [0], [1], [0, 0, 1, 1], [], []>} : vector<32x32xf32>, vector<32x16xf32>, vector<32x16xf32> -> vector<32x16xf32>
    %c1 = arith.constant 1 : index
    %c0_5 = arith.constant 0 : index
    %c0_6 = arith.constant 0 : index
    %5 = vector.load %arg2[%c1, %c0_5, %c0_6] : memref<16x32x32xf32, #tpu.memory_space<vmem>>, vector<1x32x32xf32>
    %6 = vector.shape_cast %5 : vector<1x32x32xf32> to vector<32x32xf32>
    %c0_7 = arith.constant 0 : index
    %c3 = arith.constant 3 : index
    %c0_8 = arith.constant 0 : index
    %c0_9 = arith.constant 0 : index
    %7 = vector.load %arg1[%c0_7, %c3, %c0_8, %c0_9] : memref<1x9x32x16xf32, #tpu.memory_space<vmem>>, vector<1x1x32x16xf32>
    %8 = vector.shape_cast %7 : vector<1x1x32x16xf32> to vector<32x16xf32>
    %cst_10 = arith.constant dense<0.000000e+00> : vector<32x16xf32>
    %9 = tpu.matmul %6, %8, %cst_10 {dimension_numbers = #tpu.dot_dimension_numbers<[1], [0], [0], [1], [0, 0, 1, 1], [], []>} : vector<32x32xf32>, vector<32x16xf32>, vector<32x16xf32> -> vector<32x16xf32>
    %10 = arith.addf %4, %9 : vector<32x16xf32>
    %c2 = arith.constant 2 : index
    %c0_11 = arith.constant 0 : index
    %c0_12 = arith.constant 0 : index
    %11 = vector.load %arg2[%c2, %c0_11, %c0_12] : memref<16x32x32xf32, #tpu.memory_space<vmem>>, vector<1x32x32xf32>
    %12 = vector.shape_cast %11 : vector<1x32x32xf32> to vector<32x32xf32>
    %c0_13 = arith.constant 0 : index
    %c1_14 = arith.constant 1 : index
    %c0_15 = arith.constant 0 : index
    %c0_16 = arith.constant 0 : index
    %13 = vector.load %arg1[%c0_13, %c1_14, %c0_15, %c0_16] : memref<1x9x32x16xf32, #tpu.memory_space<vmem>>, vector<1x1x32x16xf32>
    %14 = vector.shape_cast %13 : vector<1x1x32x16xf32> to vector<32x16xf32>
    %cst_17 = arith.constant dense<0.000000e+00> : vector<32x16xf32>
    %15 = tpu.matmul %12, %14, %cst_17 {dimension_numbers = #tpu.dot_dimension_numbers<[1], [0], [0], [1], [0, 0, 1, 1], [], []>} : vector<32x32xf32>, vector<32x16xf32>, vector<32x16xf32> -> vector<32x16xf32>
    %16 = arith.addf %10, %15 : vector<32x16xf32>
    %c3_18 = arith.constant 3 : index
    %c0_19 = arith.constant 0 : index
    %c0_20 = arith.constant 0 : index
    %17 = vector.load %arg2[%c3_18, %c0_19, %c0_20] : memref<16x32x32xf32, #tpu.memory_space<vmem>>, vector<1x32x32xf32>
    %18 = vector.shape_cast %17 : vector<1x32x32xf32> to vector<32x32xf32>
    %c0_21 = arith.constant 0 : index
    %c0_22 = arith.constant 0 : index
    %c0_23 = arith.constant 0 : index
    %c0_24 = arith.constant 0 : index
    %19 = vector.load %arg1[%c0_21, %c0_22, %c0_23, %c0_24] : memref<1x9x32x16xf32, #tpu.memory_space<vmem>>, vector<1x1x32x16xf32>
    %20 = vector.shape_cast %19 : vector<1x1x32x16xf32> to vector<32x16xf32>
    %cst_25 = arith.constant dense<0.000000e+00> : vector<32x16xf32>
    %21 = tpu.matmul %18, %20, %cst_25 {dimension_numbers = #tpu.dot_dimension_numbers<[1], [0], [0], [1], [0, 0, 1, 1], [], []>} : vector<32x32xf32>, vector<32x16xf32>, vector<32x16xf32> -> vector<32x16xf32>
    %22 = arith.addf %16, %21 : vector<32x16xf32>
    %c0_26 = arith.constant 0 : index
    %c0_27 = arith.constant 0 : index
    %23 = vector.load %arg3[%c0_26, %c0_27] : memref<32x1xf32, #tpu.memory_space<vmem>>, vector<32x1xf32>
    %24 = vector.broadcast %23 : vector<32x1xf32> to vector<32x16xf32>
    %25 = arith.addf %22, %24 : vector<32x16xf32>
    %cst_28 = arith.constant 0.000000e+00 : f32
    %26 = vector.broadcast %cst_28 : f32 to vector<32x16xf32>
    %27 = arith.maximumf %25, %26 : vector<32x16xf32>
    %c0_29 = arith.constant 0 : index
    %c0_30 = arith.constant 0 : index
    %c0_31 = arith.constant 0 : index
    %c0_32 = arith.constant 0 : index
    %28 = vector.load %arg4[%c0_29, %c0_30, %c0_31, %c0_32] : memref<1x4x32x16xf32, #tpu.memory_space<vmem>>, vector<1x1x32x16xf32>
    %29 = vector.shape_cast %28 : vector<1x1x32x16xf32> to vector<32x16xf32>
    %30 = vector.shape_cast %27 : vector<32x16xf32> to vector<1x1x32x16xf32>
    tpu.vector_store %arg4[%c0_29, %c0_30, %c0_31, %c0_32], %30 {strides = array<i32>} : memref<1x4x32x16xf32, #tpu.memory_space<vmem>>, vector<1x1x32x16xf32>,
    %c4_33 = arith.constant 4 : index
    %c0_34 = arith.constant 0 : index
    %c0_35 = arith.constant 0 : index
    %31 = vector.load %arg2[%c4_33, %c0_34, %c0_35] : memref<16x32x32xf32, #tpu.memory_space<vmem>>, vector<1x32x32xf32>
    %32 = vector.shape_cast %31 : vector<1x32x32xf32> to vector<32x32xf32>
    %c0_36 = arith.constant 0 : index
    %c5 = arith.constant 5 : index
    %c0_37 = arith.constant 0 : index
    %c0_38 = arith.constant 0 : index
    %33 = vector.load %arg1[%c0_36, %c5, %c0_37, %c0_38] : memref<1x9x32x16xf32, #tpu.memory_space<vmem>>, vector<1x1x32x16xf32>
    %34 = vector.shape_cast %33 : vector<1x1x32x16xf32> to vector<32x16xf32>
    %cst_39 = arith.constant dense<0.000000e+00> : vector<32x16xf32>
    %35 = tpu.matmul %32, %34, %cst_39 {dimension_numbers = #tpu.dot_dimension_numbers<[1], [0], [0], [1], [0, 0, 1, 1], [], []>} : vector<32x32xf32>, vector<32x16xf32>, vector<32x16xf32> -> vector<32x16xf32>
    %c5_40 = arith.constant 5 : index
    %c0_41 = arith.constant 0 : index
    %c0_42 = arith.constant 0 : index
    %36 = vector.load %arg2[%c5_40, %c0_41, %c0_42] : memref<16x32x32xf32, #tpu.memory_space<vmem>>, vector<1x32x32xf32>
    %37 = vector.shape_cast %36 : vector<1x32x32xf32> to vector<32x32xf32>
    %c0_43 = arith.constant 0 : index
    %c4_44 = arith.constant 4 : index
    %c0_45 = arith.constant 0 : index
    %c0_46 = arith.constant 0 : index
    %38 = vector.load %arg1[%c0_43, %c4_44, %c0_45, %c0_46] : memref<1x9x32x16xf32, #tpu.memory_space<vmem>>, vector<1x1x32x16xf32>
    %39 = vector.shape_cast %38 : vector<1x1x32x16xf32> to vector<32x16xf32>
    %cst_47 = arith.constant dense<0.000000e+00> : vector<32x16xf32>
    %40 = tpu.matmul %37, %39, %cst_47 {dimension_numbers = #tpu.dot_dimension_numbers<[1], [0], [0], [1], [0, 0, 1, 1], [], []>} : vector<32x32xf32>, vector<32x16xf32>, vector<32x16xf32> -> vector<32x16xf32>
    %41 = arith.addf %35, %40 : vector<32x16xf32>
    %c6 = arith.constant 6 : index
    %c0_48 = arith.constant 0 : index
    %c0_49 = arith.constant 0 : index
    %42 = vector.load %arg2[%c6, %c0_48, %c0_49] : memref<16x32x32xf32, #tpu.memory_space<vmem>>, vector<1x32x32xf32>
    %43 = vector.shape_cast %42 : vector<1x32x32xf32> to vector<32x32xf32>
    %c0_50 = arith.constant 0 : index
    %c2_51 = arith.constant 2 : index
    %c0_52 = arith.constant 0 : index
    %c0_53 = arith.constant 0 : index
    %44 = vector.load %arg1[%c0_50, %c2_51, %c0_52, %c0_53] : memref<1x9x32x16xf32, #tpu.memory_space<vmem>>, vector<1x1x32x16xf32>
    %45 = vector.shape_cast %44 : vector<1x1x32x16xf32> to vector<32x16xf32>
    %cst_54 = arith.constant dense<0.000000e+00> : vector<32x16xf32>
    %46 = tpu.matmul %43, %45, %cst_54 {dimension_numbers = #tpu.dot_dimension_numbers<[1], [0], [0], [1], [0, 0, 1, 1], [], []>} : vector<32x32xf32>, vector<32x16xf32>, vector<32x16xf32> -> vector<32x16xf32>
    %47 = arith.addf %41, %46 : vector<32x16xf32>
    %c7 = arith.constant 7 : index
    %c0_55 = arith.constant 0 : index
    %c0_56 = arith.constant 0 : index
    %48 = vector.load %arg2[%c7, %c0_55, %c0_56] : memref<16x32x32xf32, #tpu.memory_space<vmem>>, vector<1x32x32xf32>
    %49 = vector.shape_cast %48 : vector<1x32x32xf32> to vector<32x32xf32>
    %c0_57 = arith.constant 0 : index
    %c1_58 = arith.constant 1 : index
    %c0_59 = arith.constant 0 : index
    %c0_60 = arith.constant 0 : index
    %50 = vector.load %arg1[%c0_57, %c1_58, %c0_59, %c0_60] : memref<1x9x32x16xf32, #tpu.memory_space<vmem>>, vector<1x1x32x16xf32>
    %51 = vector.shape_cast %50 : vector<1x1x32x16xf32> to vector<32x16xf32>
    %cst_61 = arith.constant dense<0.000000e+00> : vector<32x16xf32>
    %52 = tpu.matmul %49, %51, %cst_61 {dimension_numbers = #tpu.dot_dimension_numbers<[1], [0], [0], [1], [0, 0, 1, 1], [], []>} : vector<32x32xf32>, vector<32x16xf32>, vector<32x16xf32> -> vector<32x16xf32>
    %53 = arith.addf %47, %52 : vector<32x16xf32>
    %c0_62 = arith.constant 0 : index
    %c0_63 = arith.constant 0 : index
    %54 = vector.load %arg3[%c0_62, %c0_63] : memref<32x1xf32, #tpu.memory_space<vmem>>, vector<32x1xf32>
    %55 = vector.broadcast %54 : vector<32x1xf32> to vector<32x16xf32>
    %56 = arith.addf %53, %55 : vector<32x16xf32>
    %cst_64 = arith.constant 0.000000e+00 : f32
    %57 = vector.broadcast %cst_64 : f32 to vector<32x16xf32>
    %58 = arith.maximumf %56, %57 : vector<32x16xf32>
    %c0_65 = arith.constant 0 : index
    %c1_66 = arith.constant 1 : index
    %c0_67 = arith.constant 0 : index
    %c0_68 = arith.constant 0 : index
    %59 = vector.load %arg4[%c0_65, %c1_66, %c0_67, %c0_68] : memref<1x4x32x16xf32, #tpu.memory_space<vmem>>, vector<1x1x32x16xf32>
    %60 = vector.shape_cast %59 : vector<1x1x32x16xf32> to vector<32x16xf32>
    %61 = vector.shape_cast %58 : vector<32x16xf32> to vector<1x1x32x16xf32>
    tpu.vector_store %arg4[%c0_65, %c1_66, %c0_67, %c0_68], %61 {strides = array<i32>} : memref<1x4x32x16xf32, #tpu.memory_space<vmem>>, vector<1x1x32x16xf32>,
    %c8 = arith.constant 8 : index
    %c0_69 = arith.constant 0 : index
    %c0_70 = arith.constant 0 : index
    %62 = vector.load %arg2[%c8, %c0_69, %c0_70] : memref<16x32x32xf32, #tpu.memory_space<vmem>>, vector<1x32x32xf32>
    %63 = vector.shape_cast %62 : vector<1x32x32xf32> to vector<32x32xf32>
    %c0_71 = arith.constant 0 : index
    %c7_72 = arith.constant 7 : index
    %c0_73 = arith.constant 0 : index
    %c0_74 = arith.constant 0 : index
    %64 = vector.load %arg1[%c0_71, %c7_72, %c0_73, %c0_74] : memref<1x9x32x16xf32, #tpu.memory_space<vmem>>, vector<1x1x32x16xf32>
    %65 = vector.shape_cast %64 : vector<1x1x32x16xf32> to vector<32x16xf32>
    %cst_75 = arith.constant dense<0.000000e+00> : vector<32x16xf32>
    %66 = tpu.matmul %63, %65, %cst_75 {dimension_numbers = #tpu.dot_dimension_numbers<[1], [0], [0], [1], [0, 0, 1, 1], [], []>} : vector<32x32xf32>, vector<32x16xf32>, vector<32x16xf32> -> vector<32x16xf32>
    %c9 = arith.constant 9 : index
    %c0_76 = arith.constant 0 : index
    %c0_77 = arith.constant 0 : index
    %67 = vector.load %arg2[%c9, %c0_76, %c0_77] : memref<16x32x32xf32, #tpu.memory_space<vmem>>, vector<1x32x32xf32>
    %68 = vector.shape_cast %67 : vector<1x32x32xf32> to vector<32x32xf32>
    %c0_78 = arith.constant 0 : index
    %c6_79 = arith.constant 6 : index
    %c0_80 = arith.constant 0 : index
    %c0_81 = arith.constant 0 : index
    %69 = vector.load %arg1[%c0_78, %c6_79, %c0_80, %c0_81] : memref<1x9x32x16xf32, #tpu.memory_space<vmem>>, vector<1x1x32x16xf32>
    %70 = vector.shape_cast %69 : vector<1x1x32x16xf32> to vector<32x16xf32>
    %cst_82 = arith.constant dense<0.000000e+00> : vector<32x16xf32>
    %71 = tpu.matmul %68, %70, %cst_82 {dimension_numbers = #tpu.dot_dimension_numbers<[1], [0], [0], [1], [0, 0, 1, 1], [], []>} : vector<32x32xf32>, vector<32x16xf32>, vector<32x16xf32> -> vector<32x16xf32>
    %72 = arith.addf %66, %71 : vector<32x16xf32>
    %c10 = arith.constant 10 : index
    %c0_83 = arith.constant 0 : index
    %c0_84 = arith.constant 0 : index
    %73 = vector.load %arg2[%c10, %c0_83, %c0_84] : memref<16x32x32xf32, #tpu.memory_space<vmem>>, vector<1x32x32xf32>
    %74 = vector.shape_cast %73 : vector<1x32x32xf32> to vector<32x32xf32>
    %c0_85 = arith.constant 0 : index
    %c4_86 = arith.constant 4 : index
    %c0_87 = arith.constant 0 : index
    %c0_88 = arith.constant 0 : index
    %75 = vector.load %arg1[%c0_85, %c4_86, %c0_87, %c0_88] : memref<1x9x32x16xf32, #tpu.memory_space<vmem>>, vector<1x1x32x16xf32>
    %76 = vector.shape_cast %75 : vector<1x1x32x16xf32> to vector<32x16xf32>
    %cst_89 = arith.constant dense<0.000000e+00> : vector<32x16xf32>
    %77 = tpu.matmul %74, %76, %cst_89 {dimension_numbers = #tpu.dot_dimension_numbers<[1], [0], [0], [1], [0, 0, 1, 1], [], []>} : vector<32x32xf32>, vector<32x16xf32>, vector<32x16xf32> -> vector<32x16xf32>
    %78 = arith.addf %72, %77 : vector<32x16xf32>
    %c11 = arith.constant 11 : index
    %c0_90 = arith.constant 0 : index
    %c0_91 = arith.constant 0 : index
    %79 = vector.load %arg2[%c11, %c0_90, %c0_91] : memref<16x32x32xf32, #tpu.memory_space<vmem>>, vector<1x32x32xf32>
    %80 = vector.shape_cast %79 : vector<1x32x32xf32> to vector<32x32xf32>
    %c0_92 = arith.constant 0 : index
    %c3_93 = arith.constant 3 : index
    %c0_94 = arith.constant 0 : index
    %c0_95 = arith.constant 0 : index
    %81 = vector.load %arg1[%c0_92, %c3_93, %c0_94, %c0_95] : memref<1x9x32x16xf32, #tpu.memory_space<vmem>>, vector<1x1x32x16xf32>
    %82 = vector.shape_cast %81 : vector<1x1x32x16xf32> to vector<32x16xf32>
    %cst_96 = arith.constant dense<0.000000e+00> : vector<32x16xf32>
    %83 = tpu.matmul %80, %82, %cst_96 {dimension_numbers = #tpu.dot_dimension_numbers<[1], [0], [0], [1], [0, 0, 1, 1], [], []>} : vector<32x32xf32>, vector<32x16xf32>, vector<32x16xf32> -> vector<32x16xf32>
    %84 = arith.addf %78, %83 : vector<32x16xf32>
    %c0_97 = arith.constant 0 : index
    %c0_98 = arith.constant 0 : index
    %85 = vector.load %arg3[%c0_97, %c0_98] : memref<32x1xf32, #tpu.memory_space<vmem>>, vector<32x1xf32>
    %86 = vector.broadcast %85 : vector<32x1xf32> to vector<32x16xf32>
    %87 = arith.addf %84, %86 : vector<32x16xf32>
    %cst_99 = arith.constant 0.000000e+00 : f32
    %88 = vector.broadcast %cst_99 : f32 to vector<32x16xf32>
    %89 = arith.maximumf %87, %88 : vector<32x16xf32>
    %c0_100 = arith.constant 0 : index
    %c2_101 = arith.constant 2 : index
    %c0_102 = arith.constant 0 : index
    %c0_103 = arith.constant 0 : index
    %90 = vector.load %arg4[%c0_100, %c2_101, %c0_102, %c0_103] : memref<1x4x32x16xf32, #tpu.memory_space<vmem>>, vector<1x1x32x16xf32>
    %91 = vector.shape_cast %90 : vector<1x1x32x16xf32> to vector<32x16xf32>
    %92 = vector.shape_cast %89 : vector<32x16xf32> to vector<1x1x32x16xf32>
    tpu.vector_store %arg4[%c0_100, %c2_101, %c0_102, %c0_103], %92 {strides = array<i32>} : memref<1x4x32x16xf32, #tpu.memory_space<vmem>>, vector<1x1x32x16xf32>,
    %c12 = arith.constant 12 : index
    %c0_104 = arith.constant 0 : index
    %c0_105 = arith.constant 0 : index
    %93 = vector.load %arg2[%c12, %c0_104, %c0_105] : memref<16x32x32xf32, #tpu.memory_space<vmem>>, vector<1x32x32xf32>
    %94 = vector.shape_cast %93 : vector<1x32x32xf32> to vector<32x32xf32>
    %c0_106 = arith.constant 0 : index
    %c8_107 = arith.constant 8 : index
    %c0_108 = arith.constant 0 : index
    %c0_109 = arith.constant 0 : index
    %95 = vector.load %arg1[%c0_106, %c8_107, %c0_108, %c0_109] : memref<1x9x32x16xf32, #tpu.memory_space<vmem>>, vector<1x1x32x16xf32>
    %96 = vector.shape_cast %95 : vector<1x1x32x16xf32> to vector<32x16xf32>
    %cst_110 = arith.constant dense<0.000000e+00> : vector<32x16xf32>
    %97 = tpu.matmul %94, %96, %cst_110 {dimension_numbers = #tpu.dot_dimension_numbers<[1], [0], [0], [1], [0, 0, 1, 1], [], []>} : vector<32x32xf32>, vector<32x16xf32>, vector<32x16xf32> -> vector<32x16xf32>
    %c13 = arith.constant 13 : index
    %c0_111 = arith.constant 0 : index
    %c0_112 = arith.constant 0 : index
    %98 = vector.load %arg2[%c13, %c0_111, %c0_112] : memref<16x32x32xf32, #tpu.memory_space<vmem>>, vector<1x32x32xf32>
    %99 = vector.shape_cast %98 : vector<1x32x32xf32> to vector<32x32xf32>
    %c0_113 = arith.constant 0 : index
    %c7_114 = arith.constant 7 : index
    %c0_115 = arith.constant 0 : index
    %c0_116 = arith.constant 0 : index
    %100 = vector.load %arg1[%c0_113, %c7_114, %c0_115, %c0_116] : memref<1x9x32x16xf32, #tpu.memory_space<vmem>>, vector<1x1x32x16xf32>
    %101 = vector.shape_cast %100 : vector<1x1x32x16xf32> to vector<32x16xf32>
    %cst_117 = arith.constant dense<0.000000e+00> : vector<32x16xf32>
    %102 = tpu.matmul %99, %101, %cst_117 {dimension_numbers = #tpu.dot_dimension_numbers<[1], [0], [0], [1], [0, 0, 1, 1], [], []>} : vector<32x32xf32>, vector<32x16xf32>, vector<32x16xf32> -> vector<32x16xf32>
    %103 = arith.addf %97, %102 : vector<32x16xf32>
    %c14 = arith.constant 14 : index
    %c0_118 = arith.constant 0 : index
    %c0_119 = arith.constant 0 : index
    %104 = vector.load %arg2[%c14, %c0_118, %c0_119] : memref<16x32x32xf32, #tpu.memory_space<vmem>>, vector<1x32x32xf32>
    %105 = vector.shape_cast %104 : vector<1x32x32xf32> to vector<32x32xf32>
    %c0_120 = arith.constant 0 : index
    %c5_121 = arith.constant 5 : index
    %c0_122 = arith.constant 0 : index
    %c0_123 = arith.constant 0 : index
    %106 = vector.load %arg1[%c0_120, %c5_121, %c0_122, %c0_123] : memref<1x9x32x16xf32, #tpu.memory_space<vmem>>, vector<1x1x32x16xf32>
    %107 = vector.shape_cast %106 : vector<1x1x32x16xf32> to vector<32x16xf32>
    %cst_124 = arith.constant dense<0.000000e+00> : vector<32x16xf32>
    %108 = tpu.matmul %105, %107, %cst_124 {dimension_numbers = #tpu.dot_dimension_numbers<[1], [0], [0], [1], [0, 0, 1, 1], [], []>} : vector<32x32xf32>, vector<32x16xf32>, vector<32x16xf32> -> vector<32x16xf32>
    %109 = arith.addf %103, %108 : vector<32x16xf32>
    %c15 = arith.constant 15 : index
    %c0_125 = arith.constant 0 : index
    %c0_126 = arith.constant 0 : index
    %110 = vector.load %arg2[%c15, %c0_125, %c0_126] : memref<16x32x32xf32, #tpu.memory_space<vmem>>, vector<1x32x32xf32>
    %111 = vector.shape_cast %110 : vector<1x32x32xf32> to vector<32x32xf32>
    %c0_127 = arith.constant 0 : index
    %c4_128 = arith.constant 4 : index
    %c0_129 = arith.constant 0 : index
    %c0_130 = arith.constant 0 : index
    %112 = vector.load %arg1[%c0_127, %c4_128, %c0_129, %c0_130] : memref<1x9x32x16xf32, #tpu.memory_space<vmem>>, vector<1x1x32x16xf32>
    %113 = vector.shape_cast %112 : vector<1x1x32x16xf32> to vector<32x16xf32>
    %cst_131 = arith.constant dense<0.000000e+00> : vector<32x16xf32>
    %114 = tpu.matmul %111, %113, %cst_131 {dimension_numbers = #tpu.dot_dimension_numbers<[1], [0], [0], [1], [0, 0, 1, 1], [], []>} : vector<32x32xf32>, vector<32x16xf32>, vector<32x16xf32> -> vector<32x16xf32>
    %115 = arith.addf %109, %114 : vector<32x16xf32>
    %c0_132 = arith.constant 0 : index
    %c0_133 = arith.constant 0 : index
    %116 = vector.load %arg3[%c0_132, %c0_133] : memref<32x1xf32, #tpu.memory_space<vmem>>, vector<32x1xf32>
    %117 = vector.broadcast %116 : vector<32x1xf32> to vector<32x16xf32>
    %118 = arith.addf %115, %117 : vector<32x16xf32>
    %cst_134 = arith.constant 0.000000e+00 : f32
    %119 = vector.broadcast %cst_134 : f32 to vector<32x16xf32>
    %120 = arith.maximumf %118, %119 : vector<32x16xf32>
    %c0_135 = arith.constant 0 : index
    %c3_136 = arith.constant 3 : index
    %c0_137 = arith.constant 0 : index
    %c0_138 = arith.constant 0 : index
    %121 = vector.load %arg4[%c0_135, %c3_136, %c0_137, %c0_138] : memref<1x4x32x16xf32, #tpu.memory_space<vmem>>, vector<1x1x32x16xf32>
    %122 = vector.shape_cast %121 : vector<1x1x32x16xf32> to vector<32x16xf32>
    %123 = vector.shape_cast %120 : vector<32x16xf32> to vector<1x1x32x16xf32>
    tpu.vector_store %arg4[%c0_135, %c3_136, %c0_137, %c0_138], %123 {strides = array<i32>} : memref<1x4x32x16xf32, #tpu.memory_space<vmem>>, vector<1x1x32x16xf32>,
    return
  }
  func.func @transform_0(%arg0: i32) -> (i32, i32, i32, i32) {
    %c0_i32 = arith.constant 0 : i32
    %c0_i32_0 = arith.constant 0 : i32
    %c0_i32_1 = arith.constant 0 : i32
    %c0_i32_2 = arith.constant 0 : i32
    return %arg0, %c0_i32, %c0_i32_0, %c0_i32_1 : i32, i32, i32, i32
  }
  func.func @transform_1(%arg0: i32) -> (i32, i32, i32) {
    %c0_i32 = arith.constant 0 : i32
    %c0_i32_0 = arith.constant 0 : i32
    %c0_i32_1 = arith.constant 0 : i32
    %c0_i32_2 = arith.constant 0 : i32
    return %c0_i32, %c0_i32_0, %c0_i32_1 : i32, i32, i32
  }
  func.func @transform_2(%arg0: i32) -> (i32, i32) {
    %c0_i32 = arith.constant 0 : i32
    %c0_i32_0 = arith.constant 0 : i32
    %c0_i32_1 = arith.constant 0 : i32
    return %c0_i32, %c0_i32_0 : i32, i32
  }
  func.func @transform_3(%arg0: i32) -> (i32, i32, i32, i32) {
    %c0_i32 = arith.constant 0 : i32
    %c0_i32_0 = arith.constant 0 : i32
    %c0_i32_1 = arith.constant 0 : i32
    %c0_i32_2 = arith.constant 0 : i32
    return %arg0, %c0_i32, %c0_i32_0, %c0_i32_1 : i32, i32, i32, i32
  }
}

module attributes {stable_mosaic.version = 11 : i64} {
  func.func @_convt_kernel(%arg0: i32, %arg1: memref<1x9x32x64xf32, #tpu.memory_space<vmem>>, %arg2: memref<16x32x32xf32, #tpu.memory_space<vmem>>, %arg3: memref<32x1xf32, #tpu.memory_space<vmem>>, %arg4: memref<1x4x32x64xf32, #tpu.memory_space<vmem>>) attributes {dimension_semantics = [#tpu.dimension_semantics<parallel>], iteration_bounds = array<i64: 2>, scalar_prefetch = 0 : i64, scratch_operands = 0 : i64, tpu.core_type = #tpu.core_type<tc>, window_params = [{transform_indices = @transform_0, window_bounds = array<i64: 1, 9, 32, 64>}, {pipeline_mode = #tpu.pipeline_mode<synchronous>, transform_indices = @transform_1, window_bounds = array<i64: 16, 32, 32>}, {pipeline_mode = #tpu.pipeline_mode<synchronous>, transform_indices = @transform_2, window_bounds = array<i64: 32, 1>}, {transform_indices = @transform_3, window_bounds = array<i64: 1, 4, 32, 64>}]} {
    %c0 = arith.constant 0 : index
    %c0_0 = arith.constant 0 : index
    %c0_1 = arith.constant 0 : index
    %0 = vector.load %arg2[%c0, %c0_0, %c0_1] : memref<16x32x32xf32, #tpu.memory_space<vmem>>, vector<1x32x32xf32>
    %1 = vector.shape_cast %0 : vector<1x32x32xf32> to vector<32x32xf32>
    %c0_2 = arith.constant 0 : index
    %c4 = arith.constant 4 : index
    %c0_3 = arith.constant 0 : index
    %c0_4 = arith.constant 0 : index
    %2 = vector.load %arg1[%c0_2, %c4, %c0_3, %c0_4] : memref<1x9x32x64xf32, #tpu.memory_space<vmem>>, vector<1x1x32x64xf32>
    %3 = vector.shape_cast %2 : vector<1x1x32x64xf32> to vector<32x64xf32>
    %cst = arith.constant dense<0.000000e+00> : vector<32x64xf32>
    %4 = tpu.matmul %1, %3, %cst {dimension_numbers = #tpu.dot_dimension_numbers<[1], [0], [0], [1], [0, 0, 1, 1], [], []>} : vector<32x32xf32>, vector<32x64xf32>, vector<32x64xf32> -> vector<32x64xf32>
    %c1 = arith.constant 1 : index
    %c0_5 = arith.constant 0 : index
    %c0_6 = arith.constant 0 : index
    %5 = vector.load %arg2[%c1, %c0_5, %c0_6] : memref<16x32x32xf32, #tpu.memory_space<vmem>>, vector<1x32x32xf32>
    %6 = vector.shape_cast %5 : vector<1x32x32xf32> to vector<32x32xf32>
    %c0_7 = arith.constant 0 : index
    %c3 = arith.constant 3 : index
    %c0_8 = arith.constant 0 : index
    %c0_9 = arith.constant 0 : index
    %7 = vector.load %arg1[%c0_7, %c3, %c0_8, %c0_9] : memref<1x9x32x64xf32, #tpu.memory_space<vmem>>, vector<1x1x32x64xf32>
    %8 = vector.shape_cast %7 : vector<1x1x32x64xf32> to vector<32x64xf32>
    %cst_10 = arith.constant dense<0.000000e+00> : vector<32x64xf32>
    %9 = tpu.matmul %6, %8, %cst_10 {dimension_numbers = #tpu.dot_dimension_numbers<[1], [0], [0], [1], [0, 0, 1, 1], [], []>} : vector<32x32xf32>, vector<32x64xf32>, vector<32x64xf32> -> vector<32x64xf32>
    %10 = arith.addf %4, %9 : vector<32x64xf32>
    %c2 = arith.constant 2 : index
    %c0_11 = arith.constant 0 : index
    %c0_12 = arith.constant 0 : index
    %11 = vector.load %arg2[%c2, %c0_11, %c0_12] : memref<16x32x32xf32, #tpu.memory_space<vmem>>, vector<1x32x32xf32>
    %12 = vector.shape_cast %11 : vector<1x32x32xf32> to vector<32x32xf32>
    %c0_13 = arith.constant 0 : index
    %c1_14 = arith.constant 1 : index
    %c0_15 = arith.constant 0 : index
    %c0_16 = arith.constant 0 : index
    %13 = vector.load %arg1[%c0_13, %c1_14, %c0_15, %c0_16] : memref<1x9x32x64xf32, #tpu.memory_space<vmem>>, vector<1x1x32x64xf32>
    %14 = vector.shape_cast %13 : vector<1x1x32x64xf32> to vector<32x64xf32>
    %cst_17 = arith.constant dense<0.000000e+00> : vector<32x64xf32>
    %15 = tpu.matmul %12, %14, %cst_17 {dimension_numbers = #tpu.dot_dimension_numbers<[1], [0], [0], [1], [0, 0, 1, 1], [], []>} : vector<32x32xf32>, vector<32x64xf32>, vector<32x64xf32> -> vector<32x64xf32>
    %16 = arith.addf %10, %15 : vector<32x64xf32>
    %c3_18 = arith.constant 3 : index
    %c0_19 = arith.constant 0 : index
    %c0_20 = arith.constant 0 : index
    %17 = vector.load %arg2[%c3_18, %c0_19, %c0_20] : memref<16x32x32xf32, #tpu.memory_space<vmem>>, vector<1x32x32xf32>
    %18 = vector.shape_cast %17 : vector<1x32x32xf32> to vector<32x32xf32>
    %c0_21 = arith.constant 0 : index
    %c0_22 = arith.constant 0 : index
    %c0_23 = arith.constant 0 : index
    %c0_24 = arith.constant 0 : index
    %19 = vector.load %arg1[%c0_21, %c0_22, %c0_23, %c0_24] : memref<1x9x32x64xf32, #tpu.memory_space<vmem>>, vector<1x1x32x64xf32>
    %20 = vector.shape_cast %19 : vector<1x1x32x64xf32> to vector<32x64xf32>
    %cst_25 = arith.constant dense<0.000000e+00> : vector<32x64xf32>
    %21 = tpu.matmul %18, %20, %cst_25 {dimension_numbers = #tpu.dot_dimension_numbers<[1], [0], [0], [1], [0, 0, 1, 1], [], []>} : vector<32x32xf32>, vector<32x64xf32>, vector<32x64xf32> -> vector<32x64xf32>
    %22 = arith.addf %16, %21 : vector<32x64xf32>
    %c0_26 = arith.constant 0 : index
    %c0_27 = arith.constant 0 : index
    %23 = vector.load %arg3[%c0_26, %c0_27] : memref<32x1xf32, #tpu.memory_space<vmem>>, vector<32x1xf32>
    %24 = vector.broadcast %23 : vector<32x1xf32> to vector<32x64xf32>
    %25 = arith.addf %22, %24 : vector<32x64xf32>
    %cst_28 = arith.constant 0.000000e+00 : f32
    %26 = vector.broadcast %cst_28 : f32 to vector<32x64xf32>
    %27 = arith.maximumf %25, %26 : vector<32x64xf32>
    %c0_29 = arith.constant 0 : index
    %c0_30 = arith.constant 0 : index
    %c0_31 = arith.constant 0 : index
    %c0_32 = arith.constant 0 : index
    %28 = vector.load %arg4[%c0_29, %c0_30, %c0_31, %c0_32] : memref<1x4x32x64xf32, #tpu.memory_space<vmem>>, vector<1x1x32x64xf32>
    %29 = vector.shape_cast %28 : vector<1x1x32x64xf32> to vector<32x64xf32>
    %30 = vector.shape_cast %27 : vector<32x64xf32> to vector<1x1x32x64xf32>
    tpu.vector_store %arg4[%c0_29, %c0_30, %c0_31, %c0_32], %30 {strides = array<i32>} : memref<1x4x32x64xf32, #tpu.memory_space<vmem>>, vector<1x1x32x64xf32>,
    %c4_33 = arith.constant 4 : index
    %c0_34 = arith.constant 0 : index
    %c0_35 = arith.constant 0 : index
    %31 = vector.load %arg2[%c4_33, %c0_34, %c0_35] : memref<16x32x32xf32, #tpu.memory_space<vmem>>, vector<1x32x32xf32>
    %32 = vector.shape_cast %31 : vector<1x32x32xf32> to vector<32x32xf32>
    %c0_36 = arith.constant 0 : index
    %c5 = arith.constant 5 : index
    %c0_37 = arith.constant 0 : index
    %c0_38 = arith.constant 0 : index
    %33 = vector.load %arg1[%c0_36, %c5, %c0_37, %c0_38] : memref<1x9x32x64xf32, #tpu.memory_space<vmem>>, vector<1x1x32x64xf32>
    %34 = vector.shape_cast %33 : vector<1x1x32x64xf32> to vector<32x64xf32>
    %cst_39 = arith.constant dense<0.000000e+00> : vector<32x64xf32>
    %35 = tpu.matmul %32, %34, %cst_39 {dimension_numbers = #tpu.dot_dimension_numbers<[1], [0], [0], [1], [0, 0, 1, 1], [], []>} : vector<32x32xf32>, vector<32x64xf32>, vector<32x64xf32> -> vector<32x64xf32>
    %c5_40 = arith.constant 5 : index
    %c0_41 = arith.constant 0 : index
    %c0_42 = arith.constant 0 : index
    %36 = vector.load %arg2[%c5_40, %c0_41, %c0_42] : memref<16x32x32xf32, #tpu.memory_space<vmem>>, vector<1x32x32xf32>
    %37 = vector.shape_cast %36 : vector<1x32x32xf32> to vector<32x32xf32>
    %c0_43 = arith.constant 0 : index
    %c4_44 = arith.constant 4 : index
    %c0_45 = arith.constant 0 : index
    %c0_46 = arith.constant 0 : index
    %38 = vector.load %arg1[%c0_43, %c4_44, %c0_45, %c0_46] : memref<1x9x32x64xf32, #tpu.memory_space<vmem>>, vector<1x1x32x64xf32>
    %39 = vector.shape_cast %38 : vector<1x1x32x64xf32> to vector<32x64xf32>
    %cst_47 = arith.constant dense<0.000000e+00> : vector<32x64xf32>
    %40 = tpu.matmul %37, %39, %cst_47 {dimension_numbers = #tpu.dot_dimension_numbers<[1], [0], [0], [1], [0, 0, 1, 1], [], []>} : vector<32x32xf32>, vector<32x64xf32>, vector<32x64xf32> -> vector<32x64xf32>
    %41 = arith.addf %35, %40 : vector<32x64xf32>
    %c6 = arith.constant 6 : index
    %c0_48 = arith.constant 0 : index
    %c0_49 = arith.constant 0 : index
    %42 = vector.load %arg2[%c6, %c0_48, %c0_49] : memref<16x32x32xf32, #tpu.memory_space<vmem>>, vector<1x32x32xf32>
    %43 = vector.shape_cast %42 : vector<1x32x32xf32> to vector<32x32xf32>
    %c0_50 = arith.constant 0 : index
    %c2_51 = arith.constant 2 : index
    %c0_52 = arith.constant 0 : index
    %c0_53 = arith.constant 0 : index
    %44 = vector.load %arg1[%c0_50, %c2_51, %c0_52, %c0_53] : memref<1x9x32x64xf32, #tpu.memory_space<vmem>>, vector<1x1x32x64xf32>
    %45 = vector.shape_cast %44 : vector<1x1x32x64xf32> to vector<32x64xf32>
    %cst_54 = arith.constant dense<0.000000e+00> : vector<32x64xf32>
    %46 = tpu.matmul %43, %45, %cst_54 {dimension_numbers = #tpu.dot_dimension_numbers<[1], [0], [0], [1], [0, 0, 1, 1], [], []>} : vector<32x32xf32>, vector<32x64xf32>, vector<32x64xf32> -> vector<32x64xf32>
    %47 = arith.addf %41, %46 : vector<32x64xf32>
    %c7 = arith.constant 7 : index
    %c0_55 = arith.constant 0 : index
    %c0_56 = arith.constant 0 : index
    %48 = vector.load %arg2[%c7, %c0_55, %c0_56] : memref<16x32x32xf32, #tpu.memory_space<vmem>>, vector<1x32x32xf32>
    %49 = vector.shape_cast %48 : vector<1x32x32xf32> to vector<32x32xf32>
    %c0_57 = arith.constant 0 : index
    %c1_58 = arith.constant 1 : index
    %c0_59 = arith.constant 0 : index
    %c0_60 = arith.constant 0 : index
    %50 = vector.load %arg1[%c0_57, %c1_58, %c0_59, %c0_60] : memref<1x9x32x64xf32, #tpu.memory_space<vmem>>, vector<1x1x32x64xf32>
    %51 = vector.shape_cast %50 : vector<1x1x32x64xf32> to vector<32x64xf32>
    %cst_61 = arith.constant dense<0.000000e+00> : vector<32x64xf32>
    %52 = tpu.matmul %49, %51, %cst_61 {dimension_numbers = #tpu.dot_dimension_numbers<[1], [0], [0], [1], [0, 0, 1, 1], [], []>} : vector<32x32xf32>, vector<32x64xf32>, vector<32x64xf32> -> vector<32x64xf32>
    %53 = arith.addf %47, %52 : vector<32x64xf32>
    %c0_62 = arith.constant 0 : index
    %c0_63 = arith.constant 0 : index
    %54 = vector.load %arg3[%c0_62, %c0_63] : memref<32x1xf32, #tpu.memory_space<vmem>>, vector<32x1xf32>
    %55 = vector.broadcast %54 : vector<32x1xf32> to vector<32x64xf32>
    %56 = arith.addf %53, %55 : vector<32x64xf32>
    %cst_64 = arith.constant 0.000000e+00 : f32
    %57 = vector.broadcast %cst_64 : f32 to vector<32x64xf32>
    %58 = arith.maximumf %56, %57 : vector<32x64xf32>
    %c0_65 = arith.constant 0 : index
    %c1_66 = arith.constant 1 : index
    %c0_67 = arith.constant 0 : index
    %c0_68 = arith.constant 0 : index
    %59 = vector.load %arg4[%c0_65, %c1_66, %c0_67, %c0_68] : memref<1x4x32x64xf32, #tpu.memory_space<vmem>>, vector<1x1x32x64xf32>
    %60 = vector.shape_cast %59 : vector<1x1x32x64xf32> to vector<32x64xf32>
    %61 = vector.shape_cast %58 : vector<32x64xf32> to vector<1x1x32x64xf32>
    tpu.vector_store %arg4[%c0_65, %c1_66, %c0_67, %c0_68], %61 {strides = array<i32>} : memref<1x4x32x64xf32, #tpu.memory_space<vmem>>, vector<1x1x32x64xf32>,
    %c8 = arith.constant 8 : index
    %c0_69 = arith.constant 0 : index
    %c0_70 = arith.constant 0 : index
    %62 = vector.load %arg2[%c8, %c0_69, %c0_70] : memref<16x32x32xf32, #tpu.memory_space<vmem>>, vector<1x32x32xf32>
    %63 = vector.shape_cast %62 : vector<1x32x32xf32> to vector<32x32xf32>
    %c0_71 = arith.constant 0 : index
    %c7_72 = arith.constant 7 : index
    %c0_73 = arith.constant 0 : index
    %c0_74 = arith.constant 0 : index
    %64 = vector.load %arg1[%c0_71, %c7_72, %c0_73, %c0_74] : memref<1x9x32x64xf32, #tpu.memory_space<vmem>>, vector<1x1x32x64xf32>
    %65 = vector.shape_cast %64 : vector<1x1x32x64xf32> to vector<32x64xf32>
    %cst_75 = arith.constant dense<0.000000e+00> : vector<32x64xf32>
    %66 = tpu.matmul %63, %65, %cst_75 {dimension_numbers = #tpu.dot_dimension_numbers<[1], [0], [0], [1], [0, 0, 1, 1], [], []>} : vector<32x32xf32>, vector<32x64xf32>, vector<32x64xf32> -> vector<32x64xf32>
    %c9 = arith.constant 9 : index
    %c0_76 = arith.constant 0 : index
    %c0_77 = arith.constant 0 : index
    %67 = vector.load %arg2[%c9, %c0_76, %c0_77] : memref<16x32x32xf32, #tpu.memory_space<vmem>>, vector<1x32x32xf32>
    %68 = vector.shape_cast %67 : vector<1x32x32xf32> to vector<32x32xf32>
    %c0_78 = arith.constant 0 : index
    %c6_79 = arith.constant 6 : index
    %c0_80 = arith.constant 0 : index
    %c0_81 = arith.constant 0 : index
    %69 = vector.load %arg1[%c0_78, %c6_79, %c0_80, %c0_81] : memref<1x9x32x64xf32, #tpu.memory_space<vmem>>, vector<1x1x32x64xf32>
    %70 = vector.shape_cast %69 : vector<1x1x32x64xf32> to vector<32x64xf32>
    %cst_82 = arith.constant dense<0.000000e+00> : vector<32x64xf32>
    %71 = tpu.matmul %68, %70, %cst_82 {dimension_numbers = #tpu.dot_dimension_numbers<[1], [0], [0], [1], [0, 0, 1, 1], [], []>} : vector<32x32xf32>, vector<32x64xf32>, vector<32x64xf32> -> vector<32x64xf32>
    %72 = arith.addf %66, %71 : vector<32x64xf32>
    %c10 = arith.constant 10 : index
    %c0_83 = arith.constant 0 : index
    %c0_84 = arith.constant 0 : index
    %73 = vector.load %arg2[%c10, %c0_83, %c0_84] : memref<16x32x32xf32, #tpu.memory_space<vmem>>, vector<1x32x32xf32>
    %74 = vector.shape_cast %73 : vector<1x32x32xf32> to vector<32x32xf32>
    %c0_85 = arith.constant 0 : index
    %c4_86 = arith.constant 4 : index
    %c0_87 = arith.constant 0 : index
    %c0_88 = arith.constant 0 : index
    %75 = vector.load %arg1[%c0_85, %c4_86, %c0_87, %c0_88] : memref<1x9x32x64xf32, #tpu.memory_space<vmem>>, vector<1x1x32x64xf32>
    %76 = vector.shape_cast %75 : vector<1x1x32x64xf32> to vector<32x64xf32>
    %cst_89 = arith.constant dense<0.000000e+00> : vector<32x64xf32>
    %77 = tpu.matmul %74, %76, %cst_89 {dimension_numbers = #tpu.dot_dimension_numbers<[1], [0], [0], [1], [0, 0, 1, 1], [], []>} : vector<32x32xf32>, vector<32x64xf32>, vector<32x64xf32> -> vector<32x64xf32>
    %78 = arith.addf %72, %77 : vector<32x64xf32>
    %c11 = arith.constant 11 : index
    %c0_90 = arith.constant 0 : index
    %c0_91 = arith.constant 0 : index
    %79 = vector.load %arg2[%c11, %c0_90, %c0_91] : memref<16x32x32xf32, #tpu.memory_space<vmem>>, vector<1x32x32xf32>
    %80 = vector.shape_cast %79 : vector<1x32x32xf32> to vector<32x32xf32>
    %c0_92 = arith.constant 0 : index
    %c3_93 = arith.constant 3 : index
    %c0_94 = arith.constant 0 : index
    %c0_95 = arith.constant 0 : index
    %81 = vector.load %arg1[%c0_92, %c3_93, %c0_94, %c0_95] : memref<1x9x32x64xf32, #tpu.memory_space<vmem>>, vector<1x1x32x64xf32>
    %82 = vector.shape_cast %81 : vector<1x1x32x64xf32> to vector<32x64xf32>
    %cst_96 = arith.constant dense<0.000000e+00> : vector<32x64xf32>
    %83 = tpu.matmul %80, %82, %cst_96 {dimension_numbers = #tpu.dot_dimension_numbers<[1], [0], [0], [1], [0, 0, 1, 1], [], []>} : vector<32x32xf32>, vector<32x64xf32>, vector<32x64xf32> -> vector<32x64xf32>
    %84 = arith.addf %78, %83 : vector<32x64xf32>
    %c0_97 = arith.constant 0 : index
    %c0_98 = arith.constant 0 : index
    %85 = vector.load %arg3[%c0_97, %c0_98] : memref<32x1xf32, #tpu.memory_space<vmem>>, vector<32x1xf32>
    %86 = vector.broadcast %85 : vector<32x1xf32> to vector<32x64xf32>
    %87 = arith.addf %84, %86 : vector<32x64xf32>
    %cst_99 = arith.constant 0.000000e+00 : f32
    %88 = vector.broadcast %cst_99 : f32 to vector<32x64xf32>
    %89 = arith.maximumf %87, %88 : vector<32x64xf32>
    %c0_100 = arith.constant 0 : index
    %c2_101 = arith.constant 2 : index
    %c0_102 = arith.constant 0 : index
    %c0_103 = arith.constant 0 : index
    %90 = vector.load %arg4[%c0_100, %c2_101, %c0_102, %c0_103] : memref<1x4x32x64xf32, #tpu.memory_space<vmem>>, vector<1x1x32x64xf32>
    %91 = vector.shape_cast %90 : vector<1x1x32x64xf32> to vector<32x64xf32>
    %92 = vector.shape_cast %89 : vector<32x64xf32> to vector<1x1x32x64xf32>
    tpu.vector_store %arg4[%c0_100, %c2_101, %c0_102, %c0_103], %92 {strides = array<i32>} : memref<1x4x32x64xf32, #tpu.memory_space<vmem>>, vector<1x1x32x64xf32>,
    %c12 = arith.constant 12 : index
    %c0_104 = arith.constant 0 : index
    %c0_105 = arith.constant 0 : index
    %93 = vector.load %arg2[%c12, %c0_104, %c0_105] : memref<16x32x32xf32, #tpu.memory_space<vmem>>, vector<1x32x32xf32>
    %94 = vector.shape_cast %93 : vector<1x32x32xf32> to vector<32x32xf32>
    %c0_106 = arith.constant 0 : index
    %c8_107 = arith.constant 8 : index
    %c0_108 = arith.constant 0 : index
    %c0_109 = arith.constant 0 : index
    %95 = vector.load %arg1[%c0_106, %c8_107, %c0_108, %c0_109] : memref<1x9x32x64xf32, #tpu.memory_space<vmem>>, vector<1x1x32x64xf32>
    %96 = vector.shape_cast %95 : vector<1x1x32x64xf32> to vector<32x64xf32>
    %cst_110 = arith.constant dense<0.000000e+00> : vector<32x64xf32>
    %97 = tpu.matmul %94, %96, %cst_110 {dimension_numbers = #tpu.dot_dimension_numbers<[1], [0], [0], [1], [0, 0, 1, 1], [], []>} : vector<32x32xf32>, vector<32x64xf32>, vector<32x64xf32> -> vector<32x64xf32>
    %c13 = arith.constant 13 : index
    %c0_111 = arith.constant 0 : index
    %c0_112 = arith.constant 0 : index
    %98 = vector.load %arg2[%c13, %c0_111, %c0_112] : memref<16x32x32xf32, #tpu.memory_space<vmem>>, vector<1x32x32xf32>
    %99 = vector.shape_cast %98 : vector<1x32x32xf32> to vector<32x32xf32>
    %c0_113 = arith.constant 0 : index
    %c7_114 = arith.constant 7 : index
    %c0_115 = arith.constant 0 : index
    %c0_116 = arith.constant 0 : index
    %100 = vector.load %arg1[%c0_113, %c7_114, %c0_115, %c0_116] : memref<1x9x32x64xf32, #tpu.memory_space<vmem>>, vector<1x1x32x64xf32>
    %101 = vector.shape_cast %100 : vector<1x1x32x64xf32> to vector<32x64xf32>
    %cst_117 = arith.constant dense<0.000000e+00> : vector<32x64xf32>
    %102 = tpu.matmul %99, %101, %cst_117 {dimension_numbers = #tpu.dot_dimension_numbers<[1], [0], [0], [1], [0, 0, 1, 1], [], []>} : vector<32x32xf32>, vector<32x64xf32>, vector<32x64xf32> -> vector<32x64xf32>
    %103 = arith.addf %97, %102 : vector<32x64xf32>
    %c14 = arith.constant 14 : index
    %c0_118 = arith.constant 0 : index
    %c0_119 = arith.constant 0 : index
    %104 = vector.load %arg2[%c14, %c0_118, %c0_119] : memref<16x32x32xf32, #tpu.memory_space<vmem>>, vector<1x32x32xf32>
    %105 = vector.shape_cast %104 : vector<1x32x32xf32> to vector<32x32xf32>
    %c0_120 = arith.constant 0 : index
    %c5_121 = arith.constant 5 : index
    %c0_122 = arith.constant 0 : index
    %c0_123 = arith.constant 0 : index
    %106 = vector.load %arg1[%c0_120, %c5_121, %c0_122, %c0_123] : memref<1x9x32x64xf32, #tpu.memory_space<vmem>>, vector<1x1x32x64xf32>
    %107 = vector.shape_cast %106 : vector<1x1x32x64xf32> to vector<32x64xf32>
    %cst_124 = arith.constant dense<0.000000e+00> : vector<32x64xf32>
    %108 = tpu.matmul %105, %107, %cst_124 {dimension_numbers = #tpu.dot_dimension_numbers<[1], [0], [0], [1], [0, 0, 1, 1], [], []>} : vector<32x32xf32>, vector<32x64xf32>, vector<32x64xf32> -> vector<32x64xf32>
    %109 = arith.addf %103, %108 : vector<32x64xf32>
    %c15 = arith.constant 15 : index
    %c0_125 = arith.constant 0 : index
    %c0_126 = arith.constant 0 : index
    %110 = vector.load %arg2[%c15, %c0_125, %c0_126] : memref<16x32x32xf32, #tpu.memory_space<vmem>>, vector<1x32x32xf32>
    %111 = vector.shape_cast %110 : vector<1x32x32xf32> to vector<32x32xf32>
    %c0_127 = arith.constant 0 : index
    %c4_128 = arith.constant 4 : index
    %c0_129 = arith.constant 0 : index
    %c0_130 = arith.constant 0 : index
    %112 = vector.load %arg1[%c0_127, %c4_128, %c0_129, %c0_130] : memref<1x9x32x64xf32, #tpu.memory_space<vmem>>, vector<1x1x32x64xf32>
    %113 = vector.shape_cast %112 : vector<1x1x32x64xf32> to vector<32x64xf32>
    %cst_131 = arith.constant dense<0.000000e+00> : vector<32x64xf32>
    %114 = tpu.matmul %111, %113, %cst_131 {dimension_numbers = #tpu.dot_dimension_numbers<[1], [0], [0], [1], [0, 0, 1, 1], [], []>} : vector<32x32xf32>, vector<32x64xf32>, vector<32x64xf32> -> vector<32x64xf32>
    %115 = arith.addf %109, %114 : vector<32x64xf32>
    %c0_132 = arith.constant 0 : index
    %c0_133 = arith.constant 0 : index
    %116 = vector.load %arg3[%c0_132, %c0_133] : memref<32x1xf32, #tpu.memory_space<vmem>>, vector<32x1xf32>
    %117 = vector.broadcast %116 : vector<32x1xf32> to vector<32x64xf32>
    %118 = arith.addf %115, %117 : vector<32x64xf32>
    %cst_134 = arith.constant 0.000000e+00 : f32
    %119 = vector.broadcast %cst_134 : f32 to vector<32x64xf32>
    %120 = arith.maximumf %118, %119 : vector<32x64xf32>
    %c0_135 = arith.constant 0 : index
    %c3_136 = arith.constant 3 : index
    %c0_137 = arith.constant 0 : index
    %c0_138 = arith.constant 0 : index
    %121 = vector.load %arg4[%c0_135, %c3_136, %c0_137, %c0_138] : memref<1x4x32x64xf32, #tpu.memory_space<vmem>>, vector<1x1x32x64xf32>
    %122 = vector.shape_cast %121 : vector<1x1x32x64xf32> to vector<32x64xf32>
    %123 = vector.shape_cast %120 : vector<32x64xf32> to vector<1x1x32x64xf32>
    tpu.vector_store %arg4[%c0_135, %c3_136, %c0_137, %c0_138], %123 {strides = array<i32>} : memref<1x4x32x64xf32, #tpu.memory_space<vmem>>, vector<1x1x32x64xf32>,
    return
  }
  func.func @transform_0(%arg0: i32) -> (i32, i32, i32, i32) {
    %c0_i32 = arith.constant 0 : i32
    %c0_i32_0 = arith.constant 0 : i32
    %c0_i32_1 = arith.constant 0 : i32
    %c0_i32_2 = arith.constant 0 : i32
    return %arg0, %c0_i32, %c0_i32_0, %c0_i32_1 : i32, i32, i32, i32
  }
  func.func @transform_1(%arg0: i32) -> (i32, i32, i32) {
    %c0_i32 = arith.constant 0 : i32
    %c0_i32_0 = arith.constant 0 : i32
    %c0_i32_1 = arith.constant 0 : i32
    %c0_i32_2 = arith.constant 0 : i32
    return %c0_i32, %c0_i32_0, %c0_i32_1 : i32, i32, i32
  }
  func.func @transform_2(%arg0: i32) -> (i32, i32) {
    %c0_i32 = arith.constant 0 : i32
    %c0_i32_0 = arith.constant 0 : i32
    %c0_i32_1 = arith.constant 0 : i32
    return %c0_i32, %c0_i32_0 : i32, i32
  }
  func.func @transform_3(%arg0: i32) -> (i32, i32, i32, i32) {
    %c0_i32 = arith.constant 0 : i32
    %c0_i32_0 = arith.constant 0 : i32
    %c0_i32_1 = arith.constant 0 : i32
    %c0_i32_2 = arith.constant 0 : i32
    return %arg0, %c0_i32, %c0_i32_0, %c0_i32_1 : i32, i32, i32, i32
  }
}

module attributes {stable_mosaic.version = 11 : i64} {
  func.func @_convt_kernel(%arg0: i32, %arg1: memref<1x9x32x256xf32, #tpu.memory_space<vmem>>, %arg2: memref<16x8x32xf32, #tpu.memory_space<vmem>>, %arg3: memref<8x1xf32, #tpu.memory_space<vmem>>, %arg4: memref<1x4x8x256xf32, #tpu.memory_space<vmem>>, %arg5: memref<1x4x8x256xf32, #tpu.memory_space<vmem>>) attributes {dimension_semantics = [#tpu.dimension_semantics<parallel>], iteration_bounds = array<i64: 2>, scalar_prefetch = 0 : i64, scratch_operands = 0 : i64, tpu.core_type = #tpu.core_type<tc>, window_params = [{transform_indices = @transform_0, window_bounds = array<i64: 1, 9, 32, 256>}, {pipeline_mode = #tpu.pipeline_mode<synchronous>, transform_indices = @transform_1, window_bounds = array<i64: 16, 8, 32>}, {pipeline_mode = #tpu.pipeline_mode<synchronous>, transform_indices = @transform_2, window_bounds = array<i64: 8, 1>}, {transform_indices = @transform_3, window_bounds = array<i64: 1, 4, 8, 256>}, {transform_indices = @transform_4, window_bounds = array<i64: 1, 4, 8, 256>}]} {
    %c0 = arith.constant 0 : index
    %c0_0 = arith.constant 0 : index
    %c0_1 = arith.constant 0 : index
    %0 = vector.load %arg2[%c0, %c0_0, %c0_1] : memref<16x8x32xf32, #tpu.memory_space<vmem>>, vector<1x8x32xf32>
    %1 = vector.shape_cast %0 : vector<1x8x32xf32> to vector<8x32xf32>
    %c0_2 = arith.constant 0 : index
    %c4 = arith.constant 4 : index
    %c0_3 = arith.constant 0 : index
    %c0_4 = arith.constant 0 : index
    %2 = vector.load %arg1[%c0_2, %c4, %c0_3, %c0_4] : memref<1x9x32x256xf32, #tpu.memory_space<vmem>>, vector<1x1x32x256xf32>
    %3 = vector.shape_cast %2 : vector<1x1x32x256xf32> to vector<32x256xf32>
    %cst = arith.constant dense<0.000000e+00> : vector<8x256xf32>
    %4 = tpu.matmul %1, %3, %cst {dimension_numbers = #tpu.dot_dimension_numbers<[1], [0], [0], [1], [0, 0, 1, 1], [], []>} : vector<8x32xf32>, vector<32x256xf32>, vector<8x256xf32> -> vector<8x256xf32>
    %c1 = arith.constant 1 : index
    %c0_5 = arith.constant 0 : index
    %c0_6 = arith.constant 0 : index
    %5 = vector.load %arg2[%c1, %c0_5, %c0_6] : memref<16x8x32xf32, #tpu.memory_space<vmem>>, vector<1x8x32xf32>
    %6 = vector.shape_cast %5 : vector<1x8x32xf32> to vector<8x32xf32>
    %c0_7 = arith.constant 0 : index
    %c3 = arith.constant 3 : index
    %c0_8 = arith.constant 0 : index
    %c0_9 = arith.constant 0 : index
    %7 = vector.load %arg1[%c0_7, %c3, %c0_8, %c0_9] : memref<1x9x32x256xf32, #tpu.memory_space<vmem>>, vector<1x1x32x256xf32>
    %8 = vector.shape_cast %7 : vector<1x1x32x256xf32> to vector<32x256xf32>
    %cst_10 = arith.constant dense<0.000000e+00> : vector<8x256xf32>
    %9 = tpu.matmul %6, %8, %cst_10 {dimension_numbers = #tpu.dot_dimension_numbers<[1], [0], [0], [1], [0, 0, 1, 1], [], []>} : vector<8x32xf32>, vector<32x256xf32>, vector<8x256xf32> -> vector<8x256xf32>
    %10 = arith.addf %4, %9 : vector<8x256xf32>
    %c2 = arith.constant 2 : index
    %c0_11 = arith.constant 0 : index
    %c0_12 = arith.constant 0 : index
    %11 = vector.load %arg2[%c2, %c0_11, %c0_12] : memref<16x8x32xf32, #tpu.memory_space<vmem>>, vector<1x8x32xf32>
    %12 = vector.shape_cast %11 : vector<1x8x32xf32> to vector<8x32xf32>
    %c0_13 = arith.constant 0 : index
    %c1_14 = arith.constant 1 : index
    %c0_15 = arith.constant 0 : index
    %c0_16 = arith.constant 0 : index
    %13 = vector.load %arg1[%c0_13, %c1_14, %c0_15, %c0_16] : memref<1x9x32x256xf32, #tpu.memory_space<vmem>>, vector<1x1x32x256xf32>
    %14 = vector.shape_cast %13 : vector<1x1x32x256xf32> to vector<32x256xf32>
    %cst_17 = arith.constant dense<0.000000e+00> : vector<8x256xf32>
    %15 = tpu.matmul %12, %14, %cst_17 {dimension_numbers = #tpu.dot_dimension_numbers<[1], [0], [0], [1], [0, 0, 1, 1], [], []>} : vector<8x32xf32>, vector<32x256xf32>, vector<8x256xf32> -> vector<8x256xf32>
    %16 = arith.addf %10, %15 : vector<8x256xf32>
    %c3_18 = arith.constant 3 : index
    %c0_19 = arith.constant 0 : index
    %c0_20 = arith.constant 0 : index
    %17 = vector.load %arg2[%c3_18, %c0_19, %c0_20] : memref<16x8x32xf32, #tpu.memory_space<vmem>>, vector<1x8x32xf32>
    %18 = vector.shape_cast %17 : vector<1x8x32xf32> to vector<8x32xf32>
    %c0_21 = arith.constant 0 : index
    %c0_22 = arith.constant 0 : index
    %c0_23 = arith.constant 0 : index
    %c0_24 = arith.constant 0 : index
    %19 = vector.load %arg1[%c0_21, %c0_22, %c0_23, %c0_24] : memref<1x9x32x256xf32, #tpu.memory_space<vmem>>, vector<1x1x32x256xf32>
    %20 = vector.shape_cast %19 : vector<1x1x32x256xf32> to vector<32x256xf32>
    %cst_25 = arith.constant dense<0.000000e+00> : vector<8x256xf32>
    %21 = tpu.matmul %18, %20, %cst_25 {dimension_numbers = #tpu.dot_dimension_numbers<[1], [0], [0], [1], [0, 0, 1, 1], [], []>} : vector<8x32xf32>, vector<32x256xf32>, vector<8x256xf32> -> vector<8x256xf32>
    %22 = arith.addf %16, %21 : vector<8x256xf32>
    %c0_26 = arith.constant 0 : index
    %c0_27 = arith.constant 0 : index
    %23 = vector.load %arg3[%c0_26, %c0_27] : memref<8x1xf32, #tpu.memory_space<vmem>>, vector<8x1xf32>
    %24 = vector.broadcast %23 : vector<8x1xf32> to vector<8x256xf32>
    %25 = arith.addf %22, %24 : vector<8x256xf32>
    %c0_28 = arith.constant 0 : index
    %c0_29 = arith.constant 0 : index
    %c0_30 = arith.constant 0 : index
    %c0_31 = arith.constant 0 : index
    %26 = vector.load %arg4[%c0_28, %c0_29, %c0_30, %c0_31] : memref<1x4x8x256xf32, #tpu.memory_space<vmem>>, vector<1x1x8x256xf32>
    %27 = vector.shape_cast %26 : vector<1x1x8x256xf32> to vector<8x256xf32>
    %28 = vector.shape_cast %25 : vector<8x256xf32> to vector<1x1x8x256xf32>
    tpu.vector_store %arg4[%c0_28, %c0_29, %c0_30, %c0_31], %28 {strides = array<i32>} : memref<1x4x8x256xf32, #tpu.memory_space<vmem>>, vector<1x1x8x256xf32>,
    %29 = arith.negf %25 : vector<8x256xf32>
    %30 = math.exp %29 : vector<8x256xf32>
    %cst_32 = arith.constant 1.000000e+00 : f32
    %31 = vector.broadcast %cst_32 : f32 to vector<8x256xf32>
    %32 = arith.addf %31, %30 : vector<8x256xf32>
    %33 = arith.divf %31, %32 : vector<8x256xf32>
    %c0_33 = arith.constant 0 : index
    %c0_34 = arith.constant 0 : index
    %c0_35 = arith.constant 0 : index
    %c0_36 = arith.constant 0 : index
    %34 = vector.load %arg5[%c0_33, %c0_34, %c0_35, %c0_36] : memref<1x4x8x256xf32, #tpu.memory_space<vmem>>, vector<1x1x8x256xf32>
    %35 = vector.shape_cast %34 : vector<1x1x8x256xf32> to vector<8x256xf32>
    %36 = vector.shape_cast %33 : vector<8x256xf32> to vector<1x1x8x256xf32>
    tpu.vector_store %arg5[%c0_33, %c0_34, %c0_35, %c0_36], %36 {strides = array<i32>} : memref<1x4x8x256xf32, #tpu.memory_space<vmem>>, vector<1x1x8x256xf32>,
    %c4_37 = arith.constant 4 : index
    %c0_38 = arith.constant 0 : index
    %c0_39 = arith.constant 0 : index
    %37 = vector.load %arg2[%c4_37, %c0_38, %c0_39] : memref<16x8x32xf32, #tpu.memory_space<vmem>>, vector<1x8x32xf32>
    %38 = vector.shape_cast %37 : vector<1x8x32xf32> to vector<8x32xf32>
    %c0_40 = arith.constant 0 : index
    %c5 = arith.constant 5 : index
    %c0_41 = arith.constant 0 : index
    %c0_42 = arith.constant 0 : index
    %39 = vector.load %arg1[%c0_40, %c5, %c0_41, %c0_42] : memref<1x9x32x256xf32, #tpu.memory_space<vmem>>, vector<1x1x32x256xf32>
    %40 = vector.shape_cast %39 : vector<1x1x32x256xf32> to vector<32x256xf32>
    %cst_43 = arith.constant dense<0.000000e+00> : vector<8x256xf32>
    %41 = tpu.matmul %38, %40, %cst_43 {dimension_numbers = #tpu.dot_dimension_numbers<[1], [0], [0], [1], [0, 0, 1, 1], [], []>} : vector<8x32xf32>, vector<32x256xf32>, vector<8x256xf32> -> vector<8x256xf32>
    %c5_44 = arith.constant 5 : index
    %c0_45 = arith.constant 0 : index
    %c0_46 = arith.constant 0 : index
    %42 = vector.load %arg2[%c5_44, %c0_45, %c0_46] : memref<16x8x32xf32, #tpu.memory_space<vmem>>, vector<1x8x32xf32>
    %43 = vector.shape_cast %42 : vector<1x8x32xf32> to vector<8x32xf32>
    %c0_47 = arith.constant 0 : index
    %c4_48 = arith.constant 4 : index
    %c0_49 = arith.constant 0 : index
    %c0_50 = arith.constant 0 : index
    %44 = vector.load %arg1[%c0_47, %c4_48, %c0_49, %c0_50] : memref<1x9x32x256xf32, #tpu.memory_space<vmem>>, vector<1x1x32x256xf32>
    %45 = vector.shape_cast %44 : vector<1x1x32x256xf32> to vector<32x256xf32>
    %cst_51 = arith.constant dense<0.000000e+00> : vector<8x256xf32>
    %46 = tpu.matmul %43, %45, %cst_51 {dimension_numbers = #tpu.dot_dimension_numbers<[1], [0], [0], [1], [0, 0, 1, 1], [], []>} : vector<8x32xf32>, vector<32x256xf32>, vector<8x256xf32> -> vector<8x256xf32>
    %47 = arith.addf %41, %46 : vector<8x256xf32>
    %c6 = arith.constant 6 : index
    %c0_52 = arith.constant 0 : index
    %c0_53 = arith.constant 0 : index
    %48 = vector.load %arg2[%c6, %c0_52, %c0_53] : memref<16x8x32xf32, #tpu.memory_space<vmem>>, vector<1x8x32xf32>
    %49 = vector.shape_cast %48 : vector<1x8x32xf32> to vector<8x32xf32>
    %c0_54 = arith.constant 0 : index
    %c2_55 = arith.constant 2 : index
    %c0_56 = arith.constant 0 : index
    %c0_57 = arith.constant 0 : index
    %50 = vector.load %arg1[%c0_54, %c2_55, %c0_56, %c0_57] : memref<1x9x32x256xf32, #tpu.memory_space<vmem>>, vector<1x1x32x256xf32>
    %51 = vector.shape_cast %50 : vector<1x1x32x256xf32> to vector<32x256xf32>
    %cst_58 = arith.constant dense<0.000000e+00> : vector<8x256xf32>
    %52 = tpu.matmul %49, %51, %cst_58 {dimension_numbers = #tpu.dot_dimension_numbers<[1], [0], [0], [1], [0, 0, 1, 1], [], []>} : vector<8x32xf32>, vector<32x256xf32>, vector<8x256xf32> -> vector<8x256xf32>
    %53 = arith.addf %47, %52 : vector<8x256xf32>
    %c7 = arith.constant 7 : index
    %c0_59 = arith.constant 0 : index
    %c0_60 = arith.constant 0 : index
    %54 = vector.load %arg2[%c7, %c0_59, %c0_60] : memref<16x8x32xf32, #tpu.memory_space<vmem>>, vector<1x8x32xf32>
    %55 = vector.shape_cast %54 : vector<1x8x32xf32> to vector<8x32xf32>
    %c0_61 = arith.constant 0 : index
    %c1_62 = arith.constant 1 : index
    %c0_63 = arith.constant 0 : index
    %c0_64 = arith.constant 0 : index
    %56 = vector.load %arg1[%c0_61, %c1_62, %c0_63, %c0_64] : memref<1x9x32x256xf32, #tpu.memory_space<vmem>>, vector<1x1x32x256xf32>
    %57 = vector.shape_cast %56 : vector<1x1x32x256xf32> to vector<32x256xf32>
    %cst_65 = arith.constant dense<0.000000e+00> : vector<8x256xf32>
    %58 = tpu.matmul %55, %57, %cst_65 {dimension_numbers = #tpu.dot_dimension_numbers<[1], [0], [0], [1], [0, 0, 1, 1], [], []>} : vector<8x32xf32>, vector<32x256xf32>, vector<8x256xf32> -> vector<8x256xf32>
    %59 = arith.addf %53, %58 : vector<8x256xf32>
    %c0_66 = arith.constant 0 : index
    %c0_67 = arith.constant 0 : index
    %60 = vector.load %arg3[%c0_66, %c0_67] : memref<8x1xf32, #tpu.memory_space<vmem>>, vector<8x1xf32>
    %61 = vector.broadcast %60 : vector<8x1xf32> to vector<8x256xf32>
    %62 = arith.addf %59, %61 : vector<8x256xf32>
    %c0_68 = arith.constant 0 : index
    %c1_69 = arith.constant 1 : index
    %c0_70 = arith.constant 0 : index
    %c0_71 = arith.constant 0 : index
    %63 = vector.load %arg4[%c0_68, %c1_69, %c0_70, %c0_71] : memref<1x4x8x256xf32, #tpu.memory_space<vmem>>, vector<1x1x8x256xf32>
    %64 = vector.shape_cast %63 : vector<1x1x8x256xf32> to vector<8x256xf32>
    %65 = vector.shape_cast %62 : vector<8x256xf32> to vector<1x1x8x256xf32>
    tpu.vector_store %arg4[%c0_68, %c1_69, %c0_70, %c0_71], %65 {strides = array<i32>} : memref<1x4x8x256xf32, #tpu.memory_space<vmem>>, vector<1x1x8x256xf32>,
    %66 = arith.negf %62 : vector<8x256xf32>
    %67 = math.exp %66 : vector<8x256xf32>
    %cst_72 = arith.constant 1.000000e+00 : f32
    %68 = vector.broadcast %cst_72 : f32 to vector<8x256xf32>
    %69 = arith.addf %68, %67 : vector<8x256xf32>
    %70 = arith.divf %68, %69 : vector<8x256xf32>
    %c0_73 = arith.constant 0 : index
    %c1_74 = arith.constant 1 : index
    %c0_75 = arith.constant 0 : index
    %c0_76 = arith.constant 0 : index
    %71 = vector.load %arg5[%c0_73, %c1_74, %c0_75, %c0_76] : memref<1x4x8x256xf32, #tpu.memory_space<vmem>>, vector<1x1x8x256xf32>
    %72 = vector.shape_cast %71 : vector<1x1x8x256xf32> to vector<8x256xf32>
    %73 = vector.shape_cast %70 : vector<8x256xf32> to vector<1x1x8x256xf32>
    tpu.vector_store %arg5[%c0_73, %c1_74, %c0_75, %c0_76], %73 {strides = array<i32>} : memref<1x4x8x256xf32, #tpu.memory_space<vmem>>, vector<1x1x8x256xf32>,
    %c8 = arith.constant 8 : index
    %c0_77 = arith.constant 0 : index
    %c0_78 = arith.constant 0 : index
    %74 = vector.load %arg2[%c8, %c0_77, %c0_78] : memref<16x8x32xf32, #tpu.memory_space<vmem>>, vector<1x8x32xf32>
    %75 = vector.shape_cast %74 : vector<1x8x32xf32> to vector<8x32xf32>
    %c0_79 = arith.constant 0 : index
    %c7_80 = arith.constant 7 : index
    %c0_81 = arith.constant 0 : index
    %c0_82 = arith.constant 0 : index
    %76 = vector.load %arg1[%c0_79, %c7_80, %c0_81, %c0_82] : memref<1x9x32x256xf32, #tpu.memory_space<vmem>>, vector<1x1x32x256xf32>
    %77 = vector.shape_cast %76 : vector<1x1x32x256xf32> to vector<32x256xf32>
    %cst_83 = arith.constant dense<0.000000e+00> : vector<8x256xf32>
    %78 = tpu.matmul %75, %77, %cst_83 {dimension_numbers = #tpu.dot_dimension_numbers<[1], [0], [0], [1], [0, 0, 1, 1], [], []>} : vector<8x32xf32>, vector<32x256xf32>, vector<8x256xf32> -> vector<8x256xf32>
    %c9 = arith.constant 9 : index
    %c0_84 = arith.constant 0 : index
    %c0_85 = arith.constant 0 : index
    %79 = vector.load %arg2[%c9, %c0_84, %c0_85] : memref<16x8x32xf32, #tpu.memory_space<vmem>>, vector<1x8x32xf32>
    %80 = vector.shape_cast %79 : vector<1x8x32xf32> to vector<8x32xf32>
    %c0_86 = arith.constant 0 : index
    %c6_87 = arith.constant 6 : index
    %c0_88 = arith.constant 0 : index
    %c0_89 = arith.constant 0 : index
    %81 = vector.load %arg1[%c0_86, %c6_87, %c0_88, %c0_89] : memref<1x9x32x256xf32, #tpu.memory_space<vmem>>, vector<1x1x32x256xf32>
    %82 = vector.shape_cast %81 : vector<1x1x32x256xf32> to vector<32x256xf32>
    %cst_90 = arith.constant dense<0.000000e+00> : vector<8x256xf32>
    %83 = tpu.matmul %80, %82, %cst_90 {dimension_numbers = #tpu.dot_dimension_numbers<[1], [0], [0], [1], [0, 0, 1, 1], [], []>} : vector<8x32xf32>, vector<32x256xf32>, vector<8x256xf32> -> vector<8x256xf32>
    %84 = arith.addf %78, %83 : vector<8x256xf32>
    %c10 = arith.constant 10 : index
    %c0_91 = arith.constant 0 : index
    %c0_92 = arith.constant 0 : index
    %85 = vector.load %arg2[%c10, %c0_91, %c0_92] : memref<16x8x32xf32, #tpu.memory_space<vmem>>, vector<1x8x32xf32>
    %86 = vector.shape_cast %85 : vector<1x8x32xf32> to vector<8x32xf32>
    %c0_93 = arith.constant 0 : index
    %c4_94 = arith.constant 4 : index
    %c0_95 = arith.constant 0 : index
    %c0_96 = arith.constant 0 : index
    %87 = vector.load %arg1[%c0_93, %c4_94, %c0_95, %c0_96] : memref<1x9x32x256xf32, #tpu.memory_space<vmem>>, vector<1x1x32x256xf32>
    %88 = vector.shape_cast %87 : vector<1x1x32x256xf32> to vector<32x256xf32>
    %cst_97 = arith.constant dense<0.000000e+00> : vector<8x256xf32>
    %89 = tpu.matmul %86, %88, %cst_97 {dimension_numbers = #tpu.dot_dimension_numbers<[1], [0], [0], [1], [0, 0, 1, 1], [], []>} : vector<8x32xf32>, vector<32x256xf32>, vector<8x256xf32> -> vector<8x256xf32>
    %90 = arith.addf %84, %89 : vector<8x256xf32>
    %c11 = arith.constant 11 : index
    %c0_98 = arith.constant 0 : index
    %c0_99 = arith.constant 0 : index
    %91 = vector.load %arg2[%c11, %c0_98, %c0_99] : memref<16x8x32xf32, #tpu.memory_space<vmem>>, vector<1x8x32xf32>
    %92 = vector.shape_cast %91 : vector<1x8x32xf32> to vector<8x32xf32>
    %c0_100 = arith.constant 0 : index
    %c3_101 = arith.constant 3 : index
    %c0_102 = arith.constant 0 : index
    %c0_103 = arith.constant 0 : index
    %93 = vector.load %arg1[%c0_100, %c3_101, %c0_102, %c0_103] : memref<1x9x32x256xf32, #tpu.memory_space<vmem>>, vector<1x1x32x256xf32>
    %94 = vector.shape_cast %93 : vector<1x1x32x256xf32> to vector<32x256xf32>
    %cst_104 = arith.constant dense<0.000000e+00> : vector<8x256xf32>
    %95 = tpu.matmul %92, %94, %cst_104 {dimension_numbers = #tpu.dot_dimension_numbers<[1], [0], [0], [1], [0, 0, 1, 1], [], []>} : vector<8x32xf32>, vector<32x256xf32>, vector<8x256xf32> -> vector<8x256xf32>
    %96 = arith.addf %90, %95 : vector<8x256xf32>
    %c0_105 = arith.constant 0 : index
    %c0_106 = arith.constant 0 : index
    %97 = vector.load %arg3[%c0_105, %c0_106] : memref<8x1xf32, #tpu.memory_space<vmem>>, vector<8x1xf32>
    %98 = vector.broadcast %97 : vector<8x1xf32> to vector<8x256xf32>
    %99 = arith.addf %96, %98 : vector<8x256xf32>
    %c0_107 = arith.constant 0 : index
    %c2_108 = arith.constant 2 : index
    %c0_109 = arith.constant 0 : index
    %c0_110 = arith.constant 0 : index
    %100 = vector.load %arg4[%c0_107, %c2_108, %c0_109, %c0_110] : memref<1x4x8x256xf32, #tpu.memory_space<vmem>>, vector<1x1x8x256xf32>
    %101 = vector.shape_cast %100 : vector<1x1x8x256xf32> to vector<8x256xf32>
    %102 = vector.shape_cast %99 : vector<8x256xf32> to vector<1x1x8x256xf32>
    tpu.vector_store %arg4[%c0_107, %c2_108, %c0_109, %c0_110], %102 {strides = array<i32>} : memref<1x4x8x256xf32, #tpu.memory_space<vmem>>, vector<1x1x8x256xf32>,
    %103 = arith.negf %99 : vector<8x256xf32>
    %104 = math.exp %103 : vector<8x256xf32>
    %cst_111 = arith.constant 1.000000e+00 : f32
    %105 = vector.broadcast %cst_111 : f32 to vector<8x256xf32>
    %106 = arith.addf %105, %104 : vector<8x256xf32>
    %107 = arith.divf %105, %106 : vector<8x256xf32>
    %c0_112 = arith.constant 0 : index
    %c2_113 = arith.constant 2 : index
    %c0_114 = arith.constant 0 : index
    %c0_115 = arith.constant 0 : index
    %108 = vector.load %arg5[%c0_112, %c2_113, %c0_114, %c0_115] : memref<1x4x8x256xf32, #tpu.memory_space<vmem>>, vector<1x1x8x256xf32>
    %109 = vector.shape_cast %108 : vector<1x1x8x256xf32> to vector<8x256xf32>
    %110 = vector.shape_cast %107 : vector<8x256xf32> to vector<1x1x8x256xf32>
    tpu.vector_store %arg5[%c0_112, %c2_113, %c0_114, %c0_115], %110 {strides = array<i32>} : memref<1x4x8x256xf32, #tpu.memory_space<vmem>>, vector<1x1x8x256xf32>,
    %c12 = arith.constant 12 : index
    %c0_116 = arith.constant 0 : index
    %c0_117 = arith.constant 0 : index
    %111 = vector.load %arg2[%c12, %c0_116, %c0_117] : memref<16x8x32xf32, #tpu.memory_space<vmem>>, vector<1x8x32xf32>
    %112 = vector.shape_cast %111 : vector<1x8x32xf32> to vector<8x32xf32>
    %c0_118 = arith.constant 0 : index
    %c8_119 = arith.constant 8 : index
    %c0_120 = arith.constant 0 : index
    %c0_121 = arith.constant 0 : index
    %113 = vector.load %arg1[%c0_118, %c8_119, %c0_120, %c0_121] : memref<1x9x32x256xf32, #tpu.memory_space<vmem>>, vector<1x1x32x256xf32>
    %114 = vector.shape_cast %113 : vector<1x1x32x256xf32> to vector<32x256xf32>
    %cst_122 = arith.constant dense<0.000000e+00> : vector<8x256xf32>
    %115 = tpu.matmul %112, %114, %cst_122 {dimension_numbers = #tpu.dot_dimension_numbers<[1], [0], [0], [1], [0, 0, 1, 1], [], []>} : vector<8x32xf32>, vector<32x256xf32>, vector<8x256xf32> -> vector<8x256xf32>
    %c13 = arith.constant 13 : index
    %c0_123 = arith.constant 0 : index
    %c0_124 = arith.constant 0 : index
    %116 = vector.load %arg2[%c13, %c0_123, %c0_124] : memref<16x8x32xf32, #tpu.memory_space<vmem>>, vector<1x8x32xf32>
    %117 = vector.shape_cast %116 : vector<1x8x32xf32> to vector<8x32xf32>
    %c0_125 = arith.constant 0 : index
    %c7_126 = arith.constant 7 : index
    %c0_127 = arith.constant 0 : index
    %c0_128 = arith.constant 0 : index
    %118 = vector.load %arg1[%c0_125, %c7_126, %c0_127, %c0_128] : memref<1x9x32x256xf32, #tpu.memory_space<vmem>>, vector<1x1x32x256xf32>
    %119 = vector.shape_cast %118 : vector<1x1x32x256xf32> to vector<32x256xf32>
    %cst_129 = arith.constant dense<0.000000e+00> : vector<8x256xf32>
    %120 = tpu.matmul %117, %119, %cst_129 {dimension_numbers = #tpu.dot_dimension_numbers<[1], [0], [0], [1], [0, 0, 1, 1], [], []>} : vector<8x32xf32>, vector<32x256xf32>, vector<8x256xf32> -> vector<8x256xf32>
    %121 = arith.addf %115, %120 : vector<8x256xf32>
    %c14 = arith.constant 14 : index
    %c0_130 = arith.constant 0 : index
    %c0_131 = arith.constant 0 : index
    %122 = vector.load %arg2[%c14, %c0_130, %c0_131] : memref<16x8x32xf32, #tpu.memory_space<vmem>>, vector<1x8x32xf32>
    %123 = vector.shape_cast %122 : vector<1x8x32xf32> to vector<8x32xf32>
    %c0_132 = arith.constant 0 : index
    %c5_133 = arith.constant 5 : index
    %c0_134 = arith.constant 0 : index
    %c0_135 = arith.constant 0 : index
    %124 = vector.load %arg1[%c0_132, %c5_133, %c0_134, %c0_135] : memref<1x9x32x256xf32, #tpu.memory_space<vmem>>, vector<1x1x32x256xf32>
    %125 = vector.shape_cast %124 : vector<1x1x32x256xf32> to vector<32x256xf32>
    %cst_136 = arith.constant dense<0.000000e+00> : vector<8x256xf32>
    %126 = tpu.matmul %123, %125, %cst_136 {dimension_numbers = #tpu.dot_dimension_numbers<[1], [0], [0], [1], [0, 0, 1, 1], [], []>} : vector<8x32xf32>, vector<32x256xf32>, vector<8x256xf32> -> vector<8x256xf32>
    %127 = arith.addf %121, %126 : vector<8x256xf32>
    %c15 = arith.constant 15 : index
    %c0_137 = arith.constant 0 : index
    %c0_138 = arith.constant 0 : index
    %128 = vector.load %arg2[%c15, %c0_137, %c0_138] : memref<16x8x32xf32, #tpu.memory_space<vmem>>, vector<1x8x32xf32>
    %129 = vector.shape_cast %128 : vector<1x8x32xf32> to vector<8x32xf32>
    %c0_139 = arith.constant 0 : index
    %c4_140 = arith.constant 4 : index
    %c0_141 = arith.constant 0 : index
    %c0_142 = arith.constant 0 : index
    %130 = vector.load %arg1[%c0_139, %c4_140, %c0_141, %c0_142] : memref<1x9x32x256xf32, #tpu.memory_space<vmem>>, vector<1x1x32x256xf32>
    %131 = vector.shape_cast %130 : vector<1x1x32x256xf32> to vector<32x256xf32>
    %cst_143 = arith.constant dense<0.000000e+00> : vector<8x256xf32>
    %132 = tpu.matmul %129, %131, %cst_143 {dimension_numbers = #tpu.dot_dimension_numbers<[1], [0], [0], [1], [0, 0, 1, 1], [], []>} : vector<8x32xf32>, vector<32x256xf32>, vector<8x256xf32> -> vector<8x256xf32>
    %133 = arith.addf %127, %132 : vector<8x256xf32>
    %c0_144 = arith.constant 0 : index
    %c0_145 = arith.constant 0 : index
    %134 = vector.load %arg3[%c0_144, %c0_145] : memref<8x1xf32, #tpu.memory_space<vmem>>, vector<8x1xf32>
    %135 = vector.broadcast %134 : vector<8x1xf32> to vector<8x256xf32>
    %136 = arith.addf %133, %135 : vector<8x256xf32>
    %c0_146 = arith.constant 0 : index
    %c3_147 = arith.constant 3 : index
    %c0_148 = arith.constant 0 : index
    %c0_149 = arith.constant 0 : index
    %137 = vector.load %arg4[%c0_146, %c3_147, %c0_148, %c0_149] : memref<1x4x8x256xf32, #tpu.memory_space<vmem>>, vector<1x1x8x256xf32>
    %138 = vector.shape_cast %137 : vector<1x1x8x256xf32> to vector<8x256xf32>
    %139 = vector.shape_cast %136 : vector<8x256xf32> to vector<1x1x8x256xf32>
    tpu.vector_store %arg4[%c0_146, %c3_147, %c0_148, %c0_149], %139 {strides = array<i32>} : memref<1x4x8x256xf32, #tpu.memory_space<vmem>>, vector<1x1x8x256xf32>,
    %140 = arith.negf %136 : vector<8x256xf32>
    %141 = math.exp %140 : vector<8x256xf32>
    %cst_150 = arith.constant 1.000000e+00 : f32
    %142 = vector.broadcast %cst_150 : f32 to vector<8x256xf32>
    %143 = arith.addf %142, %141 : vector<8x256xf32>
    %144 = arith.divf %142, %143 : vector<8x256xf32>
    %c0_151 = arith.constant 0 : index
    %c3_152 = arith.constant 3 : index
    %c0_153 = arith.constant 0 : index
    %c0_154 = arith.constant 0 : index
    %145 = vector.load %arg5[%c0_151, %c3_152, %c0_153, %c0_154] : memref<1x4x8x256xf32, #tpu.memory_space<vmem>>, vector<1x1x8x256xf32>
    %146 = vector.shape_cast %145 : vector<1x1x8x256xf32> to vector<8x256xf32>
    %147 = vector.shape_cast %144 : vector<8x256xf32> to vector<1x1x8x256xf32>
    tpu.vector_store %arg5[%c0_151, %c3_152, %c0_153, %c0_154], %147 {strides = array<i32>} : memref<1x4x8x256xf32, #tpu.memory_space<vmem>>, vector<1x1x8x256xf32>,
    return
  }
  func.func @transform_0(%arg0: i32) -> (i32, i32, i32, i32) {
    %c0_i32 = arith.constant 0 : i32
    %c0_i32_0 = arith.constant 0 : i32
    %c0_i32_1 = arith.constant 0 : i32
    %c0_i32_2 = arith.constant 0 : i32
    return %arg0, %c0_i32, %c0_i32_0, %c0_i32_1 : i32, i32, i32, i32
  }
  func.func @transform_1(%arg0: i32) -> (i32, i32, i32) {
    %c0_i32 = arith.constant 0 : i32
    %c0_i32_0 = arith.constant 0 : i32
    %c0_i32_1 = arith.constant 0 : i32
    %c0_i32_2 = arith.constant 0 : i32
    return %c0_i32, %c0_i32_0, %c0_i32_1 : i32, i32, i32
  }
  func.func @transform_2(%arg0: i32) -> (i32, i32) {
    %c0_i32 = arith.constant 0 : i32
    %c0_i32_0 = arith.constant 0 : i32
    %c0_i32_1 = arith.constant 0 : i32
    return %c0_i32, %c0_i32_0 : i32, i32
  }
  func.func @transform_3(%arg0: i32) -> (i32, i32, i32, i32) {
    %c0_i32 = arith.constant 0 : i32
    %c0_i32_0 = arith.constant 0 : i32
    %c0_i32_1 = arith.constant 0 : i32
    %c0_i32_2 = arith.constant 0 : i32
    return %arg0, %c0_i32, %c0_i32_0, %c0_i32_1 : i32, i32, i32, i32
  }
  func.func @transform_4(%arg0: i32) -> (i32, i32, i32, i32) {
    %c0_i32 = arith.constant 0 : i32
    %c0_i32_0 = arith.constant 0 : i32
    %c0_i32_1 = arith.constant 0 : i32
    %c0_i32_2 = arith.constant 0 : i32
    return %arg0, %c0_i32, %c0_i32_0, %c0_i32_1 : i32, i32, i32, i32
  }
}

</mosaic_0001>

<llo_original>
// kernel: decoder_burgess_forward.4
$region0: #{decoder_burgess_forward.4}
  #allocation0 [shape = 'u32[]', space=smem, size = 0x4, offset = 0x4, fixed_abs, tag = 'smem constant byte address 0x4 - core index']
  #allocation1 [shape = 'u32[144,128]{1,0:T(1,128)}', space=vmem, size = 0x12000, scoped, tag = 'internal scratch']
  %s0 = inlined_call_operand.vmem [shape: f32[2,10], index: 0, kind: input, shape index: {}]
  %s1 = inlined_call_operand.vmem [shape: f32[10,256], index: 1, kind: input, shape index: {}]
  %s2 = inlined_call_operand.vmem [shape: f32[1,256], index: 2, kind: input, shape index: {}]
  %s3 = inlined_call_operand.vmem [shape: f32[256,256], index: 3, kind: input, shape index: {}]
  %s4 = inlined_call_operand.vmem [shape: f32[1,256], index: 4, kind: input, shape index: {}]
  %s5 = inlined_call_operand.vmem [shape: f32[256,512], index: 5, kind: input, shape index: {}]
  %s6 = inlined_call_operand.vmem [shape: f32[1,512], index: 6, kind: input, shape index: {}]
  %s7 = inlined_call_operand.hbm [shape: f32[2,256], index: 7, kind: output, shape index: {0}]
  %s8 = inlined_call_operand.hbm [shape: f32[2,256], index: 8, kind: output, shape index: {1}]
  %s9 = inlined_call_operand.vmem [shape: f32[2,512], index: 9, kind: output, shape index: {2}]
  %10 = xla_tuple %s7, %s8, %s9
  %s11 = sld [smem:[#allocation0]]
  $region54: #{decoder_burgess_forward.4} parent=0
    _
  %s13 = ssub.s32 1, %s11
  %s14 = scalar_select 0, %s13, %s11
  $region1: #{decoder_burgess_forward.4} parent=0
    #allocation2 [shape = 'u8[2048]{0}', space=vmem, size = 0x800, scoped, tag = 'output window, operand 0, single buffered']
    #allocation3 [shape = 's32[1]{0}', space=sflag, size = 0x4, scoped, tag = 'scoped memory for decoder_burgess_forward.4']
    #allocation4 [shape = 'u8[2048]{0}', space=vmem, size = 0x800, scoped, tag = 'output window, operand 1, single buffered']
    #allocation5 [shape = 's32[1]{0}', space=sflag, size = 0x4, scoped, tag = 'scoped memory for decoder_burgess_forward.4']
    %15 = vsyncpa [#allocation3], 0
    %16 = vsyncpa [#allocation5], 0
    // Predicated region
    $region2: #{decoder_burgess_forward.4} parent=1 // pred_check
      _
    $region3: #{decoder_burgess_forward.4} parent=1 // pred_check_branch
      %18 = sbr.rel (0) target = $region5
    $region4: #{decoder_burgess_forward.4} parent=1 // pred_region
      _
    $region5: #{decoder_burgess_forward.4} parent=1 // pred_fallthru
      _
    // Predicated region
    $region6: #{decoder_burgess_forward.4} parent=1 // pred_check
      _
    $region7: #{decoder_burgess_forward.4} parent=1 // pred_check_branch
      %20 = sbr.rel (0) target = $region9
    $region8: #{decoder_burgess_forward.4} parent=1 // pred_region
      _
    $region9: #{decoder_burgess_forward.4} parent=1 // pred_fallthru
      _
    // Predicated region
    $region10: #{decoder_burgess_forward.4} parent=1 // pred_check
      _
    $region11: #{decoder_burgess_forward.4} parent=1 // pred_check_branch
      %22 = sbr.rel (0) target = $region13
    $region12: #{decoder_burgess_forward.4} parent=1 // pred_region
      _
    $region13: #{decoder_burgess_forward.4} parent=1 // pred_fallthru
      _
    // Predicated region
    $region14: #{decoder_burgess_forward.4} parent=1 // pred_check
      _
    $region15: #{decoder_burgess_forward.4} parent=1 // pred_check_branch
      %24 = sbr.rel (0) target = $region17
    $region16: #{decoder_burgess_forward.4} parent=1 // pred_region
      _
    $region17: #{decoder_burgess_forward.4} parent=1 // pred_fallthru
      _
    // Predicated region
    $region18: #{decoder_burgess_forward.4} parent=1 // pred_check
      _
    $region19: #{decoder_burgess_forward.4} parent=1 // pred_check_branch
      %26 = sbr.rel (0) target = $region21
    $region20: #{decoder_burgess_forward.4} parent=1 // pred_region
      _
    $region21: #{decoder_burgess_forward.4} parent=1 // pred_fallthru
      _
    // Predicated region
    $region22: #{decoder_burgess_forward.4} parent=1 // pred_check
      _
    $region23: #{decoder_burgess_forward.4} parent=1 // pred_check_branch
      %28 = sbr.rel (0) target = $region25
    $region24: #{decoder_burgess_forward.4} parent=1 // pred_region
      _
    $region25: #{decoder_burgess_forward.4} parent=1 // pred_fallthru
      _
    // Predicated region
    $region26: #{decoder_burgess_forward.4} parent=1 // pred_check
      _
    $region27: #{decoder_burgess_forward.4} parent=1 // pred_check_branch
      %30 = sbr.rel (0) target = $region29
    $region28: #{decoder_burgess_forward.4} parent=1 // pred_region
      _
    $region29: #{decoder_burgess_forward.4} parent=1 // pred_fallthru
      _
    %v31 = vld [vmem:[%s0] sm:$0x3]
    %v32 = vld [vmem:[%s1] sm:$0xff]
    %v33 = vld [vmem:[%s1 + $0x8] sm:$0xff]
    %v34 = vld [vmem:[%s1 + $0x10] sm:$0x3]
    %v35 = vld [vmem:[%s1 + $0x18] sm:$0x3]
    %v36 = vld [vmem:[%s2] sm:$0x3]
    %v38 = vlaneseq
    %v39 = vshrl.u32 %v38, 7
    %v40 = vsub.s32 0, %v39
    %v41 = vrot.slane %v36, %v40
    %v42 = vlaneseq
    %v43 = vshrl.u32 %v42, 7
    %v44 = vsub.s32 1, %v43
    %v45 = vrot.slane %v36, %v44
    %vm48 = vcmask 80896
    %v50 = vsel %vm48, %v31, 0
    %vm52 = vcmask 1041408
    %v54 = vsel %vm52, %v34, 0
    %v57 = vsel %vm52, %v35, 0
    %59 = vmatprep.subr.mxu0 %v33
    %60 = vmatpush1.msra.mxu0 %v32
    %61 = vmatprep.subr.mxu0 %v57
    %62 = vmatpush1.msra.mxu0 %v54
    %63 = vmatprep.subr.mxu0 0.0
    %64 = vmatpush1.msra.mxu0 0.0
    %65 = vmatprep.subr.mxu0 0.0
    %66 = vmatpush1.msra.mxu0 0.0
    %67 = vmatprep.subr.mxu0 0.0
    %68 = vmatpush1.msra.mxu0 0.0
    %69 = vmatprep.subr.mxu0 0.0
    %70 = vmatpush1.msra.mxu0 0.0
    %71 = vmatprep.subr.mxu0 0.0
    %72 = vmatpush1.msra.mxu0 0.0
    %73 = vmatprep.subr.mxu0 0.0
    %74 = vmatpush1.msra.mxu0 0.0
    %75 = vmatprep.subr.mxu0 0.0
    %76 = vmatpush1.msra.mxu0 0.0
    %77 = vmatprep.subr.mxu0 0.0
    %78 = vmatpush1.msra.mxu0 0.0
    %79 = vmatprep.subr.mxu0 0.0
    %80 = vmatpush1.msra.mxu0 0.0
    %81 = vmatprep.subr.mxu0 0.0
    %82 = vmatpush1.msra.mxu0 0.0
    %83 = vmatprep.subr.mxu0 0.0
    %84 = vmatpush1.msra.mxu0 0.0
    %85 = vmatprep.subr.mxu0 0.0
    %86 = vmatpush1.msra.mxu0 0.0
    %87 = vmatprep.subr.mxu0 0.0
    %88 = vmatpush1.msra.mxu0 0.0
    %89 = vmatprep.subr.mxu0 0.0
    %90 = vmatpush1.msra.mxu0 0.0
    %91 = vmatprep.subr.mxu0 0.0
    %92 = vmatpush1.msra.mxu0 0.0
    %93 = vmatprep.subr.mxu0 0.0
    %94 = vmatpush1.msra.mxu0 0.0
    %95 = vmatprep.subr.mxu0 0.0
    %96 = vmatpush1.msra.mxu0 0.0
    %97 = vmatprep.subr.mxu0 0.0
    %98 = vmatpush1.msra.mxu0 0.0
    %99 = vmatprep.subr.mxu0 0.0
    %100 = vmatpush1.msra.mxu0 0.0
    %101 = vmatprep.subr.mxu0 0.0
    %102 = vmatpush1.msra.mxu0 0.0
    %103 = vmatprep.subr.mxu0 0.0
    %104 = vmatpush1.msra.mxu0 0.0
    %105 = vmatprep.subr.mxu0 0.0
    %106 = vmatpush1.msra.mxu0 0.0
    %107 = vmatprep.subr.mxu0 0.0
    %108 = vmatpush1.msra.mxu0 0.0
    %109 = vmatprep.subr.mxu0 0.0
    %110 = vmatpush1.msra.mxu0 0.0
    %111 = vmatprep.subr.mxu0 0.0
    %112 = vmatpush1.msra.mxu0 0.0
    %113 = vmatprep.subr.mxu0 0.0
    %114 = vmatpush1.msra.mxu0 0.0
    %115 = vmatprep.subr.mxu0 0.0
    %116 = vmatpush1.msra.mxu0 0.0
    %117 = vmatprep.subr.mxu0 0.0
    %118 = vmatpush1.msra.mxu0 0.0
    %119 = vmatprep.subr.mxu0 0.0
    %120 = vmatpush1.msra.mxu0 0.0
    %121 = vmatprep.subr.mxu0 0.0
    %122 = vmatpush1.msra.mxu0 0.0
    %123 = vmatprep.mubr.f32.mxu0 0.0
    %124 = vmatmul.mubr.f32.gmra.mrb[0].mxu0 %v50
    %v125 = vpop.f32.mrb[0].mxu0
    %v126 = vadd.f32 %v41, %v125
    %v127 = vpop.f32.mrb[0].mxu0
    %v128 = vadd.f32 %v45, %v127
    %129 = vdwg.mxu0
    %v130 = vmax.f32 %v126, 0.0
    %v131 = vmax.f32 %v128, 0.0
    %v134 = vcombine.low %v130, %v131
    %v136 = vunpack.c.l.s4 1983009808
    %v137 = vunpack.c.0.s8 %v136
    %v138 = vlaneseq
    %v139 = vshrl.u32 %v138, 7
    %v140 = vsub.s32 %v137, %v139
    %v141 = vrot.slane %v134, %v140
    %143 = vst [vmem:[#allocation2] sm:$0xf] %v141
    %v144 = vld [vmem:[%s3] sm:$0xff]
    %v145 = vld [vmem:[%s3 + $0x8] sm:$0xff]
    %v146 = vld [vmem:[%s3 + $0x10] sm:$0xff]
    %v147 = vld [vmem:[%s3 + $0x18] sm:$0xff]
    %v148 = vld [vmem:[%s3 + $0x20] sm:$0xff]
    %v149 = vld [vmem:[%s3 + $0x28] sm:$0xff]
    %v150 = vld [vmem:[%s3 + $0x30] sm:$0xff]
    %v151 = vld [vmem:[%s3 + $0x38] sm:$0xff]
    %v152 = vld [vmem:[%s3 + $0x40] sm:$0xff]
    %v153 = vld [vmem:[%s3 + $0x48] sm:$0xff]
    %v154 = vld [vmem:[%s3 + $0x50] sm:$0xff]
    %v155 = vld [vmem:[%s3 + $0x58] sm:$0xff]
    %v156 = vld [vmem:[%s3 + $0x60] sm:$0xff]
    %v157 = vld [vmem:[%s3 + $0x68] sm:$0xff]
    %v158 = vld [vmem:[%s3 + $0x70] sm:$0xff]
    %v159 = vld [vmem:[%s3 + $0x78] sm:$0xff]
    %v160 = vld [vmem:[%s3 + $0x80] sm:$0xff]
    %v161 = vld [vmem:[%s3 + $0x88] sm:$0xff]
    %v162 = vld [vmem:[%s3 + $0x90] sm:$0xff]
    %v163 = vld [vmem:[%s3 + $0x98] sm:$0xff]
    %v164 = vld [vmem:[%s3 + $0xa0] sm:$0xff]
    %v165 = vld [vmem:[%s3 + $0xa8] sm:$0xff]
    %v166 = vld [vmem:[%s3 + $0xb0] sm:$0xff]
    %v167 = vld [vmem:[%s3 + $0xb8] sm:$0xff]
    %v168 = vld [vmem:[%s3 + $0xc0] sm:$0xff]
    %v169 = vld [vmem:[%s3 + $0xc8] sm:$0xff]
    %v170 = vld [vmem:[%s3 + $0xd0] sm:$0xff]
    %v171 = vld [vmem:[%s3 + $0xd8] sm:$0xff]
    %v172 = vld [vmem:[%s3 + $0xe0] sm:$0xff]
    %v173 = vld [vmem:[%s3 + $0xe8] sm:$0xff]
    %v174 = vld [vmem:[%s3 + $0xf0] sm:$0xff]
    %v175 = vld [vmem:[%s3 + $0xf8] sm:$0xff]
    %v176 = vld [vmem:[%s3 + $0x100] sm:$0xff]
    %v177 = vld [vmem:[%s3 + $0x108] sm:$0xff]
    %v178 = vld [vmem:[%s3 + $0x110] sm:$0xff]
    %v179 = vld [vmem:[%s3 + $0x118] sm:$0xff]
    %v180 = vld [vmem:[%s3 + $0x120] sm:$0xff]
    %v181 = vld [vmem:[%s3 + $0x128] sm:$0xff]
    %v182 = vld [vmem:[%s3 + $0x130] sm:$0xff]
    %v183 = vld [vmem:[%s3 + $0x138] sm:$0xff]
    %v184 = vld [vmem:[%s3 + $0x140] sm:$0xff]
    %v185 = vld [vmem:[%s3 + $0x148] sm:$0xff]
    %v186 = vld [vmem:[%s3 + $0x150] sm:$0xff]
    %v187 = vld [vmem:[%s3 + $0x158] sm:$0xff]
    %v188 = vld [vmem:[%s3 + $0x160] sm:$0xff]
    %v189 = vld [vmem:[%s3 + $0x168] sm:$0xff]
    %v190 = vld [vmem:[%s3 + $0x170] sm:$0xff]
    %v191 = vld [vmem:[%s3 + $0x178] sm:$0xff]
    %v192 = vld [vmem:[%s3 + $0x180] sm:$0xff]
    %v193 = vld [vmem:[%s3 + $0x188] sm:$0xff]
    %v194 = vld [vmem:[%s3 + $0x190] sm:$0xff]
    %v195 = vld [vmem:[%s3 + $0x198] sm:$0xff]
    %v196 = vld [vmem:[%s3 + $0x1a0] sm:$0xff]
    %v197 = vld [vmem:[%s3 + $0x1a8] sm:$0xff]
    %v198 = vld [vmem:[%s3 + $0x1b0] sm:$0xff]
    %v199 = vld [vmem:[%s3 + $0x1b8] sm:$0xff]
    %v200 = vld [vmem:[%s3 + $0x1c0] sm:$0xff]
    %v201 = vld [vmem:[%s3 + $0x1c8] sm:$0xff]
    %v202 = vld [vmem:[%s3 + $0x1d0] sm:$0xff]
    %v203 = vld [vmem:[%s3 + $0x1d8] sm:$0xff]
    %v204 = vld [vmem:[%s3 + $0x1e0] sm:$0xff]
    %v205 = vld [vmem:[%s3 + $0x1e8] sm:$0xff]
    %v206 = vld [vmem:[%s3 + $0x1f0] sm:$0xff]
    %v207 = vld [vmem:[%s3 + $0x1f8] sm:$0xff]
    %v208 = vld [vmem:[%s4] sm:$0x3]
    %v210 = vlaneseq
    %v211 = vshrl.u32 %v210, 7
    %v212 = vsub.s32 0, %v211
    %v213 = vrot.slane %v208, %v212
    %v214 = vlaneseq
    %v215 = vshrl.u32 %v214, 7
    %v216 = vsub.s32 1, %v215
    %v217 = vrot.slane %v208, %v216
    %220 = vmatprep.subr.mxu0 %v145
    %221 = vmatpush1.msra.mxu0 %v144
    %222 = vmatprep.subr.mxu0 %v147
    %223 = vmatpush1.msra.mxu0 %v146
    %224 = vmatprep.subr.mxu0 %v149
    %225 = vmatpush1.msra.mxu0 %v148
    %226 = vmatprep.subr.mxu0 %v151
    %227 = vmatpush1.msra.mxu0 %v150
    %228 = vmatprep.subr.mxu0 %v153
    %229 = vmatpush1.msra.mxu0 %v152
    %230 = vmatprep.subr.mxu0 %v155
    %231 = vmatpush1.msra.mxu0 %v154
    %232 = vmatprep.subr.mxu0 %v157
    %233 = vmatpush1.msra.mxu0 %v156
    %234 = vmatprep.subr.mxu0 %v159
    %235 = vmatpush1.msra.mxu0 %v158
    %236 = vmatprep.subr.mxu0 %v161
    %237 = vmatpush1.msra.mxu0 %v160
    %238 = vmatprep.subr.mxu0 %v163
    %239 = vmatpush1.msra.mxu0 %v162
    %240 = vmatprep.subr.mxu0 %v165
    %241 = vmatpush1.msra.mxu0 %v164
    %242 = vmatprep.subr.mxu0 %v167
    %243 = vmatpush1.msra.mxu0 %v166
    %244 = vmatprep.subr.mxu0 %v169
    %245 = vmatpush1.msra.mxu0 %v168
    %246 = vmatprep.subr.mxu0 %v171
    %247 = vmatpush1.msra.mxu0 %v170
    %248 = vmatprep.subr.mxu0 %v173
    %249 = vmatpush1.msra.mxu0 %v172
    %250 = vmatprep.subr.mxu0 %v175
    %251 = vmatpush1.msra.mxu0 %v174
    %252 = vmatprep.subr.mxu0 %v177
    %253 = vmatpush1.msra.mxu0 %v176
    %254 = vmatprep.subr.mxu0 %v179
    %255 = vmatpush1.msra.mxu0 %v178
    %256 = vmatprep.subr.mxu0 %v181
    %257 = vmatpush1.msra.mxu0 %v180
    %258 = vmatprep.subr.mxu0 %v183
    %259 = vmatpush1.msra.mxu0 %v182
    %260 = vmatprep.subr.mxu0 %v185
    %261 = vmatpush1.msra.mxu0 %v184
    %262 = vmatprep.subr.mxu0 %v187
    %263 = vmatpush1.msra.mxu0 %v186
    %264 = vmatprep.subr.mxu0 %v189
    %265 = vmatpush1.msra.mxu0 %v188
    %266 = vmatprep.subr.mxu0 %v191
    %267 = vmatpush1.msra.mxu0 %v190
    %268 = vmatprep.subr.mxu0 %v193
    %269 = vmatpush1.msra.mxu0 %v192
    %270 = vmatprep.subr.mxu0 %v195
    %271 = vmatpush1.msra.mxu0 %v194
    %272 = vmatprep.subr.mxu0 %v197
    %273 = vmatpush1.msra.mxu0 %v196
    %274 = vmatprep.subr.mxu0 %v199
    %275 = vmatpush1.msra.mxu0 %v198
    %276 = vmatprep.subr.mxu0 %v201
    %277 = vmatpush1.msra.mxu0 %v200
    %278 = vmatprep.subr.mxu0 %v203
    %279 = vmatpush1.msra.mxu0 %v202
    %280 = vmatprep.subr.mxu0 %v205
    %281 = vmatpush1.msra.mxu0 %v204
    %282 = vmatprep.subr.mxu0 %v207
    %283 = vmatpush1.msra.mxu0 %v206
    %284 = vmatprep.mubr.f32.mxu0 %v131
    %285 = vmatmul.mubr.f32.gmra.mrb[0].mxu0 %v130
    %v286 = vpop.f32.mrb[0].mxu0
    %v287 = vadd.f32 %v213, %v286
    %v288 = vpop.f32.mrb[0].mxu0
    %v289 = vadd.f32 %v217, %v288
    %290 = vdwg.mxu0
    %v291 = vmax.f32 %v287, 0.0
    %v292 = vmax.f32 %v289, 0.0
    %v295 = vcombine.low %v291, %v292
    %v297 = vunpack.c.l.s4 1983009808
    %v298 = vunpack.c.0.s8 %v297
    %v299 = vlaneseq
    %v300 = vshrl.u32 %v299, 7
    %v301 = vsub.s32 %v298, %v300
    %v302 = vrot.slane %v295, %v301
    %304 = vst [vmem:[#allocation4] sm:$0xf] %v302
    %v305 = vld [vmem:[%s5] sm:$0xff]
    %v306 = vld [vmem:[%s5 + $0x8] sm:$0xff]
    %v307 = vld [vmem:[%s5 + $0x10] sm:$0xff]
    %v308 = vld [vmem:[%s5 + $0x18] sm:$0xff]
    %v309 = vld [vmem:[%s5 + $0x20] sm:$0xff]
    %v310 = vld [vmem:[%s5 + $0x28] sm:$0xff]
    %v311 = vld [vmem:[%s5 + $0x30] sm:$0xff]
    %v312 = vld [vmem:[%s5 + $0x38] sm:$0xff]
    %v313 = vld [vmem:[%s5 + $0x40] sm:$0xff]
    %v314 = vld [vmem:[%s5 + $0x48] sm:$0xff]
    %v315 = vld [vmem:[%s5 + $0x50] sm:$0xff]
    %v316 = vld [vmem:[%s5 + $0x58] sm:$0xff]
    %v317 = vld [vmem:[%s5 + $0x60] sm:$0xff]
    %v318 = vld [vmem:[%s5 + $0x68] sm:$0xff]
    %v319 = vld [vmem:[%s5 + $0x70] sm:$0xff]
    %v320 = vld [vmem:[%s5 + $0x78] sm:$0xff]
    %v321 = vld [vmem:[%s5 + $0x80] sm:$0xff]
    %v322 = vld [vmem:[%s5 + $0x88] sm:$0xff]
    %v323 = vld [vmem:[%s5 + $0x90] sm:$0xff]
    %v324 = vld [vmem:[%s5 + $0x98] sm:$0xff]
    %v325 = vld [vmem:[%s5 + $0xa0] sm:$0xff]
    %v326 = vld [vmem:[%s5 + $0xa8] sm:$0xff]
    %v327 = vld [vmem:[%s5 + $0xb0] sm:$0xff]
    %v328 = vld [vmem:[%s5 + $0xb8] sm:$0xff]
    %v329 = vld [vmem:[%s5 + $0xc0] sm:$0xff]
    %v330 = vld [vmem:[%s5 + $0xc8] sm:$0xff]
    %v331 = vld [vmem:[%s5 + $0xd0] sm:$0xff]
    %v332 = vld [vmem:[%s5 + $0xd8] sm:$0xff]
    %v333 = vld [vmem:[%s5 + $0xe0] sm:$0xff]
    %v334 = vld [vmem:[%s5 + $0xe8] sm:$0xff]
    %v335 = vld [vmem:[%s5 + $0xf0] sm:$0xff]
    %v336 = vld [vmem:[%s5 + $0xf8] sm:$0xff]
    %v337 = vld [vmem:[%s5 + $0x100] sm:$0xff]
    %v338 = vld [vmem:[%s5 + $0x108] sm:$0xff]
    %v339 = vld [vmem:[%s5 + $0x110] sm:$0xff]
    %v340 = vld [vmem:[%s5 + $0x118] sm:$0xff]
    %v341 = vld [vmem:[%s5 + $0x120] sm:$0xff]
    %v342 = vld [vmem:[%s5 + $0x128] sm:$0xff]
    %v343 = vld [vmem:[%s5 + $0x130] sm:$0xff]
    %v344 = vld [vmem:[%s5 + $0x138] sm:$0xff]
    %v345 = vld [vmem:[%s5 + $0x140] sm:$0xff]
    %v346 = vld [vmem:[%s5 + $0x148] sm:$0xff]
    %v347 = vld [vmem:[%s5 + $0x150] sm:$0xff]
    %v348 = vld [vmem:[%s5 + $0x158] sm:$0xff]
    %v349 = vld [vmem:[%s5 + $0x160] sm:$0xff]
    %v350 = vld [vmem:[%s5 + $0x168] sm:$0xff]
    %v351 = vld [vmem:[%s5 + $0x170] sm:$0xff]
    %v352 = vld [vmem:[%s5 + $0x178] sm:$0xff]
    %v353 = vld [vmem:[%s5 + $0x180] sm:$0xff]
    %v354 = vld [vmem:[%s5 + $0x188] sm:$0xff]
    %v355 = vld [vmem:[%s5 + $0x190] sm:$0xff]
    %v356 = vld [vmem:[%s5 + $0x198] sm:$0xff]
    %v357 = vld [vmem:[%s5 + $0x1a0] sm:$0xff]
    %v358 = vld [vmem:[%s5 + $0x1a8] sm:$0xff]
    %v359 = vld [vmem:[%s5 + $0x1b0] sm:$0xff]
    %v360 = vld [vmem:[%s5 + $0x1b8] sm:$0xff]
    %v361 = vld [vmem:[%s5 + $0x1c0] sm:$0xff]
    %v362 = vld [vmem:[%s5 + $0x1c8] sm:$0xff]
    %v363 = vld [vmem:[%s5 + $0x1d0] sm:$0xff]
    %v364 = vld [vmem:[%s5 + $0x1d8] sm:$0xff]
    %v365 = vld [vmem:[%s5 + $0x1e0] sm:$0xff]
    %v366 = vld [vmem:[%s5 + $0x1e8] sm:$0xff]
    %v367 = vld [vmem:[%s5 + $0x1f0] sm:$0xff]
    %v368 = vld [vmem:[%s5 + $0x1f8] sm:$0xff]
    %v369 = vld [vmem:[%s5 + $0x200] sm:$0xff]
    %v370 = vld [vmem:[%s5 + $0x208] sm:$0xff]
    %v371 = vld [vmem:[%s5 + $0x210] sm:$0xff]
    %v372 = vld [vmem:[%s5 + $0x218] sm:$0xff]
    %v373 = vld [vmem:[%s5 + $0x220] sm:$0xff]
    %v374 = vld [vmem:[%s5 + $0x228] sm:$0xff]
    %v375 = vld [vmem:[%s5 + $0x230] sm:$0xff]
    %v376 = vld [vmem:[%s5 + $0x238] sm:$0xff]
    %v377 = vld [vmem:[%s5 + $0x240] sm:$0xff]
    %v378 = vld [vmem:[%s5 + $0x248] sm:$0xff]
    %v379 = vld [vmem:[%s5 + $0x250] sm:$0xff]
    %v380 = vld [vmem:[%s5 + $0x258] sm:$0xff]
    %v381 = vld [vmem:[%s5 + $0x260] sm:$0xff]
    %v382 = vld [vmem:[%s5 + $0x268] sm:$0xff]
    %v383 = vld [vmem:[%s5 + $0x270] sm:$0xff]
    %v384 = vld [vmem:[%s5 + $0x278] sm:$0xff]
    %v385 = vld [vmem:[%s5 + $0x280] sm:$0xff]
    %v386 = vld [vmem:[%s5 + $0x288] sm:$0xff]
    %v387 = vld [vmem:[%s5 + $0x290] sm:$0xff]
    %v388 = vld [vmem:[%s5 + $0x298] sm:$0xff]
    %v389 = vld [vmem:[%s5 + $0x2a0] sm:$0xff]
    %v390 = vld [vmem:[%s5 + $0x2a8] sm:$0xff]
    %v391 = vld [vmem:[%s5 + $0x2b0] sm:$0xff]
    %v392 = vld [vmem:[%s5 + $0x2b8] sm:$0xff]
    %v393 = vld [vmem:[%s5 + $0x2c0] sm:$0xff]
    %v394 = vld [vmem:[%s5 + $0x2c8] sm:$0xff]
    %v395 = vld [vmem:[%s5 + $0x2d0] sm:$0xff]
    %v396 = vld [vmem:[%s5 + $0x2d8] sm:$0xff]
    %v397 = vld [vmem:[%s5 + $0x2e0] sm:$0xff]
    %v398 = vld [vmem:[%s5 + $0x2e8] sm:$0xff]
    %v399 = vld [vmem:[%s5 + $0x2f0] sm:$0xff]
    %v400 = vld [vmem:[%s5 + $0x2f8] sm:$0xff]
    %v401 = vld [vmem:[%s5 + $0x300] sm:$0xff]
    %v402 = vld [vmem:[%s5 + $0x308] sm:$0xff]
    %v403 = vld [vmem:[%s5 + $0x310] sm:$0xff]
    %v404 = vld [vmem:[%s5 + $0x318] sm:$0xff]
    %v405 = vld [vmem:[%s5 + $0x320] sm:$0xff]
    %v406 = vld [vmem:[%s5 + $0x328] sm:$0xff]
    %v407 = vld [vmem:[%s5 + $0x330] sm:$0xff]
    %v408 = vld [vmem:[%s5 + $0x338] sm:$0xff]
    %v409 = vld [vmem:[%s5 + $0x340] sm:$0xff]
    %v410 = vld [vmem:[%s5 + $0x348] sm:$0xff]
    %v411 = vld [vmem:[%s5 + $0x350] sm:$0xff]
    %v412 = vld [vmem:[%s5 + $0x358] sm:$0xff]
    %v413 = vld [vmem:[%s5 + $0x360] sm:$0xff]
    %v414 = vld [vmem:[%s5 + $0x368] sm:$0xff]
    %v415 = vld [vmem:[%s5 + $0x370] sm:$0xff]
    %v416 = vld [vmem:[%s5 + $0x378] sm:$0xff]
    %v417 = vld [vmem:[%s5 + $0x380] sm:$0xff]
    %v418 = vld [vmem:[%s5 + $0x388] sm:$0xff]
    %v419 = vld [vmem:[%s5 + $0x390] sm:$0xff]
    %v420 = vld [vmem:[%s5 + $0x398] sm:$0xff]
    %v421 = vld [vmem:[%s5 + $0x3a0] sm:$0xff]
    %v422 = vld [vmem:[%s5 + $0x3a8] sm:$0xff]
    %v423 = vld [vmem:[%s5 + $0x3b0] sm:$0xff]
    %v424 = vld [vmem:[%s5 + $0x3b8] sm:$0xff]
    %v425 = vld [vmem:[%s5 + $0x3c0] sm:$0xff]
    %v426 = vld [vmem:[%s5 + $0x3c8] sm:$0xff]
    %v427 = vld [vmem:[%s5 + $0x3d0] sm:$0xff]
    %v428 = vld [vmem:[%s5 + $0x3d8] sm:$0xff]
    %v429 = vld [vmem:[%s5 + $0x3e0] sm:$0xff]
    %v430 = vld [vmem:[%s5 + $0x3e8] sm:$0xff]
    %v431 = vld [vmem:[%s5 + $0x3f0] sm:$0xff]
    %v432 = vld [vmem:[%s5 + $0x3f8] sm:$0xff]
    %v433 = vld [vmem:[%s6] sm:$0xf]
    %v435 = vlaneseq
    %v436 = vshrl.u32 %v435, 7
    %v437 = vsub.s32 0, %v436
    %v438 = vrot.slane %v433, %v437
    %v439 = vlaneseq
    %v440 = vshrl.u32 %v439, 7
    %v441 = vsub.s32 1, %v440
    %v442 = vrot.slane %v433, %v441
    %v443 = vlaneseq
    %v444 = vshrl.u32 %v443, 7
    %v445 = vsub.s32 2, %v444
    %v446 = vrot.slane %v433, %v445
    %v447 = vlaneseq
    %v448 = vshrl.u32 %v447, 7
    %v449 = vsub.s32 3, %v448
    %v450 = vrot.slane %v433, %v449
    %455 = vmatprep.subr.mxu0 %v306
    %456 = vmatpush1.msra.mxu0 %v305
    %457 = vmatprep.subr.mxu0 %v310
    %458 = vmatpush1.msra.mxu0 %v309
    %459 = vmatprep.subr.mxu0 %v314
    %460 = vmatpush1.msra.mxu0 %v313
    %461 = vmatprep.subr.mxu0 %v318
    %462 = vmatpush1.msra.mxu0 %v317
    %463 = vmatprep.subr.mxu0 %v322
    %464 = vmatpush1.msra.mxu0 %v321
    %465 = vmatprep.subr.mxu0 %v326
    %466 = vmatpush1.msra.mxu0 %v325
    %467 = vmatprep.subr.mxu0 %v330
    %468 = vmatpush1.msra.mxu0 %v329
    %469 = vmatprep.subr.mxu0 %v334
    %470 = vmatpush1.msra.mxu0 %v333
    %471 = vmatprep.subr.mxu0 %v338
    %472 = vmatpush1.msra.mxu0 %v337
    %473 = vmatprep.subr.mxu0 %v342
    %474 = vmatpush1.msra.mxu0 %v341
    %475 = vmatprep.subr.mxu0 %v346
    %476 = vmatpush1.msra.mxu0 %v345
    %477 = vmatprep.subr.mxu0 %v350
    %478 = vmatpush1.msra.mxu0 %v349
    %479 = vmatprep.subr.mxu0 %v354
    %480 = vmatpush1.msra.mxu0 %v353
    %481 = vmatprep.subr.mxu0 %v358
    %482 = vmatpush1.msra.mxu0 %v357
    %483 = vmatprep.subr.mxu0 %v362
    %484 = vmatpush1.msra.mxu0 %v361
    %485 = vmatprep.subr.mxu0 %v366
    %486 = vmatpush1.msra.mxu0 %v365
    %487 = vmatprep.subr.mxu0 %v370
    %488 = vmatpush1.msra.mxu0 %v369
    %489 = vmatprep.subr.mxu0 %v374
    %490 = vmatpush1.msra.mxu0 %v373
    %491 = vmatprep.subr.mxu0 %v378
    %492 = vmatpush1.msra.mxu0 %v377
    %493 = vmatprep.subr.mxu0 %v382
    %494 = vmatpush1.msra.mxu0 %v381
    %495 = vmatprep.subr.mxu0 %v386
    %496 = vmatpush1.msra.mxu0 %v385
    %497 = vmatprep.subr.mxu0 %v390
    %498 = vmatpush1.msra.mxu0 %v389
    %499 = vmatprep.subr.mxu0 %v394
    %500 = vmatpush1.msra.mxu0 %v393
    %501 = vmatprep.subr.mxu0 %v398
    %502 = vmatpush1.msra.mxu0 %v397
    %503 = vmatprep.subr.mxu0 %v402
    %504 = vmatpush1.msra.mxu0 %v401
    %505 = vmatprep.subr.mxu0 %v406
    %506 = vmatpush1.msra.mxu0 %v405
    %507 = vmatprep.subr.mxu0 %v410
    %508 = vmatpush1.msra.mxu0 %v409
    %509 = vmatprep.subr.mxu0 %v414
    %510 = vmatpush1.msra.mxu0 %v413
    %511 = vmatprep.subr.mxu0 %v418
    %512 = vmatpush1.msra.mxu0 %v417
    %513 = vmatprep.subr.mxu0 %v422
    %514 = vmatpush1.msra.mxu0 %v421
    %515 = vmatprep.subr.mxu0 %v426
    %516 = vmatpush1.msra.mxu0 %v425
    %517 = vmatprep.subr.mxu0 %v430
    %518 = vmatpush1.msra.mxu0 %v429
    %519 = vmatprep.mubr.f32.mxu0 %v292
    %520 = vmatmul.mubr.f32.gmra.mrb[0].mxu0 %v291
    %v521 = vpop.f32.mrb[0].mxu0
    %v522 = vadd.f32 %v438, %v521
    %v523 = vpop.f32.mrb[0].mxu0
    %v524 = vadd.f32 %v442, %v523
    %525 = vdwg.mxu0
    %526 = vmatprep.subr.mxu0 %v308
    %527 = vmatpush1.msra.mxu0 %v307
    %528 = vmatprep.subr.mxu0 %v312
    %529 = vmatpush1.msra.mxu0 %v311
    %530 = vmatprep.subr.mxu0 %v316
    %531 = vmatpush1.msra.mxu0 %v315
    %532 = vmatprep.subr.mxu0 %v320
    %533 = vmatpush1.msra.mxu0 %v319
    %534 = vmatprep.subr.mxu0 %v324
    %535 = vmatpush1.msra.mxu0 %v323
    %536 = vmatprep.subr.mxu0 %v328
    %537 = vmatpush1.msra.mxu0 %v327
    %538 = vmatprep.subr.mxu0 %v332
    %539 = vmatpush1.msra.mxu0 %v331
    %540 = vmatprep.subr.mxu0 %v336
    %541 = vmatpush1.msra.mxu0 %v335
    %542 = vmatprep.subr.mxu0 %v340
    %543 = vmatpush1.msra.mxu0 %v339
    %544 = vmatprep.subr.mxu0 %v344
    %545 = vmatpush1.msra.mxu0 %v343
    %546 = vmatprep.subr.mxu0 %v348
    %547 = vmatpush1.msra.mxu0 %v347
    %548 = vmatprep.subr.mxu0 %v352
    %549 = vmatpush1.msra.mxu0 %v351
    %550 = vmatprep.subr.mxu0 %v356
    %551 = vmatpush1.msra.mxu0 %v355
    %552 = vmatprep.subr.mxu0 %v360
    %553 = vmatpush1.msra.mxu0 %v359
    %554 = vmatprep.subr.mxu0 %v364
    %555 = vmatpush1.msra.mxu0 %v363
    %556 = vmatprep.subr.mxu0 %v368
    %557 = vmatpush1.msra.mxu0 %v367
    %558 = vmatprep.subr.mxu0 %v372
    %559 = vmatpush1.msra.mxu0 %v371
    %560 = vmatprep.subr.mxu0 %v376
    %561 = vmatpush1.msra.mxu0 %v375
    %562 = vmatprep.subr.mxu0 %v380
    %563 = vmatpush1.msra.mxu0 %v379
    %564 = vmatprep.subr.mxu0 %v384
    %565 = vmatpush1.msra.mxu0 %v383
    %566 = vmatprep.subr.mxu0 %v388
    %567 = vmatpush1.msra.mxu0 %v387
    %568 = vmatprep.subr.mxu0 %v392
    %569 = vmatpush1.msra.mxu0 %v391
    %570 = vmatprep.subr.mxu0 %v396
    %571 = vmatpush1.msra.mxu0 %v395
    %572 = vmatprep.subr.mxu0 %v400
    %573 = vmatpush1.msra.mxu0 %v399
    %574 = vmatprep.subr.mxu0 %v404
    %575 = vmatpush1.msra.mxu0 %v403
    %576 = vmatprep.subr.mxu0 %v408
    %577 = vmatpush1.msra.mxu0 %v407
    %578 = vmatprep.subr.mxu0 %v412
    %579 = vmatpush1.msra.mxu0 %v411
    %580 = vmatprep.subr.mxu0 %v416
    %581 = vmatpush1.msra.mxu0 %v415
    %582 = vmatprep.subr.mxu0 %v420
    %583 = vmatpush1.msra.mxu0 %v419
    %584 = vmatprep.subr.mxu0 %v424
    %585 = vmatpush1.msra.mxu0 %v423
    %586 = vmatprep.subr.mxu0 %v428
    %587 = vmatpush1.msra.mxu0 %v427
    %588 = vmatprep.subr.mxu0 %v432
    %589 = vmatpush1.msra.mxu0 %v431
    %590 = vmatprep.mubr.f32.mxu0 %v292
    %591 = vmatmul.mubr.f32.gmra.mrb[0].mxu0 %v291
    %v592 = vpop.f32.mrb[0].mxu0
    %v593 = vadd.f32 %v446, %v592
    %v594 = vpop.f32.mrb[0].mxu0
    %v595 = vadd.f32 %v450, %v594
    %596 = vdwg.mxu0
    %v597 = vmax.f32 %v522, 0.0
    %v598 = vmax.f32 %v524, 0.0
    %v599 = vmax.f32 %v593, 0.0
    %v600 = vmax.f32 %v595, 0.0
    %v605 = vcombine.low %v597, %v598
    %v606 = vcombine.low %v599, %v600
    %v608 = vunpack.c.l.s4 1983009808
    %v609 = vunpack.c.0.s8 %v608
    %v610 = vlaneseq
    %v611 = vshrl.u32 %v610, 7
    %v612 = vsub.s32 %v609, %v611
    %v613 = vrot.slane %v605, %v612
    %v615 = vunpack.c.l.s4 1983009808
    %v616 = vunpack.c.0.s8 %v615
    %v617 = vlaneseq
    %v618 = vshrl.u32 %v617, 7
    %v619 = vsub.s32 %v616, %v618
    %v620 = vrot.slane %v606, %v619
    %v621 = vcombine.low %v613, %v620
    %623 = vst [vmem:[%s9] sm:$0xff] %v621
    // Predicated region
    $region30: #{decoder_burgess_forward.4} parent=1 // pred_check
      _
    $region31: #{decoder_burgess_forward.4} parent=1 // pred_check_branch
      %625 = sbr.rel (0) target = $region33
    $region32: #{decoder_burgess_forward.4} parent=1 // pred_region
      %s627 = ssub.s32 64, 64
      %628 = vsyncadd [#allocation3], %s627
      %s630 = sshll.u32 [#allocation2], 4
      %s631 = int_to_ptr.vmem [resolvable:$true] %s630
      %633 = dma.vmem_to_hbm [thread:$0]  %s631, 64, %s7, [#allocation3]
    $region33: #{decoder_burgess_forward.4} parent=1 // pred_fallthru
      _
    // Predicated region
    $region34: #{decoder_burgess_forward.4} parent=1 // pred_check
      _
    $region35: #{decoder_burgess_forward.4} parent=1 // pred_check_branch
      %635 = sbr.rel (0) target = $region37
    $region36: #{decoder_burgess_forward.4} parent=1 // pred_region
      %s637 = ssub.s32 64, 64
      %638 = vsyncadd [#allocation5], %s637
      %s640 = sshll.u32 [#allocation4], 4
      %s641 = int_to_ptr.vmem [resolvable:$true] %s640
      %643 = dma.vmem_to_hbm [thread:$0]  %s641, 64, %s8, [#allocation5]
    $region37: #{decoder_burgess_forward.4} parent=1 // pred_fallthru
      _
    // Predicated region
    $region38: #{decoder_burgess_forward.4} parent=1 // pred_check
      _
    $region39: #{decoder_burgess_forward.4} parent=1 // pred_check_branch
      %645 = sbr.rel (0) target = $region41
    $region40: #{decoder_burgess_forward.4} parent=1 // pred_region
      _
    $region41: #{decoder_burgess_forward.4} parent=1 // pred_fallthru
      _
    // Predicated region
    $region42: #{decoder_burgess_forward.4} parent=1 // pred_check
      _
    $region43: #{decoder_burgess_forward.4} parent=1 // pred_check_branch
      %647 = sbr.rel (0) target = $region45
    $region44: #{decoder_burgess_forward.4} parent=1 // pred_region
      %648 = dma.done [#allocation3], 64
    $region45: #{decoder_burgess_forward.4} parent=1 // pred_fallthru
      _
    // Predicated region
    $region46: #{decoder_burgess_forward.4} parent=1 // pred_check
      _
    $region47: #{decoder_burgess_forward.4} parent=1 // pred_check_branch
      %650 = sbr.rel (0) target = $region49
    $region48: #{decoder_burgess_forward.4} parent=1 // pred_region
      %651 = dma.done [#allocation5], 64
    $region49: #{decoder_burgess_forward.4} parent=1 // pred_fallthru
      _
    // Predicated region
    $region50: #{decoder_burgess_forward.4} parent=1 // pred_check
      _
    $region51: #{decoder_burgess_forward.4} parent=1 // pred_check_branch
      %653 = sbr.rel (0) target = $region53
    $region52: #{decoder_burgess_forward.4} parent=1 // pred_region
      _
    $region53: #{decoder_burgess_forward.4} parent=1 // pred_fallthru
      _
    %654 = vsyncpa [#allocation3], 1
    %655 = vsyncpa [#allocation5], 1

// kernel: decoder_burgess_forward.5
$region0: #{decoder_burgess_forward.5}
  #allocation0 [shape = 'u32[]', space=smem, size = 0x4, offset = 0x4, fixed_abs, tag = 'smem constant byte address 0x4 - core index']
  #allocation1 [shape = 'u32[144,128]{1,0:T(1,128)}', space=vmem, size = 0x12000, scoped, tag = 'internal scratch']
  %s0 = inlined_call_operand.vmem [shape: f32[2,9,32,16], index: 0, kind: input, shape index: {}]
  %s1 = inlined_call_operand.vmem [shape: f32[16,32,32], index: 1, kind: input, shape index: {}]
  %s2 = inlined_call_operand.vmem [shape: f32[32,1], index: 2, kind: input, shape index: {}]
  %s3 = inlined_call_operand.vmem [shape: f32[2,4,32,16], index: 3, kind: output, shape index: {}]
  %s4 = sld [smem:[#allocation0]]
  $region45: #{decoder_burgess_forward.5} parent=0
    _
  %s6 = ssub.s32 1, %s4
  %s7 = scalar_select 0, %s6, %s4
  loop: start=0, step=1, limit=4
  $region2: #{decoder_burgess_forward.5} parent=0 // loop_pre_header
    _
  $region3: #{decoder_burgess_forward.5} parent=0 // loop_header
    %s9 = sphi 0, %s13
    %p10 = scmp.ge.s32.totalorder %s9, 4
    %s19 = sphi 0, %s21
    %s22 = sphi 0, %s19
    %s23 = sphi 0, %s22
    %s39 = sphi 0, %s23
    %s43 = sphi 0, %s43
    %s45 = sphi 0, %s43
    %s46 = sphi 0, %s45
    %s60 = sphi 0, %s46
    %s64 = sphi 0, %s64
    %s66 = sphi 0, %s64
    %s67 = sphi 0, %s66
    %s81 = sphi 0, %s67
    %s87 = sphi 0, %s89
    %s90 = sphi 0, %s87
    %s91 = sphi 0, %s90
    %s107 = sphi 0, %s91
  $region4: #{decoder_burgess_forward.5} parent=0 // loop_header_branch
    %12 = sbr.rel (%p10) target = $region8
  $region5: #{decoder_burgess_forward.5} parent=0 // loop_body
    %s14 = ssub.s32 %s9, 1
    %s15 = ssub.s32 %s9, 2
    %s16 = sadd.s32 %s9, 1
    %s17 = ssub.s32 %s9, %s16
    %p18 = scmp.eq.s32.totalorder %s17, 0
    %s20 = sadd.s32 %s19, 1
    %s21 = scalar_select %p18, %s19, %s20
    %p24 = pneg %p18
    %p25 = scmp.eq.s32.totalorder %s9, 1
    %p26 = por %p24, %p25
    %p27 = scmp.ne.s32.totalorder %s19, %s22
    %p28 = scmp.eq.s32.totalorder %s9, 0
    %p29 = por %p27, %p28
    %p30 = scmp.ne.s32.totalorder %s19, %s22
    %p31 = scmp.eq.s32.totalorder %s14, 1
    %p32 = por %p30, %p31
    %p33 = scmp.ne.s32.totalorder %s22, %s23
    %p34 = scmp.eq.s32.totalorder %s14, 0
    %p35 = por %p33, %p34
    %p36 = scmp.ne.s32.totalorder %s22, %s23
    %p37 = scmp.eq.s32.totalorder %s15, 1
    %p38 = por %p36, %p37
    %p40 = scmp.ne.s32.totalorder %s23, %s39
    %p41 = scmp.eq.s32.totalorder %s15, 0
    %p42 = por %p40, %p41
    %s44 = sadd.s32 %s43, 1
    %p47 = scmp.eq.s32.totalorder %s9, 1
    %p48 = scmp.ne.s32.totalorder %s43, %s45
    %p49 = scmp.eq.s32.totalorder %s9, 0
    %p50 = por %p48, %p49
    %p51 = scmp.ne.s32.totalorder %s43, %s45
    %p52 = scmp.eq.s32.totalorder %s14, 1
    %p53 = por %p51, %p52
    %p54 = scmp.ne.s32.totalorder %s45, %s46
    %p55 = scmp.eq.s32.totalorder %s14, 0
    %p56 = por %p54, %p55
    %p57 = scmp.ne.s32.totalorder %s45, %s46
    %p58 = scmp.eq.s32.totalorder %s15, 1
    %p59 = por %p57, %p58
    %p61 = scmp.ne.s32.totalorder %s46, %s60
    %p62 = scmp.eq.s32.totalorder %s15, 0
    %p63 = por %p61, %p62
    %s65 = sadd.s32 %s64, 1
    %p68 = scmp.eq.s32.totalorder %s9, 1
    %p69 = scmp.ne.s32.totalorder %s64, %s66
    %p70 = scmp.eq.s32.totalorder %s9, 0
    %p71 = por %p69, %p70
    %p72 = scmp.ne.s32.totalorder %s64, %s66
    %p73 = scmp.eq.s32.totalorder %s14, 1
    %p74 = por %p72, %p73
    %p75 = scmp.ne.s32.totalorder %s66, %s67
    %p76 = scmp.eq.s32.totalorder %s14, 0
    %p77 = por %p75, %p76
    %p78 = scmp.ne.s32.totalorder %s66, %s67
    %p79 = scmp.eq.s32.totalorder %s15, 1
    %p80 = por %p78, %p79
    %p82 = scmp.ne.s32.totalorder %s67, %s81
    %p83 = scmp.eq.s32.totalorder %s15, 0
    %p84 = por %p82, %p83
    %s85 = ssub.s32 %s9, %s16
    %p86 = scmp.eq.s32.totalorder %s85, 0
    %s88 = sadd.s32 %s87, 1
    %s89 = scalar_select %p86, %s87, %s88
    %p92 = pneg %p86
    %p93 = scmp.eq.s32.totalorder %s9, 1
    %p94 = por %p92, %p93
    %p95 = scmp.ne.s32.totalorder %s87, %s90
    %p96 = scmp.eq.s32.totalorder %s9, 0
    %p97 = por %p95, %p96
    %p98 = scmp.ne.s32.totalorder %s87, %s90
    %p99 = scmp.eq.s32.totalorder %s14, 1
    %p100 = por %p98, %p99
    %p101 = scmp.ne.s32.totalorder %s90, %s91
    %p102 = scmp.eq.s32.totalorder %s14, 0
    %p103 = por %p101, %p102
    %p104 = scmp.ne.s32.totalorder %s90, %s91
    %p105 = scmp.eq.s32.totalorder %s15, 1
    %p106 = por %p104, %p105
    %p108 = scmp.ne.s32.totalorder %s91, %s107
    %p109 = scmp.eq.s32.totalorder %s15, 0
    %p110 = por %p108, %p109
    %p111 = scmp.le.s32.totalorder 1, %s9
    %p112 = scmp.lt.s32.totalorder %s9, 3
    %p113 = pnand %p111, %p112
    %p114 = pneg %p113
    // Predicated region
    $region9: #{decoder_burgess_forward.5} parent=5 // pred_check
      _
    $region10: #{decoder_burgess_forward.5} parent=5 // pred_check_branch
      %116 = sbr.rel (%p113) target = $region12
    $region11: #{decoder_burgess_forward.5} parent=5 // pred_region
      %s117 = ssub.s32 %s9, 1
      // Predicated region
      $region13: #{decoder_burgess_forward.5} parent=11 // pred_check
        %p118 = pneg %p56
      $region14: #{decoder_burgess_forward.5} parent=11 // pred_check_branch
        %120 = sbr.rel (%p118) target = $region16
      $region15: #{decoder_burgess_forward.5} parent=11 // pred_region
        _
      $region16: #{decoder_burgess_forward.5} parent=11 // pred_fallthru
        _
      // Predicated region
      $region17: #{decoder_burgess_forward.5} parent=11 // pred_check
        %p121 = pneg %p77
      $region18: #{decoder_burgess_forward.5} parent=11 // pred_check_branch
        %123 = sbr.rel (%p121) target = $region20
      $region19: #{decoder_burgess_forward.5} parent=11 // pred_region
        _
      $region20: #{decoder_burgess_forward.5} parent=11 // pred_fallthru
        _
    $region12: #{decoder_burgess_forward.5} parent=5 // pred_fallthru
      _
    %p124 = scmp.lt.s32.totalorder %s9, 2
    // Predicated region
    $region21: #{decoder_burgess_forward.5} parent=5 // pred_check
      %p125 = pneg %p124
    $region22: #{decoder_burgess_forward.5} parent=5 // pred_check_branch
      %127 = sbr.rel (%p125) target = $region24
    $region23: #{decoder_burgess_forward.5} parent=5 // pred_region
      // Predicated region
      $region25: #{decoder_burgess_forward.5} parent=23 // pred_check
        %p128 = pneg %p29
      $region26: #{decoder_burgess_forward.5} parent=23 // pred_check_branch
        %130 = sbr.rel (%p128) target = $region28
      $region27: #{decoder_burgess_forward.5} parent=23 // pred_region
        %p131 = scmp.lt.s32.totalorder %s9, 1
        %s132 = scalar_select %p131, %s9, 1
        %s133 = smul.addr %s132, 36
        %s134 = smul.addr %s133, 8
        %s135 = scalar_lea.vmem %s0, %s134
      $region28: #{decoder_burgess_forward.5} parent=23 // pred_fallthru
        _
    $region24: #{decoder_burgess_forward.5} parent=5 // pred_fallthru
      _
    %p136 = scmp.le.s32.totalorder 1, %s9
    %p137 = scmp.lt.s32.totalorder %s9, 3
    %p138 = pnand %p136, %p137
    %p139 = pneg %p138
    // Predicated region
    $region29: #{decoder_burgess_forward.5} parent=5 // pred_check
      _
    $region30: #{decoder_burgess_forward.5} parent=5 // pred_check_branch
      %141 = sbr.rel (%p138) target = $region32
    $region31: #{decoder_burgess_forward.5} parent=5 // pred_region
      %s142 = ssub.s32 %s9, 1
      %p143 = scmp.lt.s32.totalorder %s14, 1
      %s144 = scalar_select %p143, %s14, 1
      %s145 = smul.addr %s144, 36
      %s146 = smul.addr %s145, 8
      %s147 = scalar_lea.vmem %s0, %s146
      %p148 = pneg %p35
      %p149 = pneg %p32
      %p150 = pneg %p56
      %p151 = pneg %p53
      %p152 = pneg %p77
      %p153 = pneg %p74
      %p154 = pneg %p103
      %p155 = pneg %p100
      %p156 = scmp.lt.s32.totalorder %s14, 1
      %s157 = scalar_select %p156, %s14, 1
      %s158 = smul.addr %s157, 16
      %s159 = smul.addr %s158, 8
      %s160 = scalar_lea.vmem %s3, %s159
      %p161 = scmp.lt.s32.totalorder %s14, 1
      %s162 = scalar_select %p161, %s14, 1
      %s163 = smul.addr %s162, 36
      %s164 = smul.addr %s163, 8
      %s165 = scalar_lea.vmem %s0, %s164
      %p166 = scmp.lt.s32.totalorder %s14, 1
      %s167 = scalar_select %p166, %s14, 1
      %s168 = smul.addr %s167, 16
      %s169 = smul.addr %s168, 8
      %s170 = scalar_lea.vmem %s3, %s169
      %v171 = vld [vmem:[%s1] sm:$0xff]
      %v172 = vld [vmem:[%s1 + $0x8] sm:$0xff]
      %v173 = vld [vmem:[%s1 + $0x10] sm:$0xff]
      %v174 = vld [vmem:[%s1 + $0x18] sm:$0xff]
      %s175 = scalar_lea.vmem %s165, 128
      %v176 = vld [vmem:[%s175] sm:$0xff]
      %v177 = vld [vmem:[%s175 + $0x8] sm:$0xff]
      %v178 = vld [vmem:[%s175 + $0x10] sm:$0xff]
      %v179 = vld [vmem:[%s175 + $0x18] sm:$0xff]
      %s180 = scalar_lea.vmem %s1, 32
      %v181 = vld [vmem:[%s180] sm:$0xff]
      %v182 = vld [vmem:[%s180 + $0x8] sm:$0xff]
      %v183 = vld [vmem:[%s180 + $0x10] sm:$0xff]
      %v184 = vld [vmem:[%s180 + $0x18] sm:$0xff]
      %s185 = scalar_lea.vmem %s165, 96
      %v186 = vld [vmem:[%s185] sm:$0xff]
      %v187 = vld [vmem:[%s185 + $0x8] sm:$0xff]
      %v188 = vld [vmem:[%s185 + $0x10] sm:$0xff]
      %v189 = vld [vmem:[%s185 + $0x18] sm:$0xff]
      %vm190 = vcmask 261120
      %v192 = vsel %vm190, %v181, 0
      %v195 = vsel %vm190, %v182, 0
      %v198 = vsel %vm190, %v183, 0
      %v201 = vsel %vm190, %v184, 0
      %203 = vmatprep.subr.mxu0 0.0
      %204 = vmatpush1.msra.mxu0 %v186
      %205 = vmatprep.subr.mxu0 0.0
      %206 = vmatpush1.msra.mxu0 %v187
      %207 = vmatprep.subr.mxu0 0.0
      %208 = vmatpush1.msra.mxu0 %v188
      %209 = vmatprep.subr.mxu0 0.0
      %210 = vmatpush1.msra.mxu0 %v189
      %211 = vmatprep.subr.mxu0 0.0
      %212 = vmatpush1.msra.mxu0 0.0
      %213 = vmatprep.subr.mxu0 0.0
      %214 = vmatpush1.msra.mxu0 0.0
      %215 = vmatprep.subr.mxu0 0.0
      %216 = vmatpush1.msra.mxu0 0.0
      %217 = vmatprep.subr.mxu0 0.0
      %218 = vmatpush1.msra.mxu0 0.0
      %219 = vmatprep.subr.mxu0 0.0
      %220 = vmatpush1.msra.mxu0 0.0
      %221 = vmatprep.subr.mxu0 0.0
      %222 = vmatpush1.msra.mxu0 0.0
      %223 = vmatprep.subr.mxu0 0.0
      %224 = vmatpush1.msra.mxu0 0.0
      %225 = vmatprep.subr.mxu0 0.0
      %226 = vmatpush1.msra.mxu0 0.0
      %227 = vmatprep.subr.mxu0 0.0
      %228 = vmatpush1.msra.mxu0 0.0
      %229 = vmatprep.subr.mxu0 0.0
      %230 = vmatpush1.msra.mxu0 0.0
      %231 = vmatprep.subr.mxu0 0.0
      %232 = vmatpush1.msra.mxu0 0.0
      %233 = vmatprep.subr.mxu0 0.0
      %234 = vmatpush1.msra.mxu0 0.0
      %235 = vmatprep.subr.mxu0 0.0
      %236 = vmatpush1.msra.mxu0 0.0
      %237 = vmatprep.subr.mxu0 0.0
      %238 = vmatpush1.msra.mxu0 0.0
      %239 = vmatprep.subr.mxu0 0.0
      %240 = vmatpush1.msra.mxu0 0.0
      %241 = vmatprep.subr.mxu0 0.0
      %242 = vmatpush1.msra.mxu0 0.0
      %243 = vmatprep.subr.mxu0 0.0
      %244 = vmatpush1.msra.mxu0 0.0
      %245 = vmatprep.subr.mxu0 0.0
      %246 = vmatpush1.msra.mxu0 0.0
      %247 = vmatprep.subr.mxu0 0.0
      %248 = vmatpush1.msra.mxu0 0.0
      %249 = vmatprep.subr.mxu0 0.0
      %250 = vmatpush1.msra.mxu0 0.0
      %251 = vmatprep.subr.mxu0 0.0
      %252 = vmatpush1.msra.mxu0 0.0
      %253 = vmatprep.subr.mxu0 0.0
      %254 = vmatpush1.msra.mxu0 0.0
      %255 = vmatprep.subr.mxu0 0.0
      %256 = vmatpush1.msra.mxu0 0.0
      %257 = vmatprep.subr.mxu0 0.0
      %258 = vmatpush1.msra.mxu0 0.0
      %259 = vmatprep.subr.mxu0 0.0
      %260 = vmatpush1.msra.mxu0 0.0
      %261 = vmatprep.subr.mxu0 0.0
      %262 = vmatpush1.msra.mxu0 0.0
      %263 = vmatprep.subr.mxu0 0.0
      %264 = vmatpush1.msra.mxu0 0.0
      %265 = vmatprep.subr.mxu0 0.0
      %266 = vmatpush1.msra.mxu0 0.0
      %267 = vmatprep.mubr.f32.mxu0 0.0
      %268 = vmatmul.mubr.f32.gmra.mrb[0].mxu0 %v192
      %v269 = vpop.f32.mrb[0].mxu0
      %v270 = vadd.f32 0.0, %v269
      %v271 = vpop.f32.mrb[0].mxu0
      %272 = vmatprep.mubr.f32.mxu0 0.0
      %273 = vmatmul.mubr.f32.gmra.mrb[0].mxu0 %v195
      %v274 = vpop.f32.mrb[0].mxu0
      %v275 = vadd.f32 0.0, %v274
      %v276 = vpop.f32.mrb[0].mxu0
      %277 = vmatprep.mubr.f32.mxu0 0.0
      %278 = vmatmul.mubr.f32.gmra.mrb[0].mxu0 %v198
      %v279 = vpop.f32.mrb[0].mxu0
      %v280 = vadd.f32 0.0, %v279
      %v281 = vpop.f32.mrb[0].mxu0
      %282 = vmatprep.mubr.f32.mxu0 0.0
      %283 = vmatmul.mubr.f32.gmra.mrb[0].mxu0 %v201
      %v284 = vpop.f32.mrb[0].mxu0
      %v285 = vadd.f32 0.0, %v284
      %v286 = vpop.f32.mrb[0].mxu0
      %287 = vdwg.mxu0
      %v289 = vsel %vm190, %v171, 0
      %v292 = vsel %vm190, %v172, 0
      %v295 = vsel %vm190, %v173, 0
      %v298 = vsel %vm190, %v174, 0
      %300 = vmatprep.subr.mxu0 0.0
      %301 = vmatpush1.msra.mxu0 %v176
      %302 = vmatprep.subr.mxu0 0.0
      %303 = vmatpush1.msra.mxu0 %v177
      %304 = vmatprep.subr.mxu0 0.0
      %305 = vmatpush1.msra.mxu0 %v178
      %306 = vmatprep.subr.mxu0 0.0
      %307 = vmatpush1.msra.mxu0 %v179
      %308 = vmatprep.subr.mxu0 0.0
      %309 = vmatpush1.msra.mxu0 0.0
      %310 = vmatprep.subr.mxu0 0.0
      %311 = vmatpush1.msra.mxu0 0.0
      %312 = vmatprep.subr.mxu0 0.0
      %313 = vmatpush1.msra.mxu0 0.0
      %314 = vmatprep.subr.mxu0 0.0
      %315 = vmatpush1.msra.mxu0 0.0
      %316 = vmatprep.subr.mxu0 0.0
      %317 = vmatpush1.msra.mxu0 0.0
      %318 = vmatprep.subr.mxu0 0.0
      %319 = vmatpush1.msra.mxu0 0.0
      %320 = vmatprep.subr.mxu0 0.0
      %321 = vmatpush1.msra.mxu0 0.0
      %322 = vmatprep.subr.mxu0 0.0
      %323 = vmatpush1.msra.mxu0 0.0
      %324 = vmatprep.subr.mxu0 0.0
      %325 = vmatpush1.msra.mxu0 0.0
      %326 = vmatprep.subr.mxu0 0.0
      %327 = vmatpush1.msra.mxu0 0.0
      %328 = vmatprep.subr.mxu0 0.0
      %329 = vmatpush1.msra.mxu0 0.0
      %330 = vmatprep.subr.mxu0 0.0
      %331 = vmatpush1.msra.mxu0 0.0
      %332 = vmatprep.subr.mxu0 0.0
      %333 = vmatpush1.msra.mxu0 0.0
      %334 = vmatprep.subr.mxu0 0.0
      %335 = vmatpush1.msra.mxu0 0.0
      %336 = vmatprep.subr.mxu0 0.0
      %337 = vmatpush1.msra.mxu0 0.0
      %338 = vmatprep.subr.mxu0 0.0
      %339 = vmatpush1.msra.mxu0 0.0
      %340 = vmatprep.subr.mxu0 0.0
      %341 = vmatpush1.msra.mxu0 0.0
      %342 = vmatprep.subr.mxu0 0.0
      %343 = vmatpush1.msra.mxu0 0.0
      %344 = vmatprep.subr.mxu0 0.0
      %345 = vmatpush1.msra.mxu0 0.0
      %346 = vmatprep.subr.mxu0 0.0
      %347 = vmatpush1.msra.mxu0 0.0
      %348 = vmatprep.subr.mxu0 0.0
      %349 = vmatpush1.msra.mxu0 0.0
      %350 = vmatprep.subr.mxu0 0.0
      %351 = vmatpush1.msra.mxu0 0.0
      %352 = vmatprep.subr.mxu0 0.0
      %353 = vmatpush1.msra.mxu0 0.0
      %354 = vmatprep.subr.mxu0 0.0
      %355 = vmatpush1.msra.mxu0 0.0
      %356 = vmatprep.subr.mxu0 0.0
      %357 = vmatpush1.msra.mxu0 0.0
      %358 = vmatprep.subr.mxu0 0.0
      %359 = vmatpush1.msra.mxu0 0.0
      %360 = vmatprep.subr.mxu0 0.0
      %361 = vmatpush1.msra.mxu0 0.0
      %362 = vmatprep.subr.mxu0 0.0
      %363 = vmatpush1.msra.mxu0 0.0
      %364 = vmatprep.mubr.f32.mxu0 0.0
      %365 = vmatmul.mubr.f32.gmra.mrb[0].mxu0 %v289
      %v366 = vpop.f32.mrb[0].mxu0
      %v367 = vadd.f32 %v270, %v366
      %v368 = vpop.f32.mrb[0].mxu0
      %369 = vmatprep.mubr.f32.mxu0 0.0
      %370 = vmatmul.mubr.f32.gmra.mrb[0].mxu0 %v292
      %v371 = vpop.f32.mrb[0].mxu0
      %v372 = vadd.f32 %v275, %v371
      %v373 = vpop.f32.mrb[0].mxu0
      %374 = vmatprep.mubr.f32.mxu0 0.0
      %375 = vmatmul.mubr.f32.gmra.mrb[0].mxu0 %v295
      %v376 = vpop.f32.mrb[0].mxu0
      %v377 = vadd.f32 %v280, %v376
      %v378 = vpop.f32.mrb[0].mxu0
      %379 = vmatprep.mubr.f32.mxu0 0.0
      %380 = vmatmul.mubr.f32.gmra.mrb[0].mxu0 %v298
      %v381 = vpop.f32.mrb[0].mxu0
      %v382 = vadd.f32 %v285, %v381
      %v383 = vpop.f32.mrb[0].mxu0
      %384 = vdwg.mxu0
      %s385 = scalar_lea.vmem %s1, 64
      %v386 = vld [vmem:[%s385] sm:$0xff]
      %v387 = vld [vmem:[%s385 + $0x8] sm:$0xff]
      %v388 = vld [vmem:[%s385 + $0x10] sm:$0xff]
      %v389 = vld [vmem:[%s385 + $0x18] sm:$0xff]
      %s390 = scalar_lea.vmem %s165, 32
      %v391 = vld [vmem:[%s390] sm:$0xff]
      %v392 = vld [vmem:[%s390 + $0x8] sm:$0xff]
      %v393 = vld [vmem:[%s390 + $0x10] sm:$0xff]
      %v394 = vld [vmem:[%s390 + $0x18] sm:$0xff]
      %v396 = vsel %vm190, %v386, 0
      %v399 = vsel %vm190, %v387, 0
      %v402 = vsel %vm190, %v388, 0
      %v405 = vsel %vm190, %v389, 0
      %407 = vmatprep.subr.mxu0 0.0
      %408 = vmatpush1.msra.mxu0 %v391
      %409 = vmatprep.subr.mxu0 0.0
      %410 = vmatpush1.msra.mxu0 %v392
      %411 = vmatprep.subr.mxu0 0.0
      %412 = vmatpush1.msra.mxu0 %v393
      %413 = vmatprep.subr.mxu0 0.0
      %414 = vmatpush1.msra.mxu0 %v394
      %415 = vmatprep.subr.mxu0 0.0
      %416 = vmatpush1.msra.mxu0 0.0
      %417 = vmatprep.subr.mxu0 0.0
      %418 = vmatpush1.msra.mxu0 0.0
      %419 = vmatprep.subr.mxu0 0.0
      %420 = vmatpush1.msra.mxu0 0.0
      %421 = vmatprep.subr.mxu0 0.0
      %422 = vmatpush1.msra.mxu0 0.0
      %423 = vmatprep.subr.mxu0 0.0
      %424 = vmatpush1.msra.mxu0 0.0
      %425 = vmatprep.subr.mxu0 0.0
      %426 = vmatpush1.msra.mxu0 0.0
      %427 = vmatprep.subr.mxu0 0.0
      %428 = vmatpush1.msra.mxu0 0.0
      %429 = vmatprep.subr.mxu0 0.0
      %430 = vmatpush1.msra.mxu0 0.0
      %431 = vmatprep.subr.mxu0 0.0
      %432 = vmatpush1.msra.mxu0 0.0
      %433 = vmatprep.subr.mxu0 0.0
      %434 = vmatpush1.msra.mxu0 0.0
      %435 = vmatprep.subr.mxu0 0.0
      %436 = vmatpush1.msra.mxu0 0.0
      %437 = vmatprep.subr.mxu0 0.0
      %438 = vmatpush1.msra.mxu0 0.0
      %439 = vmatprep.subr.mxu0 0.0
      %440 = vmatpush1.msra.mxu0 0.0
      %441 = vmatprep.subr.mxu0 0.0
      %442 = vmatpush1.msra.mxu0 0.0
      %443 = vmatprep.subr.mxu0 0.0
      %444 = vmatpush1.msra.mxu0 0.0
      %445 = vmatprep.subr.mxu0 0.0
      %446 = vmatpush1.msra.mxu0 0.0
      %447 = vmatprep.subr.mxu0 0.0
      %448 = vmatpush1.msra.mxu0 0.0
      %449 = vmatprep.subr.mxu0 0.0
      %450 = vmatpush1.msra.mxu0 0.0
      %451 = vmatprep.subr.mxu0 0.0
      %452 = vmatpush1.msra.mxu0 0.0
      %453 = vmatprep.subr.mxu0 0.0
      %454 = vmatpush1.msra.mxu0 0.0
      %455 = vmatprep.subr.mxu0 0.0
      %456 = vmatpush1.msra.mxu0 0.0
      %457 = vmatprep.subr.mxu0 0.0
      %458 = vmatpush1.msra.mxu0 0.0
      %459 = vmatprep.subr.mxu0 0.0
      %460 = vmatpush1.msra.mxu0 0.0
      %461 = vmatprep.subr.mxu0 0.0
      %462 = vmatpush1.msra.mxu0 0.0
      %463 = vmatprep.subr.mxu0 0.0
      %464 = vmatpush1.msra.mxu0 0.0
      %465 = vmatprep.subr.mxu0 0.0
      %466 = vmatpush1.msra.mxu0 0.0
      %467 = vmatprep.subr.mxu0 0.0
      %468 = vmatpush1.msra.mxu0 0.0
      %469 = vmatprep.subr.mxu0 0.0
      %470 = vmatpush1.msra.mxu0 0.0
      %471 = vmatprep.mubr.f32.mxu0 0.0
      %472 = vmatmul.mubr.f32.gmra.mrb[0].mxu0 %v396
      %v473 = vpop.f32.mrb[0].mxu0
      %v474 = vadd.f32 0.0, %v473
      %v475 = vpop.f32.mrb[0].mxu0
      %476 = vmatprep.mubr.f32.mxu0 0.0
      %477 = vmatmul.mubr.f32.gmra.mrb[0].mxu0 %v399
      %v478 = vpop.f32.mrb[0].mxu0
      %v479 = vadd.f32 0.0, %v478
      %v480 = vpop.f32.mrb[0].mxu0
      %481 = vmatprep.mubr.f32.mxu0 0.0
      %482 = vmatmul.mubr.f32.gmra.mrb[0].mxu0 %v402
      %v483 = vpop.f32.mrb[0].mxu0
      %v484 = vadd.f32 0.0, %v483
      %v485 = vpop.f32.mrb[0].mxu0
      %486 = vmatprep.mubr.f32.mxu0 0.0
      %487 = vmatmul.mubr.f32.gmra.mrb[0].mxu0 %v405
      %v488 = vpop.f32.mrb[0].mxu0
      %v489 = vadd.f32 0.0, %v488
      %v490 = vpop.f32.mrb[0].mxu0
      %491 = vdwg.mxu0
      %v492 = vadd.f32 %v367, %v474
      %v493 = vadd.f32 %v372, %v479
      %v494 = vadd.f32 %v377, %v484
      %v495 = vadd.f32 %v382, %v489
      %s496 = scalar_lea.vmem %s1, 96
      %v497 = vld [vmem:[%s496] sm:$0xff]
      %v498 = vld [vmem:[%s496 + $0x8] sm:$0xff]
      %v499 = vld [vmem:[%s496 + $0x10] sm:$0xff]
      %v500 = vld [vmem:[%s496 + $0x18] sm:$0xff]
      %v501 = vld [vmem:[%s165] sm:$0xff]
      %v502 = vld [vmem:[%s165 + $0x8] sm:$0xff]
      %v503 = vld [vmem:[%s165 + $0x10] sm:$0xff]
      %v504 = vld [vmem:[%s165 + $0x18] sm:$0xff]
      %v506 = vsel %vm190, %v497, 0
      %v509 = vsel %vm190, %v498, 0
      %v512 = vsel %vm190, %v499, 0
      %v515 = vsel %vm190, %v500, 0
      %517 = vmatprep.subr.mxu0 0.0
      %518 = vmatpush1.msra.mxu0 %v501
      %519 = vmatprep.subr.mxu0 0.0
      %520 = vmatpush1.msra.mxu0 %v502
      %521 = vmatprep.subr.mxu0 0.0
      %522 = vmatpush1.msra.mxu0 %v503
      %523 = vmatprep.subr.mxu0 0.0
      %524 = vmatpush1.msra.mxu0 %v504
      %525 = vmatprep.subr.mxu0 0.0
      %526 = vmatpush1.msra.mxu0 0.0
      %527 = vmatprep.subr.mxu0 0.0
      %528 = vmatpush1.msra.mxu0 0.0
      %529 = vmatprep.subr.mxu0 0.0
      %530 = vmatpush1.msra.mxu0 0.0
      %531 = vmatprep.subr.mxu0 0.0
      %532 = vmatpush1.msra.mxu0 0.0
      %533 = vmatprep.subr.mxu0 0.0
      %534 = vmatpush1.msra.mxu0 0.0
      %535 = vmatprep.subr.mxu0 0.0
      %536 = vmatpush1.msra.mxu0 0.0
      %537 = vmatprep.subr.mxu0 0.0
      %538 = vmatpush1.msra.mxu0 0.0
      %539 = vmatprep.subr.mxu0 0.0
      %540 = vmatpush1.msra.mxu0 0.0
      %541 = vmatprep.subr.mxu0 0.0
      %542 = vmatpush1.msra.mxu0 0.0
      %543 = vmatprep.subr.mxu0 0.0
      %544 = vmatpush1.msra.mxu0 0.0
      %545 = vmatprep.subr.mxu0 0.0
      %546 = vmatpush1.msra.mxu0 0.0
      %547 = vmatprep.subr.mxu0 0.0
      %548 = vmatpush1.msra.mxu0 0.0
      %549 = vmatprep.subr.mxu0 0.0
      %550 = vmatpush1.msra.mxu0 0.0
      %551 = vmatprep.subr.mxu0 0.0
      %552 = vmatpush1.msra.mxu0 0.0
      %553 = vmatprep.subr.mxu0 0.0
      %554 = vmatpush1.msra.mxu0 0.0
      %555 = vmatprep.subr.mxu0 0.0
      %556 = vmatpush1.msra.mxu0 0.0
      %557 = vmatprep.subr.mxu0 0.0
      %558 = vmatpush1.msra.mxu0 0.0
      %559 = vmatprep.subr.mxu0 0.0
      %560 = vmatpush1.msra.mxu0 0.0
      %561 = vmatprep.subr.mxu0 0.0
      %562 = vmatpush1.msra.mxu0 0.0
      %563 = vmatprep.subr.mxu0 0.0
      %564 = vmatpush1.msra.mxu0 0.0
      %565 = vmatprep.subr.mxu0 0.0
      %566 = vmatpush1.msra.mxu0 0.0
      %567 = vmatprep.subr.mxu0 0.0
      %568 = vmatpush1.msra.mxu0 0.0
      %569 = vmatprep.subr.mxu0 0.0
      %570 = vmatpush1.msra.mxu0 0.0
      %571 = vmatprep.subr.mxu0 0.0
      %572 = vmatpush1.msra.mxu0 0.0
      %573 = vmatprep.subr.mxu0 0.0
      %574 = vmatpush1.msra.mxu0 0.0
      %575 = vmatprep.subr.mxu0 0.0
      %576 = vmatpush1.msra.mxu0 0.0
      %577 = vmatprep.subr.mxu0 0.0
      %578 = vmatpush1.msra.mxu0 0.0
      %579 = vmatprep.subr.mxu0 0.0
      %580 = vmatpush1.msra.mxu0 0.0
      %581 = vmatprep.mubr.f32.mxu0 0.0
      %582 = vmatmul.mubr.f32.gmra.mrb[0].mxu0 %v506
      %v583 = vpop.f32.mrb[0].mxu0
      %v584 = vadd.f32 0.0, %v583
      %v585 = vpop.f32.mrb[0].mxu0
      %586 = vmatprep.mubr.f32.mxu0 0.0
      %587 = vmatmul.mubr.f32.gmra.mrb[0].mxu0 %v509
      %v588 = vpop.f32.mrb[0].mxu0
      %v589 = vadd.f32 0.0, %v588
      %v590 = vpop.f32.mrb[0].mxu0
      %591 = vmatprep.mubr.f32.mxu0 0.0
      %592 = vmatmul.mubr.f32.gmra.mrb[0].mxu0 %v512
      %v593 = vpop.f32.mrb[0].mxu0
      %v594 = vadd.f32 0.0, %v593
      %v595 = vpop.f32.mrb[0].mxu0
      %596 = vmatprep.mubr.f32.mxu0 0.0
      %597 = vmatmul.mubr.f32.gmra.mrb[0].mxu0 %v515
      %v598 = vpop.f32.mrb[0].mxu0
      %v599 = vadd.f32 0.0, %v598
      %v600 = vpop.f32.mrb[0].mxu0
      %601 = vdwg.mxu0
      %v602 = vadd.f32 %v492, %v584
      %v603 = vadd.f32 %v493, %v589
      %v604 = vadd.f32 %v494, %v594
      %v605 = vadd.f32 %v495, %v599
      %v606 = vld [vmem:[%s2] sm:$0xff]
      %v607 = vld [vmem:[%s2 + $0x8] sm:$0xff]
      %v608 = vld [vmem:[%s2 + $0x10] sm:$0xff]
      %v609 = vld [vmem:[%s2 + $0x18] sm:$0xff]
      %611 = vset.pattern.permute.xlu0 0
      %612 = vperm.xlu0 %611, %v606
      %v613 = vpop.permute.xlu0 %612
      %616 = vset.pattern.permute.xlu0 0
      %617 = vperm.xlu0 %616, %v607
      %v618 = vpop.permute.xlu0 %617
      %621 = vset.pattern.permute.xlu0 0
      %622 = vperm.xlu0 %621, %v608
      %v623 = vpop.permute.xlu0 %622
      %626 = vset.pattern.permute.xlu0 0
      %627 = vperm.xlu0 %626, %v609
      %v628 = vpop.permute.xlu0 %627
      %v630 = vadd.f32 %v602, %v613
      %v631 = vadd.f32 %v603, %v618
      %v632 = vadd.f32 %v604, %v623
      %v633 = vadd.f32 %v605, %v628
      %v634 = vmax.f32 %v630, 0.0
      %v635 = vmax.f32 %v631, 0.0
      %v636 = vmax.f32 %v632, 0.0
      %v637 = vmax.f32 %v633, 0.0
      %vm638 = vcmask 130048
      %639 = vst.msk [vmem:[%s170] sm:$0xff] %vm638, %v634
      %640 = vst.msk [vmem:[%s170 + $0x8] sm:$0xff] %vm638, %v635
      %641 = vst.msk [vmem:[%s170 + $0x10] sm:$0xff] %vm638, %v636
      %642 = vst.msk [vmem:[%s170 + $0x18] sm:$0xff] %vm638, %v637
      %s643 = scalar_lea.vmem %s1, 128
      %v644 = vld [vmem:[%s643] sm:$0xff]
      %v645 = vld [vmem:[%s643 + $0x8] sm:$0xff]
      %v646 = vld [vmem:[%s643 + $0x10] sm:$0xff]
      %v647 = vld [vmem:[%s643 + $0x18] sm:$0xff]
      %s648 = scalar_lea.vmem %s165, 160
      %v649 = vld [vmem:[%s648] sm:$0xff]
      %v650 = vld [vmem:[%s648 + $0x8] sm:$0xff]
      %v651 = vld [vmem:[%s648 + $0x10] sm:$0xff]
      %v652 = vld [vmem:[%s648 + $0x18] sm:$0xff]
      %s653 = scalar_lea.vmem %s1, 160
      %v654 = vld [vmem:[%s653] sm:$0xff]
      %v655 = vld [vmem:[%s653 + $0x8] sm:$0xff]
      %v656 = vld [vmem:[%s653 + $0x10] sm:$0xff]
      %v657 = vld [vmem:[%s653 + $0x18] sm:$0xff]
      %v658 = vld [vmem:[%s175] sm:$0xff]
      %v659 = vld [vmem:[%s175 + $0x8] sm:$0xff]
      %v660 = vld [vmem:[%s175 + $0x10] sm:$0xff]
      %v661 = vld [vmem:[%s175 + $0x18] sm:$0xff]
      %v663 = vsel %vm190, %v654, 0
      %v666 = vsel %vm190, %v655, 0
      %v669 = vsel %vm190, %v656, 0
      %v672 = vsel %vm190, %v657, 0
      %674 = vmatprep.subr.mxu0 0.0
      %675 = vmatpush1.msra.mxu0 %v658
      %676 = vmatprep.subr.mxu0 0.0
      %677 = vmatpush1.msra.mxu0 %v659
      %678 = vmatprep.subr.mxu0 0.0
      %679 = vmatpush1.msra.mxu0 %v660
      %680 = vmatprep.subr.mxu0 0.0
      %681 = vmatpush1.msra.mxu0 %v661
      %682 = vmatprep.subr.mxu0 0.0
      %683 = vmatpush1.msra.mxu0 0.0
      %684 = vmatprep.subr.mxu0 0.0
      %685 = vmatpush1.msra.mxu0 0.0
      %686 = vmatprep.subr.mxu0 0.0
      %687 = vmatpush1.msra.mxu0 0.0
      %688 = vmatprep.subr.mxu0 0.0
      %689 = vmatpush1.msra.mxu0 0.0
      %690 = vmatprep.subr.mxu0 0.0
      %691 = vmatpush1.msra.mxu0 0.0
      %692 = vmatprep.subr.mxu0 0.0
      %693 = vmatpush1.msra.mxu0 0.0
      %694 = vmatprep.subr.mxu0 0.0
      %695 = vmatpush1.msra.mxu0 0.0
      %696 = vmatprep.subr.mxu0 0.0
      %697 = vmatpush1.msra.mxu0 0.0
      %698 = vmatprep.subr.mxu0 0.0
      %699 = vmatpush1.msra.mxu0 0.0
      %700 = vmatprep.subr.mxu0 0.0
      %701 = vmatpush1.msra.mxu0 0.0
      %702 = vmatprep.subr.mxu0 0.0
      %703 = vmatpush1.msra.mxu0 0.0
      %704 = vmatprep.subr.mxu0 0.0
      %705 = vmatpush1.msra.mxu0 0.0
      %706 = vmatprep.subr.mxu0 0.0
      %707 = vmatpush1.msra.mxu0 0.0
      %708 = vmatprep.subr.mxu0 0.0
      %709 = vmatpush1.msra.mxu0 0.0
      %710 = vmatprep.subr.mxu0 0.0
      %711 = vmatpush1.msra.mxu0 0.0
      %712 = vmatprep.subr.mxu0 0.0
      %713 = vmatpush1.msra.mxu0 0.0
      %714 = vmatprep.subr.mxu0 0.0
      %715 = vmatpush1.msra.mxu0 0.0
      %716 = vmatprep.subr.mxu0 0.0
      %717 = vmatpush1.msra.mxu0 0.0
      %718 = vmatprep.subr.mxu0 0.0
      %719 = vmatpush1.msra.mxu0 0.0
      %720 = vmatprep.subr.mxu0 0.0
      %721 = vmatpush1.msra.mxu0 0.0
      %722 = vmatprep.subr.mxu0 0.0
      %723 = vmatpush1.msra.mxu0 0.0
      %724 = vmatprep.subr.mxu0 0.0
      %725 = vmatpush1.msra.mxu0 0.0
      %726 = vmatprep.subr.mxu0 0.0
      %727 = vmatpush1.msra.mxu0 0.0
      %728 = vmatprep.subr.mxu0 0.0
      %729 = vmatpush1.msra.mxu0 0.0
      %730 = vmatprep.subr.mxu0 0.0
      %731 = vmatpush1.msra.mxu0 0.0
      %732 = vmatprep.subr.mxu0 0.0
      %733 = vmatpush1.msra.mxu0 0.0
      %734 = vmatprep.subr.mxu0 0.0
      %735 = vmatpush1.msra.mxu0 0.0
      %736 = vmatprep.subr.mxu0 0.0
      %737 = vmatpush1.msra.mxu0 0.0
      %738 = vmatprep.mubr.f32.mxu0 0.0
      %739 = vmatmul.mubr.f32.gmra.mrb[0].mxu0 %v663
      %v740 = vpop.f32.mrb[0].mxu0
      %v741 = vadd.f32 0.0, %v740
      %v742 = vpop.f32.mrb[0].mxu0
      %743 = vmatprep.mubr.f32.mxu0 0.0
      %744 = vmatmul.mubr.f32.gmra.mrb[0].mxu0 %v666
      %v745 = vpop.f32.mrb[0].mxu0
      %v746 = vadd.f32 0.0, %v745
      %v747 = vpop.f32.mrb[0].mxu0
      %748 = vmatprep.mubr.f32.mxu0 0.0
      %749 = vmatmul.mubr.f32.gmra.mrb[0].mxu0 %v669
      %v750 = vpop.f32.mrb[0].mxu0
      %v751 = vadd.f32 0.0, %v750
      %v752 = vpop.f32.mrb[0].mxu0
      %753 = vmatprep.mubr.f32.mxu0 0.0
      %754 = vmatmul.mubr.f32.gmra.mrb[0].mxu0 %v672
      %v755 = vpop.f32.mrb[0].mxu0
      %v756 = vadd.f32 0.0, %v755
      %v757 = vpop.f32.mrb[0].mxu0
      %758 = vdwg.mxu0
      %v760 = vsel %vm190, %v644, 0
      %v763 = vsel %vm190, %v645, 0
      %v766 = vsel %vm190, %v646, 0
      %v769 = vsel %vm190, %v647, 0
      %771 = vmatprep.subr.mxu0 0.0
      %772 = vmatpush1.msra.mxu0 %v649
      %773 = vmatprep.subr.mxu0 0.0
      %774 = vmatpush1.msra.mxu0 %v650
      %775 = vmatprep.subr.mxu0 0.0
      %776 = vmatpush1.msra.mxu0 %v651
      %777 = vmatprep.subr.mxu0 0.0
      %778 = vmatpush1.msra.mxu0 %v652
      %779 = vmatprep.subr.mxu0 0.0
      %780 = vmatpush1.msra.mxu0 0.0
      %781 = vmatprep.subr.mxu0 0.0
      %782 = vmatpush1.msra.mxu0 0.0
      %783 = vmatprep.subr.mxu0 0.0
      %784 = vmatpush1.msra.mxu0 0.0
      %785 = vmatprep.subr.mxu0 0.0
      %786 = vmatpush1.msra.mxu0 0.0
      %787 = vmatprep.subr.mxu0 0.0
      %788 = vmatpush1.msra.mxu0 0.0
      %789 = vmatprep.subr.mxu0 0.0
      %790 = vmatpush1.msra.mxu0 0.0
      %791 = vmatprep.subr.mxu0 0.0
      %792 = vmatpush1.msra.mxu0 0.0
      %793 = vmatprep.subr.mxu0 0.0
      %794 = vmatpush1.msra.mxu0 0.0
      %795 = vmatprep.subr.mxu0 0.0
      %796 = vmatpush1.msra.mxu0 0.0
      %797 = vmatprep.subr.mxu0 0.0
      %798 = vmatpush1.msra.mxu0 0.0
      %799 = vmatprep.subr.mxu0 0.0
      %800 = vmatpush1.msra.mxu0 0.0
      %801 = vmatprep.subr.mxu0 0.0
      %802 = vmatpush1.msra.mxu0 0.0
      %803 = vmatprep.subr.mxu0 0.0
      %804 = vmatpush1.msra.mxu0 0.0
      %805 = vmatprep.subr.mxu0 0.0
      %806 = vmatpush1.msra.mxu0 0.0
      %807 = vmatprep.subr.mxu0 0.0
      %808 = vmatpush1.msra.mxu0 0.0
      %809 = vmatprep.subr.mxu0 0.0
      %810 = vmatpush1.msra.mxu0 0.0
      %811 = vmatprep.subr.mxu0 0.0
      %812 = vmatpush1.msra.mxu0 0.0
      %813 = vmatprep.subr.mxu0 0.0
      %814 = vmatpush1.msra.mxu0 0.0
      %815 = vmatprep.subr.mxu0 0.0
      %816 = vmatpush1.msra.mxu0 0.0
      %817 = vmatprep.subr.mxu0 0.0
      %818 = vmatpush1.msra.mxu0 0.0
      %819 = vmatprep.subr.mxu0 0.0
      %820 = vmatpush1.msra.mxu0 0.0
      %821 = vmatprep.subr.mxu0 0.0
      %822 = vmatpush1.msra.mxu0 0.0
      %823 = vmatprep.subr.mxu0 0.0
      %824 = vmatpush1.msra.mxu0 0.0
      %825 = vmatprep.subr.mxu0 0.0
      %826 = vmatpush1.msra.mxu0 0.0
      %827 = vmatprep.subr.mxu0 0.0
      %828 = vmatpush1.msra.mxu0 0.0
      %829 = vmatprep.subr.mxu0 0.0
      %830 = vmatpush1.msra.mxu0 0.0
      %831 = vmatprep.subr.mxu0 0.0
      %832 = vmatpush1.msra.mxu0 0.0
      %833 = vmatprep.subr.mxu0 0.0
      %834 = vmatpush1.msra.mxu0 0.0
      %835 = vmatprep.mubr.f32.mxu0 0.0
      %836 = vmatmul.mubr.f32.gmra.mrb[0].mxu0 %v760
      %v837 = vpop.f32.mrb[0].mxu0
      %v838 = vadd.f32 %v741, %v837
      %v839 = vpop.f32.mrb[0].mxu0
      %840 = vmatprep.mubr.f32.mxu0 0.0
      %841 = vmatmul.mubr.f32.gmra.mrb[0].mxu0 %v763
      %v842 = vpop.f32.mrb[0].mxu0
      %v843 = vadd.f32 %v746, %v842
      %v844 = vpop.f32.mrb[0].mxu0
      %845 = vmatprep.mubr.f32.mxu0 0.0
      %846 = vmatmul.mubr.f32.gmra.mrb[0].mxu0 %v766
      %v847 = vpop.f32.mrb[0].mxu0
      %v848 = vadd.f32 %v751, %v847
      %v849 = vpop.f32.mrb[0].mxu0
      %850 = vmatprep.mubr.f32.mxu0 0.0
      %851 = vmatmul.mubr.f32.gmra.mrb[0].mxu0 %v769
      %v852 = vpop.f32.mrb[0].mxu0
      %v853 = vadd.f32 %v756, %v852
      %v854 = vpop.f32.mrb[0].mxu0
      %855 = vdwg.mxu0
      %s856 = scalar_lea.vmem %s1, 192
      %v857 = vld [vmem:[%s856] sm:$0xff]
      %v858 = vld [vmem:[%s856 + $0x8] sm:$0xff]
      %v859 = vld [vmem:[%s856 + $0x10] sm:$0xff]
      %v860 = vld [vmem:[%s856 + $0x18] sm:$0xff]
      %s861 = scalar_lea.vmem %s165, 64
      %v862 = vld [vmem:[%s861] sm:$0xff]
      %v863 = vld [vmem:[%s861 + $0x8] sm:$0xff]
      %v864 = vld [vmem:[%s861 + $0x10] sm:$0xff]
      %v865 = vld [vmem:[%s861 + $0x18] sm:$0xff]
      %v867 = vsel %vm190, %v857, 0
      %v870 = vsel %vm190, %v858, 0
      %v873 = vsel %vm190, %v859, 0
      %v876 = vsel %vm190, %v860, 0
      %878 = vmatprep.subr.mxu0 0.0
      %879 = vmatpush1.msra.mxu0 %v862
      %880 = vmatprep.subr.mxu0 0.0
      %881 = vmatpush1.msra.mxu0 %v863
      %882 = vmatprep.subr.mxu0 0.0
      %883 = vmatpush1.msra.mxu0 %v864
      %884 = vmatprep.subr.mxu0 0.0
      %885 = vmatpush1.msra.mxu0 %v865
      %886 = vmatprep.subr.mxu0 0.0
      %887 = vmatpush1.msra.mxu0 0.0
      %888 = vmatprep.subr.mxu0 0.0
      %889 = vmatpush1.msra.mxu0 0.0
      %890 = vmatprep.subr.mxu0 0.0
      %891 = vmatpush1.msra.mxu0 0.0
      %892 = vmatprep.subr.mxu0 0.0
      %893 = vmatpush1.msra.mxu0 0.0
      %894 = vmatprep.subr.mxu0 0.0
      %895 = vmatpush1.msra.mxu0 0.0
      %896 = vmatprep.subr.mxu0 0.0
      %897 = vmatpush1.msra.mxu0 0.0
      %898 = vmatprep.subr.mxu0 0.0
      %899 = vmatpush1.msra.mxu0 0.0
      %900 = vmatprep.subr.mxu0 0.0
      %901 = vmatpush1.msra.mxu0 0.0
      %902 = vmatprep.subr.mxu0 0.0
      %903 = vmatpush1.msra.mxu0 0.0
      %904 = vmatprep.subr.mxu0 0.0
      %905 = vmatpush1.msra.mxu0 0.0
      %906 = vmatprep.subr.mxu0 0.0
      %907 = vmatpush1.msra.mxu0 0.0
      %908 = vmatprep.subr.mxu0 0.0
      %909 = vmatpush1.msra.mxu0 0.0
      %910 = vmatprep.subr.mxu0 0.0
      %911 = vmatpush1.msra.mxu0 0.0
      %912 = vmatprep.subr.mxu0 0.0
      %913 = vmatpush1.msra.mxu0 0.0
      %914 = vmatprep.subr.mxu0 0.0
      %915 = vmatpush1.msra.mxu0 0.0
      %916 = vmatprep.subr.mxu0 0.0
      %917 = vmatpush1.msra.mxu0 0.0
      %918 = vmatprep.subr.mxu0 0.0
      %919 = vmatpush1.msra.mxu0 0.0
      %920 = vmatprep.subr.mxu0 0.0
      %921 = vmatpush1.msra.mxu0 0.0
      %922 = vmatprep.subr.mxu0 0.0
      %923 = vmatpush1.msra.mxu0 0.0
      %924 = vmatprep.subr.mxu0 0.0
      %925 = vmatpush1.msra.mxu0 0.0
      %926 = vmatprep.subr.mxu0 0.0
      %927 = vmatpush1.msra.mxu0 0.0
      %928 = vmatprep.subr.mxu0 0.0
      %929 = vmatpush1.msra.mxu0 0.0
      %930 = vmatprep.subr.mxu0 0.0
      %931 = vmatpush1.msra.mxu0 0.0
      %932 = vmatprep.subr.mxu0 0.0
      %933 = vmatpush1.msra.mxu0 0.0
      %934 = vmatprep.subr.mxu0 0.0
      %935 = vmatpush1.msra.mxu0 0.0
      %936 = vmatprep.subr.mxu0 0.0
      %937 = vmatpush1.msra.mxu0 0.0
      %938 = vmatprep.subr.mxu0 0.0
      %939 = vmatpush1.msra.mxu0 0.0
      %940 = vmatprep.subr.mxu0 0.0
      %941 = vmatpush1.msra.mxu0 0.0
      %942 = vmatprep.mubr.f32.mxu0 0.0
      %943 = vmatmul.mubr.f32.gmra.mrb[0].mxu0 %v867
      %v944 = vpop.f32.mrb[0].mxu0
      %v945 = vadd.f32 0.0, %v944
      %v946 = vpop.f32.mrb[0].mxu0
      %947 = vmatprep.mubr.f32.mxu0 0.0
      %948 = vmatmul.mubr.f32.gmra.mrb[0].mxu0 %v870
      %v949 = vpop.f32.mrb[0].mxu0
      %v950 = vadd.f32 0.0, %v949
      %v951 = vpop.f32.mrb[0].mxu0
      %952 = vmatprep.mubr.f32.mxu0 0.0
      %953 = vmatmul.mubr.f32.gmra.mrb[0].mxu0 %v873
      %v954 = vpop.f32.mrb[0].mxu0
      %v955 = vadd.f32 0.0, %v954
      %v956 = vpop.f32.mrb[0].mxu0
      %957 = vmatprep.mubr.f32.mxu0 0.0
      %958 = vmatmul.mubr.f32.gmra.mrb[0].mxu0 %v876
      %v959 = vpop.f32.mrb[0].mxu0
      %v960 = vadd.f32 0.0, %v959
      %v961 = vpop.f32.mrb[0].mxu0
      %962 = vdwg.mxu0
      %v963 = vadd.f32 %v838, %v945
      %v964 = vadd.f32 %v843, %v950
      %v965 = vadd.f32 %v848, %v955
      %v966 = vadd.f32 %v853, %v960
      %s967 = scalar_lea.vmem %s1, 224
      %v968 = vld [vmem:[%s967] sm:$0xff]
      %v969 = vld [vmem:[%s967 + $0x8] sm:$0xff]
      %v970 = vld [vmem:[%s967 + $0x10] sm:$0xff]
      %v971 = vld [vmem:[%s967 + $0x18] sm:$0xff]
      %v972 = vld [vmem:[%s390] sm:$0xff]
      %v973 = vld [vmem:[%s390 + $0x8] sm:$0xff]
      %v974 = vld [vmem:[%s390 + $0x10] sm:$0xff]
      %v975 = vld [vmem:[%s390 + $0x18] sm:$0xff]
      %v977 = vsel %vm190, %v968, 0
      %v980 = vsel %vm190, %v969, 0
      %v983 = vsel %vm190, %v970, 0
      %v986 = vsel %vm190, %v971, 0
      %988 = vmatprep.subr.mxu0 0.0
      %989 = vmatpush1.msra.mxu0 %v972
      %990 = vmatprep.subr.mxu0 0.0
      %991 = vmatpush1.msra.mxu0 %v973
      %992 = vmatprep.subr.mxu0 0.0
      %993 = vmatpush1.msra.mxu0 %v974
      %994 = vmatprep.subr.mxu0 0.0
      %995 = vmatpush1.msra.mxu0 %v975
      %996 = vmatprep.subr.mxu0 0.0
      %997 = vmatpush1.msra.mxu0 0.0
      %998 = vmatprep.subr.mxu0 0.0
      %999 = vmatpush1.msra.mxu0 0.0
      %1000 = vmatprep.subr.mxu0 0.0
      %1001 = vmatpush1.msra.mxu0 0.0
      %1002 = vmatprep.subr.mxu0 0.0
      %1003 = vmatpush1.msra.mxu0 0.0
      %1004 = vmatprep.subr.mxu0 0.0
      %1005 = vmatpush1.msra.mxu0 0.0
      %1006 = vmatprep.subr.mxu0 0.0
      %1007 = vmatpush1.msra.mxu0 0.0
      %1008 = vmatprep.subr.mxu0 0.0
      %1009 = vmatpush1.msra.mxu0 0.0
      %1010 = vmatprep.subr.mxu0 0.0
      %1011 = vmatpush1.msra.mxu0 0.0
      %1012 = vmatprep.subr.mxu0 0.0
      %1013 = vmatpush1.msra.mxu0 0.0
      %1014 = vmatprep.subr.mxu0 0.0
      %1015 = vmatpush1.msra.mxu0 0.0
      %1016 = vmatprep.subr.mxu0 0.0
      %1017 = vmatpush1.msra.mxu0 0.0
      %1018 = vmatprep.subr.mxu0 0.0
      %1019 = vmatpush1.msra.mxu0 0.0
      %1020 = vmatprep.subr.mxu0 0.0
      %1021 = vmatpush1.msra.mxu0 0.0
      %1022 = vmatprep.subr.mxu0 0.0
      %1023 = vmatpush1.msra.mxu0 0.0
      %1024 = vmatprep.subr.mxu0 0.0
      %1025 = vmatpush1.msra.mxu0 0.0
      %1026 = vmatprep.subr.mxu0 0.0
      %1027 = vmatpush1.msra.mxu0 0.0
      %1028 = vmatprep.subr.mxu0 0.0
      %1029 = vmatpush1.msra.mxu0 0.0
      %1030 = vmatprep.subr.mxu0 0.0
      %1031 = vmatpush1.msra.mxu0 0.0
      %1032 = vmatprep.subr.mxu0 0.0
      %1033 = vmatpush1.msra.mxu0 0.0
      %1034 = vmatprep.subr.mxu0 0.0
      %1035 = vmatpush1.msra.mxu0 0.0
      %1036 = vmatprep.subr.mxu0 0.0
      %1037 = vmatpush1.msra.mxu0 0.0
      %1038 = vmatprep.subr.mxu0 0.0
      %1039 = vmatpush1.msra.mxu0 0.0
      %1040 = vmatprep.subr.mxu0 0.0
      %1041 = vmatpush1.msra.mxu0 0.0
      %1042 = vmatprep.subr.mxu0 0.0
      %1043 = vmatpush1.msra.mxu0 0.0
      %1044 = vmatprep.subr.mxu0 0.0
      %1045 = vmatpush1.msra.mxu0 0.0
      %1046 = vmatprep.subr.mxu0 0.0
      %1047 = vmatpush1.msra.mxu0 0.0
      %1048 = vmatprep.subr.mxu0 0.0
      %1049 = vmatpush1.msra.mxu0 0.0
      %1050 = vmatprep.subr.mxu0 0.0
      %1051 = vmatpush1.msra.mxu0 0.0
      %1052 = vmatprep.mubr.f32.mxu0 0.0
      %1053 = vmatmul.mubr.f32.gmra.mrb[0].mxu0 %v977
      %v1054 = vpop.f32.mrb[0].mxu0
      %v1055 = vadd.f32 0.0, %v1054
      %v1056 = vpop.f32.mrb[0].mxu0
      %1057 = vmatprep.mubr.f32.mxu0 0.0
      %1058 = vmatmul.mubr.f32.gmra.mrb[0].mxu0 %v980
      %v1059 = vpop.f32.mrb[0].mxu0
      %v1060 = vadd.f32 0.0, %v1059
      %v1061 = vpop.f32.mrb[0].mxu0
      %1062 = vmatprep.mubr.f32.mxu0 0.0
      %1063 = vmatmul.mubr.f32.gmra.mrb[0].mxu0 %v983
      %v1064 = vpop.f32.mrb[0].mxu0
      %v1065 = vadd.f32 0.0, %v1064
      %v1066 = vpop.f32.mrb[0].mxu0
      %1067 = vmatprep.mubr.f32.mxu0 0.0
      %1068 = vmatmul.mubr.f32.gmra.mrb[0].mxu0 %v986
      %v1069 = vpop.f32.mrb[0].mxu0
      %v1070 = vadd.f32 0.0, %v1069
      %v1071 = vpop.f32.mrb[0].mxu0
      %1072 = vdwg.mxu0
      %v1073 = vadd.f32 %v963, %v1055
      %v1074 = vadd.f32 %v964, %v1060
      %v1075 = vadd.f32 %v965, %v1065
      %v1076 = vadd.f32 %v966, %v1070
      %v1077 = vld [vmem:[%s2] sm:$0xff]
      %v1078 = vld [vmem:[%s2 + $0x8] sm:$0xff]
      %v1079 = vld [vmem:[%s2 + $0x10] sm:$0xff]
      %v1080 = vld [vmem:[%s2 + $0x18] sm:$0xff]
      %1082 = vset.pattern.permute.xlu0 0
      %1083 = vperm.xlu0 %1082, %v1077
      %v1084 = vpop.permute.xlu0 %1083
      %1087 = vset.pattern.permute.xlu0 0
      %1088 = vperm.xlu0 %1087, %v1078
      %v1089 = vpop.permute.xlu0 %1088
      %1092 = vset.pattern.permute.xlu0 0
      %1093 = vperm.xlu0 %1092, %v1079
      %v1094 = vpop.permute.xlu0 %1093
      %1097 = vset.pattern.permute.xlu0 0
      %1098 = vperm.xlu0 %1097, %v1080
      %v1099 = vpop.permute.xlu0 %1098
      %v1101 = vadd.f32 %v1073, %v1084
      %v1102 = vadd.f32 %v1074, %v1089
      %v1103 = vadd.f32 %v1075, %v1094
      %v1104 = vadd.f32 %v1076, %v1099
      %v1105 = vmax.f32 %v1101, 0.0
      %v1106 = vmax.f32 %v1102, 0.0
      %v1107 = vmax.f32 %v1103, 0.0
      %v1108 = vmax.f32 %v1104, 0.0
      %s1109 = scalar_lea.vmem %s170, 32
      %1110 = vst.msk [vmem:[%s1109] sm:$0xff] %vm638, %v1105
      %1111 = vst.msk [vmem:[%s1109 + $0x8] sm:$0xff] %vm638, %v1106
      %1112 = vst.msk [vmem:[%s1109 + $0x10] sm:$0xff] %vm638, %v1107
      %1113 = vst.msk [vmem:[%s1109 + $0x18] sm:$0xff] %vm638, %v1108
      %s1114 = scalar_lea.vmem %s1, 256
      %v1115 = vld [vmem:[%s1114] sm:$0xff]
      %v1116 = vld [vmem:[%s1114 + $0x8] sm:$0xff]
      %v1117 = vld [vmem:[%s1114 + $0x10] sm:$0xff]
      %v1118 = vld [vmem:[%s1114 + $0x18] sm:$0xff]
      %s1119 = scalar_lea.vmem %s165, 224
      %v1120 = vld [vmem:[%s1119] sm:$0xff]
      %v1121 = vld [vmem:[%s1119 + $0x8] sm:$0xff]
      %v1122 = vld [vmem:[%s1119 + $0x10] sm:$0xff]
      %v1123 = vld [vmem:[%s1119 + $0x18] sm:$0xff]
      %s1124 = scalar_lea.vmem %s1, 288
      %v1125 = vld [vmem:[%s1124] sm:$0xff]
      %v1126 = vld [vmem:[%s1124 + $0x8] sm:$0xff]
      %v1127 = vld [vmem:[%s1124 + $0x10] sm:$0xff]
      %v1128 = vld [vmem:[%s1124 + $0x18] sm:$0xff]
      %s1129 = scalar_lea.vmem %s165, 192
      %v1130 = vld [vmem:[%s1129] sm:$0xff]
      %v1131 = vld [vmem:[%s1129 + $0x8] sm:$0xff]
      %v1132 = vld [vmem:[%s1129 + $0x10] sm:$0xff]
      %v1133 = vld [vmem:[%s1129 + $0x18] sm:$0xff]
      %v1135 = vsel %vm190, %v1125, 0
      %v1138 = vsel %vm190, %v1126, 0
      %v1141 = vsel %vm190, %v1127, 0
      %v1144 = vsel %vm190, %v1128, 0
      %1146 = vmatprep.subr.mxu0 0.0
      %1147 = vmatpush1.msra.mxu0 %v1130
      %1148 = vmatprep.subr.mxu0 0.0
      %1149 = vmatpush1.msra.mxu0 %v1131
      %1150 = vmatprep.subr.mxu0 0.0
      %1151 = vmatpush1.msra.mxu0 %v1132
      %1152 = vmatprep.subr.mxu0 0.0
      %1153 = vmatpush1.msra.mxu0 %v1133
      %1154 = vmatprep.subr.mxu0 0.0
      %1155 = vmatpush1.msra.mxu0 0.0
      %1156 = vmatprep.subr.mxu0 0.0
      %1157 = vmatpush1.msra.mxu0 0.0
      %1158 = vmatprep.subr.mxu0 0.0
      %1159 = vmatpush1.msra.mxu0 0.0
      %1160 = vmatprep.subr.mxu0 0.0
      %1161 = vmatpush1.msra.mxu0 0.0
      %1162 = vmatprep.subr.mxu0 0.0
      %1163 = vmatpush1.msra.mxu0 0.0
      %1164 = vmatprep.subr.mxu0 0.0
      %1165 = vmatpush1.msra.mxu0 0.0
      %1166 = vmatprep.subr.mxu0 0.0
      %1167 = vmatpush1.msra.mxu0 0.0
      %1168 = vmatprep.subr.mxu0 0.0
      %1169 = vmatpush1.msra.mxu0 0.0
      %1170 = vmatprep.subr.mxu0 0.0
      %1171 = vmatpush1.msra.mxu0 0.0
      %1172 = vmatprep.subr.mxu0 0.0
      %1173 = vmatpush1.msra.mxu0 0.0
      %1174 = vmatprep.subr.mxu0 0.0
      %1175 = vmatpush1.msra.mxu0 0.0
      %1176 = vmatprep.subr.mxu0 0.0
      %1177 = vmatpush1.msra.mxu0 0.0
      %1178 = vmatprep.subr.mxu0 0.0
      %1179 = vmatpush1.msra.mxu0 0.0
      %1180 = vmatprep.subr.mxu0 0.0
      %1181 = vmatpush1.msra.mxu0 0.0
      %1182 = vmatprep.subr.mxu0 0.0
      %1183 = vmatpush1.msra.mxu0 0.0
      %1184 = vmatprep.subr.mxu0 0.0
      %1185 = vmatpush1.msra.mxu0 0.0
      %1186 = vmatprep.subr.mxu0 0.0
      %1187 = vmatpush1.msra.mxu0 0.0
      %1188 = vmatprep.subr.mxu0 0.0
      %1189 = vmatpush1.msra.mxu0 0.0
      %1190 = vmatprep.subr.mxu0 0.0
      %1191 = vmatpush1.msra.mxu0 0.0
      %1192 = vmatprep.subr.mxu0 0.0
      %1193 = vmatpush1.msra.mxu0 0.0
      %1194 = vmatprep.subr.mxu0 0.0
      %1195 = vmatpush1.msra.mxu0 0.0
      %1196 = vmatprep.subr.mxu0 0.0
      %1197 = vmatpush1.msra.mxu0 0.0
      %1198 = vmatprep.subr.mxu0 0.0
      %1199 = vmatpush1.msra.mxu0 0.0
      %1200 = vmatprep.subr.mxu0 0.0
      %1201 = vmatpush1.msra.mxu0 0.0
      %1202 = vmatprep.subr.mxu0 0.0
      %1203 = vmatpush1.msra.mxu0 0.0
      %1204 = vmatprep.subr.mxu0 0.0
      %1205 = vmatpush1.msra.mxu0 0.0
      %1206 = vmatprep.subr.mxu0 0.0
      %1207 = vmatpush1.msra.mxu0 0.0
      %1208 = vmatprep.subr.mxu0 0.0
      %1209 = vmatpush1.msra.mxu0 0.0
      %1210 = vmatprep.mubr.f32.mxu0 0.0
      %1211 = vmatmul.mubr.f32.gmra.mrb[0].mxu0 %v1135
      %v1212 = vpop.f32.mrb[0].mxu0
      %v1213 = vadd.f32 0.0, %v1212
      %v1214 = vpop.f32.mrb[0].mxu0
      %1215 = vmatprep.mubr.f32.mxu0 0.0
      %1216 = vmatmul.mubr.f32.gmra.mrb[0].mxu0 %v1138
      %v1217 = vpop.f32.mrb[0].mxu0
      %v1218 = vadd.f32 0.0, %v1217
      %v1219 = vpop.f32.mrb[0].mxu0
      %1220 = vmatprep.mubr.f32.mxu0 0.0
      %1221 = vmatmul.mubr.f32.gmra.mrb[0].mxu0 %v1141
      %v1222 = vpop.f32.mrb[0].mxu0
      %v1223 = vadd.f32 0.0, %v1222
      %v1224 = vpop.f32.mrb[0].mxu0
      %1225 = vmatprep.mubr.f32.mxu0 0.0
      %1226 = vmatmul.mubr.f32.gmra.mrb[0].mxu0 %v1144
      %v1227 = vpop.f32.mrb[0].mxu0
      %v1228 = vadd.f32 0.0, %v1227
      %v1229 = vpop.f32.mrb[0].mxu0
      %1230 = vdwg.mxu0
      %v1232 = vsel %vm190, %v1115, 0
      %v1235 = vsel %vm190, %v1116, 0
      %v1238 = vsel %vm190, %v1117, 0
      %v1241 = vsel %vm190, %v1118, 0
      %1243 = vmatprep.subr.mxu0 0.0
      %1244 = vmatpush1.msra.mxu0 %v1120
      %1245 = vmatprep.subr.mxu0 0.0
      %1246 = vmatpush1.msra.mxu0 %v1121
      %1247 = vmatprep.subr.mxu0 0.0
      %1248 = vmatpush1.msra.mxu0 %v1122
      %1249 = vmatprep.subr.mxu0 0.0
      %1250 = vmatpush1.msra.mxu0 %v1123
      %1251 = vmatprep.subr.mxu0 0.0
      %1252 = vmatpush1.msra.mxu0 0.0
      %1253 = vmatprep.subr.mxu0 0.0
      %1254 = vmatpush1.msra.mxu0 0.0
      %1255 = vmatprep.subr.mxu0 0.0
      %1256 = vmatpush1.msra.mxu0 0.0
      %1257 = vmatprep.subr.mxu0 0.0
      %1258 = vmatpush1.msra.mxu0 0.0
      %1259 = vmatprep.subr.mxu0 0.0
      %1260 = vmatpush1.msra.mxu0 0.0
      %1261 = vmatprep.subr.mxu0 0.0
      %1262 = vmatpush1.msra.mxu0 0.0
      %1263 = vmatprep.subr.mxu0 0.0
      %1264 = vmatpush1.msra.mxu0 0.0
      %1265 = vmatprep.subr.mxu0 0.0
      %1266 = vmatpush1.msra.mxu0 0.0
      %1267 = vmatprep.subr.mxu0 0.0
      %1268 = vmatpush1.msra.mxu0 0.0
      %1269 = vmatprep.subr.mxu0 0.0
      %1270 = vmatpush1.msra.mxu0 0.0
      %1271 = vmatprep.subr.mxu0 0.0
      %1272 = vmatpush1.msra.mxu0 0.0
      %1273 = vmatprep.subr.mxu0 0.0
      %1274 = vmatpush1.msra.mxu0 0.0
      %1275 = vmatprep.subr.mxu0 0.0
      %1276 = vmatpush1.msra.mxu0 0.0
      %1277 = vmatprep.subr.mxu0 0.0
      %1278 = vmatpush1.msra.mxu0 0.0
      %1279 = vmatprep.subr.mxu0 0.0
      %1280 = vmatpush1.msra.mxu0 0.0
      %1281 = vmatprep.subr.mxu0 0.0
      %1282 = vmatpush1.msra.mxu0 0.0
      %1283 = vmatprep.subr.mxu0 0.0
      %1284 = vmatpush1.msra.mxu0 0.0
      %1285 = vmatprep.subr.mxu0 0.0
      %1286 = vmatpush1.msra.mxu0 0.0
      %1287 = vmatprep.subr.mxu0 0.0
      %1288 = vmatpush1.msra.mxu0 0.0
      %1289 = vmatprep.subr.mxu0 0.0
      %1290 = vmatpush1.msra.mxu0 0.0
      %1291 = vmatprep.subr.mxu0 0.0
      %1292 = vmatpush1.msra.mxu0 0.0
      %1293 = vmatprep.subr.mxu0 0.0
      %1294 = vmatpush1.msra.mxu0 0.0
      %1295 = vmatprep.subr.mxu0 0.0
      %1296 = vmatpush1.msra.mxu0 0.0
      %1297 = vmatprep.subr.mxu0 0.0
      %1298 = vmatpush1.msra.mxu0 0.0
      %1299 = vmatprep.subr.mxu0 0.0
      %1300 = vmatpush1.msra.mxu0 0.0
      %1301 = vmatprep.subr.mxu0 0.0
      %1302 = vmatpush1.msra.mxu0 0.0
      %1303 = vmatprep.subr.mxu0 0.0
      %1304 = vmatpush1.msra.mxu0 0.0
      %1305 = vmatprep.subr.mxu0 0.0
      %1306 = vmatpush1.msra.mxu0 0.0
      %1307 = vmatprep.mubr.f32.mxu0 0.0
      %1308 = vmatmul.mubr.f32.gmra.mrb[0].mxu0 %v1232
      %v1309 = vpop.f32.mrb[0].mxu0
      %v1310 = vadd.f32 %v1213, %v1309
      %v1311 = vpop.f32.mrb[0].mxu0
      %1312 = vmatprep.mubr.f32.mxu0 0.0
      %1313 = vmatmul.mubr.f32.gmra.mrb[0].mxu0 %v1235
      %v1314 = vpop.f32.mrb[0].mxu0
      %v1315 = vadd.f32 %v1218, %v1314
      %v1316 = vpop.f32.mrb[0].mxu0
      %1317 = vmatprep.mubr.f32.mxu0 0.0
      %1318 = vmatmul.mubr.f32.gmra.mrb[0].mxu0 %v1238
      %v1319 = vpop.f32.mrb[0].mxu0
      %v1320 = vadd.f32 %v1223, %v1319
      %v1321 = vpop.f32.mrb[0].mxu0
      %1322 = vmatprep.mubr.f32.mxu0 0.0
      %1323 = vmatmul.mubr.f32.gmra.mrb[0].mxu0 %v1241
      %v1324 = vpop.f32.mrb[0].mxu0
      %v1325 = vadd.f32 %v1228, %v1324
      %v1326 = vpop.f32.mrb[0].mxu0
      %1327 = vdwg.mxu0
      %s1328 = scalar_lea.vmem %s1, 320
      %v1329 = vld [vmem:[%s1328] sm:$0xff]
      %v1330 = vld [vmem:[%s1328 + $0x8] sm:$0xff]
      %v1331 = vld [vmem:[%s1328 + $0x10] sm:$0xff]
      %v1332 = vld [vmem:[%s1328 + $0x18] sm:$0xff]
      %v1333 = vld [vmem:[%s175] sm:$0xff]
      %v1334 = vld [vmem:[%s175 + $0x8] sm:$0xff]
      %v1335 = vld [vmem:[%s175 + $0x10] sm:$0xff]
      %v1336 = vld [vmem:[%s175 + $0x18] sm:$0xff]
      %v1338 = vsel %vm190, %v1329, 0
      %v1341 = vsel %vm190, %v1330, 0
      %v1344 = vsel %vm190, %v1331, 0
      %v1347 = vsel %vm190, %v1332, 0
      %1349 = vmatprep.subr.mxu0 0.0
      %1350 = vmatpush1.msra.mxu0 %v1333
      %1351 = vmatprep.subr.mxu0 0.0
      %1352 = vmatpush1.msra.mxu0 %v1334
      %1353 = vmatprep.subr.mxu0 0.0
      %1354 = vmatpush1.msra.mxu0 %v1335
      %1355 = vmatprep.subr.mxu0 0.0
      %1356 = vmatpush1.msra.mxu0 %v1336
      %1357 = vmatprep.subr.mxu0 0.0
      %1358 = vmatpush1.msra.mxu0 0.0
      %1359 = vmatprep.subr.mxu0 0.0
      %1360 = vmatpush1.msra.mxu0 0.0
      %1361 = vmatprep.subr.mxu0 0.0
      %1362 = vmatpush1.msra.mxu0 0.0
      %1363 = vmatprep.subr.mxu0 0.0
      %1364 = vmatpush1.msra.mxu0 0.0
      %1365 = vmatprep.subr.mxu0 0.0
      %1366 = vmatpush1.msra.mxu0 0.0
      %1367 = vmatprep.subr.mxu0 0.0
      %1368 = vmatpush1.msra.mxu0 0.0
      %1369 = vmatprep.subr.mxu0 0.0
      %1370 = vmatpush1.msra.mxu0 0.0
      %1371 = vmatprep.subr.mxu0 0.0
      %1372 = vmatpush1.msra.mxu0 0.0
      %1373 = vmatprep.subr.mxu0 0.0
      %1374 = vmatpush1.msra.mxu0 0.0
      %1375 = vmatprep.subr.mxu0 0.0
      %1376 = vmatpush1.msra.mxu0 0.0
      %1377 = vmatprep.subr.mxu0 0.0
      %1378 = vmatpush1.msra.mxu0 0.0
      %1379 = vmatprep.subr.mxu0 0.0
      %1380 = vmatpush1.msra.mxu0 0.0
      %1381 = vmatprep.subr.mxu0 0.0
      %1382 = vmatpush1.msra.mxu0 0.0
      %1383 = vmatprep.subr.mxu0 0.0
      %1384 = vmatpush1.msra.mxu0 0.0
      %1385 = vmatprep.subr.mxu0 0.0
      %1386 = vmatpush1.msra.mxu0 0.0
      %1387 = vmatprep.subr.mxu0 0.0
      %1388 = vmatpush1.msra.mxu0 0.0
      %1389 = vmatprep.subr.mxu0 0.0
      %1390 = vmatpush1.msra.mxu0 0.0
      %1391 = vmatprep.subr.mxu0 0.0
      %1392 = vmatpush1.msra.mxu0 0.0
      %1393 = vmatprep.subr.mxu0 0.0
      %1394 = vmatpush1.msra.mxu0 0.0
      %1395 = vmatprep.subr.mxu0 0.0
      %1396 = vmatpush1.msra.mxu0 0.0
      %1397 = vmatprep.subr.mxu0 0.0
      %1398 = vmatpush1.msra.mxu0 0.0
      %1399 = vmatprep.subr.mxu0 0.0
      %1400 = vmatpush1.msra.mxu0 0.0
      %1401 = vmatprep.subr.mxu0 0.0
      %1402 = vmatpush1.msra.mxu0 0.0
      %1403 = vmatprep.subr.mxu0 0.0
      %1404 = vmatpush1.msra.mxu0 0.0
      %1405 = vmatprep.subr.mxu0 0.0
      %1406 = vmatpush1.msra.mxu0 0.0
      %1407 = vmatprep.subr.mxu0 0.0
      %1408 = vmatpush1.msra.mxu0 0.0
      %1409 = vmatprep.subr.mxu0 0.0
      %1410 = vmatpush1.msra.mxu0 0.0
      %1411 = vmatprep.subr.mxu0 0.0
      %1412 = vmatpush1.msra.mxu0 0.0
      %1413 = vmatprep.mubr.f32.mxu0 0.0
      %1414 = vmatmul.mubr.f32.gmra.mrb[0].mxu0 %v1338
      %v1415 = vpop.f32.mrb[0].mxu0
      %v1416 = vadd.f32 0.0, %v1415
      %v1417 = vpop.f32.mrb[0].mxu0
      %1418 = vmatprep.mubr.f32.mxu0 0.0
      %1419 = vmatmul.mubr.f32.gmra.mrb[0].mxu0 %v1341
      %v1420 = vpop.f32.mrb[0].mxu0
      %v1421 = vadd.f32 0.0, %v1420
      %v1422 = vpop.f32.mrb[0].mxu0
      %1423 = vmatprep.mubr.f32.mxu0 0.0
      %1424 = vmatmul.mubr.f32.gmra.mrb[0].mxu0 %v1344
      %v1425 = vpop.f32.mrb[0].mxu0
      %v1426 = vadd.f32 0.0, %v1425
      %v1427 = vpop.f32.mrb[0].mxu0
      %1428 = vmatprep.mubr.f32.mxu0 0.0
      %1429 = vmatmul.mubr.f32.gmra.mrb[0].mxu0 %v1347
      %v1430 = vpop.f32.mrb[0].mxu0
      %v1431 = vadd.f32 0.0, %v1430
      %v1432 = vpop.f32.mrb[0].mxu0
      %1433 = vdwg.mxu0
      %v1434 = vadd.f32 %v1310, %v1416
      %v1435 = vadd.f32 %v1315, %v1421
      %v1436 = vadd.f32 %v1320, %v1426
      %v1437 = vadd.f32 %v1325, %v1431
      %s1438 = scalar_lea.vmem %s1, 352
      %v1439 = vld [vmem:[%s1438] sm:$0xff]
      %v1440 = vld [vmem:[%s1438 + $0x8] sm:$0xff]
      %v1441 = vld [vmem:[%s1438 + $0x10] sm:$0xff]
      %v1442 = vld [vmem:[%s1438 + $0x18] sm:$0xff]
      %v1443 = vld [vmem:[%s185] sm:$0xff]
      %v1444 = vld [vmem:[%s185 + $0x8] sm:$0xff]
      %v1445 = vld [vmem:[%s185 + $0x10] sm:$0xff]
      %v1446 = vld [vmem:[%s185 + $0x18] sm:$0xff]
      %v1448 = vsel %vm190, %v1439, 0
      %v1451 = vsel %vm190, %v1440, 0
      %v1454 = vsel %vm190, %v1441, 0
      %v1457 = vsel %vm190, %v1442, 0
      %1459 = vmatprep.subr.mxu0 0.0
      %1460 = vmatpush1.msra.mxu0 %v1443
      %1461 = vmatprep.subr.mxu0 0.0
      %1462 = vmatpush1.msra.mxu0 %v1444
      %1463 = vmatprep.subr.mxu0 0.0
      %1464 = vmatpush1.msra.mxu0 %v1445
      %1465 = vmatprep.subr.mxu0 0.0
      %1466 = vmatpush1.msra.mxu0 %v1446
      %1467 = vmatprep.subr.mxu0 0.0
      %1468 = vmatpush1.msra.mxu0 0.0
      %1469 = vmatprep.subr.mxu0 0.0
      %1470 = vmatpush1.msra.mxu0 0.0
      %1471 = vmatprep.subr.mxu0 0.0
      %1472 = vmatpush1.msra.mxu0 0.0
      %1473 = vmatprep.subr.mxu0 0.0
      %1474 = vmatpush1.msra.mxu0 0.0
      %1475 = vmatprep.subr.mxu0 0.0
      %1476 = vmatpush1.msra.mxu0 0.0
      %1477 = vmatprep.subr.mxu0 0.0
      %1478 = vmatpush1.msra.mxu0 0.0
      %1479 = vmatprep.subr.mxu0 0.0
      %1480 = vmatpush1.msra.mxu0 0.0
      %1481 = vmatprep.subr.mxu0 0.0
      %1482 = vmatpush1.msra.mxu0 0.0
      %1483 = vmatprep.subr.mxu0 0.0
      %1484 = vmatpush1.msra.mxu0 0.0
      %1485 = vmatprep.subr.mxu0 0.0
      %1486 = vmatpush1.msra.mxu0 0.0
      %1487 = vmatprep.subr.mxu0 0.0
      %1488 = vmatpush1.msra.mxu0 0.0
      %1489 = vmatprep.subr.mxu0 0.0
      %1490 = vmatpush1.msra.mxu0 0.0
      %1491 = vmatprep.subr.mxu0 0.0
      %1492 = vmatpush1.msra.mxu0 0.0
      %1493 = vmatprep.subr.mxu0 0.0
      %1494 = vmatpush1.msra.mxu0 0.0
      %1495 = vmatprep.subr.mxu0 0.0
      %1496 = vmatpush1.msra.mxu0 0.0
      %1497 = vmatprep.subr.mxu0 0.0
      %1498 = vmatpush1.msra.mxu0 0.0
      %1499 = vmatprep.subr.mxu0 0.0
      %1500 = vmatpush1.msra.mxu0 0.0
      %1501 = vmatprep.subr.mxu0 0.0
      %1502 = vmatpush1.msra.mxu0 0.0
      %1503 = vmatprep.subr.mxu0 0.0
      %1504 = vmatpush1.msra.mxu0 0.0
      %1505 = vmatprep.subr.mxu0 0.0
      %1506 = vmatpush1.msra.mxu0 0.0
      %1507 = vmatprep.subr.mxu0 0.0
      %1508 = vmatpush1.msra.mxu0 0.0
      %1509 = vmatprep.subr.mxu0 0.0
      %1510 = vmatpush1.msra.mxu0 0.0
      %1511 = vmatprep.subr.mxu0 0.0
      %1512 = vmatpush1.msra.mxu0 0.0
      %1513 = vmatprep.subr.mxu0 0.0
      %1514 = vmatpush1.msra.mxu0 0.0
      %1515 = vmatprep.subr.mxu0 0.0
      %1516 = vmatpush1.msra.mxu0 0.0
      %1517 = vmatprep.subr.mxu0 0.0
      %1518 = vmatpush1.msra.mxu0 0.0
      %1519 = vmatprep.subr.mxu0 0.0
      %1520 = vmatpush1.msra.mxu0 0.0
      %1521 = vmatprep.subr.mxu0 0.0
      %1522 = vmatpush1.msra.mxu0 0.0
      %1523 = vmatprep.mubr.f32.mxu0 0.0
      %1524 = vmatmul.mubr.f32.gmra.mrb[0].mxu0 %v1448
      %v1525 = vpop.f32.mrb[0].mxu0
      %v1526 = vadd.f32 0.0, %v1525
      %v1527 = vpop.f32.mrb[0].mxu0
      %1528 = vmatprep.mubr.f32.mxu0 0.0
      %1529 = vmatmul.mubr.f32.gmra.mrb[0].mxu0 %v1451
      %v1530 = vpop.f32.mrb[0].mxu0
      %v1531 = vadd.f32 0.0, %v1530
      %v1532 = vpop.f32.mrb[0].mxu0
      %1533 = vmatprep.mubr.f32.mxu0 0.0
      %1534 = vmatmul.mubr.f32.gmra.mrb[0].mxu0 %v1454
      %v1535 = vpop.f32.mrb[0].mxu0
      %v1536 = vadd.f32 0.0, %v1535
      %v1537 = vpop.f32.mrb[0].mxu0
      %1538 = vmatprep.mubr.f32.mxu0 0.0
      %1539 = vmatmul.mubr.f32.gmra.mrb[0].mxu0 %v1457
      %v1540 = vpop.f32.mrb[0].mxu0
      %v1541 = vadd.f32 0.0, %v1540
      %v1542 = vpop.f32.mrb[0].mxu0
      %1543 = vdwg.mxu0
      %v1544 = vadd.f32 %v1434, %v1526
      %v1545 = vadd.f32 %v1435, %v1531
      %v1546 = vadd.f32 %v1436, %v1536
      %v1547 = vadd.f32 %v1437, %v1541
      %v1548 = vld [vmem:[%s2] sm:$0xff]
      %v1549 = vld [vmem:[%s2 + $0x8] sm:$0xff]
      %v1550 = vld [vmem:[%s2 + $0x10] sm:$0xff]
      %v1551 = vld [vmem:[%s2 + $0x18] sm:$0xff]
      %1553 = vset.pattern.permute.xlu0 0
      %1554 = vperm.xlu0 %1553, %v1548
      %v1555 = vpop.permute.xlu0 %1554
      %1558 = vset.pattern.permute.xlu0 0
      %1559 = vperm.xlu0 %1558, %v1549
      %v1560 = vpop.permute.xlu0 %1559
      %1563 = vset.pattern.permute.xlu0 0
      %1564 = vperm.xlu0 %1563, %v1550
      %v1565 = vpop.permute.xlu0 %1564
      %1568 = vset.pattern.permute.xlu0 0
      %1569 = vperm.xlu0 %1568, %v1551
      %v1570 = vpop.permute.xlu0 %1569
      %v1572 = vadd.f32 %v1544, %v1555
      %v1573 = vadd.f32 %v1545, %v1560
      %v1574 = vadd.f32 %v1546, %v1565
      %v1575 = vadd.f32 %v1547, %v1570
      %v1576 = vmax.f32 %v1572, 0.0
      %v1577 = vmax.f32 %v1573, 0.0
      %v1578 = vmax.f32 %v1574, 0.0
      %v1579 = vmax.f32 %v1575, 0.0
      %s1580 = scalar_lea.vmem %s170, 64
      %1581 = vst.msk [vmem:[%s1580] sm:$0xff] %vm638, %v1576
      %1582 = vst.msk [vmem:[%s1580 + $0x8] sm:$0xff] %vm638, %v1577
      %1583 = vst.msk [vmem:[%s1580 + $0x10] sm:$0xff] %vm638, %v1578
      %1584 = vst.msk [vmem:[%s1580 + $0x18] sm:$0xff] %vm638, %v1579
      %s1585 = scalar_lea.vmem %s1, 384
      %v1586 = vld [vmem:[%s1585] sm:$0xff]
      %v1587 = vld [vmem:[%s1585 + $0x8] sm:$0xff]
      %v1588 = vld [vmem:[%s1585 + $0x10] sm:$0xff]
      %v1589 = vld [vmem:[%s1585 + $0x18] sm:$0xff]
      %s1590 = scalar_lea.vmem %s165, 256
      %v1591 = vld [vmem:[%s1590] sm:$0xff]
      %v1592 = vld [vmem:[%s1590 + $0x8] sm:$0xff]
      %v1593 = vld [vmem:[%s1590 + $0x10] sm:$0xff]
      %v1594 = vld [vmem:[%s1590 + $0x18] sm:$0xff]
      %s1595 = scalar_lea.vmem %s1, 416
      %v1596 = vld [vmem:[%s1595] sm:$0xff]
      %v1597 = vld [vmem:[%s1595 + $0x8] sm:$0xff]
      %v1598 = vld [vmem:[%s1595 + $0x10] sm:$0xff]
      %v1599 = vld [vmem:[%s1595 + $0x18] sm:$0xff]
      %v1600 = vld [vmem:[%s1119] sm:$0xff]
      %v1601 = vld [vmem:[%s1119 + $0x8] sm:$0xff]
      %v1602 = vld [vmem:[%s1119 + $0x10] sm:$0xff]
      %v1603 = vld [vmem:[%s1119 + $0x18] sm:$0xff]
      %v1605 = vsel %vm190, %v1596, 0
      %v1608 = vsel %vm190, %v1597, 0
      %v1611 = vsel %vm190, %v1598, 0
      %v1614 = vsel %vm190, %v1599, 0
      %1616 = vmatprep.subr.mxu0 0.0
      %1617 = vmatpush1.msra.mxu0 %v1600
      %1618 = vmatprep.subr.mxu0 0.0
      %1619 = vmatpush1.msra.mxu0 %v1601
      %1620 = vmatprep.subr.mxu0 0.0
      %1621 = vmatpush1.msra.mxu0 %v1602
      %1622 = vmatprep.subr.mxu0 0.0
      %1623 = vmatpush1.msra.mxu0 %v1603
      %1624 = vmatprep.subr.mxu0 0.0
      %1625 = vmatpush1.msra.mxu0 0.0
      %1626 = vmatprep.subr.mxu0 0.0
      %1627 = vmatpush1.msra.mxu0 0.0
      %1628 = vmatprep.subr.mxu0 0.0
      %1629 = vmatpush1.msra.mxu0 0.0
      %1630 = vmatprep.subr.mxu0 0.0
      %1631 = vmatpush1.msra.mxu0 0.0
      %1632 = vmatprep.subr.mxu0 0.0
      %1633 = vmatpush1.msra.mxu0 0.0
      %1634 = vmatprep.subr.mxu0 0.0
      %1635 = vmatpush1.msra.mxu0 0.0
      %1636 = vmatprep.subr.mxu0 0.0
      %1637 = vmatpush1.msra.mxu0 0.0
      %1638 = vmatprep.subr.mxu0 0.0
      %1639 = vmatpush1.msra.mxu0 0.0
      %1640 = vmatprep.subr.mxu0 0.0
      %1641 = vmatpush1.msra.mxu0 0.0
      %1642 = vmatprep.subr.mxu0 0.0
      %1643 = vmatpush1.msra.mxu0 0.0
      %1644 = vmatprep.subr.mxu0 0.0
      %1645 = vmatpush1.msra.mxu0 0.0
      %1646 = vmatprep.subr.mxu0 0.0
      %1647 = vmatpush1.msra.mxu0 0.0
      %1648 = vmatprep.subr.mxu0 0.0
      %1649 = vmatpush1.msra.mxu0 0.0
      %1650 = vmatprep.subr.mxu0 0.0
      %1651 = vmatpush1.msra.mxu0 0.0
      %1652 = vmatprep.subr.mxu0 0.0
      %1653 = vmatpush1.msra.mxu0 0.0
      %1654 = vmatprep.subr.mxu0 0.0
      %1655 = vmatpush1.msra.mxu0 0.0
      %1656 = vmatprep.subr.mxu0 0.0
      %1657 = vmatpush1.msra.mxu0 0.0
      %1658 = vmatprep.subr.mxu0 0.0
      %1659 = vmatpush1.msra.mxu0 0.0
      %1660 = vmatprep.subr.mxu0 0.0
      %1661 = vmatpush1.msra.mxu0 0.0
      %1662 = vmatprep.subr.mxu0 0.0
      %1663 = vmatpush1.msra.mxu0 0.0
      %1664 = vmatprep.subr.mxu0 0.0
      %1665 = vmatpush1.msra.mxu0 0.0
      %1666 = vmatprep.subr.mxu0 0.0
      %1667 = vmatpush1.msra.mxu0 0.0
      %1668 = vmatprep.subr.mxu0 0.0
      %1669 = vmatpush1.msra.mxu0 0.0
      %1670 = vmatprep.subr.mxu0 0.0
      %1671 = vmatpush1.msra.mxu0 0.0
      %1672 = vmatprep.subr.mxu0 0.0
      %1673 = vmatpush1.msra.mxu0 0.0
      %1674 = vmatprep.subr.mxu0 0.0
      %1675 = vmatpush1.msra.mxu0 0.0
      %1676 = vmatprep.subr.mxu0 0.0
      %1677 = vmatpush1.msra.mxu0 0.0
      %1678 = vmatprep.subr.mxu0 0.0
      %1679 = vmatpush1.msra.mxu0 0.0
      %1680 = vmatprep.mubr.f32.mxu0 0.0
      %1681 = vmatmul.mubr.f32.gmra.mrb[0].mxu0 %v1605
      %v1682 = vpop.f32.mrb[0].mxu0
      %v1683 = vadd.f32 0.0, %v1682
      %v1684 = vpop.f32.mrb[0].mxu0
      %1685 = vmatprep.mubr.f32.mxu0 0.0
      %1686 = vmatmul.mubr.f32.gmra.mrb[0].mxu0 %v1608
      %v1687 = vpop.f32.mrb[0].mxu0
      %v1688 = vadd.f32 0.0, %v1687
      %v1689 = vpop.f32.mrb[0].mxu0
      %1690 = vmatprep.mubr.f32.mxu0 0.0
      %1691 = vmatmul.mubr.f32.gmra.mrb[0].mxu0 %v1611
      %v1692 = vpop.f32.mrb[0].mxu0
      %v1693 = vadd.f32 0.0, %v1692
      %v1694 = vpop.f32.mrb[0].mxu0
      %1695 = vmatprep.mubr.f32.mxu0 0.0
      %1696 = vmatmul.mubr.f32.gmra.mrb[0].mxu0 %v1614
      %v1697 = vpop.f32.mrb[0].mxu0
      %v1698 = vadd.f32 0.0, %v1697
      %v1699 = vpop.f32.mrb[0].mxu0
      %1700 = vdwg.mxu0
      %v1702 = vsel %vm190, %v1586, 0
      %v1705 = vsel %vm190, %v1587, 0
      %v1708 = vsel %vm190, %v1588, 0
      %v1711 = vsel %vm190, %v1589, 0
      %1713 = vmatprep.subr.mxu0 0.0
      %1714 = vmatpush1.msra.mxu0 %v1591
      %1715 = vmatprep.subr.mxu0 0.0
      %1716 = vmatpush1.msra.mxu0 %v1592
      %1717 = vmatprep.subr.mxu0 0.0
      %1718 = vmatpush1.msra.mxu0 %v1593
      %1719 = vmatprep.subr.mxu0 0.0
      %1720 = vmatpush1.msra.mxu0 %v1594
      %1721 = vmatprep.subr.mxu0 0.0
      %1722 = vmatpush1.msra.mxu0 0.0
      %1723 = vmatprep.subr.mxu0 0.0
      %1724 = vmatpush1.msra.mxu0 0.0
      %1725 = vmatprep.subr.mxu0 0.0
      %1726 = vmatpush1.msra.mxu0 0.0
      %1727 = vmatprep.subr.mxu0 0.0
      %1728 = vmatpush1.msra.mxu0 0.0
      %1729 = vmatprep.subr.mxu0 0.0
      %1730 = vmatpush1.msra.mxu0 0.0
      %1731 = vmatprep.subr.mxu0 0.0
      %1732 = vmatpush1.msra.mxu0 0.0
      %1733 = vmatprep.subr.mxu0 0.0
      %1734 = vmatpush1.msra.mxu0 0.0
      %1735 = vmatprep.subr.mxu0 0.0
      %1736 = vmatpush1.msra.mxu0 0.0
      %1737 = vmatprep.subr.mxu0 0.0
      %1738 = vmatpush1.msra.mxu0 0.0
      %1739 = vmatprep.subr.mxu0 0.0
      %1740 = vmatpush1.msra.mxu0 0.0
      %1741 = vmatprep.subr.mxu0 0.0
      %1742 = vmatpush1.msra.mxu0 0.0
      %1743 = vmatprep.subr.mxu0 0.0
      %1744 = vmatpush1.msra.mxu0 0.0
      %1745 = vmatprep.subr.mxu0 0.0
      %1746 = vmatpush1.msra.mxu0 0.0
      %1747 = vmatprep.subr.mxu0 0.0
      %1748 = vmatpush1.msra.mxu0 0.0
      %1749 = vmatprep.subr.mxu0 0.0
      %1750 = vmatpush1.msra.mxu0 0.0
      %1751 = vmatprep.subr.mxu0 0.0
      %1752 = vmatpush1.msra.mxu0 0.0
      %1753 = vmatprep.subr.mxu0 0.0
      %1754 = vmatpush1.msra.mxu0 0.0
      %1755 = vmatprep.subr.mxu0 0.0
      %1756 = vmatpush1.msra.mxu0 0.0
      %1757 = vmatprep.subr.mxu0 0.0
      %1758 = vmatpush1.msra.mxu0 0.0
      %1759 = vmatprep.subr.mxu0 0.0
      %1760 = vmatpush1.msra.mxu0 0.0
      %1761 = vmatprep.subr.mxu0 0.0
      %1762 = vmatpush1.msra.mxu0 0.0
      %1763 = vmatprep.subr.mxu0 0.0
      %1764 = vmatpush1.msra.mxu0 0.0
      %1765 = vmatprep.subr.mxu0 0.0
      %1766 = vmatpush1.msra.mxu0 0.0
      %1767 = vmatprep.subr.mxu0 0.0
      %1768 = vmatpush1.msra.mxu0 0.0
      %1769 = vmatprep.subr.mxu0 0.0
      %1770 = vmatpush1.msra.mxu0 0.0
      %1771 = vmatprep.subr.mxu0 0.0
      %1772 = vmatpush1.msra.mxu0 0.0
      %1773 = vmatprep.subr.mxu0 0.0
      %1774 = vmatpush1.msra.mxu0 0.0
      %1775 = vmatprep.subr.mxu0 0.0
      %1776 = vmatpush1.msra.mxu0 0.0
      %1777 = vmatprep.mubr.f32.mxu0 0.0
      %1778 = vmatmul.mubr.f32.gmra.mrb[0].mxu0 %v1702
      %v1779 = vpop.f32.mrb[0].mxu0
      %v1780 = vadd.f32 %v1683, %v1779
      %v1781 = vpop.f32.mrb[0].mxu0
      %1782 = vmatprep.mubr.f32.mxu0 0.0
      %1783 = vmatmul.mubr.f32.gmra.mrb[0].mxu0 %v1705
      %v1784 = vpop.f32.mrb[0].mxu0
      %v1785 = vadd.f32 %v1688, %v1784
      %v1786 = vpop.f32.mrb[0].mxu0
      %1787 = vmatprep.mubr.f32.mxu0 0.0
      %1788 = vmatmul.mubr.f32.gmra.mrb[0].mxu0 %v1708
      %v1789 = vpop.f32.mrb[0].mxu0
      %v1790 = vadd.f32 %v1693, %v1789
      %v1791 = vpop.f32.mrb[0].mxu0
      %1792 = vmatprep.mubr.f32.mxu0 0.0
      %1793 = vmatmul.mubr.f32.gmra.mrb[0].mxu0 %v1711
      %v1794 = vpop.f32.mrb[0].mxu0
      %v1795 = vadd.f32 %v1698, %v1794
      %v1796 = vpop.f32.mrb[0].mxu0
      %1797 = vdwg.mxu0
      %s1798 = scalar_lea.vmem %s1, 448
      %v1799 = vld [vmem:[%s1798] sm:$0xff]
      %v1800 = vld [vmem:[%s1798 + $0x8] sm:$0xff]
      %v1801 = vld [vmem:[%s1798 + $0x10] sm:$0xff]
      %v1802 = vld [vmem:[%s1798 + $0x18] sm:$0xff]
      %v1803 = vld [vmem:[%s648] sm:$0xff]
      %v1804 = vld [vmem:[%s648 + $0x8] sm:$0xff]
      %v1805 = vld [vmem:[%s648 + $0x10] sm:$0xff]
      %v1806 = vld [vmem:[%s648 + $0x18] sm:$0xff]
      %v1808 = vsel %vm190, %v1799, 0
      %v1811 = vsel %vm190, %v1800, 0
      %v1814 = vsel %vm190, %v1801, 0
      %v1817 = vsel %vm190, %v1802, 0
      %1819 = vmatprep.subr.mxu0 0.0
      %1820 = vmatpush1.msra.mxu0 %v1803
      %1821 = vmatprep.subr.mxu0 0.0
      %1822 = vmatpush1.msra.mxu0 %v1804
      %1823 = vmatprep.subr.mxu0 0.0
      %1824 = vmatpush1.msra.mxu0 %v1805
      %1825 = vmatprep.subr.mxu0 0.0
      %1826 = vmatpush1.msra.mxu0 %v1806
      %1827 = vmatprep.subr.mxu0 0.0
      %1828 = vmatpush1.msra.mxu0 0.0
      %1829 = vmatprep.subr.mxu0 0.0
      %1830 = vmatpush1.msra.mxu0 0.0
      %1831 = vmatprep.subr.mxu0 0.0
      %1832 = vmatpush1.msra.mxu0 0.0
      %1833 = vmatprep.subr.mxu0 0.0
      %1834 = vmatpush1.msra.mxu0 0.0
      %1835 = vmatprep.subr.mxu0 0.0
      %1836 = vmatpush1.msra.mxu0 0.0
      %1837 = vmatprep.subr.mxu0 0.0
      %1838 = vmatpush1.msra.mxu0 0.0
      %1839 = vmatprep.subr.mxu0 0.0
      %1840 = vmatpush1.msra.mxu0 0.0
      %1841 = vmatprep.subr.mxu0 0.0
      %1842 = vmatpush1.msra.mxu0 0.0
      %1843 = vmatprep.subr.mxu0 0.0
      %1844 = vmatpush1.msra.mxu0 0.0
      %1845 = vmatprep.subr.mxu0 0.0
      %1846 = vmatpush1.msra.mxu0 0.0
      %1847 = vmatprep.subr.mxu0 0.0
      %1848 = vmatpush1.msra.mxu0 0.0
      %1849 = vmatprep.subr.mxu0 0.0
      %1850 = vmatpush1.msra.mxu0 0.0
      %1851 = vmatprep.subr.mxu0 0.0
      %1852 = vmatpush1.msra.mxu0 0.0
      %1853 = vmatprep.subr.mxu0 0.0
      %1854 = vmatpush1.msra.mxu0 0.0
      %1855 = vmatprep.subr.mxu0 0.0
      %1856 = vmatpush1.msra.mxu0 0.0
      %1857 = vmatprep.subr.mxu0 0.0
      %1858 = vmatpush1.msra.mxu0 0.0
      %1859 = vmatprep.subr.mxu0 0.0
      %1860 = vmatpush1.msra.mxu0 0.0
      %1861 = vmatprep.subr.mxu0 0.0
      %1862 = vmatpush1.msra.mxu0 0.0
      %1863 = vmatprep.subr.mxu0 0.0
      %1864 = vmatpush1.msra.mxu0 0.0
      %1865 = vmatprep.subr.mxu0 0.0
      %1866 = vmatpush1.msra.mxu0 0.0
      %1867 = vmatprep.subr.mxu0 0.0
      %1868 = vmatpush1.msra.mxu0 0.0
      %1869 = vmatprep.subr.mxu0 0.0
      %1870 = vmatpush1.msra.mxu0 0.0
      %1871 = vmatprep.subr.mxu0 0.0
      %1872 = vmatpush1.msra.mxu0 0.0
      %1873 = vmatprep.subr.mxu0 0.0
      %1874 = vmatpush1.msra.mxu0 0.0
      %1875 = vmatprep.subr.mxu0 0.0
      %1876 = vmatpush1.msra.mxu0 0.0
      %1877 = vmatprep.subr.mxu0 0.0
      %1878 = vmatpush1.msra.mxu0 0.0
      %1879 = vmatprep.subr.mxu0 0.0
      %1880 = vmatpush1.msra.mxu0 0.0
      %1881 = vmatprep.subr.mxu0 0.0
      %1882 = vmatpush1.msra.mxu0 0.0
      %1883 = vmatprep.mubr.f32.mxu0 0.0
      %1884 = vmatmul.mubr.f32.gmra.mrb[0].mxu0 %v1808
      %v1885 = vpop.f32.mrb[0].mxu0
      %v1886 = vadd.f32 0.0, %v1885
      %v1887 = vpop.f32.mrb[0].mxu0
      %1888 = vmatprep.mubr.f32.mxu0 0.0
      %1889 = vmatmul.mubr.f32.gmra.mrb[0].mxu0 %v1811
      %v1890 = vpop.f32.mrb[0].mxu0
      %v1891 = vadd.f32 0.0, %v1890
      %v1892 = vpop.f32.mrb[0].mxu0
      %1893 = vmatprep.mubr.f32.mxu0 0.0
      %1894 = vmatmul.mubr.f32.gmra.mrb[0].mxu0 %v1814
      %v1895 = vpop.f32.mrb[0].mxu0
      %v1896 = vadd.f32 0.0, %v1895
      %v1897 = vpop.f32.mrb[0].mxu0
      %1898 = vmatprep.mubr.f32.mxu0 0.0
      %1899 = vmatmul.mubr.f32.gmra.mrb[0].mxu0 %v1817
      %v1900 = vpop.f32.mrb[0].mxu0
      %v1901 = vadd.f32 0.0, %v1900
      %v1902 = vpop.f32.mrb[0].mxu0
      %1903 = vdwg.mxu0
      %v1904 = vadd.f32 %v1780, %v1886
      %v1905 = vadd.f32 %v1785, %v1891
      %v1906 = vadd.f32 %v1790, %v1896
      %v1907 = vadd.f32 %v1795, %v1901
      %s1908 = scalar_lea.vmem %s1, 480
      %v1909 = vld [vmem:[%s1908] sm:$0xff]
      %v1910 = vld [vmem:[%s1908 + $0x8] sm:$0xff]
      %v1911 = vld [vmem:[%s1908 + $0x10] sm:$0xff]
      %v1912 = vld [vmem:[%s1908 + $0x18] sm:$0xff]
      %v1913 = vld [vmem:[%s175] sm:$0xff]
      %v1914 = vld [vmem:[%s175 + $0x8] sm:$0xff]
      %v1915 = vld [vmem:[%s175 + $0x10] sm:$0xff]
      %v1916 = vld [vmem:[%s175 + $0x18] sm:$0xff]
      %v1918 = vsel %vm190, %v1909, 0
      %v1921 = vsel %vm190, %v1910, 0
      %v1924 = vsel %vm190, %v1911, 0
      %v1927 = vsel %vm190, %v1912, 0
      %1929 = vmatprep.subr.mxu0 0.0
      %1930 = vmatpush1.msra.mxu0 %v1913
      %1931 = vmatprep.subr.mxu0 0.0
      %1932 = vmatpush1.msra.mxu0 %v1914
      %1933 = vmatprep.subr.mxu0 0.0
      %1934 = vmatpush1.msra.mxu0 %v1915
      %1935 = vmatprep.subr.mxu0 0.0
      %1936 = vmatpush1.msra.mxu0 %v1916
      %1937 = vmatprep.subr.mxu0 0.0
      %1938 = vmatpush1.msra.mxu0 0.0
      %1939 = vmatprep.subr.mxu0 0.0
      %1940 = vmatpush1.msra.mxu0 0.0
      %1941 = vmatprep.subr.mxu0 0.0
      %1942 = vmatpush1.msra.mxu0 0.0
      %1943 = vmatprep.subr.mxu0 0.0
      %1944 = vmatpush1.msra.mxu0 0.0
      %1945 = vmatprep.subr.mxu0 0.0
      %1946 = vmatpush1.msra.mxu0 0.0
      %1947 = vmatprep.subr.mxu0 0.0
      %1948 = vmatpush1.msra.mxu0 0.0
      %1949 = vmatprep.subr.mxu0 0.0
      %1950 = vmatpush1.msra.mxu0 0.0
      %1951 = vmatprep.subr.mxu0 0.0
      %1952 = vmatpush1.msra.mxu0 0.0
      %1953 = vmatprep.subr.mxu0 0.0
      %1954 = vmatpush1.msra.mxu0 0.0
      %1955 = vmatprep.subr.mxu0 0.0
      %1956 = vmatpush1.msra.mxu0 0.0
      %1957 = vmatprep.subr.mxu0 0.0
      %1958 = vmatpush1.msra.mxu0 0.0
      %1959 = vmatprep.subr.mxu0 0.0
      %1960 = vmatpush1.msra.mxu0 0.0
      %1961 = vmatprep.subr.mxu0 0.0
      %1962 = vmatpush1.msra.mxu0 0.0
      %1963 = vmatprep.subr.mxu0 0.0
      %1964 = vmatpush1.msra.mxu0 0.0
      %1965 = vmatprep.subr.mxu0 0.0
      %1966 = vmatpush1.msra.mxu0 0.0
      %1967 = vmatprep.subr.mxu0 0.0
      %1968 = vmatpush1.msra.mxu0 0.0
      %1969 = vmatprep.subr.mxu0 0.0
      %1970 = vmatpush1.msra.mxu0 0.0
      %1971 = vmatprep.subr.mxu0 0.0
      %1972 = vmatpush1.msra.mxu0 0.0
      %1973 = vmatprep.subr.mxu0 0.0
      %1974 = vmatpush1.msra.mxu0 0.0
      %1975 = vmatprep.subr.mxu0 0.0
      %1976 = vmatpush1.msra.mxu0 0.0
      %1977 = vmatprep.subr.mxu0 0.0
      %1978 = vmatpush1.msra.mxu0 0.0
      %1979 = vmatprep.subr.mxu0 0.0
      %1980 = vmatpush1.msra.mxu0 0.0
      %1981 = vmatprep.subr.mxu0 0.0
      %1982 = vmatpush1.msra.mxu0 0.0
      %1983 = vmatprep.subr.mxu0 0.0
      %1984 = vmatpush1.msra.mxu0 0.0
      %1985 = vmatprep.subr.mxu0 0.0
      %1986 = vmatpush1.msra.mxu0 0.0
      %1987 = vmatprep.subr.mxu0 0.0
      %1988 = vmatpush1.msra.mxu0 0.0
      %1989 = vmatprep.subr.mxu0 0.0
      %1990 = vmatpush1.msra.mxu0 0.0
      %1991 = vmatprep.subr.mxu0 0.0
      %1992 = vmatpush1.msra.mxu0 0.0
      %1993 = vmatprep.mubr.f32.mxu0 0.0
      %1994 = vmatmul.mubr.f32.gmra.mrb[0].mxu0 %v1918
      %v1995 = vpop.f32.mrb[0].mxu0
      %v1996 = vadd.f32 0.0, %v1995
      %v1997 = vpop.f32.mrb[0].mxu0
      %1998 = vmatprep.mubr.f32.mxu0 0.0
      %1999 = vmatmul.mubr.f32.gmra.mrb[0].mxu0 %v1921
      %v2000 = vpop.f32.mrb[0].mxu0
      %v2001 = vadd.f32 0.0, %v2000
      %v2002 = vpop.f32.mrb[0].mxu0
      %2003 = vmatprep.mubr.f32.mxu0 0.0
      %2004 = vmatmul.mubr.f32.gmra.mrb[0].mxu0 %v1924
      %v2005 = vpop.f32.mrb[0].mxu0
      %v2006 = vadd.f32 0.0, %v2005
      %v2007 = vpop.f32.mrb[0].mxu0
      %2008 = vmatprep.mubr.f32.mxu0 0.0
      %2009 = vmatmul.mubr.f32.gmra.mrb[0].mxu0 %v1927
      %v2010 = vpop.f32.mrb[0].mxu0
      %v2011 = vadd.f32 0.0, %v2010
      %v2012 = vpop.f32.mrb[0].mxu0
      %2013 = vdwg.mxu0
      %v2014 = vadd.f32 %v1904, %v1996
      %v2015 = vadd.f32 %v1905, %v2001
      %v2016 = vadd.f32 %v1906, %v2006
      %v2017 = vadd.f32 %v1907, %v2011
      %v2018 = vld [vmem:[%s2] sm:$0xff]
      %v2019 = vld [vmem:[%s2 + $0x8] sm:$0xff]
      %v2020 = vld [vmem:[%s2 + $0x10] sm:$0xff]
      %v2021 = vld [vmem:[%s2 + $0x18] sm:$0xff]
      %2023 = vset.pattern.permute.xlu0 0
      %2024 = vperm.xlu0 %2023, %v2018
      %v2025 = vpop.permute.xlu0 %2024
      %2028 = vset.pattern.permute.xlu0 0
      %2029 = vperm.xlu0 %2028, %v2019
      %v2030 = vpop.permute.xlu0 %2029
      %2033 = vset.pattern.permute.xlu0 0
      %2034 = vperm.xlu0 %2033, %v2020
      %v2035 = vpop.permute.xlu0 %2034
      %2038 = vset.pattern.permute.xlu0 0
      %2039 = vperm.xlu0 %2038, %v2021
      %v2040 = vpop.permute.xlu0 %2039
      %v2042 = vadd.f32 %v2014, %v2025
      %v2043 = vadd.f32 %v2015, %v2030
      %v2044 = vadd.f32 %v2016, %v2035
      %v2045 = vadd.f32 %v2017, %v2040
      %v2046 = vmax.f32 %v2042, 0.0
      %v2047 = vmax.f32 %v2043, 0.0
      %v2048 = vmax.f32 %v2044, 0.0
      %v2049 = vmax.f32 %v2045, 0.0
      %s2050 = scalar_lea.vmem %s170, 96
      %2051 = vst.msk [vmem:[%s2050] sm:$0xff] %vm638, %v2046
      %2052 = vst.msk [vmem:[%s2050 + $0x8] sm:$0xff] %vm638, %v2047
      %2053 = vst.msk [vmem:[%s2050 + $0x10] sm:$0xff] %vm638, %v2048
      %2054 = vst.msk [vmem:[%s2050 + $0x18] sm:$0xff] %vm638, %v2049
      %p2055 = scmp.lt.s32.totalorder %s14, 1
      %s2056 = scalar_select %p2055, %s14, 1
      %s2057 = smul.addr %s2056, 16
      %s2058 = smul.addr %s2057, 8
      %s2059 = scalar_lea.vmem %s3, %s2058
      // Predicated region
      $region33: #{decoder_burgess_forward.5} parent=31 // pred_check
        %p2060 = pneg %p100
      $region34: #{decoder_burgess_forward.5} parent=31 // pred_check_branch
        %2062 = sbr.rel (%p2060) target = $region36
      $region35: #{decoder_burgess_forward.5} parent=31 // pred_region
        _
      $region36: #{decoder_burgess_forward.5} parent=31 // pred_fallthru
        _
    $region32: #{decoder_burgess_forward.5} parent=5 // pred_fallthru
      _
    %p2063 = scmp.le.s32.totalorder 2, %s9
    // Predicated region
    $region37: #{decoder_burgess_forward.5} parent=5 // pred_check
      %p2064 = pneg %p2063
    $region38: #{decoder_burgess_forward.5} parent=5 // pred_check_branch
      %2066 = sbr.rel (%p2064) target = $region40
    $region39: #{decoder_burgess_forward.5} parent=5 // pred_region
      %s2067 = ssub.s32 %s9, 2
      // Predicated region
      $region41: #{decoder_burgess_forward.5} parent=39 // pred_check
        %p2068 = pneg %p106
      $region42: #{decoder_burgess_forward.5} parent=39 // pred_check_branch
        %2070 = sbr.rel (%p2068) target = $region44
      $region43: #{decoder_burgess_forward.5} parent=39 // pred_region
        %p2071 = scmp.lt.s32.totalorder %s15, 1
        %s2072 = scalar_select %p2071, %s15, 1
        %s2073 = smul.addr %s2072, 16
        %s2074 = smul.addr %s2073, 8
        %s2075 = scalar_lea.vmem %s3, %s2074
      $region44: #{decoder_burgess_forward.5} parent=39 // pred_fallthru
        _
    $region40: #{decoder_burgess_forward.5} parent=5 // pred_fallthru
      _
  $region6: #{decoder_burgess_forward.5} parent=0 // loop_footer
    %s13 = sadd.s32 1, %s9
  $region7: #{decoder_burgess_forward.5} parent=0 // loop_footer_branch
    %8 = sbr.rel target = $region3
  $region8: #{decoder_burgess_forward.5} parent=0 // loop_exit
    _

// kernel: decoder_burgess_forward.6
$region0: #{decoder_burgess_forward.6}
  #allocation0 [shape = 'u32[]', space=smem, size = 0x4, offset = 0x4, fixed_abs, tag = 'smem constant byte address 0x4 - core index']
  #allocation1 [shape = 'u32[144,128]{1,0:T(1,128)}', space=vmem, size = 0x12000, scoped, tag = 'internal scratch']
  %s0 = inlined_call_operand.vmem [shape: f32[2,9,32,64], index: 0, kind: input, shape index: {}]
  %s1 = inlined_call_operand.vmem [shape: f32[16,32,32], index: 1, kind: input, shape index: {}]
  %s2 = inlined_call_operand.vmem [shape: f32[32,1], index: 2, kind: input, shape index: {}]
  %s3 = inlined_call_operand.vmem [shape: f32[2,4,32,64], index: 3, kind: output, shape index: {}]
  %s4 = sld [smem:[#allocation0]]
  $region45: #{decoder_burgess_forward.6} parent=0
    _
  %s6 = ssub.s32 1, %s4
  %s7 = scalar_select 0, %s6, %s4
  loop: start=0, step=1, limit=4
  $region2: #{decoder_burgess_forward.6} parent=0 // loop_pre_header
    _
  $region3: #{decoder_burgess_forward.6} parent=0 // loop_header
    %s9 = sphi 0, %s13
    %p10 = scmp.ge.s32.totalorder %s9, 4
    %s19 = sphi 0, %s21
    %s22 = sphi 0, %s19
    %s23 = sphi 0, %s22
    %s39 = sphi 0, %s23
    %s43 = sphi 0, %s43
    %s45 = sphi 0, %s43
    %s46 = sphi 0, %s45
    %s60 = sphi 0, %s46
    %s64 = sphi 0, %s64
    %s66 = sphi 0, %s64
    %s67 = sphi 0, %s66
    %s81 = sphi 0, %s67
    %s87 = sphi 0, %s89
    %s90 = sphi 0, %s87
    %s91 = sphi 0, %s90
    %s107 = sphi 0, %s91
  $region4: #{decoder_burgess_forward.6} parent=0 // loop_header_branch
    %12 = sbr.rel (%p10) target = $region8
  $region5: #{decoder_burgess_forward.6} parent=0 // loop_body
    %s14 = ssub.s32 %s9, 1
    %s15 = ssub.s32 %s9, 2
    %s16 = sadd.s32 %s9, 1
    %s17 = ssub.s32 %s9, %s16
    %p18 = scmp.eq.s32.totalorder %s17, 0
    %s20 = sadd.s32 %s19, 1
    %s21 = scalar_select %p18, %s19, %s20
    %p24 = pneg %p18
    %p25 = scmp.eq.s32.totalorder %s9, 1
    %p26 = por %p24, %p25
    %p27 = scmp.ne.s32.totalorder %s19, %s22
    %p28 = scmp.eq.s32.totalorder %s9, 0
    %p29 = por %p27, %p28
    %p30 = scmp.ne.s32.totalorder %s19, %s22
    %p31 = scmp.eq.s32.totalorder %s14, 1
    %p32 = por %p30, %p31
    %p33 = scmp.ne.s32.totalorder %s22, %s23
    %p34 = scmp.eq.s32.totalorder %s14, 0
    %p35 = por %p33, %p34
    %p36 = scmp.ne.s32.totalorder %s22, %s23
    %p37 = scmp.eq.s32.totalorder %s15, 1
    %p38 = por %p36, %p37
    %p40 = scmp.ne.s32.totalorder %s23, %s39
    %p41 = scmp.eq.s32.totalorder %s15, 0
    %p42 = por %p40, %p41
    %s44 = sadd.s32 %s43, 1
    %p47 = scmp.eq.s32.totalorder %s9, 1
    %p48 = scmp.ne.s32.totalorder %s43, %s45
    %p49 = scmp.eq.s32.totalorder %s9, 0
    %p50 = por %p48, %p49
    %p51 = scmp.ne.s32.totalorder %s43, %s45
    %p52 = scmp.eq.s32.totalorder %s14, 1
    %p53 = por %p51, %p52
    %p54 = scmp.ne.s32.totalorder %s45, %s46
    %p55 = scmp.eq.s32.totalorder %s14, 0
    %p56 = por %p54, %p55
    %p57 = scmp.ne.s32.totalorder %s45, %s46
    %p58 = scmp.eq.s32.totalorder %s15, 1
    %p59 = por %p57, %p58
    %p61 = scmp.ne.s32.totalorder %s46, %s60
    %p62 = scmp.eq.s32.totalorder %s15, 0
    %p63 = por %p61, %p62
    %s65 = sadd.s32 %s64, 1
    %p68 = scmp.eq.s32.totalorder %s9, 1
    %p69 = scmp.ne.s32.totalorder %s64, %s66
    %p70 = scmp.eq.s32.totalorder %s9, 0
    %p71 = por %p69, %p70
    %p72 = scmp.ne.s32.totalorder %s64, %s66
    %p73 = scmp.eq.s32.totalorder %s14, 1
    %p74 = por %p72, %p73
    %p75 = scmp.ne.s32.totalorder %s66, %s67
    %p76 = scmp.eq.s32.totalorder %s14, 0
    %p77 = por %p75, %p76
    %p78 = scmp.ne.s32.totalorder %s66, %s67
    %p79 = scmp.eq.s32.totalorder %s15, 1
    %p80 = por %p78, %p79
    %p82 = scmp.ne.s32.totalorder %s67, %s81
    %p83 = scmp.eq.s32.totalorder %s15, 0
    %p84 = por %p82, %p83
    %s85 = ssub.s32 %s9, %s16
    %p86 = scmp.eq.s32.totalorder %s85, 0
    %s88 = sadd.s32 %s87, 1
    %s89 = scalar_select %p86, %s87, %s88
    %p92 = pneg %p86
    %p93 = scmp.eq.s32.totalorder %s9, 1
    %p94 = por %p92, %p93
    %p95 = scmp.ne.s32.totalorder %s87, %s90
    %p96 = scmp.eq.s32.totalorder %s9, 0
    %p97 = por %p95, %p96
    %p98 = scmp.ne.s32.totalorder %s87, %s90
    %p99 = scmp.eq.s32.totalorder %s14, 1
    %p100 = por %p98, %p99
    %p101 = scmp.ne.s32.totalorder %s90, %s91
    %p102 = scmp.eq.s32.totalorder %s14, 0
    %p103 = por %p101, %p102
    %p104 = scmp.ne.s32.totalorder %s90, %s91
    %p105 = scmp.eq.s32.totalorder %s15, 1
    %p106 = por %p104, %p105
    %p108 = scmp.ne.s32.totalorder %s91, %s107
    %p109 = scmp.eq.s32.totalorder %s15, 0
    %p110 = por %p108, %p109
    %p111 = scmp.le.s32.totalorder 1, %s9
    %p112 = scmp.lt.s32.totalorder %s9, 3
    %p113 = pnand %p111, %p112
    %p114 = pneg %p113
    // Predicated region
    $region9: #{decoder_burgess_forward.6} parent=5 // pred_check
      _
    $region10: #{decoder_burgess_forward.6} parent=5 // pred_check_branch
      %116 = sbr.rel (%p113) target = $region12
    $region11: #{decoder_burgess_forward.6} parent=5 // pred_region
      %s117 = ssub.s32 %s9, 1
      // Predicated region
      $region13: #{decoder_burgess_forward.6} parent=11 // pred_check
        %p118 = pneg %p56
      $region14: #{decoder_burgess_forward.6} parent=11 // pred_check_branch
        %120 = sbr.rel (%p118) target = $region16
      $region15: #{decoder_burgess_forward.6} parent=11 // pred_region
        _
      $region16: #{decoder_burgess_forward.6} parent=11 // pred_fallthru
        _
      // Predicated region
      $region17: #{decoder_burgess_forward.6} parent=11 // pred_check
        %p121 = pneg %p77
      $region18: #{decoder_burgess_forward.6} parent=11 // pred_check_branch
        %123 = sbr.rel (%p121) target = $region20
      $region19: #{decoder_burgess_forward.6} parent=11 // pred_region
        _
      $region20: #{decoder_burgess_forward.6} parent=11 // pred_fallthru
        _
    $region12: #{decoder_burgess_forward.6} parent=5 // pred_fallthru
      _
    %p124 = scmp.lt.s32.totalorder %s9, 2
    // Predicated region
    $region21: #{decoder_burgess_forward.6} parent=5 // pred_check
      %p125 = pneg %p124
    $region22: #{decoder_burgess_forward.6} parent=5 // pred_check_branch
      %127 = sbr.rel (%p125) target = $region24
    $region23: #{decoder_burgess_forward.6} parent=5 // pred_region
      // Predicated region
      $region25: #{decoder_burgess_forward.6} parent=23 // pred_check
        %p128 = pneg %p29
      $region26: #{decoder_burgess_forward.6} parent=23 // pred_check_branch
        %130 = sbr.rel (%p128) target = $region28
      $region27: #{decoder_burgess_forward.6} parent=23 // pred_region
        %p131 = scmp.lt.s32.totalorder %s9, 1
        %s132 = scalar_select %p131, %s9, 1
        %s133 = smul.addr %s132, 36
        %s134 = smul.addr %s133, 8
        %s135 = scalar_lea.vmem %s0, %s134
      $region28: #{decoder_burgess_forward.6} parent=23 // pred_fallthru
        _
    $region24: #{decoder_burgess_forward.6} parent=5 // pred_fallthru
      _
    %p136 = scmp.le.s32.totalorder 1, %s9
    %p137 = scmp.lt.s32.totalorder %s9, 3
    %p138 = pnand %p136, %p137
    %p139 = pneg %p138
    // Predicated region
    $region29: #{decoder_burgess_forward.6} parent=5 // pred_check
      _
    $region30: #{decoder_burgess_forward.6} parent=5 // pred_check_branch
      %141 = sbr.rel (%p138) target = $region32
    $region31: #{decoder_burgess_forward.6} parent=5 // pred_region
      %s142 = ssub.s32 %s9, 1
      %p143 = scmp.lt.s32.totalorder %s14, 1
      %s144 = scalar_select %p143, %s14, 1
      %s145 = smul.addr %s144, 36
      %s146 = smul.addr %s145, 8
      %s147 = scalar_lea.vmem %s0, %s146
      %p148 = pneg %p35
      %p149 = pneg %p32
      %p150 = pneg %p56
      %p151 = pneg %p53
      %p152 = pneg %p77
      %p153 = pneg %p74
      %p154 = pneg %p103
      %p155 = pneg %p100
      %p156 = scmp.lt.s32.totalorder %s14, 1
      %s157 = scalar_select %p156, %s14, 1
      %s158 = smul.addr %s157, 16
      %s159 = smul.addr %s158, 8
      %s160 = scalar_lea.vmem %s3, %s159
      %p161 = scmp.lt.s32.totalorder %s14, 1
      %s162 = scalar_select %p161, %s14, 1
      %s163 = smul.addr %s162, 36
      %s164 = smul.addr %s163, 8
      %s165 = scalar_lea.vmem %s0, %s164
      %p166 = scmp.lt.s32.totalorder %s14, 1
      %s167 = scalar_select %p166, %s14, 1
      %s168 = smul.addr %s167, 16
      %s169 = smul.addr %s168, 8
      %s170 = scalar_lea.vmem %s3, %s169
      %v171 = vld [vmem:[%s1] sm:$0xff]
      %v172 = vld [vmem:[%s1 + $0x8] sm:$0xff]
      %v173 = vld [vmem:[%s1 + $0x10] sm:$0xff]
      %v174 = vld [vmem:[%s1 + $0x18] sm:$0xff]
      %s175 = scalar_lea.vmem %s165, 128
      %v176 = vld [vmem:[%s175] sm:$0xff]
      %v177 = vld [vmem:[%s175 + $0x8] sm:$0xff]
      %v178 = vld [vmem:[%s175 + $0x10] sm:$0xff]
      %v179 = vld [vmem:[%s175 + $0x18] sm:$0xff]
      %s180 = scalar_lea.vmem %s1, 32
      %v181 = vld [vmem:[%s180] sm:$0xff]
      %v182 = vld [vmem:[%s180 + $0x8] sm:$0xff]
      %v183 = vld [vmem:[%s180 + $0x10] sm:$0xff]
      %v184 = vld [vmem:[%s180 + $0x18] sm:$0xff]
      %s185 = scalar_lea.vmem %s165, 96
      %v186 = vld [vmem:[%s185] sm:$0xff]
      %v187 = vld [vmem:[%s185 + $0x8] sm:$0xff]
      %v188 = vld [vmem:[%s185 + $0x10] sm:$0xff]
      %v189 = vld [vmem:[%s185 + $0x18] sm:$0xff]
      %vm190 = vcmask 261120
      %v192 = vsel %vm190, %v181, 0
      %v195 = vsel %vm190, %v182, 0
      %v198 = vsel %vm190, %v183, 0
      %v201 = vsel %vm190, %v184, 0
      %203 = vmatprep.subr.mxu0 0.0
      %204 = vmatpush1.msra.mxu0 %v186
      %205 = vmatprep.subr.mxu0 0.0
      %206 = vmatpush1.msra.mxu0 %v187
      %207 = vmatprep.subr.mxu0 0.0
      %208 = vmatpush1.msra.mxu0 %v188
      %209 = vmatprep.subr.mxu0 0.0
      %210 = vmatpush1.msra.mxu0 %v189
      %211 = vmatprep.subr.mxu0 0.0
      %212 = vmatpush1.msra.mxu0 0.0
      %213 = vmatprep.subr.mxu0 0.0
      %214 = vmatpush1.msra.mxu0 0.0
      %215 = vmatprep.subr.mxu0 0.0
      %216 = vmatpush1.msra.mxu0 0.0
      %217 = vmatprep.subr.mxu0 0.0
      %218 = vmatpush1.msra.mxu0 0.0
      %219 = vmatprep.subr.mxu0 0.0
      %220 = vmatpush1.msra.mxu0 0.0
      %221 = vmatprep.subr.mxu0 0.0
      %222 = vmatpush1.msra.mxu0 0.0
      %223 = vmatprep.subr.mxu0 0.0
      %224 = vmatpush1.msra.mxu0 0.0
      %225 = vmatprep.subr.mxu0 0.0
      %226 = vmatpush1.msra.mxu0 0.0
      %227 = vmatprep.subr.mxu0 0.0
      %228 = vmatpush1.msra.mxu0 0.0
      %229 = vmatprep.subr.mxu0 0.0
      %230 = vmatpush1.msra.mxu0 0.0
      %231 = vmatprep.subr.mxu0 0.0
      %232 = vmatpush1.msra.mxu0 0.0
      %233 = vmatprep.subr.mxu0 0.0
      %234 = vmatpush1.msra.mxu0 0.0
      %235 = vmatprep.subr.mxu0 0.0
      %236 = vmatpush1.msra.mxu0 0.0
      %237 = vmatprep.subr.mxu0 0.0
      %238 = vmatpush1.msra.mxu0 0.0
      %239 = vmatprep.subr.mxu0 0.0
      %240 = vmatpush1.msra.mxu0 0.0
      %241 = vmatprep.subr.mxu0 0.0
      %242 = vmatpush1.msra.mxu0 0.0
      %243 = vmatprep.subr.mxu0 0.0
      %244 = vmatpush1.msra.mxu0 0.0
      %245 = vmatprep.subr.mxu0 0.0
      %246 = vmatpush1.msra.mxu0 0.0
      %247 = vmatprep.subr.mxu0 0.0
      %248 = vmatpush1.msra.mxu0 0.0
      %249 = vmatprep.subr.mxu0 0.0
      %250 = vmatpush1.msra.mxu0 0.0
      %251 = vmatprep.subr.mxu0 0.0
      %252 = vmatpush1.msra.mxu0 0.0
      %253 = vmatprep.subr.mxu0 0.0
      %254 = vmatpush1.msra.mxu0 0.0
      %255 = vmatprep.subr.mxu0 0.0
      %256 = vmatpush1.msra.mxu0 0.0
      %257 = vmatprep.subr.mxu0 0.0
      %258 = vmatpush1.msra.mxu0 0.0
      %259 = vmatprep.subr.mxu0 0.0
      %260 = vmatpush1.msra.mxu0 0.0
      %261 = vmatprep.subr.mxu0 0.0
      %262 = vmatpush1.msra.mxu0 0.0
      %263 = vmatprep.subr.mxu0 0.0
      %264 = vmatpush1.msra.mxu0 0.0
      %265 = vmatprep.subr.mxu0 0.0
      %266 = vmatpush1.msra.mxu0 0.0
      %267 = vmatprep.mubr.f32.mxu0 0.0
      %268 = vmatmul.mubr.f32.gmra.mrb[0].mxu0 %v192
      %v269 = vpop.f32.mrb[0].mxu0
      %v270 = vadd.f32 0.0, %v269
      %v271 = vpop.f32.mrb[0].mxu0
      %272 = vmatprep.mubr.f32.mxu0 0.0
      %273 = vmatmul.mubr.f32.gmra.mrb[0].mxu0 %v195
      %v274 = vpop.f32.mrb[0].mxu0
      %v275 = vadd.f32 0.0, %v274
      %v276 = vpop.f32.mrb[0].mxu0
      %277 = vmatprep.mubr.f32.mxu0 0.0
      %278 = vmatmul.mubr.f32.gmra.mrb[0].mxu0 %v198
      %v279 = vpop.f32.mrb[0].mxu0
      %v280 = vadd.f32 0.0, %v279
      %v281 = vpop.f32.mrb[0].mxu0
      %282 = vmatprep.mubr.f32.mxu0 0.0
      %283 = vmatmul.mubr.f32.gmra.mrb[0].mxu0 %v201
      %v284 = vpop.f32.mrb[0].mxu0
      %v285 = vadd.f32 0.0, %v284
      %v286 = vpop.f32.mrb[0].mxu0
      %287 = vdwg.mxu0
      %v289 = vsel %vm190, %v171, 0
      %v292 = vsel %vm190, %v172, 0
      %v295 = vsel %vm190, %v173, 0
      %v298 = vsel %vm190, %v174, 0
      %300 = vmatprep.subr.mxu0 0.0
      %301 = vmatpush1.msra.mxu0 %v176
      %302 = vmatprep.subr.mxu0 0.0
      %303 = vmatpush1.msra.mxu0 %v177
      %304 = vmatprep.subr.mxu0 0.0
      %305 = vmatpush1.msra.mxu0 %v178
      %306 = vmatprep.subr.mxu0 0.0
      %307 = vmatpush1.msra.mxu0 %v179
      %308 = vmatprep.subr.mxu0 0.0
      %309 = vmatpush1.msra.mxu0 0.0
      %310 = vmatprep.subr.mxu0 0.0
      %311 = vmatpush1.msra.mxu0 0.0
      %312 = vmatprep.subr.mxu0 0.0
      %313 = vmatpush1.msra.mxu0 0.0
      %314 = vmatprep.subr.mxu0 0.0
      %315 = vmatpush1.msra.mxu0 0.0
      %316 = vmatprep.subr.mxu0 0.0
      %317 = vmatpush1.msra.mxu0 0.0
      %318 = vmatprep.subr.mxu0 0.0
      %319 = vmatpush1.msra.mxu0 0.0
      %320 = vmatprep.subr.mxu0 0.0
      %321 = vmatpush1.msra.mxu0 0.0
      %322 = vmatprep.subr.mxu0 0.0
      %323 = vmatpush1.msra.mxu0 0.0
      %324 = vmatprep.subr.mxu0 0.0
      %325 = vmatpush1.msra.mxu0 0.0
      %326 = vmatprep.subr.mxu0 0.0
      %327 = vmatpush1.msra.mxu0 0.0
      %328 = vmatprep.subr.mxu0 0.0
      %329 = vmatpush1.msra.mxu0 0.0
      %330 = vmatprep.subr.mxu0 0.0
      %331 = vmatpush1.msra.mxu0 0.0
      %332 = vmatprep.subr.mxu0 0.0
      %333 = vmatpush1.msra.mxu0 0.0
      %334 = vmatprep.subr.mxu0 0.0
      %335 = vmatpush1.msra.mxu0 0.0
      %336 = vmatprep.subr.mxu0 0.0
      %337 = vmatpush1.msra.mxu0 0.0
      %338 = vmatprep.subr.mxu0 0.0
      %339 = vmatpush1.msra.mxu0 0.0
      %340 = vmatprep.subr.mxu0 0.0
      %341 = vmatpush1.msra.mxu0 0.0
      %342 = vmatprep.subr.mxu0 0.0
      %343 = vmatpush1.msra.mxu0 0.0
      %344 = vmatprep.subr.mxu0 0.0
      %345 = vmatpush1.msra.mxu0 0.0
      %346 = vmatprep.subr.mxu0 0.0
      %347 = vmatpush1.msra.mxu0 0.0
      %348 = vmatprep.subr.mxu0 0.0
      %349 = vmatpush1.msra.mxu0 0.0
      %350 = vmatprep.subr.mxu0 0.0
      %351 = vmatpush1.msra.mxu0 0.0
      %352 = vmatprep.subr.mxu0 0.0
      %353 = vmatpush1.msra.mxu0 0.0
      %354 = vmatprep.subr.mxu0 0.0
      %355 = vmatpush1.msra.mxu0 0.0
      %356 = vmatprep.subr.mxu0 0.0
      %357 = vmatpush1.msra.mxu0 0.0
      %358 = vmatprep.subr.mxu0 0.0
      %359 = vmatpush1.msra.mxu0 0.0
      %360 = vmatprep.subr.mxu0 0.0
      %361 = vmatpush1.msra.mxu0 0.0
      %362 = vmatprep.subr.mxu0 0.0
      %363 = vmatpush1.msra.mxu0 0.0
      %364 = vmatprep.mubr.f32.mxu0 0.0
      %365 = vmatmul.mubr.f32.gmra.mrb[0].mxu0 %v289
      %v366 = vpop.f32.mrb[0].mxu0
      %v367 = vadd.f32 %v270, %v366
      %v368 = vpop.f32.mrb[0].mxu0
      %369 = vmatprep.mubr.f32.mxu0 0.0
      %370 = vmatmul.mubr.f32.gmra.mrb[0].mxu0 %v292
      %v371 = vpop.f32.mrb[0].mxu0
      %v372 = vadd.f32 %v275, %v371
      %v373 = vpop.f32.mrb[0].mxu0
      %374 = vmatprep.mubr.f32.mxu0 0.0
      %375 = vmatmul.mubr.f32.gmra.mrb[0].mxu0 %v295
      %v376 = vpop.f32.mrb[0].mxu0
      %v377 = vadd.f32 %v280, %v376
      %v378 = vpop.f32.mrb[0].mxu0
      %379 = vmatprep.mubr.f32.mxu0 0.0
      %380 = vmatmul.mubr.f32.gmra.mrb[0].mxu0 %v298
      %v381 = vpop.f32.mrb[0].mxu0
      %v382 = vadd.f32 %v285, %v381
      %v383 = vpop.f32.mrb[0].mxu0
      %384 = vdwg.mxu0
      %s385 = scalar_lea.vmem %s1, 64
      %v386 = vld [vmem:[%s385] sm:$0xff]
      %v387 = vld [vmem:[%s385 + $0x8] sm:$0xff]
      %v388 = vld [vmem:[%s385 + $0x10] sm:$0xff]
      %v389 = vld [vmem:[%s385 + $0x18] sm:$0xff]
      %s390 = scalar_lea.vmem %s165, 32
      %v391 = vld [vmem:[%s390] sm:$0xff]
      %v392 = vld [vmem:[%s390 + $0x8] sm:$0xff]
      %v393 = vld [vmem:[%s390 + $0x10] sm:$0xff]
      %v394 = vld [vmem:[%s390 + $0x18] sm:$0xff]
      %v396 = vsel %vm190, %v386, 0
      %v399 = vsel %vm190, %v387, 0
      %v402 = vsel %vm190, %v388, 0
      %v405 = vsel %vm190, %v389, 0
      %407 = vmatprep.subr.mxu0 0.0
      %408 = vmatpush1.msra.mxu0 %v391
      %409 = vmatprep.subr.mxu0 0.0
      %410 = vmatpush1.msra.mxu0 %v392
      %411 = vmatprep.subr.mxu0 0.0
      %412 = vmatpush1.msra.mxu0 %v393
      %413 = vmatprep.subr.mxu0 0.0
      %414 = vmatpush1.msra.mxu0 %v394
      %415 = vmatprep.subr.mxu0 0.0
      %416 = vmatpush1.msra.mxu0 0.0
      %417 = vmatprep.subr.mxu0 0.0
      %418 = vmatpush1.msra.mxu0 0.0
      %419 = vmatprep.subr.mxu0 0.0
      %420 = vmatpush1.msra.mxu0 0.0
      %421 = vmatprep.subr.mxu0 0.0
      %422 = vmatpush1.msra.mxu0 0.0
      %423 = vmatprep.subr.mxu0 0.0
      %424 = vmatpush1.msra.mxu0 0.0
      %425 = vmatprep.subr.mxu0 0.0
      %426 = vmatpush1.msra.mxu0 0.0
      %427 = vmatprep.subr.mxu0 0.0
      %428 = vmatpush1.msra.mxu0 0.0
      %429 = vmatprep.subr.mxu0 0.0
      %430 = vmatpush1.msra.mxu0 0.0
      %431 = vmatprep.subr.mxu0 0.0
      %432 = vmatpush1.msra.mxu0 0.0
      %433 = vmatprep.subr.mxu0 0.0
      %434 = vmatpush1.msra.mxu0 0.0
      %435 = vmatprep.subr.mxu0 0.0
      %436 = vmatpush1.msra.mxu0 0.0
      %437 = vmatprep.subr.mxu0 0.0
      %438 = vmatpush1.msra.mxu0 0.0
      %439 = vmatprep.subr.mxu0 0.0
      %440 = vmatpush1.msra.mxu0 0.0
      %441 = vmatprep.subr.mxu0 0.0
      %442 = vmatpush1.msra.mxu0 0.0
      %443 = vmatprep.subr.mxu0 0.0
      %444 = vmatpush1.msra.mxu0 0.0
      %445 = vmatprep.subr.mxu0 0.0
      %446 = vmatpush1.msra.mxu0 0.0
      %447 = vmatprep.subr.mxu0 0.0
      %448 = vmatpush1.msra.mxu0 0.0
      %449 = vmatprep.subr.mxu0 0.0
      %450 = vmatpush1.msra.mxu0 0.0
      %451 = vmatprep.subr.mxu0 0.0
      %452 = vmatpush1.msra.mxu0 0.0
      %453 = vmatprep.subr.mxu0 0.0
      %454 = vmatpush1.msra.mxu0 0.0
      %455 = vmatprep.subr.mxu0 0.0
      %456 = vmatpush1.msra.mxu0 0.0
      %457 = vmatprep.subr.mxu0 0.0
      %458 = vmatpush1.msra.mxu0 0.0
      %459 = vmatprep.subr.mxu0 0.0
      %460 = vmatpush1.msra.mxu0 0.0
      %461 = vmatprep.subr.mxu0 0.0
      %462 = vmatpush1.msra.mxu0 0.0
      %463 = vmatprep.subr.mxu0 0.0
      %464 = vmatpush1.msra.mxu0 0.0
      %465 = vmatprep.subr.mxu0 0.0
      %466 = vmatpush1.msra.mxu0 0.0
      %467 = vmatprep.subr.mxu0 0.0
      %468 = vmatpush1.msra.mxu0 0.0
      %469 = vmatprep.subr.mxu0 0.0
      %470 = vmatpush1.msra.mxu0 0.0
      %471 = vmatprep.mubr.f32.mxu0 0.0
      %472 = vmatmul.mubr.f32.gmra.mrb[0].mxu0 %v396
      %v473 = vpop.f32.mrb[0].mxu0
      %v474 = vadd.f32 0.0, %v473
      %v475 = vpop.f32.mrb[0].mxu0
      %476 = vmatprep.mubr.f32.mxu0 0.0
      %477 = vmatmul.mubr.f32.gmra.mrb[0].mxu0 %v399
      %v478 = vpop.f32.mrb[0].mxu0
      %v479 = vadd.f32 0.0, %v478
      %v480 = vpop.f32.mrb[0].mxu0
      %481 = vmatprep.mubr.f32.mxu0 0.0
      %482 = vmatmul.mubr.f32.gmra.mrb[0].mxu0 %v402
      %v483 = vpop.f32.mrb[0].mxu0
      %v484 = vadd.f32 0.0, %v483
      %v485 = vpop.f32.mrb[0].mxu0
      %486 = vmatprep.mubr.f32.mxu0 0.0
      %487 = vmatmul.mubr.f32.gmra.mrb[0].mxu0 %v405
      %v488 = vpop.f32.mrb[0].mxu0
      %v489 = vadd.f32 0.0, %v488
      %v490 = vpop.f32.mrb[0].mxu0
      %491 = vdwg.mxu0
      %v492 = vadd.f32 %v367, %v474
      %v493 = vadd.f32 %v372, %v479
      %v494 = vadd.f32 %v377, %v484
      %v495 = vadd.f32 %v382, %v489
      %s496 = scalar_lea.vmem %s1, 96
      %v497 = vld [vmem:[%s496] sm:$0xff]
      %v498 = vld [vmem:[%s496 + $0x8] sm:$0xff]
      %v499 = vld [vmem:[%s496 + $0x10] sm:$0xff]
      %v500 = vld [vmem:[%s496 + $0x18] sm:$0xff]
      %v501 = vld [vmem:[%s165] sm:$0xff]
      %v502 = vld [vmem:[%s165 + $0x8] sm:$0xff]
      %v503 = vld [vmem:[%s165 + $0x10] sm:$0xff]
      %v504 = vld [vmem:[%s165 + $0x18] sm:$0xff]
      %v506 = vsel %vm190, %v497, 0
      %v509 = vsel %vm190, %v498, 0
      %v512 = vsel %vm190, %v499, 0
      %v515 = vsel %vm190, %v500, 0
      %517 = vmatprep.subr.mxu0 0.0
      %518 = vmatpush1.msra.mxu0 %v501
      %519 = vmatprep.subr.mxu0 0.0
      %520 = vmatpush1.msra.mxu0 %v502
      %521 = vmatprep.subr.mxu0 0.0
      %522 = vmatpush1.msra.mxu0 %v503
      %523 = vmatprep.subr.mxu0 0.0
      %524 = vmatpush1.msra.mxu0 %v504
      %525 = vmatprep.subr.mxu0 0.0
      %526 = vmatpush1.msra.mxu0 0.0
      %527 = vmatprep.subr.mxu0 0.0
      %528 = vmatpush1.msra.mxu0 0.0
      %529 = vmatprep.subr.mxu0 0.0
      %530 = vmatpush1.msra.mxu0 0.0
      %531 = vmatprep.subr.mxu0 0.0
      %532 = vmatpush1.msra.mxu0 0.0
      %533 = vmatprep.subr.mxu0 0.0
      %534 = vmatpush1.msra.mxu0 0.0
      %535 = vmatprep.subr.mxu0 0.0
      %536 = vmatpush1.msra.mxu0 0.0
      %537 = vmatprep.subr.mxu0 0.0
      %538 = vmatpush1.msra.mxu0 0.0
      %539 = vmatprep.subr.mxu0 0.0
      %540 = vmatpush1.msra.mxu0 0.0
      %541 = vmatprep.subr.mxu0 0.0
      %542 = vmatpush1.msra.mxu0 0.0
      %543 = vmatprep.subr.mxu0 0.0
      %544 = vmatpush1.msra.mxu0 0.0
      %545 = vmatprep.subr.mxu0 0.0
      %546 = vmatpush1.msra.mxu0 0.0
      %547 = vmatprep.subr.mxu0 0.0
      %548 = vmatpush1.msra.mxu0 0.0
      %549 = vmatprep.subr.mxu0 0.0
      %550 = vmatpush1.msra.mxu0 0.0
      %551 = vmatprep.subr.mxu0 0.0
      %552 = vmatpush1.msra.mxu0 0.0
      %553 = vmatprep.subr.mxu0 0.0
      %554 = vmatpush1.msra.mxu0 0.0
      %555 = vmatprep.subr.mxu0 0.0
      %556 = vmatpush1.msra.mxu0 0.0
      %557 = vmatprep.subr.mxu0 0.0
      %558 = vmatpush1.msra.mxu0 0.0
      %559 = vmatprep.subr.mxu0 0.0
      %560 = vmatpush1.msra.mxu0 0.0
      %561 = vmatprep.subr.mxu0 0.0
      %562 = vmatpush1.msra.mxu0 0.0
      %563 = vmatprep.subr.mxu0 0.0
      %564 = vmatpush1.msra.mxu0 0.0
      %565 = vmatprep.subr.mxu0 0.0
      %566 = vmatpush1.msra.mxu0 0.0
      %567 = vmatprep.subr.mxu0 0.0
      %568 = vmatpush1.msra.mxu0 0.0
      %569 = vmatprep.subr.mxu0 0.0
      %570 = vmatpush1.msra.mxu0 0.0
      %571 = vmatprep.subr.mxu0 0.0
      %572 = vmatpush1.msra.mxu0 0.0
      %573 = vmatprep.subr.mxu0 0.0
      %574 = vmatpush1.msra.mxu0 0.0
      %575 = vmatprep.subr.mxu0 0.0
      %576 = vmatpush1.msra.mxu0 0.0
      %577 = vmatprep.subr.mxu0 0.0
      %578 = vmatpush1.msra.mxu0 0.0
      %579 = vmatprep.subr.mxu0 0.0
      %580 = vmatpush1.msra.mxu0 0.0
      %581 = vmatprep.mubr.f32.mxu0 0.0
      %582 = vmatmul.mubr.f32.gmra.mrb[0].mxu0 %v506
      %v583 = vpop.f32.mrb[0].mxu0
      %v584 = vadd.f32 0.0, %v583
      %v585 = vpop.f32.mrb[0].mxu0
      %586 = vmatprep.mubr.f32.mxu0 0.0
      %587 = vmatmul.mubr.f32.gmra.mrb[0].mxu0 %v509
      %v588 = vpop.f32.mrb[0].mxu0
      %v589 = vadd.f32 0.0, %v588
      %v590 = vpop.f32.mrb[0].mxu0
      %591 = vmatprep.mubr.f32.mxu0 0.0
      %592 = vmatmul.mubr.f32.gmra.mrb[0].mxu0 %v512
      %v593 = vpop.f32.mrb[0].mxu0
      %v594 = vadd.f32 0.0, %v593
      %v595 = vpop.f32.mrb[0].mxu0
      %596 = vmatprep.mubr.f32.mxu0 0.0
      %597 = vmatmul.mubr.f32.gmra.mrb[0].mxu0 %v515
      %v598 = vpop.f32.mrb[0].mxu0
      %v599 = vadd.f32 0.0, %v598
      %v600 = vpop.f32.mrb[0].mxu0
      %601 = vdwg.mxu0
      %v602 = vadd.f32 %v492, %v584
      %v603 = vadd.f32 %v493, %v589
      %v604 = vadd.f32 %v494, %v594
      %v605 = vadd.f32 %v495, %v599
      %v606 = vld [vmem:[%s2] sm:$0xff]
      %v607 = vld [vmem:[%s2 + $0x8] sm:$0xff]
      %v608 = vld [vmem:[%s2 + $0x10] sm:$0xff]
      %v609 = vld [vmem:[%s2 + $0x18] sm:$0xff]
      %611 = vset.pattern.permute.xlu0 0
      %612 = vperm.xlu0 %611, %v606
      %v613 = vpop.permute.xlu0 %612
      %616 = vset.pattern.permute.xlu0 0
      %617 = vperm.xlu0 %616, %v607
      %v618 = vpop.permute.xlu0 %617
      %621 = vset.pattern.permute.xlu0 0
      %622 = vperm.xlu0 %621, %v608
      %v623 = vpop.permute.xlu0 %622
      %626 = vset.pattern.permute.xlu0 0
      %627 = vperm.xlu0 %626, %v609
      %v628 = vpop.permute.xlu0 %627
      %v630 = vadd.f32 %v602, %v613
      %v631 = vadd.f32 %v603, %v618
      %v632 = vadd.f32 %v604, %v623
      %v633 = vadd.f32 %v605, %v628
      %v634 = vmax.f32 %v630, 0.0
      %v635 = vmax.f32 %v631, 0.0
      %v636 = vmax.f32 %v632, 0.0
      %v637 = vmax.f32 %v633, 0.0
      %vm638 = vcmask 523264
      %639 = vst.msk [vmem:[%s170] sm:$0xff] %vm638, %v634
      %640 = vst.msk [vmem:[%s170 + $0x8] sm:$0xff] %vm638, %v635
      %641 = vst.msk [vmem:[%s170 + $0x10] sm:$0xff] %vm638, %v636
      %642 = vst.msk [vmem:[%s170 + $0x18] sm:$0xff] %vm638, %v637
      %s643 = scalar_lea.vmem %s1, 128
      %v644 = vld [vmem:[%s643] sm:$0xff]
      %v645 = vld [vmem:[%s643 + $0x8] sm:$0xff]
      %v646 = vld [vmem:[%s643 + $0x10] sm:$0xff]
      %v647 = vld [vmem:[%s643 + $0x18] sm:$0xff]
      %s648 = scalar_lea.vmem %s165, 160
      %v649 = vld [vmem:[%s648] sm:$0xff]
      %v650 = vld [vmem:[%s648 + $0x8] sm:$0xff]
      %v651 = vld [vmem:[%s648 + $0x10] sm:$0xff]
      %v652 = vld [vmem:[%s648 + $0x18] sm:$0xff]
      %s653 = scalar_lea.vmem %s1, 160
      %v654 = vld [vmem:[%s653] sm:$0xff]
      %v655 = vld [vmem:[%s653 + $0x8] sm:$0xff]
      %v656 = vld [vmem:[%s653 + $0x10] sm:$0xff]
      %v657 = vld [vmem:[%s653 + $0x18] sm:$0xff]
      %v658 = vld [vmem:[%s175] sm:$0xff]
      %v659 = vld [vmem:[%s175 + $0x8] sm:$0xff]
      %v660 = vld [vmem:[%s175 + $0x10] sm:$0xff]
      %v661 = vld [vmem:[%s175 + $0x18] sm:$0xff]
      %v663 = vsel %vm190, %v654, 0
      %v666 = vsel %vm190, %v655, 0
      %v669 = vsel %vm190, %v656, 0
      %v672 = vsel %vm190, %v657, 0
      %674 = vmatprep.subr.mxu0 0.0
      %675 = vmatpush1.msra.mxu0 %v658
      %676 = vmatprep.subr.mxu0 0.0
      %677 = vmatpush1.msra.mxu0 %v659
      %678 = vmatprep.subr.mxu0 0.0
      %679 = vmatpush1.msra.mxu0 %v660
      %680 = vmatprep.subr.mxu0 0.0
      %681 = vmatpush1.msra.mxu0 %v661
      %682 = vmatprep.subr.mxu0 0.0
      %683 = vmatpush1.msra.mxu0 0.0
      %684 = vmatprep.subr.mxu0 0.0
      %685 = vmatpush1.msra.mxu0 0.0
      %686 = vmatprep.subr.mxu0 0.0
      %687 = vmatpush1.msra.mxu0 0.0
      %688 = vmatprep.subr.mxu0 0.0
      %689 = vmatpush1.msra.mxu0 0.0
      %690 = vmatprep.subr.mxu0 0.0
      %691 = vmatpush1.msra.mxu0 0.0
      %692 = vmatprep.subr.mxu0 0.0
      %693 = vmatpush1.msra.mxu0 0.0
      %694 = vmatprep.subr.mxu0 0.0
      %695 = vmatpush1.msra.mxu0 0.0
      %696 = vmatprep.subr.mxu0 0.0
      %697 = vmatpush1.msra.mxu0 0.0
      %698 = vmatprep.subr.mxu0 0.0
      %699 = vmatpush1.msra.mxu0 0.0
      %700 = vmatprep.subr.mxu0 0.0
      %701 = vmatpush1.msra.mxu0 0.0
      %702 = vmatprep.subr.mxu0 0.0
      %703 = vmatpush1.msra.mxu0 0.0
      %704 = vmatprep.subr.mxu0 0.0
      %705 = vmatpush1.msra.mxu0 0.0
      %706 = vmatprep.subr.mxu0 0.0
      %707 = vmatpush1.msra.mxu0 0.0
      %708 = vmatprep.subr.mxu0 0.0
      %709 = vmatpush1.msra.mxu0 0.0
      %710 = vmatprep.subr.mxu0 0.0
      %711 = vmatpush1.msra.mxu0 0.0
      %712 = vmatprep.subr.mxu0 0.0
      %713 = vmatpush1.msra.mxu0 0.0
      %714 = vmatprep.subr.mxu0 0.0
      %715 = vmatpush1.msra.mxu0 0.0
      %716 = vmatprep.subr.mxu0 0.0
      %717 = vmatpush1.msra.mxu0 0.0
      %718 = vmatprep.subr.mxu0 0.0
      %719 = vmatpush1.msra.mxu0 0.0
      %720 = vmatprep.subr.mxu0 0.0
      %721 = vmatpush1.msra.mxu0 0.0
      %722 = vmatprep.subr.mxu0 0.0
      %723 = vmatpush1.msra.mxu0 0.0
      %724 = vmatprep.subr.mxu0 0.0
      %725 = vmatpush1.msra.mxu0 0.0
      %726 = vmatprep.subr.mxu0 0.0
      %727 = vmatpush1.msra.mxu0 0.0
      %728 = vmatprep.subr.mxu0 0.0
      %729 = vmatpush1.msra.mxu0 0.0
      %730 = vmatprep.subr.mxu0 0.0
      %731 = vmatpush1.msra.mxu0 0.0
      %732 = vmatprep.subr.mxu0 0.0
      %733 = vmatpush1.msra.mxu0 0.0
      %734 = vmatprep.subr.mxu0 0.0
      %735 = vmatpush1.msra.mxu0 0.0
      %736 = vmatprep.subr.mxu0 0.0
      %737 = vmatpush1.msra.mxu0 0.0
      %738 = vmatprep.mubr.f32.mxu0 0.0
      %739 = vmatmul.mubr.f32.gmra.mrb[0].mxu0 %v663
      %v740 = vpop.f32.mrb[0].mxu0
      %v741 = vadd.f32 0.0, %v740
      %v742 = vpop.f32.mrb[0].mxu0
      %743 = vmatprep.mubr.f32.mxu0 0.0
      %744 = vmatmul.mubr.f32.gmra.mrb[0].mxu0 %v666
      %v745 = vpop.f32.mrb[0].mxu0
      %v746 = vadd.f32 0.0, %v745
      %v747 = vpop.f32.mrb[0].mxu0
      %748 = vmatprep.mubr.f32.mxu0 0.0
      %749 = vmatmul.mubr.f32.gmra.mrb[0].mxu0 %v669
      %v750 = vpop.f32.mrb[0].mxu0
      %v751 = vadd.f32 0.0, %v750
      %v752 = vpop.f32.mrb[0].mxu0
      %753 = vmatprep.mubr.f32.mxu0 0.0
      %754 = vmatmul.mubr.f32.gmra.mrb[0].mxu0 %v672
      %v755 = vpop.f32.mrb[0].mxu0
      %v756 = vadd.f32 0.0, %v755
      %v757 = vpop.f32.mrb[0].mxu0
      %758 = vdwg.mxu0
      %v760 = vsel %vm190, %v644, 0
      %v763 = vsel %vm190, %v645, 0
      %v766 = vsel %vm190, %v646, 0
      %v769 = vsel %vm190, %v647, 0
      %771 = vmatprep.subr.mxu0 0.0
      %772 = vmatpush1.msra.mxu0 %v649
      %773 = vmatprep.subr.mxu0 0.0
      %774 = vmatpush1.msra.mxu0 %v650
      %775 = vmatprep.subr.mxu0 0.0
      %776 = vmatpush1.msra.mxu0 %v651
      %777 = vmatprep.subr.mxu0 0.0
      %778 = vmatpush1.msra.mxu0 %v652
      %779 = vmatprep.subr.mxu0 0.0
      %780 = vmatpush1.msra.mxu0 0.0
      %781 = vmatprep.subr.mxu0 0.0
      %782 = vmatpush1.msra.mxu0 0.0
      %783 = vmatprep.subr.mxu0 0.0
      %784 = vmatpush1.msra.mxu0 0.0
      %785 = vmatprep.subr.mxu0 0.0
      %786 = vmatpush1.msra.mxu0 0.0
      %787 = vmatprep.subr.mxu0 0.0
      %788 = vmatpush1.msra.mxu0 0.0
      %789 = vmatprep.subr.mxu0 0.0
      %790 = vmatpush1.msra.mxu0 0.0
      %791 = vmatprep.subr.mxu0 0.0
      %792 = vmatpush1.msra.mxu0 0.0
      %793 = vmatprep.subr.mxu0 0.0
      %794 = vmatpush1.msra.mxu0 0.0
      %795 = vmatprep.subr.mxu0 0.0
      %796 = vmatpush1.msra.mxu0 0.0
      %797 = vmatprep.subr.mxu0 0.0
      %798 = vmatpush1.msra.mxu0 0.0
      %799 = vmatprep.subr.mxu0 0.0
      %800 = vmatpush1.msra.mxu0 0.0
      %801 = vmatprep.subr.mxu0 0.0
      %802 = vmatpush1.msra.mxu0 0.0
      %803 = vmatprep.subr.mxu0 0.0
      %804 = vmatpush1.msra.mxu0 0.0
      %805 = vmatprep.subr.mxu0 0.0
      %806 = vmatpush1.msra.mxu0 0.0
      %807 = vmatprep.subr.mxu0 0.0
      %808 = vmatpush1.msra.mxu0 0.0
      %809 = vmatprep.subr.mxu0 0.0
      %810 = vmatpush1.msra.mxu0 0.0
      %811 = vmatprep.subr.mxu0 0.0
      %812 = vmatpush1.msra.mxu0 0.0
      %813 = vmatprep.subr.mxu0 0.0
      %814 = vmatpush1.msra.mxu0 0.0
      %815 = vmatprep.subr.mxu0 0.0
      %816 = vmatpush1.msra.mxu0 0.0
      %817 = vmatprep.subr.mxu0 0.0
      %818 = vmatpush1.msra.mxu0 0.0
      %819 = vmatprep.subr.mxu0 0.0
      %820 = vmatpush1.msra.mxu0 0.0
      %821 = vmatprep.subr.mxu0 0.0
      %822 = vmatpush1.msra.mxu0 0.0
      %823 = vmatprep.subr.mxu0 0.0
      %824 = vmatpush1.msra.mxu0 0.0
      %825 = vmatprep.subr.mxu0 0.0
      %826 = vmatpush1.msra.mxu0 0.0
      %827 = vmatprep.subr.mxu0 0.0
      %828 = vmatpush1.msra.mxu0 0.0
      %829 = vmatprep.subr.mxu0 0.0
      %830 = vmatpush1.msra.mxu0 0.0
      %831 = vmatprep.subr.mxu0 0.0
      %832 = vmatpush1.msra.mxu0 0.0
      %833 = vmatprep.subr.mxu0 0.0
      %834 = vmatpush1.msra.mxu0 0.0
      %835 = vmatprep.mubr.f32.mxu0 0.0
      %836 = vmatmul.mubr.f32.gmra.mrb[0].mxu0 %v760
      %v837 = vpop.f32.mrb[0].mxu0
      %v838 = vadd.f32 %v741, %v837
      %v839 = vpop.f32.mrb[0].mxu0
      %840 = vmatprep.mubr.f32.mxu0 0.0
      %841 = vmatmul.mubr.f32.gmra.mrb[0].mxu0 %v763
      %v842 = vpop.f32.mrb[0].mxu0
      %v843 = vadd.f32 %v746, %v842
      %v844 = vpop.f32.mrb[0].mxu0
      %845 = vmatprep.mubr.f32.mxu0 0.0
      %846 = vmatmul.mubr.f32.gmra.mrb[0].mxu0 %v766
      %v847 = vpop.f32.mrb[0].mxu0
      %v848 = vadd.f32 %v751, %v847
      %v849 = vpop.f32.mrb[0].mxu0
      %850 = vmatprep.mubr.f32.mxu0 0.0
      %851 = vmatmul.mubr.f32.gmra.mrb[0].mxu0 %v769
      %v852 = vpop.f32.mrb[0].mxu0
      %v853 = vadd.f32 %v756, %v852
      %v854 = vpop.f32.mrb[0].mxu0
      %855 = vdwg.mxu0
      %s856 = scalar_lea.vmem %s1, 192
      %v857 = vld [vmem:[%s856] sm:$0xff]
      %v858 = vld [vmem:[%s856 + $0x8] sm:$0xff]
      %v859 = vld [vmem:[%s856 + $0x10] sm:$0xff]
      %v860 = vld [vmem:[%s856 + $0x18] sm:$0xff]
      %s861 = scalar_lea.vmem %s165, 64
      %v862 = vld [vmem:[%s861] sm:$0xff]
      %v863 = vld [vmem:[%s861 + $0x8] sm:$0xff]
      %v864 = vld [vmem:[%s861 + $0x10] sm:$0xff]
      %v865 = vld [vmem:[%s861 + $0x18] sm:$0xff]
      %v867 = vsel %vm190, %v857, 0
      %v870 = vsel %vm190, %v858, 0
      %v873 = vsel %vm190, %v859, 0
      %v876 = vsel %vm190, %v860, 0
      %878 = vmatprep.subr.mxu0 0.0
      %879 = vmatpush1.msra.mxu0 %v862
      %880 = vmatprep.subr.mxu0 0.0
      %881 = vmatpush1.msra.mxu0 %v863
      %882 = vmatprep.subr.mxu0 0.0
      %883 = vmatpush1.msra.mxu0 %v864
      %884 = vmatprep.subr.mxu0 0.0
      %885 = vmatpush1.msra.mxu0 %v865
      %886 = vmatprep.subr.mxu0 0.0
      %887 = vmatpush1.msra.mxu0 0.0
      %888 = vmatprep.subr.mxu0 0.0
      %889 = vmatpush1.msra.mxu0 0.0
      %890 = vmatprep.subr.mxu0 0.0
      %891 = vmatpush1.msra.mxu0 0.0
      %892 = vmatprep.subr.mxu0 0.0
      %893 = vmatpush1.msra.mxu0 0.0
      %894 = vmatprep.subr.mxu0 0.0
      %895 = vmatpush1.msra.mxu0 0.0
      %896 = vmatprep.subr.mxu0 0.0
      %897 = vmatpush1.msra.mxu0 0.0
      %898 = vmatprep.subr.mxu0 0.0
      %899 = vmatpush1.msra.mxu0 0.0
      %900 = vmatprep.subr.mxu0 0.0
      %901 = vmatpush1.msra.mxu0 0.0
      %902 = vmatprep.subr.mxu0 0.0
      %903 = vmatpush1.msra.mxu0 0.0
      %904 = vmatprep.subr.mxu0 0.0
      %905 = vmatpush1.msra.mxu0 0.0
      %906 = vmatprep.subr.mxu0 0.0
      %907 = vmatpush1.msra.mxu0 0.0
      %908 = vmatprep.subr.mxu0 0.0
      %909 = vmatpush1.msra.mxu0 0.0
      %910 = vmatprep.subr.mxu0 0.0
      %911 = vmatpush1.msra.mxu0 0.0
      %912 = vmatprep.subr.mxu0 0.0
      %913 = vmatpush1.msra.mxu0 0.0
      %914 = vmatprep.subr.mxu0 0.0
      %915 = vmatpush1.msra.mxu0 0.0
      %916 = vmatprep.subr.mxu0 0.0
      %917 = vmatpush1.msra.mxu0 0.0
      %918 = vmatprep.subr.mxu0 0.0
      %919 = vmatpush1.msra.mxu0 0.0
      %920 = vmatprep.subr.mxu0 0.0
      %921 = vmatpush1.msra.mxu0 0.0
      %922 = vmatprep.subr.mxu0 0.0
      %923 = vmatpush1.msra.mxu0 0.0
      %924 = vmatprep.subr.mxu0 0.0
      %925 = vmatpush1.msra.mxu0 0.0
      %926 = vmatprep.subr.mxu0 0.0
      %927 = vmatpush1.msra.mxu0 0.0
      %928 = vmatprep.subr.mxu0 0.0
      %929 = vmatpush1.msra.mxu0 0.0
      %930 = vmatprep.subr.mxu0 0.0
      %931 = vmatpush1.msra.mxu0 0.0
      %932 = vmatprep.subr.mxu0 0.0
      %933 = vmatpush1.msra.mxu0 0.0
      %934 = vmatprep.subr.mxu0 0.0
      %935 = vmatpush1.msra.mxu0 0.0
      %936 = vmatprep.subr.mxu0 0.0
      %937 = vmatpush1.msra.mxu0 0.0
      %938 = vmatprep.subr.mxu0 0.0
      %939 = vmatpush1.msra.mxu0 0.0
      %940 = vmatprep.subr.mxu0 0.0
      %941 = vmatpush1.msra.mxu0 0.0
      %942 = vmatprep.mubr.f32.mxu0 0.0
      %943 = vmatmul.mubr.f32.gmra.mrb[0].mxu0 %v867
      %v944 = vpop.f32.mrb[0].mxu0
      %v945 = vadd.f32 0.0, %v944
      %v946 = vpop.f32.mrb[0].mxu0
      %947 = vmatprep.mubr.f32.mxu0 0.0
      %948 = vmatmul.mubr.f32.gmra.mrb[0].mxu0 %v870
      %v949 = vpop.f32.mrb[0].mxu0
      %v950 = vadd.f32 0.0, %v949
      %v951 = vpop.f32.mrb[0].mxu0
      %952 = vmatprep.mubr.f32.mxu0 0.0
      %953 = vmatmul.mubr.f32.gmra.mrb[0].mxu0 %v873
      %v954 = vpop.f32.mrb[0].mxu0
      %v955 = vadd.f32 0.0, %v954
      %v956 = vpop.f32.mrb[0].mxu0
      %957 = vmatprep.mubr.f32.mxu0 0.0
      %958 = vmatmul.mubr.f32.gmra.mrb[0].mxu0 %v876
      %v959 = vpop.f32.mrb[0].mxu0
      %v960 = vadd.f32 0.0, %v959
      %v961 = vpop.f32.mrb[0].mxu0
      %962 = vdwg.mxu0
      %v963 = vadd.f32 %v838, %v945
      %v964 = vadd.f32 %v843, %v950
      %v965 = vadd.f32 %v848, %v955
      %v966 = vadd.f32 %v853, %v960
      %s967 = scalar_lea.vmem %s1, 224
      %v968 = vld [vmem:[%s967] sm:$0xff]
      %v969 = vld [vmem:[%s967 + $0x8] sm:$0xff]
      %v970 = vld [vmem:[%s967 + $0x10] sm:$0xff]
      %v971 = vld [vmem:[%s967 + $0x18] sm:$0xff]
      %v972 = vld [vmem:[%s390] sm:$0xff]
      %v973 = vld [vmem:[%s390 + $0x8] sm:$0xff]
      %v974 = vld [vmem:[%s390 + $0x10] sm:$0xff]
      %v975 = vld [vmem:[%s390 + $0x18] sm:$0xff]
      %v977 = vsel %vm190, %v968, 0
      %v980 = vsel %vm190, %v969, 0
      %v983 = vsel %vm190, %v970, 0
      %v986 = vsel %vm190, %v971, 0
      %988 = vmatprep.subr.mxu0 0.0
      %989 = vmatpush1.msra.mxu0 %v972
      %990 = vmatprep.subr.mxu0 0.0
      %991 = vmatpush1.msra.mxu0 %v973
      %992 = vmatprep.subr.mxu0 0.0
      %993 = vmatpush1.msra.mxu0 %v974
      %994 = vmatprep.subr.mxu0 0.0
      %995 = vmatpush1.msra.mxu0 %v975
      %996 = vmatprep.subr.mxu0 0.0
      %997 = vmatpush1.msra.mxu0 0.0
      %998 = vmatprep.subr.mxu0 0.0
      %999 = vmatpush1.msra.mxu0 0.0
      %1000 = vmatprep.subr.mxu0 0.0
      %1001 = vmatpush1.msra.mxu0 0.0
      %1002 = vmatprep.subr.mxu0 0.0
      %1003 = vmatpush1.msra.mxu0 0.0
      %1004 = vmatprep.subr.mxu0 0.0
      %1005 = vmatpush1.msra.mxu0 0.0
      %1006 = vmatprep.subr.mxu0 0.0
      %1007 = vmatpush1.msra.mxu0 0.0
      %1008 = vmatprep.subr.mxu0 0.0
      %1009 = vmatpush1.msra.mxu0 0.0
      %1010 = vmatprep.subr.mxu0 0.0
      %1011 = vmatpush1.msra.mxu0 0.0
      %1012 = vmatprep.subr.mxu0 0.0
      %1013 = vmatpush1.msra.mxu0 0.0
      %1014 = vmatprep.subr.mxu0 0.0
      %1015 = vmatpush1.msra.mxu0 0.0
      %1016 = vmatprep.subr.mxu0 0.0
      %1017 = vmatpush1.msra.mxu0 0.0
      %1018 = vmatprep.subr.mxu0 0.0
      %1019 = vmatpush1.msra.mxu0 0.0
      %1020 = vmatprep.subr.mxu0 0.0
      %1021 = vmatpush1.msra.mxu0 0.0
      %1022 = vmatprep.subr.mxu0 0.0
      %1023 = vmatpush1.msra.mxu0 0.0
      %1024 = vmatprep.subr.mxu0 0.0
      %1025 = vmatpush1.msra.mxu0 0.0
      %1026 = vmatprep.subr.mxu0 0.0
      %1027 = vmatpush1.msra.mxu0 0.0
      %1028 = vmatprep.subr.mxu0 0.0
      %1029 = vmatpush1.msra.mxu0 0.0
      %1030 = vmatprep.subr.mxu0 0.0
      %1031 = vmatpush1.msra.mxu0 0.0
      %1032 = vmatprep.subr.mxu0 0.0
      %1033 = vmatpush1.msra.mxu0 0.0
      %1034 = vmatprep.subr.mxu0 0.0
      %1035 = vmatpush1.msra.mxu0 0.0
      %1036 = vmatprep.subr.mxu0 0.0
      %1037 = vmatpush1.msra.mxu0 0.0
      %1038 = vmatprep.subr.mxu0 0.0
      %1039 = vmatpush1.msra.mxu0 0.0
      %1040 = vmatprep.subr.mxu0 0.0
      %1041 = vmatpush1.msra.mxu0 0.0
      %1042 = vmatprep.subr.mxu0 0.0
      %1043 = vmatpush1.msra.mxu0 0.0
      %1044 = vmatprep.subr.mxu0 0.0
      %1045 = vmatpush1.msra.mxu0 0.0
      %1046 = vmatprep.subr.mxu0 0.0
      %1047 = vmatpush1.msra.mxu0 0.0
      %1048 = vmatprep.subr.mxu0 0.0
      %1049 = vmatpush1.msra.mxu0 0.0
      %1050 = vmatprep.subr.mxu0 0.0
      %1051 = vmatpush1.msra.mxu0 0.0
      %1052 = vmatprep.mubr.f32.mxu0 0.0
      %1053 = vmatmul.mubr.f32.gmra.mrb[0].mxu0 %v977
      %v1054 = vpop.f32.mrb[0].mxu0
      %v1055 = vadd.f32 0.0, %v1054
      %v1056 = vpop.f32.mrb[0].mxu0
      %1057 = vmatprep.mubr.f32.mxu0 0.0
      %1058 = vmatmul.mubr.f32.gmra.mrb[0].mxu0 %v980
      %v1059 = vpop.f32.mrb[0].mxu0
      %v1060 = vadd.f32 0.0, %v1059
      %v1061 = vpop.f32.mrb[0].mxu0
      %1062 = vmatprep.mubr.f32.mxu0 0.0
      %1063 = vmatmul.mubr.f32.gmra.mrb[0].mxu0 %v983
      %v1064 = vpop.f32.mrb[0].mxu0
      %v1065 = vadd.f32 0.0, %v1064
      %v1066 = vpop.f32.mrb[0].mxu0
      %1067 = vmatprep.mubr.f32.mxu0 0.0
      %1068 = vmatmul.mubr.f32.gmra.mrb[0].mxu0 %v986
      %v1069 = vpop.f32.mrb[0].mxu0
      %v1070 = vadd.f32 0.0, %v1069
      %v1071 = vpop.f32.mrb[0].mxu0
      %1072 = vdwg.mxu0
      %v1073 = vadd.f32 %v963, %v1055
      %v1074 = vadd.f32 %v964, %v1060
      %v1075 = vadd.f32 %v965, %v1065
      %v1076 = vadd.f32 %v966, %v1070
      %v1077 = vld [vmem:[%s2] sm:$0xff]
      %v1078 = vld [vmem:[%s2 + $0x8] sm:$0xff]
      %v1079 = vld [vmem:[%s2 + $0x10] sm:$0xff]
      %v1080 = vld [vmem:[%s2 + $0x18] sm:$0xff]
      %1082 = vset.pattern.permute.xlu0 0
      %1083 = vperm.xlu0 %1082, %v1077
      %v1084 = vpop.permute.xlu0 %1083
      %1087 = vset.pattern.permute.xlu0 0
      %1088 = vperm.xlu0 %1087, %v1078
      %v1089 = vpop.permute.xlu0 %1088
      %1092 = vset.pattern.permute.xlu0 0
      %1093 = vperm.xlu0 %1092, %v1079
      %v1094 = vpop.permute.xlu0 %1093
      %1097 = vset.pattern.permute.xlu0 0
      %1098 = vperm.xlu0 %1097, %v1080
      %v1099 = vpop.permute.xlu0 %1098
      %v1101 = vadd.f32 %v1073, %v1084
      %v1102 = vadd.f32 %v1074, %v1089
      %v1103 = vadd.f32 %v1075, %v1094
      %v1104 = vadd.f32 %v1076, %v1099
      %v1105 = vmax.f32 %v1101, 0.0
      %v1106 = vmax.f32 %v1102, 0.0
      %v1107 = vmax.f32 %v1103, 0.0
      %v1108 = vmax.f32 %v1104, 0.0
      %s1109 = scalar_lea.vmem %s170, 32
      %1110 = vst.msk [vmem:[%s1109] sm:$0xff] %vm638, %v1105
      %1111 = vst.msk [vmem:[%s1109 + $0x8] sm:$0xff] %vm638, %v1106
      %1112 = vst.msk [vmem:[%s1109 + $0x10] sm:$0xff] %vm638, %v1107
      %1113 = vst.msk [vmem:[%s1109 + $0x18] sm:$0xff] %vm638, %v1108
      %s1114 = scalar_lea.vmem %s1, 256
      %v1115 = vld [vmem:[%s1114] sm:$0xff]
      %v1116 = vld [vmem:[%s1114 + $0x8] sm:$0xff]
      %v1117 = vld [vmem:[%s1114 + $0x10] sm:$0xff]
      %v1118 = vld [vmem:[%s1114 + $0x18] sm:$0xff]
      %s1119 = scalar_lea.vmem %s165, 224
      %v1120 = vld [vmem:[%s1119] sm:$0xff]
      %v1121 = vld [vmem:[%s1119 + $0x8] sm:$0xff]
      %v1122 = vld [vmem:[%s1119 + $0x10] sm:$0xff]
      %v1123 = vld [vmem:[%s1119 + $0x18] sm:$0xff]
      %s1124 = scalar_lea.vmem %s1, 288
      %v1125 = vld [vmem:[%s1124] sm:$0xff]
      %v1126 = vld [vmem:[%s1124 + $0x8] sm:$0xff]
      %v1127 = vld [vmem:[%s1124 + $0x10] sm:$0xff]
      %v1128 = vld [vmem:[%s1124 + $0x18] sm:$0xff]
      %s1129 = scalar_lea.vmem %s165, 192
      %v1130 = vld [vmem:[%s1129] sm:$0xff]
      %v1131 = vld [vmem:[%s1129 + $0x8] sm:$0xff]
      %v1132 = vld [vmem:[%s1129 + $0x10] sm:$0xff]
      %v1133 = vld [vmem:[%s1129 + $0x18] sm:$0xff]
      %v1135 = vsel %vm190, %v1125, 0
      %v1138 = vsel %vm190, %v1126, 0
      %v1141 = vsel %vm190, %v1127, 0
      %v1144 = vsel %vm190, %v1128, 0
      %1146 = vmatprep.subr.mxu0 0.0
      %1147 = vmatpush1.msra.mxu0 %v1130
      %1148 = vmatprep.subr.mxu0 0.0
      %1149 = vmatpush1.msra.mxu0 %v1131
      %1150 = vmatprep.subr.mxu0 0.0
      %1151 = vmatpush1.msra.mxu0 %v1132
      %1152 = vmatprep.subr.mxu0 0.0
      %1153 = vmatpush1.msra.mxu0 %v1133
      %1154 = vmatprep.subr.mxu0 0.0
      %1155 = vmatpush1.msra.mxu0 0.0
      %1156 = vmatprep.subr.mxu0 0.0
      %1157 = vmatpush1.msra.mxu0 0.0
      %1158 = vmatprep.subr.mxu0 0.0
      %1159 = vmatpush1.msra.mxu0 0.0
      %1160 = vmatprep.subr.mxu0 0.0
      %1161 = vmatpush1.msra.mxu0 0.0
      %1162 = vmatprep.subr.mxu0 0.0
      %1163 = vmatpush1.msra.mxu0 0.0
      %1164 = vmatprep.subr.mxu0 0.0
      %1165 = vmatpush1.msra.mxu0 0.0
      %1166 = vmatprep.subr.mxu0 0.0
      %1167 = vmatpush1.msra.mxu0 0.0
      %1168 = vmatprep.subr.mxu0 0.0
      %1169 = vmatpush1.msra.mxu0 0.0
      %1170 = vmatprep.subr.mxu0 0.0
      %1171 = vmatpush1.msra.mxu0 0.0
      %1172 = vmatprep.subr.mxu0 0.0
      %1173 = vmatpush1.msra.mxu0 0.0
      %1174 = vmatprep.subr.mxu0 0.0
      %1175 = vmatpush1.msra.mxu0 0.0
      %1176 = vmatprep.subr.mxu0 0.0
      %1177 = vmatpush1.msra.mxu0 0.0
      %1178 = vmatprep.subr.mxu0 0.0
      %1179 = vmatpush1.msra.mxu0 0.0
      %1180 = vmatprep.subr.mxu0 0.0
      %1181 = vmatpush1.msra.mxu0 0.0
      %1182 = vmatprep.subr.mxu0 0.0
      %1183 = vmatpush1.msra.mxu0 0.0
      %1184 = vmatprep.subr.mxu0 0.0
      %1185 = vmatpush1.msra.mxu0 0.0
      %1186 = vmatprep.subr.mxu0 0.0
      %1187 = vmatpush1.msra.mxu0 0.0
      %1188 = vmatprep.subr.mxu0 0.0
      %1189 = vmatpush1.msra.mxu0 0.0
      %1190 = vmatprep.subr.mxu0 0.0
      %1191 = vmatpush1.msra.mxu0 0.0
      %1192 = vmatprep.subr.mxu0 0.0
      %1193 = vmatpush1.msra.mxu0 0.0
      %1194 = vmatprep.subr.mxu0 0.0
      %1195 = vmatpush1.msra.mxu0 0.0
      %1196 = vmatprep.subr.mxu0 0.0
      %1197 = vmatpush1.msra.mxu0 0.0
      %1198 = vmatprep.subr.mxu0 0.0
      %1199 = vmatpush1.msra.mxu0 0.0
      %1200 = vmatprep.subr.mxu0 0.0
      %1201 = vmatpush1.msra.mxu0 0.0
      %1202 = vmatprep.subr.mxu0 0.0
      %1203 = vmatpush1.msra.mxu0 0.0
      %1204 = vmatprep.subr.mxu0 0.0
      %1205 = vmatpush1.msra.mxu0 0.0
      %1206 = vmatprep.subr.mxu0 0.0
      %1207 = vmatpush1.msra.mxu0 0.0
      %1208 = vmatprep.subr.mxu0 0.0
      %1209 = vmatpush1.msra.mxu0 0.0
      %1210 = vmatprep.mubr.f32.mxu0 0.0
      %1211 = vmatmul.mubr.f32.gmra.mrb[0].mxu0 %v1135
      %v1212 = vpop.f32.mrb[0].mxu0
      %v1213 = vadd.f32 0.0, %v1212
      %v1214 = vpop.f32.mrb[0].mxu0
      %1215 = vmatprep.mubr.f32.mxu0 0.0
      %1216 = vmatmul.mubr.f32.gmra.mrb[0].mxu0 %v1138
      %v1217 = vpop.f32.mrb[0].mxu0
      %v1218 = vadd.f32 0.0, %v1217
      %v1219 = vpop.f32.mrb[0].mxu0
      %1220 = vmatprep.mubr.f32.mxu0 0.0
      %1221 = vmatmul.mubr.f32.gmra.mrb[0].mxu0 %v1141
      %v1222 = vpop.f32.mrb[0].mxu0
      %v1223 = vadd.f32 0.0, %v1222
      %v1224 = vpop.f32.mrb[0].mxu0
      %1225 = vmatprep.mubr.f32.mxu0 0.0
      %1226 = vmatmul.mubr.f32.gmra.mrb[0].mxu0 %v1144
      %v1227 = vpop.f32.mrb[0].mxu0
      %v1228 = vadd.f32 0.0, %v1227
      %v1229 = vpop.f32.mrb[0].mxu0
      %1230 = vdwg.mxu0
      %v1232 = vsel %vm190, %v1115, 0
      %v1235 = vsel %vm190, %v1116, 0
      %v1238 = vsel %vm190, %v1117, 0
      %v1241 = vsel %vm190, %v1118, 0
      %1243 = vmatprep.subr.mxu0 0.0
      %1244 = vmatpush1.msra.mxu0 %v1120
      %1245 = vmatprep.subr.mxu0 0.0
      %1246 = vmatpush1.msra.mxu0 %v1121
      %1247 = vmatprep.subr.mxu0 0.0
      %1248 = vmatpush1.msra.mxu0 %v1122
      %1249 = vmatprep.subr.mxu0 0.0
      %1250 = vmatpush1.msra.mxu0 %v1123
      %1251 = vmatprep.subr.mxu0 0.0
      %1252 = vmatpush1.msra.mxu0 0.0
      %1253 = vmatprep.subr.mxu0 0.0
      %1254 = vmatpush1.msra.mxu0 0.0
      %1255 = vmatprep.subr.mxu0 0.0
      %1256 = vmatpush1.msra.mxu0 0.0
      %1257 = vmatprep.subr.mxu0 0.0
      %1258 = vmatpush1.msra.mxu0 0.0
      %1259 = vmatprep.subr.mxu0 0.0
      %1260 = vmatpush1.msra.mxu0 0.0
      %1261 = vmatprep.subr.mxu0 0.0
      %1262 = vmatpush1.msra.mxu0 0.0
      %1263 = vmatprep.subr.mxu0 0.0
      %1264 = vmatpush1.msra.mxu0 0.0
      %1265 = vmatprep.subr.mxu0 0.0
      %1266 = vmatpush1.msra.mxu0 0.0
      %1267 = vmatprep.subr.mxu0 0.0
      %1268 = vmatpush1.msra.mxu0 0.0
      %1269 = vmatprep.subr.mxu0 0.0
      %1270 = vmatpush1.msra.mxu0 0.0
      %1271 = vmatprep.subr.mxu0 0.0
      %1272 = vmatpush1.msra.mxu0 0.0
      %1273 = vmatprep.subr.mxu0 0.0
      %1274 = vmatpush1.msra.mxu0 0.0
      %1275 = vmatprep.subr.mxu0 0.0
      %1276 = vmatpush1.msra.mxu0 0.0
      %1277 = vmatprep.subr.mxu0 0.0
      %1278 = vmatpush1.msra.mxu0 0.0
      %1279 = vmatprep.subr.mxu0 0.0
      %1280 = vmatpush1.msra.mxu0 0.0
      %1281 = vmatprep.subr.mxu0 0.0
      %1282 = vmatpush1.msra.mxu0 0.0
      %1283 = vmatprep.subr.mxu0 0.0
      %1284 = vmatpush1.msra.mxu0 0.0
      %1285 = vmatprep.subr.mxu0 0.0
      %1286 = vmatpush1.msra.mxu0 0.0
      %1287 = vmatprep.subr.mxu0 0.0
      %1288 = vmatpush1.msra.mxu0 0.0
      %1289 = vmatprep.subr.mxu0 0.0
      %1290 = vmatpush1.msra.mxu0 0.0
      %1291 = vmatprep.subr.mxu0 0.0
      %1292 = vmatpush1.msra.mxu0 0.0
      %1293 = vmatprep.subr.mxu0 0.0
      %1294 = vmatpush1.msra.mxu0 0.0
      %1295 = vmatprep.subr.mxu0 0.0
      %1296 = vmatpush1.msra.mxu0 0.0
      %1297 = vmatprep.subr.mxu0 0.0
      %1298 = vmatpush1.msra.mxu0 0.0
      %1299 = vmatprep.subr.mxu0 0.0
      %1300 = vmatpush1.msra.mxu0 0.0
      %1301 = vmatprep.subr.mxu0 0.0
      %1302 = vmatpush1.msra.mxu0 0.0
      %1303 = vmatprep.subr.mxu0 0.0
      %1304 = vmatpush1.msra.mxu0 0.0
      %1305 = vmatprep.subr.mxu0 0.0
      %1306 = vmatpush1.msra.mxu0 0.0
      %1307 = vmatprep.mubr.f32.mxu0 0.0
      %1308 = vmatmul.mubr.f32.gmra.mrb[0].mxu0 %v1232
      %v1309 = vpop.f32.mrb[0].mxu0
      %v1310 = vadd.f32 %v1213, %v1309
      %v1311 = vpop.f32.mrb[0].mxu0
      %1312 = vmatprep.mubr.f32.mxu0 0.0
      %1313 = vmatmul.mubr.f32.gmra.mrb[0].mxu0 %v1235
      %v1314 = vpop.f32.mrb[0].mxu0
      %v1315 = vadd.f32 %v1218, %v1314
      %v1316 = vpop.f32.mrb[0].mxu0
      %1317 = vmatprep.mubr.f32.mxu0 0.0
      %1318 = vmatmul.mubr.f32.gmra.mrb[0].mxu0 %v1238
      %v1319 = vpop.f32.mrb[0].mxu0
      %v1320 = vadd.f32 %v1223, %v1319
      %v1321 = vpop.f32.mrb[0].mxu0
      %1322 = vmatprep.mubr.f32.mxu0 0.0
      %1323 = vmatmul.mubr.f32.gmra.mrb[0].mxu0 %v1241
      %v1324 = vpop.f32.mrb[0].mxu0
      %v1325 = vadd.f32 %v1228, %v1324
      %v1326 = vpop.f32.mrb[0].mxu0
      %1327 = vdwg.mxu0
      %s1328 = scalar_lea.vmem %s1, 320
      %v1329 = vld [vmem:[%s1328] sm:$0xff]
      %v1330 = vld [vmem:[%s1328 + $0x8] sm:$0xff]
      %v1331 = vld [vmem:[%s1328 + $0x10] sm:$0xff]
      %v1332 = vld [vmem:[%s1328 + $0x18] sm:$0xff]
      %v1333 = vld [vmem:[%s175] sm:$0xff]
      %v1334 = vld [vmem:[%s175 + $0x8] sm:$0xff]
      %v1335 = vld [vmem:[%s175 + $0x10] sm:$0xff]
      %v1336 = vld [vmem:[%s175 + $0x18] sm:$0xff]
      %v1338 = vsel %vm190, %v1329, 0
      %v1341 = vsel %vm190, %v1330, 0
      %v1344 = vsel %vm190, %v1331, 0
      %v1347 = vsel %vm190, %v1332, 0
      %1349 = vmatprep.subr.mxu0 0.0
      %1350 = vmatpush1.msra.mxu0 %v1333
      %1351 = vmatprep.subr.mxu0 0.0
      %1352 = vmatpush1.msra.mxu0 %v1334
      %1353 = vmatprep.subr.mxu0 0.0
      %1354 = vmatpush1.msra.mxu0 %v1335
      %1355 = vmatprep.subr.mxu0 0.0
      %1356 = vmatpush1.msra.mxu0 %v1336
      %1357 = vmatprep.subr.mxu0 0.0
      %1358 = vmatpush1.msra.mxu0 0.0
      %1359 = vmatprep.subr.mxu0 0.0
      %1360 = vmatpush1.msra.mxu0 0.0
      %1361 = vmatprep.subr.mxu0 0.0
      %1362 = vmatpush1.msra.mxu0 0.0
      %1363 = vmatprep.subr.mxu0 0.0
      %1364 = vmatpush1.msra.mxu0 0.0
      %1365 = vmatprep.subr.mxu0 0.0
      %1366 = vmatpush1.msra.mxu0 0.0
      %1367 = vmatprep.subr.mxu0 0.0
      %1368 = vmatpush1.msra.mxu0 0.0
      %1369 = vmatprep.subr.mxu0 0.0
      %1370 = vmatpush1.msra.mxu0 0.0
      %1371 = vmatprep.subr.mxu0 0.0
      %1372 = vmatpush1.msra.mxu0 0.0
      %1373 = vmatprep.subr.mxu0 0.0
      %1374 = vmatpush1.msra.mxu0 0.0
      %1375 = vmatprep.subr.mxu0 0.0
      %1376 = vmatpush1.msra.mxu0 0.0
      %1377 = vmatprep.subr.mxu0 0.0
      %1378 = vmatpush1.msra.mxu0 0.0
      %1379 = vmatprep.subr.mxu0 0.0
      %1380 = vmatpush1.msra.mxu0 0.0
      %1381 = vmatprep.subr.mxu0 0.0
      %1382 = vmatpush1.msra.mxu0 0.0
      %1383 = vmatprep.subr.mxu0 0.0
      %1384 = vmatpush1.msra.mxu0 0.0
      %1385 = vmatprep.subr.mxu0 0.0
      %1386 = vmatpush1.msra.mxu0 0.0
      %1387 = vmatprep.subr.mxu0 0.0
      %1388 = vmatpush1.msra.mxu0 0.0
      %1389 = vmatprep.subr.mxu0 0.0
      %1390 = vmatpush1.msra.mxu0 0.0
      %1391 = vmatprep.subr.mxu0 0.0
      %1392 = vmatpush1.msra.mxu0 0.0
      %1393 = vmatprep.subr.mxu0 0.0
      %1394 = vmatpush1.msra.mxu0 0.0
      %1395 = vmatprep.subr.mxu0 0.0
      %1396 = vmatpush1.msra.mxu0 0.0
      %1397 = vmatprep.subr.mxu0 0.0
      %1398 = vmatpush1.msra.mxu0 0.0
      %1399 = vmatprep.subr.mxu0 0.0
      %1400 = vmatpush1.msra.mxu0 0.0
      %1401 = vmatprep.subr.mxu0 0.0
      %1402 = vmatpush1.msra.mxu0 0.0
      %1403 = vmatprep.subr.mxu0 0.0
      %1404 = vmatpush1.msra.mxu0 0.0
      %1405 = vmatprep.subr.mxu0 0.0
      %1406 = vmatpush1.msra.mxu0 0.0
      %1407 = vmatprep.subr.mxu0 0.0
      %1408 = vmatpush1.msra.mxu0 0.0
      %1409 = vmatprep.subr.mxu0 0.0
      %1410 = vmatpush1.msra.mxu0 0.0
      %1411 = vmatprep.subr.mxu0 0.0
      %1412 = vmatpush1.msra.mxu0 0.0
      %1413 = vmatprep.mubr.f32.mxu0 0.0
      %1414 = vmatmul.mubr.f32.gmra.mrb[0].mxu0 %v1338
      %v1415 = vpop.f32.mrb[0].mxu0
      %v1416 = vadd.f32 0.0, %v1415
      %v1417 = vpop.f32.mrb[0].mxu0
      %1418 = vmatprep.mubr.f32.mxu0 0.0
      %1419 = vmatmul.mubr.f32.gmra.mrb[0].mxu0 %v1341
      %v1420 = vpop.f32.mrb[0].mxu0
      %v1421 = vadd.f32 0.0, %v1420
      %v1422 = vpop.f32.mrb[0].mxu0
      %1423 = vmatprep.mubr.f32.mxu0 0.0
      %1424 = vmatmul.mubr.f32.gmra.mrb[0].mxu0 %v1344
      %v1425 = vpop.f32.mrb[0].mxu0
      %v1426 = vadd.f32 0.0, %v1425
      %v1427 = vpop.f32.mrb[0].mxu0
      %1428 = vmatprep.mubr.f32.mxu0 0.0
      %1429 = vmatmul.mubr.f32.gmra.mrb[0].mxu0 %v1347
      %v1430 = vpop.f32.mrb[0].mxu0
      %v1431 = vadd.f32 0.0, %v1430
      %v1432 = vpop.f32.mrb[0].mxu0
      %1433 = vdwg.mxu0
      %v1434 = vadd.f32 %v1310, %v1416
      %v1435 = vadd.f32 %v1315, %v1421
      %v1436 = vadd.f32 %v1320, %v1426
      %v1437 = vadd.f32 %v1325, %v1431
      %s1438 = scalar_lea.vmem %s1, 352
      %v1439 = vld [vmem:[%s1438] sm:$0xff]
      %v1440 = vld [vmem:[%s1438 + $0x8] sm:$0xff]
      %v1441 = vld [vmem:[%s1438 + $0x10] sm:$0xff]
      %v1442 = vld [vmem:[%s1438 + $0x18] sm:$0xff]
      %v1443 = vld [vmem:[%s185] sm:$0xff]
      %v1444 = vld [vmem:[%s185 + $0x8] sm:$0xff]
      %v1445 = vld [vmem:[%s185 + $0x10] sm:$0xff]
      %v1446 = vld [vmem:[%s185 + $0x18] sm:$0xff]
      %v1448 = vsel %vm190, %v1439, 0
      %v1451 = vsel %vm190, %v1440, 0
      %v1454 = vsel %vm190, %v1441, 0
      %v1457 = vsel %vm190, %v1442, 0
      %1459 = vmatprep.subr.mxu0 0.0
      %1460 = vmatpush1.msra.mxu0 %v1443
      %1461 = vmatprep.subr.mxu0 0.0
      %1462 = vmatpush1.msra.mxu0 %v1444
      %1463 = vmatprep.subr.mxu0 0.0
      %1464 = vmatpush1.msra.mxu0 %v1445
      %1465 = vmatprep.subr.mxu0 0.0
      %1466 = vmatpush1.msra.mxu0 %v1446
      %1467 = vmatprep.subr.mxu0 0.0
      %1468 = vmatpush1.msra.mxu0 0.0
      %1469 = vmatprep.subr.mxu0 0.0
      %1470 = vmatpush1.msra.mxu0 0.0
      %1471 = vmatprep.subr.mxu0 0.0
      %1472 = vmatpush1.msra.mxu0 0.0
      %1473 = vmatprep.subr.mxu0 0.0
      %1474 = vmatpush1.msra.mxu0 0.0
      %1475 = vmatprep.subr.mxu0 0.0
      %1476 = vmatpush1.msra.mxu0 0.0
      %1477 = vmatprep.subr.mxu0 0.0
      %1478 = vmatpush1.msra.mxu0 0.0
      %1479 = vmatprep.subr.mxu0 0.0
      %1480 = vmatpush1.msra.mxu0 0.0
      %1481 = vmatprep.subr.mxu0 0.0
      %1482 = vmatpush1.msra.mxu0 0.0
      %1483 = vmatprep.subr.mxu0 0.0
      %1484 = vmatpush1.msra.mxu0 0.0
      %1485 = vmatprep.subr.mxu0 0.0
      %1486 = vmatpush1.msra.mxu0 0.0
      %1487 = vmatprep.subr.mxu0 0.0
      %1488 = vmatpush1.msra.mxu0 0.0
      %1489 = vmatprep.subr.mxu0 0.0
      %1490 = vmatpush1.msra.mxu0 0.0
      %1491 = vmatprep.subr.mxu0 0.0
      %1492 = vmatpush1.msra.mxu0 0.0
      %1493 = vmatprep.subr.mxu0 0.0
      %1494 = vmatpush1.msra.mxu0 0.0
      %1495 = vmatprep.subr.mxu0 0.0
      %1496 = vmatpush1.msra.mxu0 0.0
      %1497 = vmatprep.subr.mxu0 0.0
      %1498 = vmatpush1.msra.mxu0 0.0
      %1499 = vmatprep.subr.mxu0 0.0
      %1500 = vmatpush1.msra.mxu0 0.0
      %1501 = vmatprep.subr.mxu0 0.0
      %1502 = vmatpush1.msra.mxu0 0.0
      %1503 = vmatprep.subr.mxu0 0.0
      %1504 = vmatpush1.msra.mxu0 0.0
      %1505 = vmatprep.subr.mxu0 0.0
      %1506 = vmatpush1.msra.mxu0 0.0
      %1507 = vmatprep.subr.mxu0 0.0
      %1508 = vmatpush1.msra.mxu0 0.0
      %1509 = vmatprep.subr.mxu0 0.0
      %1510 = vmatpush1.msra.mxu0 0.0
      %1511 = vmatprep.subr.mxu0 0.0
      %1512 = vmatpush1.msra.mxu0 0.0
      %1513 = vmatprep.subr.mxu0 0.0
      %1514 = vmatpush1.msra.mxu0 0.0
      %1515 = vmatprep.subr.mxu0 0.0
      %1516 = vmatpush1.msra.mxu0 0.0
      %1517 = vmatprep.subr.mxu0 0.0
      %1518 = vmatpush1.msra.mxu0 0.0
      %1519 = vmatprep.subr.mxu0 0.0
      %1520 = vmatpush1.msra.mxu0 0.0
      %1521 = vmatprep.subr.mxu0 0.0
      %1522 = vmatpush1.msra.mxu0 0.0
      %1523 = vmatprep.mubr.f32.mxu0 0.0
      %1524 = vmatmul.mubr.f32.gmra.mrb[0].mxu0 %v1448
      %v1525 = vpop.f32.mrb[0].mxu0
      %v1526 = vadd.f32 0.0, %v1525
      %v1527 = vpop.f32.mrb[0].mxu0
      %1528 = vmatprep.mubr.f32.mxu0 0.0
      %1529 = vmatmul.mubr.f32.gmra.mrb[0].mxu0 %v1451
      %v1530 = vpop.f32.mrb[0].mxu0
      %v1531 = vadd.f32 0.0, %v1530
      %v1532 = vpop.f32.mrb[0].mxu0
      %1533 = vmatprep.mubr.f32.mxu0 0.0
      %1534 = vmatmul.mubr.f32.gmra.mrb[0].mxu0 %v1454
      %v1535 = vpop.f32.mrb[0].mxu0
      %v1536 = vadd.f32 0.0, %v1535
      %v1537 = vpop.f32.mrb[0].mxu0
      %1538 = vmatprep.mubr.f32.mxu0 0.0
      %1539 = vmatmul.mubr.f32.gmra.mrb[0].mxu0 %v1457
      %v1540 = vpop.f32.mrb[0].mxu0
      %v1541 = vadd.f32 0.0, %v1540
      %v1542 = vpop.f32.mrb[0].mxu0
      %1543 = vdwg.mxu0
      %v1544 = vadd.f32 %v1434, %v1526
      %v1545 = vadd.f32 %v1435, %v1531
      %v1546 = vadd.f32 %v1436, %v1536
      %v1547 = vadd.f32 %v1437, %v1541
      %v1548 = vld [vmem:[%s2] sm:$0xff]
      %v1549 = vld [vmem:[%s2 + $0x8] sm:$0xff]
      %v1550 = vld [vmem:[%s2 + $0x10] sm:$0xff]
      %v1551 = vld [vmem:[%s2 + $0x18] sm:$0xff]
      %1553 = vset.pattern.permute.xlu0 0
      %1554 = vperm.xlu0 %1553, %v1548
      %v1555 = vpop.permute.xlu0 %1554
      %1558 = vset.pattern.permute.xlu0 0
      %1559 = vperm.xlu0 %1558, %v1549
      %v1560 = vpop.permute.xlu0 %1559
      %1563 = vset.pattern.permute.xlu0 0
      %1564 = vperm.xlu0 %1563, %v1550
      %v1565 = vpop.permute.xlu0 %1564
      %1568 = vset.pattern.permute.xlu0 0
      %1569 = vperm.xlu0 %1568, %v1551
      %v1570 = vpop.permute.xlu0 %1569
      %v1572 = vadd.f32 %v1544, %v1555
      %v1573 = vadd.f32 %v1545, %v1560
      %v1574 = vadd.f32 %v1546, %v1565
      %v1575 = vadd.f32 %v1547, %v1570
      %v1576 = vmax.f32 %v1572, 0.0
      %v1577 = vmax.f32 %v1573, 0.0
      %v1578 = vmax.f32 %v1574, 0.0
      %v1579 = vmax.f32 %v1575, 0.0
      %s1580 = scalar_lea.vmem %s170, 64
      %1581 = vst.msk [vmem:[%s1580] sm:$0xff] %vm638, %v1576
      %1582 = vst.msk [vmem:[%s1580 + $0x8] sm:$0xff] %vm638, %v1577
      %1583 = vst.msk [vmem:[%s1580 + $0x10] sm:$0xff] %vm638, %v1578
      %1584 = vst.msk [vmem:[%s1580 + $0x18] sm:$0xff] %vm638, %v1579
      %s1585 = scalar_lea.vmem %s1, 384
      %v1586 = vld [vmem:[%s1585] sm:$0xff]
      %v1587 = vld [vmem:[%s1585 + $0x8] sm:$0xff]
      %v1588 = vld [vmem:[%s1585 + $0x10] sm:$0xff]
      %v1589 = vld [vmem:[%s1585 + $0x18] sm:$0xff]
      %s1590 = scalar_lea.vmem %s165, 256
      %v1591 = vld [vmem:[%s1590] sm:$0xff]
      %v1592 = vld [vmem:[%s1590 + $0x8] sm:$0xff]
      %v1593 = vld [vmem:[%s1590 + $0x10] sm:$0xff]
      %v1594 = vld [vmem:[%s1590 + $0x18] sm:$0xff]
      %s1595 = scalar_lea.vmem %s1, 416
      %v1596 = vld [vmem:[%s1595] sm:$0xff]
      %v1597 = vld [vmem:[%s1595 + $0x8] sm:$0xff]
      %v1598 = vld [vmem:[%s1595 + $0x10] sm:$0xff]
      %v1599 = vld [vmem:[%s1595 + $0x18] sm:$0xff]
      %v1600 = vld [vmem:[%s1119] sm:$0xff]
      %v1601 = vld [vmem:[%s1119 + $0x8] sm:$0xff]
      %v1602 = vld [vmem:[%s1119 + $0x10] sm:$0xff]
      %v1603 = vld [vmem:[%s1119 + $0x18] sm:$0xff]
      %v1605 = vsel %vm190, %v1596, 0
      %v1608 = vsel %vm190, %v1597, 0
      %v1611 = vsel %vm190, %v1598, 0
      %v1614 = vsel %vm190, %v1599, 0
      %1616 = vmatprep.subr.mxu0 0.0
      %1617 = vmatpush1.msra.mxu0 %v1600
      %1618 = vmatprep.subr.mxu0 0.0
      %1619 = vmatpush1.msra.mxu0 %v1601
      %1620 = vmatprep.subr.mxu0 0.0
      %1621 = vmatpush1.msra.mxu0 %v1602
      %1622 = vmatprep.subr.mxu0 0.0
      %1623 = vmatpush1.msra.mxu0 %v1603
      %1624 = vmatprep.subr.mxu0 0.0
      %1625 = vmatpush1.msra.mxu0 0.0
      %1626 = vmatprep.subr.mxu0 0.0
      %1627 = vmatpush1.msra.mxu0 0.0
      %1628 = vmatprep.subr.mxu0 0.0
      %1629 = vmatpush1.msra.mxu0 0.0
      %1630 = vmatprep.subr.mxu0 0.0
      %1631 = vmatpush1.msra.mxu0 0.0
      %1632 = vmatprep.subr.mxu0 0.0
      %1633 = vmatpush1.msra.mxu0 0.0
      %1634 = vmatprep.subr.mxu0 0.0
      %1635 = vmatpush1.msra.mxu0 0.0
      %1636 = vmatprep.subr.mxu0 0.0
      %1637 = vmatpush1.msra.mxu0 0.0
      %1638 = vmatprep.subr.mxu0 0.0
      %1639 = vmatpush1.msra.mxu0 0.0
      %1640 = vmatprep.subr.mxu0 0.0
      %1641 = vmatpush1.msra.mxu0 0.0
      %1642 = vmatprep.subr.mxu0 0.0
      %1643 = vmatpush1.msra.mxu0 0.0
      %1644 = vmatprep.subr.mxu0 0.0
      %1645 = vmatpush1.msra.mxu0 0.0
      %1646 = vmatprep.subr.mxu0 0.0
      %1647 = vmatpush1.msra.mxu0 0.0
      %1648 = vmatprep.subr.mxu0 0.0
      %1649 = vmatpush1.msra.mxu0 0.0
      %1650 = vmatprep.subr.mxu0 0.0
      %1651 = vmatpush1.msra.mxu0 0.0
      %1652 = vmatprep.subr.mxu0 0.0
      %1653 = vmatpush1.msra.mxu0 0.0
      %1654 = vmatprep.subr.mxu0 0.0
      %1655 = vmatpush1.msra.mxu0 0.0
      %1656 = vmatprep.subr.mxu0 0.0
      %1657 = vmatpush1.msra.mxu0 0.0
      %1658 = vmatprep.subr.mxu0 0.0
      %1659 = vmatpush1.msra.mxu0 0.0
      %1660 = vmatprep.subr.mxu0 0.0
      %1661 = vmatpush1.msra.mxu0 0.0
      %1662 = vmatprep.subr.mxu0 0.0
      %1663 = vmatpush1.msra.mxu0 0.0
      %1664 = vmatprep.subr.mxu0 0.0
      %1665 = vmatpush1.msra.mxu0 0.0
      %1666 = vmatprep.subr.mxu0 0.0
      %1667 = vmatpush1.msra.mxu0 0.0
      %1668 = vmatprep.subr.mxu0 0.0
      %1669 = vmatpush1.msra.mxu0 0.0
      %1670 = vmatprep.subr.mxu0 0.0
      %1671 = vmatpush1.msra.mxu0 0.0
      %1672 = vmatprep.subr.mxu0 0.0
      %1673 = vmatpush1.msra.mxu0 0.0
      %1674 = vmatprep.subr.mxu0 0.0
      %1675 = vmatpush1.msra.mxu0 0.0
      %1676 = vmatprep.subr.mxu0 0.0
      %1677 = vmatpush1.msra.mxu0 0.0
      %1678 = vmatprep.subr.mxu0 0.0
      %1679 = vmatpush1.msra.mxu0 0.0
      %1680 = vmatprep.mubr.f32.mxu0 0.0
      %1681 = vmatmul.mubr.f32.gmra.mrb[0].mxu0 %v1605
      %v1682 = vpop.f32.mrb[0].mxu0
      %v1683 = vadd.f32 0.0, %v1682
      %v1684 = vpop.f32.mrb[0].mxu0
      %1685 = vmatprep.mubr.f32.mxu0 0.0
      %1686 = vmatmul.mubr.f32.gmra.mrb[0].mxu0 %v1608
      %v1687 = vpop.f32.mrb[0].mxu0
      %v1688 = vadd.f32 0.0, %v1687
      %v1689 = vpop.f32.mrb[0].mxu0
      %1690 = vmatprep.mubr.f32.mxu0 0.0
      %1691 = vmatmul.mubr.f32.gmra.mrb[0].mxu0 %v1611
      %v1692 = vpop.f32.mrb[0].mxu0
      %v1693 = vadd.f32 0.0, %v1692
      %v1694 = vpop.f32.mrb[0].mxu0
      %1695 = vmatprep.mubr.f32.mxu0 0.0
      %1696 = vmatmul.mubr.f32.gmra.mrb[0].mxu0 %v1614
      %v1697 = vpop.f32.mrb[0].mxu0
      %v1698 = vadd.f32 0.0, %v1697
      %v1699 = vpop.f32.mrb[0].mxu0
      %1700 = vdwg.mxu0
      %v1702 = vsel %vm190, %v1586, 0
      %v1705 = vsel %vm190, %v1587, 0
      %v1708 = vsel %vm190, %v1588, 0
      %v1711 = vsel %vm190, %v1589, 0
      %1713 = vmatprep.subr.mxu0 0.0
      %1714 = vmatpush1.msra.mxu0 %v1591
      %1715 = vmatprep.subr.mxu0 0.0
      %1716 = vmatpush1.msra.mxu0 %v1592
      %1717 = vmatprep.subr.mxu0 0.0
      %1718 = vmatpush1.msra.mxu0 %v1593
      %1719 = vmatprep.subr.mxu0 0.0
      %1720 = vmatpush1.msra.mxu0 %v1594
      %1721 = vmatprep.subr.mxu0 0.0
      %1722 = vmatpush1.msra.mxu0 0.0
      %1723 = vmatprep.subr.mxu0 0.0
      %1724 = vmatpush1.msra.mxu0 0.0
      %1725 = vmatprep.subr.mxu0 0.0
      %1726 = vmatpush1.msra.mxu0 0.0
      %1727 = vmatprep.subr.mxu0 0.0
      %1728 = vmatpush1.msra.mxu0 0.0
      %1729 = vmatprep.subr.mxu0 0.0
      %1730 = vmatpush1.msra.mxu0 0.0
      %1731 = vmatprep.subr.mxu0 0.0
      %1732 = vmatpush1.msra.mxu0 0.0
      %1733 = vmatprep.subr.mxu0 0.0
      %1734 = vmatpush1.msra.mxu0 0.0
      %1735 = vmatprep.subr.mxu0 0.0
      %1736 = vmatpush1.msra.mxu0 0.0
      %1737 = vmatprep.subr.mxu0 0.0
      %1738 = vmatpush1.msra.mxu0 0.0
      %1739 = vmatprep.subr.mxu0 0.0
      %1740 = vmatpush1.msra.mxu0 0.0
      %1741 = vmatprep.subr.mxu0 0.0
      %1742 = vmatpush1.msra.mxu0 0.0
      %1743 = vmatprep.subr.mxu0 0.0
      %1744 = vmatpush1.msra.mxu0 0.0
      %1745 = vmatprep.subr.mxu0 0.0
      %1746 = vmatpush1.msra.mxu0 0.0
      %1747 = vmatprep.subr.mxu0 0.0
      %1748 = vmatpush1.msra.mxu0 0.0
      %1749 = vmatprep.subr.mxu0 0.0
      %1750 = vmatpush1.msra.mxu0 0.0
      %1751 = vmatprep.subr.mxu0 0.0
      %1752 = vmatpush1.msra.mxu0 0.0
      %1753 = vmatprep.subr.mxu0 0.0
      %1754 = vmatpush1.msra.mxu0 0.0
      %1755 = vmatprep.subr.mxu0 0.0
      %1756 = vmatpush1.msra.mxu0 0.0
      %1757 = vmatprep.subr.mxu0 0.0
      %1758 = vmatpush1.msra.mxu0 0.0
      %1759 = vmatprep.subr.mxu0 0.0
      %1760 = vmatpush1.msra.mxu0 0.0
      %1761 = vmatprep.subr.mxu0 0.0
      %1762 = vmatpush1.msra.mxu0 0.0
      %1763 = vmatprep.subr.mxu0 0.0
      %1764 = vmatpush1.msra.mxu0 0.0
      %1765 = vmatprep.subr.mxu0 0.0
      %1766 = vmatpush1.msra.mxu0 0.0
      %1767 = vmatprep.subr.mxu0 0.0
      %1768 = vmatpush1.msra.mxu0 0.0
      %1769 = vmatprep.subr.mxu0 0.0
      %1770 = vmatpush1.msra.mxu0 0.0
      %1771 = vmatprep.subr.mxu0 0.0
      %1772 = vmatpush1.msra.mxu0 0.0
      %1773 = vmatprep.subr.mxu0 0.0
      %1774 = vmatpush1.msra.mxu0 0.0
      %1775 = vmatprep.subr.mxu0 0.0
      %1776 = vmatpush1.msra.mxu0 0.0
      %1777 = vmatprep.mubr.f32.mxu0 0.0
      %1778 = vmatmul.mubr.f32.gmra.mrb[0].mxu0 %v1702
      %v1779 = vpop.f32.mrb[0].mxu0
      %v1780 = vadd.f32 %v1683, %v1779
      %v1781 = vpop.f32.mrb[0].mxu0
      %1782 = vmatprep.mubr.f32.mxu0 0.0
      %1783 = vmatmul.mubr.f32.gmra.mrb[0].mxu0 %v1705
      %v1784 = vpop.f32.mrb[0].mxu0
      %v1785 = vadd.f32 %v1688, %v1784
      %v1786 = vpop.f32.mrb[0].mxu0
      %1787 = vmatprep.mubr.f32.mxu0 0.0
      %1788 = vmatmul.mubr.f32.gmra.mrb[0].mxu0 %v1708
      %v1789 = vpop.f32.mrb[0].mxu0
      %v1790 = vadd.f32 %v1693, %v1789
      %v1791 = vpop.f32.mrb[0].mxu0
      %1792 = vmatprep.mubr.f32.mxu0 0.0
      %1793 = vmatmul.mubr.f32.gmra.mrb[0].mxu0 %v1711
      %v1794 = vpop.f32.mrb[0].mxu0
      %v1795 = vadd.f32 %v1698, %v1794
      %v1796 = vpop.f32.mrb[0].mxu0
      %1797 = vdwg.mxu0
      %s1798 = scalar_lea.vmem %s1, 448
      %v1799 = vld [vmem:[%s1798] sm:$0xff]
      %v1800 = vld [vmem:[%s1798 + $0x8] sm:$0xff]
      %v1801 = vld [vmem:[%s1798 + $0x10] sm:$0xff]
      %v1802 = vld [vmem:[%s1798 + $0x18] sm:$0xff]
      %v1803 = vld [vmem:[%s648] sm:$0xff]
      %v1804 = vld [vmem:[%s648 + $0x8] sm:$0xff]
      %v1805 = vld [vmem:[%s648 + $0x10] sm:$0xff]
      %v1806 = vld [vmem:[%s648 + $0x18] sm:$0xff]
      %v1808 = vsel %vm190, %v1799, 0
      %v1811 = vsel %vm190, %v1800, 0
      %v1814 = vsel %vm190, %v1801, 0
      %v1817 = vsel %vm190, %v1802, 0
      %1819 = vmatprep.subr.mxu0 0.0
      %1820 = vmatpush1.msra.mxu0 %v1803
      %1821 = vmatprep.subr.mxu0 0.0
      %1822 = vmatpush1.msra.mxu0 %v1804
      %1823 = vmatprep.subr.mxu0 0.0
      %1824 = vmatpush1.msra.mxu0 %v1805
      %1825 = vmatprep.subr.mxu0 0.0
      %1826 = vmatpush1.msra.mxu0 %v1806
      %1827 = vmatprep.subr.mxu0 0.0
      %1828 = vmatpush1.msra.mxu0 0.0
      %1829 = vmatprep.subr.mxu0 0.0
      %1830 = vmatpush1.msra.mxu0 0.0
      %1831 = vmatprep.subr.mxu0 0.0
      %1832 = vmatpush1.msra.mxu0 0.0
      %1833 = vmatprep.subr.mxu0 0.0
      %1834 = vmatpush1.msra.mxu0 0.0
      %1835 = vmatprep.subr.mxu0 0.0
      %1836 = vmatpush1.msra.mxu0 0.0
      %1837 = vmatprep.subr.mxu0 0.0
      %1838 = vmatpush1.msra.mxu0 0.0
      %1839 = vmatprep.subr.mxu0 0.0
      %1840 = vmatpush1.msra.mxu0 0.0
      %1841 = vmatprep.subr.mxu0 0.0
      %1842 = vmatpush1.msra.mxu0 0.0
      %1843 = vmatprep.subr.mxu0 0.0
      %1844 = vmatpush1.msra.mxu0 0.0
      %1845 = vmatprep.subr.mxu0 0.0
      %1846 = vmatpush1.msra.mxu0 0.0
      %1847 = vmatprep.subr.mxu0 0.0
      %1848 = vmatpush1.msra.mxu0 0.0
      %1849 = vmatprep.subr.mxu0 0.0
      %1850 = vmatpush1.msra.mxu0 0.0
      %1851 = vmatprep.subr.mxu0 0.0
      %1852 = vmatpush1.msra.mxu0 0.0
      %1853 = vmatprep.subr.mxu0 0.0
      %1854 = vmatpush1.msra.mxu0 0.0
      %1855 = vmatprep.subr.mxu0 0.0
      %1856 = vmatpush1.msra.mxu0 0.0
      %1857 = vmatprep.subr.mxu0 0.0
      %1858 = vmatpush1.msra.mxu0 0.0
      %1859 = vmatprep.subr.mxu0 0.0
      %1860 = vmatpush1.msra.mxu0 0.0
      %1861 = vmatprep.subr.mxu0 0.0
      %1862 = vmatpush1.msra.mxu0 0.0
      %1863 = vmatprep.subr.mxu0 0.0
      %1864 = vmatpush1.msra.mxu0 0.0
      %1865 = vmatprep.subr.mxu0 0.0
      %1866 = vmatpush1.msra.mxu0 0.0
      %1867 = vmatprep.subr.mxu0 0.0
      %1868 = vmatpush1.msra.mxu0 0.0
      %1869 = vmatprep.subr.mxu0 0.0
      %1870 = vmatpush1.msra.mxu0 0.0
      %1871 = vmatprep.subr.mxu0 0.0
      %1872 = vmatpush1.msra.mxu0 0.0
      %1873 = vmatprep.subr.mxu0 0.0
      %1874 = vmatpush1.msra.mxu0 0.0
      %1875 = vmatprep.subr.mxu0 0.0
      %1876 = vmatpush1.msra.mxu0 0.0
      %1877 = vmatprep.subr.mxu0 0.0
      %1878 = vmatpush1.msra.mxu0 0.0
      %1879 = vmatprep.subr.mxu0 0.0
      %1880 = vmatpush1.msra.mxu0 0.0
      %1881 = vmatprep.subr.mxu0 0.0
      %1882 = vmatpush1.msra.mxu0 0.0
      %1883 = vmatprep.mubr.f32.mxu0 0.0
      %1884 = vmatmul.mubr.f32.gmra.mrb[0].mxu0 %v1808
      %v1885 = vpop.f32.mrb[0].mxu0
      %v1886 = vadd.f32 0.0, %v1885
      %v1887 = vpop.f32.mrb[0].mxu0
      %1888 = vmatprep.mubr.f32.mxu0 0.0
      %1889 = vmatmul.mubr.f32.gmra.mrb[0].mxu0 %v1811
      %v1890 = vpop.f32.mrb[0].mxu0
      %v1891 = vadd.f32 0.0, %v1890
      %v1892 = vpop.f32.mrb[0].mxu0
      %1893 = vmatprep.mubr.f32.mxu0 0.0
      %1894 = vmatmul.mubr.f32.gmra.mrb[0].mxu0 %v1814
      %v1895 = vpop.f32.mrb[0].mxu0
      %v1896 = vadd.f32 0.0, %v1895
      %v1897 = vpop.f32.mrb[0].mxu0
      %1898 = vmatprep.mubr.f32.mxu0 0.0
      %1899 = vmatmul.mubr.f32.gmra.mrb[0].mxu0 %v1817
      %v1900 = vpop.f32.mrb[0].mxu0
      %v1901 = vadd.f32 0.0, %v1900
      %v1902 = vpop.f32.mrb[0].mxu0
      %1903 = vdwg.mxu0
      %v1904 = vadd.f32 %v1780, %v1886
      %v1905 = vadd.f32 %v1785, %v1891
      %v1906 = vadd.f32 %v1790, %v1896
      %v1907 = vadd.f32 %v1795, %v1901
      %s1908 = scalar_lea.vmem %s1, 480
      %v1909 = vld [vmem:[%s1908] sm:$0xff]
      %v1910 = vld [vmem:[%s1908 + $0x8] sm:$0xff]
      %v1911 = vld [vmem:[%s1908 + $0x10] sm:$0xff]
      %v1912 = vld [vmem:[%s1908 + $0x18] sm:$0xff]
      %v1913 = vld [vmem:[%s175] sm:$0xff]
      %v1914 = vld [vmem:[%s175 + $0x8] sm:$0xff]
      %v1915 = vld [vmem:[%s175 + $0x10] sm:$0xff]
      %v1916 = vld [vmem:[%s175 + $0x18] sm:$0xff]
      %v1918 = vsel %vm190, %v1909, 0
      %v1921 = vsel %vm190, %v1910, 0
      %v1924 = vsel %vm190, %v1911, 0
      %v1927 = vsel %vm190, %v1912, 0
      %1929 = vmatprep.subr.mxu0 0.0
      %1930 = vmatpush1.msra.mxu0 %v1913
      %1931 = vmatprep.subr.mxu0 0.0
      %1932 = vmatpush1.msra.mxu0 %v1914
      %1933 = vmatprep.subr.mxu0 0.0
      %1934 = vmatpush1.msra.mxu0 %v1915
      %1935 = vmatprep.subr.mxu0 0.0
      %1936 = vmatpush1.msra.mxu0 %v1916
      %1937 = vmatprep.subr.mxu0 0.0
      %1938 = vmatpush1.msra.mxu0 0.0
      %1939 = vmatprep.subr.mxu0 0.0
      %1940 = vmatpush1.msra.mxu0 0.0
      %1941 = vmatprep.subr.mxu0 0.0
      %1942 = vmatpush1.msra.mxu0 0.0
      %1943 = vmatprep.subr.mxu0 0.0
      %1944 = vmatpush1.msra.mxu0 0.0
      %1945 = vmatprep.subr.mxu0 0.0
      %1946 = vmatpush1.msra.mxu0 0.0
      %1947 = vmatprep.subr.mxu0 0.0
      %1948 = vmatpush1.msra.mxu0 0.0
      %1949 = vmatprep.subr.mxu0 0.0
      %1950 = vmatpush1.msra.mxu0 0.0
      %1951 = vmatprep.subr.mxu0 0.0
      %1952 = vmatpush1.msra.mxu0 0.0
      %1953 = vmatprep.subr.mxu0 0.0
      %1954 = vmatpush1.msra.mxu0 0.0
      %1955 = vmatprep.subr.mxu0 0.0
      %1956 = vmatpush1.msra.mxu0 0.0
      %1957 = vmatprep.subr.mxu0 0.0
      %1958 = vmatpush1.msra.mxu0 0.0
      %1959 = vmatprep.subr.mxu0 0.0
      %1960 = vmatpush1.msra.mxu0 0.0
      %1961 = vmatprep.subr.mxu0 0.0
      %1962 = vmatpush1.msra.mxu0 0.0
      %1963 = vmatprep.subr.mxu0 0.0
      %1964 = vmatpush1.msra.mxu0 0.0
      %1965 = vmatprep.subr.mxu0 0.0
      %1966 = vmatpush1.msra.mxu0 0.0
      %1967 = vmatprep.subr.mxu0 0.0
      %1968 = vmatpush1.msra.mxu0 0.0
      %1969 = vmatprep.subr.mxu0 0.0
      %1970 = vmatpush1.msra.mxu0 0.0
      %1971 = vmatprep.subr.mxu0 0.0
      %1972 = vmatpush1.msra.mxu0 0.0
      %1973 = vmatprep.subr.mxu0 0.0
      %1974 = vmatpush1.msra.mxu0 0.0
      %1975 = vmatprep.subr.mxu0 0.0
      %1976 = vmatpush1.msra.mxu0 0.0
      %1977 = vmatprep.subr.mxu0 0.0
      %1978 = vmatpush1.msra.mxu0 0.0
      %1979 = vmatprep.subr.mxu0 0.0
      %1980 = vmatpush1.msra.mxu0 0.0
      %1981 = vmatprep.subr.mxu0 0.0
      %1982 = vmatpush1.msra.mxu0 0.0
      %1983 = vmatprep.subr.mxu0 0.0
      %1984 = vmatpush1.msra.mxu0 0.0
      %1985 = vmatprep.subr.mxu0 0.0
      %1986 = vmatpush1.msra.mxu0 0.0
      %1987 = vmatprep.subr.mxu0 0.0
      %1988 = vmatpush1.msra.mxu0 0.0
      %1989 = vmatprep.subr.mxu0 0.0
      %1990 = vmatpush1.msra.mxu0 0.0
      %1991 = vmatprep.subr.mxu0 0.0
      %1992 = vmatpush1.msra.mxu0 0.0
      %1993 = vmatprep.mubr.f32.mxu0 0.0
      %1994 = vmatmul.mubr.f32.gmra.mrb[0].mxu0 %v1918
      %v1995 = vpop.f32.mrb[0].mxu0
      %v1996 = vadd.f32 0.0, %v1995
      %v1997 = vpop.f32.mrb[0].mxu0
      %1998 = vmatprep.mubr.f32.mxu0 0.0
      %1999 = vmatmul.mubr.f32.gmra.mrb[0].mxu0 %v1921
      %v2000 = vpop.f32.mrb[0].mxu0
      %v2001 = vadd.f32 0.0, %v2000
      %v2002 = vpop.f32.mrb[0].mxu0
      %2003 = vmatprep.mubr.f32.mxu0 0.0
      %2004 = vmatmul.mubr.f32.gmra.mrb[0].mxu0 %v1924
      %v2005 = vpop.f32.mrb[0].mxu0
      %v2006 = vadd.f32 0.0, %v2005
      %v2007 = vpop.f32.mrb[0].mxu0
      %2008 = vmatprep.mubr.f32.mxu0 0.0
      %2009 = vmatmul.mubr.f32.gmra.mrb[0].mxu0 %v1927
      %v2010 = vpop.f32.mrb[0].mxu0
      %v2011 = vadd.f32 0.0, %v2010
      %v2012 = vpop.f32.mrb[0].mxu0
      %2013 = vdwg.mxu0
      %v2014 = vadd.f32 %v1904, %v1996
      %v2015 = vadd.f32 %v1905, %v2001
      %v2016 = vadd.f32 %v1906, %v2006
      %v2017 = vadd.f32 %v1907, %v2011
      %v2018 = vld [vmem:[%s2] sm:$0xff]
      %v2019 = vld [vmem:[%s2 + $0x8] sm:$0xff]
      %v2020 = vld [vmem:[%s2 + $0x10] sm:$0xff]
      %v2021 = vld [vmem:[%s2 + $0x18] sm:$0xff]
      %2023 = vset.pattern.permute.xlu0 0
      %2024 = vperm.xlu0 %2023, %v2018
      %v2025 = vpop.permute.xlu0 %2024
      %2028 = vset.pattern.permute.xlu0 0
      %2029 = vperm.xlu0 %2028, %v2019
      %v2030 = vpop.permute.xlu0 %2029
      %2033 = vset.pattern.permute.xlu0 0
      %2034 = vperm.xlu0 %2033, %v2020
      %v2035 = vpop.permute.xlu0 %2034
      %2038 = vset.pattern.permute.xlu0 0
      %2039 = vperm.xlu0 %2038, %v2021
      %v2040 = vpop.permute.xlu0 %2039
      %v2042 = vadd.f32 %v2014, %v2025
      %v2043 = vadd.f32 %v2015, %v2030
      %v2044 = vadd.f32 %v2016, %v2035
      %v2045 = vadd.f32 %v2017, %v2040
      %v2046 = vmax.f32 %v2042, 0.0
      %v2047 = vmax.f32 %v2043, 0.0
      %v2048 = vmax.f32 %v2044, 0.0
      %v2049 = vmax.f32 %v2045, 0.0
      %s2050 = scalar_lea.vmem %s170, 96
      %2051 = vst.msk [vmem:[%s2050] sm:$0xff] %vm638, %v2046
      %2052 = vst.msk [vmem:[%s2050 + $0x8] sm:$0xff] %vm638, %v2047
      %2053 = vst.msk [vmem:[%s2050 + $0x10] sm:$0xff] %vm638, %v2048
      %2054 = vst.msk [vmem:[%s2050 + $0x18] sm:$0xff] %vm638, %v2049
      %p2055 = scmp.lt.s32.totalorder %s14, 1
      %s2056 = scalar_select %p2055, %s14, 1
      %s2057 = smul.addr %s2056, 16
      %s2058 = smul.addr %s2057, 8
      %s2059 = scalar_lea.vmem %s3, %s2058
      // Predicated region
      $region33: #{decoder_burgess_forward.6} parent=31 // pred_check
        %p2060 = pneg %p100
      $region34: #{decoder_burgess_forward.6} parent=31 // pred_check_branch
        %2062 = sbr.rel (%p2060) target = $region36
      $region35: #{decoder_burgess_forward.6} parent=31 // pred_region
        _
      $region36: #{decoder_burgess_forward.6} parent=31 // pred_fallthru
        _
    $region32: #{decoder_burgess_forward.6} parent=5 // pred_fallthru
      _
    %p2063 = scmp.le.s32.totalorder 2, %s9
    // Predicated region
    $region37: #{decoder_burgess_forward.6} parent=5 // pred_check
      %p2064 = pneg %p2063
    $region38: #{decoder_burgess_forward.6} parent=5 // pred_check_branch
      %2066 = sbr.rel (%p2064) target = $region40
    $region39: #{decoder_burgess_forward.6} parent=5 // pred_region
      %s2067 = ssub.s32 %s9, 2
      // Predicated region
      $region41: #{decoder_burgess_forward.6} parent=39 // pred_check
        %p2068 = pneg %p106
      $region42: #{decoder_burgess_forward.6} parent=39 // pred_check_branch
        %2070 = sbr.rel (%p2068) target = $region44
      $region43: #{decoder_burgess_forward.6} parent=39 // pred_region
        %p2071 = scmp.lt.s32.totalorder %s15, 1
        %s2072 = scalar_select %p2071, %s15, 1
        %s2073 = smul.addr %s2072, 16
        %s2074 = smul.addr %s2073, 8
        %s2075 = scalar_lea.vmem %s3, %s2074
      $region44: #{decoder_burgess_forward.6} parent=39 // pred_fallthru
        _
    $region40: #{decoder_burgess_forward.6} parent=5 // pred_fallthru
      _
  $region6: #{decoder_burgess_forward.6} parent=0 // loop_footer
    %s13 = sadd.s32 1, %s9
  $region7: #{decoder_burgess_forward.6} parent=0 // loop_footer_branch
    %8 = sbr.rel target = $region3
  $region8: #{decoder_burgess_forward.6} parent=0 // loop_exit
    _

// kernel: decoder_burgess_forward.7
$region0: #{decoder_burgess_forward.7}
  #allocation0 [shape = 'u32[]', space=smem, size = 0x4, offset = 0x4, fixed_abs, tag = 'smem constant byte address 0x4 - core index']
  #allocation1 [shape = 'u32[144,128]{1,0:T(1,128)}', space=vmem, size = 0x12000, scoped, tag = 'internal scratch']
  %s0 = inlined_call_operand.vmem [shape: f32[2,9,32,256], index: 0, kind: input, shape index: {}]
  %s1 = inlined_call_operand.vmem [shape: f32[16,8,32], index: 1, kind: input, shape index: {}]
  %s2 = inlined_call_operand.vmem [shape: f32[8,1], index: 2, kind: input, shape index: {}]
  %s3 = inlined_call_operand.vmem [shape: f32[2,4,8,256], index: 3, kind: output, shape index: {0}]
  %s4 = inlined_call_operand.vmem [shape: f32[2,4,8,256], index: 4, kind: output, shape index: {1}]
  %5 = xla_tuple %s3, %s4
  %s6 = sld [smem:[#allocation0]]
  $region53: #{decoder_burgess_forward.7} parent=0
    _
  %s8 = ssub.s32 1, %s6
  %s9 = scalar_select 0, %s8, %s6
  loop: start=0, step=1, limit=4
  $region2: #{decoder_burgess_forward.7} parent=0 // loop_pre_header
    _
  $region3: #{decoder_burgess_forward.7} parent=0 // loop_header
    %s11 = sphi 0, %s15
    %p12 = scmp.ge.s32.totalorder %s11, 4
    %s21 = sphi 0, %s23
    %s24 = sphi 0, %s21
    %s25 = sphi 0, %s24
    %s41 = sphi 0, %s25
    %s45 = sphi 0, %s45
    %s47 = sphi 0, %s45
    %s48 = sphi 0, %s47
    %s62 = sphi 0, %s48
    %s66 = sphi 0, %s66
    %s68 = sphi 0, %s66
    %s69 = sphi 0, %s68
    %s83 = sphi 0, %s69
    %s89 = sphi 0, %s91
    %s92 = sphi 0, %s89
    %s93 = sphi 0, %s92
    %s109 = sphi 0, %s93
    %s115 = sphi 0, %s117
    %s118 = sphi 0, %s115
    %s119 = sphi 0, %s118
    %s135 = sphi 0, %s119
  $region4: #{decoder_burgess_forward.7} parent=0 // loop_header_branch
    %14 = sbr.rel (%p12) target = $region8
  $region5: #{decoder_burgess_forward.7} parent=0 // loop_body
    %s16 = ssub.s32 %s11, 1
    %s17 = ssub.s32 %s11, 2
    %s18 = sadd.s32 %s11, 1
    %s19 = ssub.s32 %s11, %s18
    %p20 = scmp.eq.s32.totalorder %s19, 0
    %s22 = sadd.s32 %s21, 1
    %s23 = scalar_select %p20, %s21, %s22
    %p26 = pneg %p20
    %p27 = scmp.eq.s32.totalorder %s11, 1
    %p28 = por %p26, %p27
    %p29 = scmp.ne.s32.totalorder %s21, %s24
    %p30 = scmp.eq.s32.totalorder %s11, 0
    %p31 = por %p29, %p30
    %p32 = scmp.ne.s32.totalorder %s21, %s24
    %p33 = scmp.eq.s32.totalorder %s16, 1
    %p34 = por %p32, %p33
    %p35 = scmp.ne.s32.totalorder %s24, %s25
    %p36 = scmp.eq.s32.totalorder %s16, 0
    %p37 = por %p35, %p36
    %p38 = scmp.ne.s32.totalorder %s24, %s25
    %p39 = scmp.eq.s32.totalorder %s17, 1
    %p40 = por %p38, %p39
    %p42 = scmp.ne.s32.totalorder %s25, %s41
    %p43 = scmp.eq.s32.totalorder %s17, 0
    %p44 = por %p42, %p43
    %s46 = sadd.s32 %s45, 1
    %p49 = scmp.eq.s32.totalorder %s11, 1
    %p50 = scmp.ne.s32.totalorder %s45, %s47
    %p51 = scmp.eq.s32.totalorder %s11, 0
    %p52 = por %p50, %p51
    %p53 = scmp.ne.s32.totalorder %s45, %s47
    %p54 = scmp.eq.s32.totalorder %s16, 1
    %p55 = por %p53, %p54
    %p56 = scmp.ne.s32.totalorder %s47, %s48
    %p57 = scmp.eq.s32.totalorder %s16, 0
    %p58 = por %p56, %p57
    %p59 = scmp.ne.s32.totalorder %s47, %s48
    %p60 = scmp.eq.s32.totalorder %s17, 1
    %p61 = por %p59, %p60
    %p63 = scmp.ne.s32.totalorder %s48, %s62
    %p64 = scmp.eq.s32.totalorder %s17, 0
    %p65 = por %p63, %p64
    %s67 = sadd.s32 %s66, 1
    %p70 = scmp.eq.s32.totalorder %s11, 1
    %p71 = scmp.ne.s32.totalorder %s66, %s68
    %p72 = scmp.eq.s32.totalorder %s11, 0
    %p73 = por %p71, %p72
    %p74 = scmp.ne.s32.totalorder %s66, %s68
    %p75 = scmp.eq.s32.totalorder %s16, 1
    %p76 = por %p74, %p75
    %p77 = scmp.ne.s32.totalorder %s68, %s69
    %p78 = scmp.eq.s32.totalorder %s16, 0
    %p79 = por %p77, %p78
    %p80 = scmp.ne.s32.totalorder %s68, %s69
    %p81 = scmp.eq.s32.totalorder %s17, 1
    %p82 = por %p80, %p81
    %p84 = scmp.ne.s32.totalorder %s69, %s83
    %p85 = scmp.eq.s32.totalorder %s17, 0
    %p86 = por %p84, %p85
    %s87 = ssub.s32 %s11, %s18
    %p88 = scmp.eq.s32.totalorder %s87, 0
    %s90 = sadd.s32 %s89, 1
    %s91 = scalar_select %p88, %s89, %s90
    %p94 = pneg %p88
    %p95 = scmp.eq.s32.totalorder %s11, 1
    %p96 = por %p94, %p95
    %p97 = scmp.ne.s32.totalorder %s89, %s92
    %p98 = scmp.eq.s32.totalorder %s11, 0
    %p99 = por %p97, %p98
    %p100 = scmp.ne.s32.totalorder %s89, %s92
    %p101 = scmp.eq.s32.totalorder %s16, 1
    %p102 = por %p100, %p101
    %p103 = scmp.ne.s32.totalorder %s92, %s93
    %p104 = scmp.eq.s32.totalorder %s16, 0
    %p105 = por %p103, %p104
    %p106 = scmp.ne.s32.totalorder %s92, %s93
    %p107 = scmp.eq.s32.totalorder %s17, 1
    %p108 = por %p106, %p107
    %p110 = scmp.ne.s32.totalorder %s93, %s109
    %p111 = scmp.eq.s32.totalorder %s17, 0
    %p112 = por %p110, %p111
    %s113 = ssub.s32 %s11, %s18
    %p114 = scmp.eq.s32.totalorder %s113, 0
    %s116 = sadd.s32 %s115, 1
    %s117 = scalar_select %p114, %s115, %s116
    %p120 = pneg %p114
    %p121 = scmp.eq.s32.totalorder %s11, 1
    %p122 = por %p120, %p121
    %p123 = scmp.ne.s32.totalorder %s115, %s118
    %p124 = scmp.eq.s32.totalorder %s11, 0
    %p125 = por %p123, %p124
    %p126 = scmp.ne.s32.totalorder %s115, %s118
    %p127 = scmp.eq.s32.totalorder %s16, 1
    %p128 = por %p126, %p127
    %p129 = scmp.ne.s32.totalorder %s118, %s119
    %p130 = scmp.eq.s32.totalorder %s16, 0
    %p131 = por %p129, %p130
    %p132 = scmp.ne.s32.totalorder %s118, %s119
    %p133 = scmp.eq.s32.totalorder %s17, 1
    %p134 = por %p132, %p133
    %p136 = scmp.ne.s32.totalorder %s119, %s135
    %p137 = scmp.eq.s32.totalorder %s17, 0
    %p138 = por %p136, %p137
    %p139 = scmp.le.s32.totalorder 1, %s11
    %p140 = scmp.lt.s32.totalorder %s11, 3
    %p141 = pnand %p139, %p140
    %p142 = pneg %p141
    // Predicated region
    $region9: #{decoder_burgess_forward.7} parent=5 // pred_check
      _
    $region10: #{decoder_burgess_forward.7} parent=5 // pred_check_branch
      %144 = sbr.rel (%p141) target = $region12
    $region11: #{decoder_burgess_forward.7} parent=5 // pred_region
      %s145 = ssub.s32 %s11, 1
      // Predicated region
      $region13: #{decoder_burgess_forward.7} parent=11 // pred_check
        %p146 = pneg %p58
      $region14: #{decoder_burgess_forward.7} parent=11 // pred_check_branch
        %148 = sbr.rel (%p146) target = $region16
      $region15: #{decoder_burgess_forward.7} parent=11 // pred_region
        _
      $region16: #{decoder_burgess_forward.7} parent=11 // pred_fallthru
        _
      // Predicated region
      $region17: #{decoder_burgess_forward.7} parent=11 // pred_check
        %p149 = pneg %p79
      $region18: #{decoder_burgess_forward.7} parent=11 // pred_check_branch
        %151 = sbr.rel (%p149) target = $region20
      $region19: #{decoder_burgess_forward.7} parent=11 // pred_region
        _
      $region20: #{decoder_burgess_forward.7} parent=11 // pred_fallthru
        _
    $region12: #{decoder_burgess_forward.7} parent=5 // pred_fallthru
      _
    %p152 = scmp.lt.s32.totalorder %s11, 2
    // Predicated region
    $region21: #{decoder_burgess_forward.7} parent=5 // pred_check
      %p153 = pneg %p152
    $region22: #{decoder_burgess_forward.7} parent=5 // pred_check_branch
      %155 = sbr.rel (%p153) target = $region24
    $region23: #{decoder_burgess_forward.7} parent=5 // pred_region
      // Predicated region
      $region25: #{decoder_burgess_forward.7} parent=23 // pred_check
        %p156 = pneg %p31
      $region26: #{decoder_burgess_forward.7} parent=23 // pred_check_branch
        %158 = sbr.rel (%p156) target = $region28
      $region27: #{decoder_burgess_forward.7} parent=23 // pred_region
        %p159 = scmp.lt.s32.totalorder %s11, 1
        %s160 = scalar_select %p159, %s11, 1
        %s161 = smul.addr %s160, 72
        %s162 = smul.addr %s161, 8
        %s163 = scalar_lea.vmem %s0, %s162
      $region28: #{decoder_burgess_forward.7} parent=23 // pred_fallthru
        _
    $region24: #{decoder_burgess_forward.7} parent=5 // pred_fallthru
      _
    %p164 = scmp.le.s32.totalorder 1, %s11
    %p165 = scmp.lt.s32.totalorder %s11, 3
    %p166 = pnand %p164, %p165
    %p167 = pneg %p166
    // Predicated region
    $region29: #{decoder_burgess_forward.7} parent=5 // pred_check
      _
    $region30: #{decoder_burgess_forward.7} parent=5 // pred_check_branch
      %169 = sbr.rel (%p166) target = $region32
    $region31: #{decoder_burgess_forward.7} parent=5 // pred_region
      %s170 = ssub.s32 %s11, 1
      %p171 = scmp.lt.s32.totalorder %s16, 1
      %s172 = scalar_select %p171, %s16, 1
      %s173 = smul.addr %s172, 72
      %s174 = smul.addr %s173, 8
      %s175 = scalar_lea.vmem %s0, %s174
      %p176 = pneg %p37
      %p177 = pneg %p34
      %p178 = pneg %p58
      %p179 = pneg %p55
      %p180 = pneg %p79
      %p181 = pneg %p76
      %p182 = pneg %p105
      %p183 = pneg %p102
      %p184 = scmp.lt.s32.totalorder %s16, 1
      %s185 = scalar_select %p184, %s16, 1
      %s186 = smul.addr %s185, 8
      %s187 = smul.addr %s186, 8
      %s188 = scalar_lea.vmem %s3, %s187
      %p189 = pneg %p131
      %p190 = pneg %p128
      %p191 = scmp.lt.s32.totalorder %s16, 1
      %s192 = scalar_select %p191, %s16, 1
      %s193 = smul.addr %s192, 8
      %s194 = smul.addr %s193, 8
      %s195 = scalar_lea.vmem %s4, %s194
      %p196 = scmp.lt.s32.totalorder %s16, 1
      %s197 = scalar_select %p196, %s16, 1
      %s198 = smul.addr %s197, 72
      %s199 = smul.addr %s198, 8
      %s200 = scalar_lea.vmem %s0, %s199
      %p201 = scmp.lt.s32.totalorder %s16, 1
      %s202 = scalar_select %p201, %s16, 1
      %s203 = smul.addr %s202, 8
      %s204 = smul.addr %s203, 8
      %s205 = scalar_lea.vmem %s3, %s204
      %p206 = scmp.lt.s32.totalorder %s16, 1
      %s207 = scalar_select %p206, %s16, 1
      %s208 = smul.addr %s207, 8
      %s209 = smul.addr %s208, 8
      %s210 = scalar_lea.vmem %s4, %s209
      %v211 = vld [vmem:[%s1] sm:$0xff]
      %s212 = scalar_lea.vmem %s200, 256
      %v213 = vld [vmem:[%s212] sm:$0xff]
      %v214 = vld [vmem:[%s212 + $0x8] sm:$0xff]
      %v215 = vld [vmem:[%s212 + $0x10] sm:$0xff]
      %v216 = vld [vmem:[%s212 + $0x18] sm:$0xff]
      %v217 = vld [vmem:[%s212 + $0x20] sm:$0xff]
      %v218 = vld [vmem:[%s212 + $0x28] sm:$0xff]
      %v219 = vld [vmem:[%s212 + $0x30] sm:$0xff]
      %v220 = vld [vmem:[%s212 + $0x38] sm:$0xff]
      %s221 = scalar_lea.vmem %s1, 8
      %v222 = vld [vmem:[%s221] sm:$0xff]
      %s223 = scalar_lea.vmem %s200, 192
      %v224 = vld [vmem:[%s223] sm:$0xff]
      %v225 = vld [vmem:[%s223 + $0x8] sm:$0xff]
      %v226 = vld [vmem:[%s223 + $0x10] sm:$0xff]
      %v227 = vld [vmem:[%s223 + $0x18] sm:$0xff]
      %v228 = vld [vmem:[%s223 + $0x20] sm:$0xff]
      %v229 = vld [vmem:[%s223 + $0x28] sm:$0xff]
      %v230 = vld [vmem:[%s223 + $0x30] sm:$0xff]
      %v231 = vld [vmem:[%s223 + $0x38] sm:$0xff]
      %vm232 = vcmask 261120
      %v234 = vsel %vm232, %v222, 0
      %236 = vmatprep.subr.mxu0 %v225
      %237 = vmatpush1.msra.mxu0 %v224
      %238 = vmatprep.subr.mxu0 %v227
      %239 = vmatpush1.msra.mxu0 %v226
      %240 = vmatprep.subr.mxu0 %v229
      %241 = vmatpush1.msra.mxu0 %v228
      %242 = vmatprep.subr.mxu0 %v231
      %243 = vmatpush1.msra.mxu0 %v230
      %244 = vmatprep.subr.mxu0 0.0
      %245 = vmatpush1.msra.mxu0 0.0
      %246 = vmatprep.subr.mxu0 0.0
      %247 = vmatpush1.msra.mxu0 0.0
      %248 = vmatprep.subr.mxu0 0.0
      %249 = vmatpush1.msra.mxu0 0.0
      %250 = vmatprep.subr.mxu0 0.0
      %251 = vmatpush1.msra.mxu0 0.0
      %252 = vmatprep.subr.mxu0 0.0
      %253 = vmatpush1.msra.mxu0 0.0
      %254 = vmatprep.subr.mxu0 0.0
      %255 = vmatpush1.msra.mxu0 0.0
      %256 = vmatprep.subr.mxu0 0.0
      %257 = vmatpush1.msra.mxu0 0.0
      %258 = vmatprep.subr.mxu0 0.0
      %259 = vmatpush1.msra.mxu0 0.0
      %260 = vmatprep.subr.mxu0 0.0
      %261 = vmatpush1.msra.mxu0 0.0
      %262 = vmatprep.subr.mxu0 0.0
      %263 = vmatpush1.msra.mxu0 0.0
      %264 = vmatprep.subr.mxu0 0.0
      %265 = vmatpush1.msra.mxu0 0.0
      %266 = vmatprep.subr.mxu0 0.0
      %267 = vmatpush1.msra.mxu0 0.0
      %268 = vmatprep.subr.mxu0 0.0
      %269 = vmatpush1.msra.mxu0 0.0
      %270 = vmatprep.subr.mxu0 0.0
      %271 = vmatpush1.msra.mxu0 0.0
      %272 = vmatprep.subr.mxu0 0.0
      %273 = vmatpush1.msra.mxu0 0.0
      %274 = vmatprep.subr.mxu0 0.0
      %275 = vmatpush1.msra.mxu0 0.0
      %276 = vmatprep.subr.mxu0 0.0
      %277 = vmatpush1.msra.mxu0 0.0
      %278 = vmatprep.subr.mxu0 0.0
      %279 = vmatpush1.msra.mxu0 0.0
      %280 = vmatprep.subr.mxu0 0.0
      %281 = vmatpush1.msra.mxu0 0.0
      %282 = vmatprep.subr.mxu0 0.0
      %283 = vmatpush1.msra.mxu0 0.0
      %284 = vmatprep.subr.mxu0 0.0
      %285 = vmatpush1.msra.mxu0 0.0
      %286 = vmatprep.subr.mxu0 0.0
      %287 = vmatpush1.msra.mxu0 0.0
      %288 = vmatprep.subr.mxu0 0.0
      %289 = vmatpush1.msra.mxu0 0.0
      %290 = vmatprep.subr.mxu0 0.0
      %291 = vmatpush1.msra.mxu0 0.0
      %292 = vmatprep.subr.mxu0 0.0
      %293 = vmatpush1.msra.mxu0 0.0
      %294 = vmatprep.subr.mxu0 0.0
      %295 = vmatpush1.msra.mxu0 0.0
      %296 = vmatprep.subr.mxu0 0.0
      %297 = vmatpush1.msra.mxu0 0.0
      %298 = vmatprep.subr.mxu0 0.0
      %299 = vmatpush1.msra.mxu0 0.0
      %300 = vmatprep.mubr.f32.mxu0 0.0
      %301 = vmatmul.mubr.f32.gmra.mrb[0].mxu0 %v234
      %v302 = vpop.f32.mrb[0].mxu0
      %v303 = vadd.f32 0.0, %v302
      %v304 = vpop.f32.mrb[0].mxu0
      %v305 = vadd.f32 0.0, %v304
      %306 = vdwg.mxu0
      %v308 = vsel %vm232, %v211, 0
      %310 = vmatprep.subr.mxu0 %v214
      %311 = vmatpush1.msra.mxu0 %v213
      %312 = vmatprep.subr.mxu0 %v216
      %313 = vmatpush1.msra.mxu0 %v215
      %314 = vmatprep.subr.mxu0 %v218
      %315 = vmatpush1.msra.mxu0 %v217
      %316 = vmatprep.subr.mxu0 %v220
      %317 = vmatpush1.msra.mxu0 %v219
      %318 = vmatprep.subr.mxu0 0.0
      %319 = vmatpush1.msra.mxu0 0.0
      %320 = vmatprep.subr.mxu0 0.0
      %321 = vmatpush1.msra.mxu0 0.0
      %322 = vmatprep.subr.mxu0 0.0
      %323 = vmatpush1.msra.mxu0 0.0
      %324 = vmatprep.subr.mxu0 0.0
      %325 = vmatpush1.msra.mxu0 0.0
      %326 = vmatprep.subr.mxu0 0.0
      %327 = vmatpush1.msra.mxu0 0.0
      %328 = vmatprep.subr.mxu0 0.0
      %329 = vmatpush1.msra.mxu0 0.0
      %330 = vmatprep.subr.mxu0 0.0
      %331 = vmatpush1.msra.mxu0 0.0
      %332 = vmatprep.subr.mxu0 0.0
      %333 = vmatpush1.msra.mxu0 0.0
      %334 = vmatprep.subr.mxu0 0.0
      %335 = vmatpush1.msra.mxu0 0.0
      %336 = vmatprep.subr.mxu0 0.0
      %337 = vmatpush1.msra.mxu0 0.0
      %338 = vmatprep.subr.mxu0 0.0
      %339 = vmatpush1.msra.mxu0 0.0
      %340 = vmatprep.subr.mxu0 0.0
      %341 = vmatpush1.msra.mxu0 0.0
      %342 = vmatprep.subr.mxu0 0.0
      %343 = vmatpush1.msra.mxu0 0.0
      %344 = vmatprep.subr.mxu0 0.0
      %345 = vmatpush1.msra.mxu0 0.0
      %346 = vmatprep.subr.mxu0 0.0
      %347 = vmatpush1.msra.mxu0 0.0
      %348 = vmatprep.subr.mxu0 0.0
      %349 = vmatpush1.msra.mxu0 0.0
      %350 = vmatprep.subr.mxu0 0.0
      %351 = vmatpush1.msra.mxu0 0.0
      %352 = vmatprep.subr.mxu0 0.0
      %353 = vmatpush1.msra.mxu0 0.0
      %354 = vmatprep.subr.mxu0 0.0
      %355 = vmatpush1.msra.mxu0 0.0
      %356 = vmatprep.subr.mxu0 0.0
      %357 = vmatpush1.msra.mxu0 0.0
      %358 = vmatprep.subr.mxu0 0.0
      %359 = vmatpush1.msra.mxu0 0.0
      %360 = vmatprep.subr.mxu0 0.0
      %361 = vmatpush1.msra.mxu0 0.0
      %362 = vmatprep.subr.mxu0 0.0
      %363 = vmatpush1.msra.mxu0 0.0
      %364 = vmatprep.subr.mxu0 0.0
      %365 = vmatpush1.msra.mxu0 0.0
      %366 = vmatprep.subr.mxu0 0.0
      %367 = vmatpush1.msra.mxu0 0.0
      %368 = vmatprep.subr.mxu0 0.0
      %369 = vmatpush1.msra.mxu0 0.0
      %370 = vmatprep.subr.mxu0 0.0
      %371 = vmatpush1.msra.mxu0 0.0
      %372 = vmatprep.subr.mxu0 0.0
      %373 = vmatpush1.msra.mxu0 0.0
      %374 = vmatprep.mubr.f32.mxu0 0.0
      %375 = vmatmul.mubr.f32.gmra.mrb[0].mxu0 %v308
      %v376 = vpop.f32.mrb[0].mxu0
      %v377 = vadd.f32 %v303, %v376
      %v378 = vpop.f32.mrb[0].mxu0
      %v379 = vadd.f32 %v305, %v378
      %380 = vdwg.mxu0
      %s381 = scalar_lea.vmem %s1, 16
      %v382 = vld [vmem:[%s381] sm:$0xff]
      %s383 = scalar_lea.vmem %s200, 64
      %v384 = vld [vmem:[%s383] sm:$0xff]
      %v385 = vld [vmem:[%s383 + $0x8] sm:$0xff]
      %v386 = vld [vmem:[%s383 + $0x10] sm:$0xff]
      %v387 = vld [vmem:[%s383 + $0x18] sm:$0xff]
      %v388 = vld [vmem:[%s383 + $0x20] sm:$0xff]
      %v389 = vld [vmem:[%s383 + $0x28] sm:$0xff]
      %v390 = vld [vmem:[%s383 + $0x30] sm:$0xff]
      %v391 = vld [vmem:[%s383 + $0x38] sm:$0xff]
      %v393 = vsel %vm232, %v382, 0
      %395 = vmatprep.subr.mxu0 %v385
      %396 = vmatpush1.msra.mxu0 %v384
      %397 = vmatprep.subr.mxu0 %v387
      %398 = vmatpush1.msra.mxu0 %v386
      %399 = vmatprep.subr.mxu0 %v389
      %400 = vmatpush1.msra.mxu0 %v388
      %401 = vmatprep.subr.mxu0 %v391
      %402 = vmatpush1.msra.mxu0 %v390
      %403 = vmatprep.subr.mxu0 0.0
      %404 = vmatpush1.msra.mxu0 0.0
      %405 = vmatprep.subr.mxu0 0.0
      %406 = vmatpush1.msra.mxu0 0.0
      %407 = vmatprep.subr.mxu0 0.0
      %408 = vmatpush1.msra.mxu0 0.0
      %409 = vmatprep.subr.mxu0 0.0
      %410 = vmatpush1.msra.mxu0 0.0
      %411 = vmatprep.subr.mxu0 0.0
      %412 = vmatpush1.msra.mxu0 0.0
      %413 = vmatprep.subr.mxu0 0.0
      %414 = vmatpush1.msra.mxu0 0.0
      %415 = vmatprep.subr.mxu0 0.0
      %416 = vmatpush1.msra.mxu0 0.0
      %417 = vmatprep.subr.mxu0 0.0
      %418 = vmatpush1.msra.mxu0 0.0
      %419 = vmatprep.subr.mxu0 0.0
      %420 = vmatpush1.msra.mxu0 0.0
      %421 = vmatprep.subr.mxu0 0.0
      %422 = vmatpush1.msra.mxu0 0.0
      %423 = vmatprep.subr.mxu0 0.0
      %424 = vmatpush1.msra.mxu0 0.0
      %425 = vmatprep.subr.mxu0 0.0
      %426 = vmatpush1.msra.mxu0 0.0
      %427 = vmatprep.subr.mxu0 0.0
      %428 = vmatpush1.msra.mxu0 0.0
      %429 = vmatprep.subr.mxu0 0.0
      %430 = vmatpush1.msra.mxu0 0.0
      %431 = vmatprep.subr.mxu0 0.0
      %432 = vmatpush1.msra.mxu0 0.0
      %433 = vmatprep.subr.mxu0 0.0
      %434 = vmatpush1.msra.mxu0 0.0
      %435 = vmatprep.subr.mxu0 0.0
      %436 = vmatpush1.msra.mxu0 0.0
      %437 = vmatprep.subr.mxu0 0.0
      %438 = vmatpush1.msra.mxu0 0.0
      %439 = vmatprep.subr.mxu0 0.0
      %440 = vmatpush1.msra.mxu0 0.0
      %441 = vmatprep.subr.mxu0 0.0
      %442 = vmatpush1.msra.mxu0 0.0
      %443 = vmatprep.subr.mxu0 0.0
      %444 = vmatpush1.msra.mxu0 0.0
      %445 = vmatprep.subr.mxu0 0.0
      %446 = vmatpush1.msra.mxu0 0.0
      %447 = vmatprep.subr.mxu0 0.0
      %448 = vmatpush1.msra.mxu0 0.0
      %449 = vmatprep.subr.mxu0 0.0
      %450 = vmatpush1.msra.mxu0 0.0
      %451 = vmatprep.subr.mxu0 0.0
      %452 = vmatpush1.msra.mxu0 0.0
      %453 = vmatprep.subr.mxu0 0.0
      %454 = vmatpush1.msra.mxu0 0.0
      %455 = vmatprep.subr.mxu0 0.0
      %456 = vmatpush1.msra.mxu0 0.0
      %457 = vmatprep.subr.mxu0 0.0
      %458 = vmatpush1.msra.mxu0 0.0
      %459 = vmatprep.mubr.f32.mxu0 0.0
      %460 = vmatmul.mubr.f32.gmra.mrb[0].mxu0 %v393
      %v461 = vpop.f32.mrb[0].mxu0
      %v462 = vadd.f32 0.0, %v461
      %v463 = vpop.f32.mrb[0].mxu0
      %v464 = vadd.f32 0.0, %v463
      %465 = vdwg.mxu0
      %v466 = vadd.f32 %v377, %v462
      %v467 = vadd.f32 %v379, %v464
      %s468 = scalar_lea.vmem %s1, 24
      %v469 = vld [vmem:[%s468] sm:$0xff]
      %v470 = vld [vmem:[%s200] sm:$0xff]
      %v471 = vld [vmem:[%s200 + $0x8] sm:$0xff]
      %v472 = vld [vmem:[%s200 + $0x10] sm:$0xff]
      %v473 = vld [vmem:[%s200 + $0x18] sm:$0xff]
      %v474 = vld [vmem:[%s200 + $0x20] sm:$0xff]
      %v475 = vld [vmem:[%s200 + $0x28] sm:$0xff]
      %v476 = vld [vmem:[%s200 + $0x30] sm:$0xff]
      %v477 = vld [vmem:[%s200 + $0x38] sm:$0xff]
      %v479 = vsel %vm232, %v469, 0
      %481 = vmatprep.subr.mxu0 %v471
      %482 = vmatpush1.msra.mxu0 %v470
      %483 = vmatprep.subr.mxu0 %v473
      %484 = vmatpush1.msra.mxu0 %v472
      %485 = vmatprep.subr.mxu0 %v475
      %486 = vmatpush1.msra.mxu0 %v474
      %487 = vmatprep.subr.mxu0 %v477
      %488 = vmatpush1.msra.mxu0 %v476
      %489 = vmatprep.subr.mxu0 0.0
      %490 = vmatpush1.msra.mxu0 0.0
      %491 = vmatprep.subr.mxu0 0.0
      %492 = vmatpush1.msra.mxu0 0.0
      %493 = vmatprep.subr.mxu0 0.0
      %494 = vmatpush1.msra.mxu0 0.0
      %495 = vmatprep.subr.mxu0 0.0
      %496 = vmatpush1.msra.mxu0 0.0
      %497 = vmatprep.subr.mxu0 0.0
      %498 = vmatpush1.msra.mxu0 0.0
      %499 = vmatprep.subr.mxu0 0.0
      %500 = vmatpush1.msra.mxu0 0.0
      %501 = vmatprep.subr.mxu0 0.0
      %502 = vmatpush1.msra.mxu0 0.0
      %503 = vmatprep.subr.mxu0 0.0
      %504 = vmatpush1.msra.mxu0 0.0
      %505 = vmatprep.subr.mxu0 0.0
      %506 = vmatpush1.msra.mxu0 0.0
      %507 = vmatprep.subr.mxu0 0.0
      %508 = vmatpush1.msra.mxu0 0.0
      %509 = vmatprep.subr.mxu0 0.0
      %510 = vmatpush1.msra.mxu0 0.0
      %511 = vmatprep.subr.mxu0 0.0
      %512 = vmatpush1.msra.mxu0 0.0
      %513 = vmatprep.subr.mxu0 0.0
      %514 = vmatpush1.msra.mxu0 0.0
      %515 = vmatprep.subr.mxu0 0.0
      %516 = vmatpush1.msra.mxu0 0.0
      %517 = vmatprep.subr.mxu0 0.0
      %518 = vmatpush1.msra.mxu0 0.0
      %519 = vmatprep.subr.mxu0 0.0
      %520 = vmatpush1.msra.mxu0 0.0
      %521 = vmatprep.subr.mxu0 0.0
      %522 = vmatpush1.msra.mxu0 0.0
      %523 = vmatprep.subr.mxu0 0.0
      %524 = vmatpush1.msra.mxu0 0.0
      %525 = vmatprep.subr.mxu0 0.0
      %526 = vmatpush1.msra.mxu0 0.0
      %527 = vmatprep.subr.mxu0 0.0
      %528 = vmatpush1.msra.mxu0 0.0
      %529 = vmatprep.subr.mxu0 0.0
      %530 = vmatpush1.msra.mxu0 0.0
      %531 = vmatprep.subr.mxu0 0.0
      %532 = vmatpush1.msra.mxu0 0.0
      %533 = vmatprep.subr.mxu0 0.0
      %534 = vmatpush1.msra.mxu0 0.0
      %535 = vmatprep.subr.mxu0 0.0
      %536 = vmatpush1.msra.mxu0 0.0
      %537 = vmatprep.subr.mxu0 0.0
      %538 = vmatpush1.msra.mxu0 0.0
      %539 = vmatprep.subr.mxu0 0.0
      %540 = vmatpush1.msra.mxu0 0.0
      %541 = vmatprep.subr.mxu0 0.0
      %542 = vmatpush1.msra.mxu0 0.0
      %543 = vmatprep.subr.mxu0 0.0
      %544 = vmatpush1.msra.mxu0 0.0
      %545 = vmatprep.mubr.f32.mxu0 0.0
      %546 = vmatmul.mubr.f32.gmra.mrb[0].mxu0 %v479
      %v547 = vpop.f32.mrb[0].mxu0
      %v548 = vadd.f32 0.0, %v547
      %v549 = vpop.f32.mrb[0].mxu0
      %v550 = vadd.f32 0.0, %v549
      %551 = vdwg.mxu0
      %v552 = vadd.f32 %v466, %v548
      %v553 = vadd.f32 %v467, %v550
      %v554 = vld [vmem:[%s2] sm:$0xff]
      %556 = vset.pattern.permute.xlu0 0
      %557 = vperm.xlu0 %556, %v554
      %v558 = vpop.permute.xlu0 %557
      %v560 = vadd.f32 %v552, %v558
      %v561 = vadd.f32 %v553, %v558
      %562 = vst [vmem:[%s205] sm:$0xff] %v560
      %563 = vst [vmem:[%s205 + $0x8] sm:$0xff] %v561
      %v564 = vxor.u32 %v560, 2147483648
      %v565 = vxor.u32 %v561, 2147483648
      %v566 = vmul.f32 %v564, 1.442695
      %v567 = vpow.pop %v566
      %v568 = vmul.f32 %v565, 1.442695
      %v569 = vpow.pop %v568
      %v570 = vadd.f32 %v567, 1.0
      %v571 = vadd.f32 %v569, 1.0
      %v572 = vrcp.pop %v570
      %v573 = vmul.f32 1.0, %v572
      %v574 = vrcp.pop %v571
      %v575 = vmul.f32 1.0, %v574
      %576 = vst [vmem:[%s210] sm:$0xff] %v573
      %577 = vst [vmem:[%s210 + $0x8] sm:$0xff] %v575
      %s578 = scalar_lea.vmem %s1, 32
      %v579 = vld [vmem:[%s578] sm:$0xff]
      %s580 = scalar_lea.vmem %s200, 320
      %v581 = vld [vmem:[%s580] sm:$0xff]
      %v582 = vld [vmem:[%s580 + $0x8] sm:$0xff]
      %v583 = vld [vmem:[%s580 + $0x10] sm:$0xff]
      %v584 = vld [vmem:[%s580 + $0x18] sm:$0xff]
      %v585 = vld [vmem:[%s580 + $0x20] sm:$0xff]
      %v586 = vld [vmem:[%s580 + $0x28] sm:$0xff]
      %v587 = vld [vmem:[%s580 + $0x30] sm:$0xff]
      %v588 = vld [vmem:[%s580 + $0x38] sm:$0xff]
      %s589 = scalar_lea.vmem %s1, 40
      %v590 = vld [vmem:[%s589] sm:$0xff]
      %v591 = vld [vmem:[%s212] sm:$0xff]
      %v592 = vld [vmem:[%s212 + $0x8] sm:$0xff]
      %v593 = vld [vmem:[%s212 + $0x10] sm:$0xff]
      %v594 = vld [vmem:[%s212 + $0x18] sm:$0xff]
      %v595 = vld [vmem:[%s212 + $0x20] sm:$0xff]
      %v596 = vld [vmem:[%s212 + $0x28] sm:$0xff]
      %v597 = vld [vmem:[%s212 + $0x30] sm:$0xff]
      %v598 = vld [vmem:[%s212 + $0x38] sm:$0xff]
      %v600 = vsel %vm232, %v590, 0
      %602 = vmatprep.subr.mxu0 %v592
      %603 = vmatpush1.msra.mxu0 %v591
      %604 = vmatprep.subr.mxu0 %v594
      %605 = vmatpush1.msra.mxu0 %v593
      %606 = vmatprep.subr.mxu0 %v596
      %607 = vmatpush1.msra.mxu0 %v595
      %608 = vmatprep.subr.mxu0 %v598
      %609 = vmatpush1.msra.mxu0 %v597
      %610 = vmatprep.subr.mxu0 0.0
      %611 = vmatpush1.msra.mxu0 0.0
      %612 = vmatprep.subr.mxu0 0.0
      %613 = vmatpush1.msra.mxu0 0.0
      %614 = vmatprep.subr.mxu0 0.0
      %615 = vmatpush1.msra.mxu0 0.0
      %616 = vmatprep.subr.mxu0 0.0
      %617 = vmatpush1.msra.mxu0 0.0
      %618 = vmatprep.subr.mxu0 0.0
      %619 = vmatpush1.msra.mxu0 0.0
      %620 = vmatprep.subr.mxu0 0.0
      %621 = vmatpush1.msra.mxu0 0.0
      %622 = vmatprep.subr.mxu0 0.0
      %623 = vmatpush1.msra.mxu0 0.0
      %624 = vmatprep.subr.mxu0 0.0
      %625 = vmatpush1.msra.mxu0 0.0
      %626 = vmatprep.subr.mxu0 0.0
      %627 = vmatpush1.msra.mxu0 0.0
      %628 = vmatprep.subr.mxu0 0.0
      %629 = vmatpush1.msra.mxu0 0.0
      %630 = vmatprep.subr.mxu0 0.0
      %631 = vmatpush1.msra.mxu0 0.0
      %632 = vmatprep.subr.mxu0 0.0
      %633 = vmatpush1.msra.mxu0 0.0
      %634 = vmatprep.subr.mxu0 0.0
      %635 = vmatpush1.msra.mxu0 0.0
      %636 = vmatprep.subr.mxu0 0.0
      %637 = vmatpush1.msra.mxu0 0.0
      %638 = vmatprep.subr.mxu0 0.0
      %639 = vmatpush1.msra.mxu0 0.0
      %640 = vmatprep.subr.mxu0 0.0
      %641 = vmatpush1.msra.mxu0 0.0
      %642 = vmatprep.subr.mxu0 0.0
      %643 = vmatpush1.msra.mxu0 0.0
      %644 = vmatprep.subr.mxu0 0.0
      %645 = vmatpush1.msra.mxu0 0.0
      %646 = vmatprep.subr.mxu0 0.0
      %647 = vmatpush1.msra.mxu0 0.0
      %648 = vmatprep.subr.mxu0 0.0
      %649 = vmatpush1.msra.mxu0 0.0
      %650 = vmatprep.subr.mxu0 0.0
      %651 = vmatpush1.msra.mxu0 0.0
      %652 = vmatprep.subr.mxu0 0.0
      %653 = vmatpush1.msra.mxu0 0.0
      %654 = vmatprep.subr.mxu0 0.0
      %655 = vmatpush1.msra.mxu0 0.0
      %656 = vmatprep.subr.mxu0 0.0
      %657 = vmatpush1.msra.mxu0 0.0
      %658 = vmatprep.subr.mxu0 0.0
      %659 = vmatpush1.msra.mxu0 0.0
      %660 = vmatprep.subr.mxu0 0.0
      %661 = vmatpush1.msra.mxu0 0.0
      %662 = vmatprep.subr.mxu0 0.0
      %663 = vmatpush1.msra.mxu0 0.0
      %664 = vmatprep.subr.mxu0 0.0
      %665 = vmatpush1.msra.mxu0 0.0
      %666 = vmatprep.mubr.f32.mxu0 0.0
      %667 = vmatmul.mubr.f32.gmra.mrb[0].mxu0 %v600
      %v668 = vpop.f32.mrb[0].mxu0
      %v669 = vadd.f32 0.0, %v668
      %v670 = vpop.f32.mrb[0].mxu0
      %v671 = vadd.f32 0.0, %v670
      %672 = vdwg.mxu0
      %v674 = vsel %vm232, %v579, 0
      %676 = vmatprep.subr.mxu0 %v582
      %677 = vmatpush1.msra.mxu0 %v581
      %678 = vmatprep.subr.mxu0 %v584
      %679 = vmatpush1.msra.mxu0 %v583
      %680 = vmatprep.subr.mxu0 %v586
      %681 = vmatpush1.msra.mxu0 %v585
      %682 = vmatprep.subr.mxu0 %v588
      %683 = vmatpush1.msra.mxu0 %v587
      %684 = vmatprep.subr.mxu0 0.0
      %685 = vmatpush1.msra.mxu0 0.0
      %686 = vmatprep.subr.mxu0 0.0
      %687 = vmatpush1.msra.mxu0 0.0
      %688 = vmatprep.subr.mxu0 0.0
      %689 = vmatpush1.msra.mxu0 0.0
      %690 = vmatprep.subr.mxu0 0.0
      %691 = vmatpush1.msra.mxu0 0.0
      %692 = vmatprep.subr.mxu0 0.0
      %693 = vmatpush1.msra.mxu0 0.0
      %694 = vmatprep.subr.mxu0 0.0
      %695 = vmatpush1.msra.mxu0 0.0
      %696 = vmatprep.subr.mxu0 0.0
      %697 = vmatpush1.msra.mxu0 0.0
      %698 = vmatprep.subr.mxu0 0.0
      %699 = vmatpush1.msra.mxu0 0.0
      %700 = vmatprep.subr.mxu0 0.0
      %701 = vmatpush1.msra.mxu0 0.0
      %702 = vmatprep.subr.mxu0 0.0
      %703 = vmatpush1.msra.mxu0 0.0
      %704 = vmatprep.subr.mxu0 0.0
      %705 = vmatpush1.msra.mxu0 0.0
      %706 = vmatprep.subr.mxu0 0.0
      %707 = vmatpush1.msra.mxu0 0.0
      %708 = vmatprep.subr.mxu0 0.0
      %709 = vmatpush1.msra.mxu0 0.0
      %710 = vmatprep.subr.mxu0 0.0
      %711 = vmatpush1.msra.mxu0 0.0
      %712 = vmatprep.subr.mxu0 0.0
      %713 = vmatpush1.msra.mxu0 0.0
      %714 = vmatprep.subr.mxu0 0.0
      %715 = vmatpush1.msra.mxu0 0.0
      %716 = vmatprep.subr.mxu0 0.0
      %717 = vmatpush1.msra.mxu0 0.0
      %718 = vmatprep.subr.mxu0 0.0
      %719 = vmatpush1.msra.mxu0 0.0
      %720 = vmatprep.subr.mxu0 0.0
      %721 = vmatpush1.msra.mxu0 0.0
      %722 = vmatprep.subr.mxu0 0.0
      %723 = vmatpush1.msra.mxu0 0.0
      %724 = vmatprep.subr.mxu0 0.0
      %725 = vmatpush1.msra.mxu0 0.0
      %726 = vmatprep.subr.mxu0 0.0
      %727 = vmatpush1.msra.mxu0 0.0
      %728 = vmatprep.subr.mxu0 0.0
      %729 = vmatpush1.msra.mxu0 0.0
      %730 = vmatprep.subr.mxu0 0.0
      %731 = vmatpush1.msra.mxu0 0.0
      %732 = vmatprep.subr.mxu0 0.0
      %733 = vmatpush1.msra.mxu0 0.0
      %734 = vmatprep.subr.mxu0 0.0
      %735 = vmatpush1.msra.mxu0 0.0
      %736 = vmatprep.subr.mxu0 0.0
      %737 = vmatpush1.msra.mxu0 0.0
      %738 = vmatprep.subr.mxu0 0.0
      %739 = vmatpush1.msra.mxu0 0.0
      %740 = vmatprep.mubr.f32.mxu0 0.0
      %741 = vmatmul.mubr.f32.gmra.mrb[0].mxu0 %v674
      %v742 = vpop.f32.mrb[0].mxu0
      %v743 = vadd.f32 %v669, %v742
      %v744 = vpop.f32.mrb[0].mxu0
      %v745 = vadd.f32 %v671, %v744
      %746 = vdwg.mxu0
      %s747 = scalar_lea.vmem %s1, 48
      %v748 = vld [vmem:[%s747] sm:$0xff]
      %s749 = scalar_lea.vmem %s200, 128
      %v750 = vld [vmem:[%s749] sm:$0xff]
      %v751 = vld [vmem:[%s749 + $0x8] sm:$0xff]
      %v752 = vld [vmem:[%s749 + $0x10] sm:$0xff]
      %v753 = vld [vmem:[%s749 + $0x18] sm:$0xff]
      %v754 = vld [vmem:[%s749 + $0x20] sm:$0xff]
      %v755 = vld [vmem:[%s749 + $0x28] sm:$0xff]
      %v756 = vld [vmem:[%s749 + $0x30] sm:$0xff]
      %v757 = vld [vmem:[%s749 + $0x38] sm:$0xff]
      %v759 = vsel %vm232, %v748, 0
      %761 = vmatprep.subr.mxu0 %v751
      %762 = vmatpush1.msra.mxu0 %v750
      %763 = vmatprep.subr.mxu0 %v753
      %764 = vmatpush1.msra.mxu0 %v752
      %765 = vmatprep.subr.mxu0 %v755
      %766 = vmatpush1.msra.mxu0 %v754
      %767 = vmatprep.subr.mxu0 %v757
      %768 = vmatpush1.msra.mxu0 %v756
      %769 = vmatprep.subr.mxu0 0.0
      %770 = vmatpush1.msra.mxu0 0.0
      %771 = vmatprep.subr.mxu0 0.0
      %772 = vmatpush1.msra.mxu0 0.0
      %773 = vmatprep.subr.mxu0 0.0
      %774 = vmatpush1.msra.mxu0 0.0
      %775 = vmatprep.subr.mxu0 0.0
      %776 = vmatpush1.msra.mxu0 0.0
      %777 = vmatprep.subr.mxu0 0.0
      %778 = vmatpush1.msra.mxu0 0.0
      %779 = vmatprep.subr.mxu0 0.0
      %780 = vmatpush1.msra.mxu0 0.0
      %781 = vmatprep.subr.mxu0 0.0
      %782 = vmatpush1.msra.mxu0 0.0
      %783 = vmatprep.subr.mxu0 0.0
      %784 = vmatpush1.msra.mxu0 0.0
      %785 = vmatprep.subr.mxu0 0.0
      %786 = vmatpush1.msra.mxu0 0.0
      %787 = vmatprep.subr.mxu0 0.0
      %788 = vmatpush1.msra.mxu0 0.0
      %789 = vmatprep.subr.mxu0 0.0
      %790 = vmatpush1.msra.mxu0 0.0
      %791 = vmatprep.subr.mxu0 0.0
      %792 = vmatpush1.msra.mxu0 0.0
      %793 = vmatprep.subr.mxu0 0.0
      %794 = vmatpush1.msra.mxu0 0.0
      %795 = vmatprep.subr.mxu0 0.0
      %796 = vmatpush1.msra.mxu0 0.0
      %797 = vmatprep.subr.mxu0 0.0
      %798 = vmatpush1.msra.mxu0 0.0
      %799 = vmatprep.subr.mxu0 0.0
      %800 = vmatpush1.msra.mxu0 0.0
      %801 = vmatprep.subr.mxu0 0.0
      %802 = vmatpush1.msra.mxu0 0.0
      %803 = vmatprep.subr.mxu0 0.0
      %804 = vmatpush1.msra.mxu0 0.0
      %805 = vmatprep.subr.mxu0 0.0
      %806 = vmatpush1.msra.mxu0 0.0
      %807 = vmatprep.subr.mxu0 0.0
      %808 = vmatpush1.msra.mxu0 0.0
      %809 = vmatprep.subr.mxu0 0.0
      %810 = vmatpush1.msra.mxu0 0.0
      %811 = vmatprep.subr.mxu0 0.0
      %812 = vmatpush1.msra.mxu0 0.0
      %813 = vmatprep.subr.mxu0 0.0
      %814 = vmatpush1.msra.mxu0 0.0
      %815 = vmatprep.subr.mxu0 0.0
      %816 = vmatpush1.msra.mxu0 0.0
      %817 = vmatprep.subr.mxu0 0.0
      %818 = vmatpush1.msra.mxu0 0.0
      %819 = vmatprep.subr.mxu0 0.0
      %820 = vmatpush1.msra.mxu0 0.0
      %821 = vmatprep.subr.mxu0 0.0
      %822 = vmatpush1.msra.mxu0 0.0
      %823 = vmatprep.subr.mxu0 0.0
      %824 = vmatpush1.msra.mxu0 0.0
      %825 = vmatprep.mubr.f32.mxu0 0.0
      %826 = vmatmul.mubr.f32.gmra.mrb[0].mxu0 %v759
      %v827 = vpop.f32.mrb[0].mxu0
      %v828 = vadd.f32 0.0, %v827
      %v829 = vpop.f32.mrb[0].mxu0
      %v830 = vadd.f32 0.0, %v829
      %831 = vdwg.mxu0
      %v832 = vadd.f32 %v743, %v828
      %v833 = vadd.f32 %v745, %v830
      %s834 = scalar_lea.vmem %s1, 56
      %v835 = vld [vmem:[%s834] sm:$0xff]
      %v836 = vld [vmem:[%s383] sm:$0xff]
      %v837 = vld [vmem:[%s383 + $0x8] sm:$0xff]
      %v838 = vld [vmem:[%s383 + $0x10] sm:$0xff]
      %v839 = vld [vmem:[%s383 + $0x18] sm:$0xff]
      %v840 = vld [vmem:[%s383 + $0x20] sm:$0xff]
      %v841 = vld [vmem:[%s383 + $0x28] sm:$0xff]
      %v842 = vld [vmem:[%s383 + $0x30] sm:$0xff]
      %v843 = vld [vmem:[%s383 + $0x38] sm:$0xff]
      %v845 = vsel %vm232, %v835, 0
      %847 = vmatprep.subr.mxu0 %v837
      %848 = vmatpush1.msra.mxu0 %v836
      %849 = vmatprep.subr.mxu0 %v839
      %850 = vmatpush1.msra.mxu0 %v838
      %851 = vmatprep.subr.mxu0 %v841
      %852 = vmatpush1.msra.mxu0 %v840
      %853 = vmatprep.subr.mxu0 %v843
      %854 = vmatpush1.msra.mxu0 %v842
      %855 = vmatprep.subr.mxu0 0.0
      %856 = vmatpush1.msra.mxu0 0.0
      %857 = vmatprep.subr.mxu0 0.0
      %858 = vmatpush1.msra.mxu0 0.0
      %859 = vmatprep.subr.mxu0 0.0
      %860 = vmatpush1.msra.mxu0 0.0
      %861 = vmatprep.subr.mxu0 0.0
      %862 = vmatpush1.msra.mxu0 0.0
      %863 = vmatprep.subr.mxu0 0.0
      %864 = vmatpush1.msra.mxu0 0.0
      %865 = vmatprep.subr.mxu0 0.0
      %866 = vmatpush1.msra.mxu0 0.0
      %867 = vmatprep.subr.mxu0 0.0
      %868 = vmatpush1.msra.mxu0 0.0
      %869 = vmatprep.subr.mxu0 0.0
      %870 = vmatpush1.msra.mxu0 0.0
      %871 = vmatprep.subr.mxu0 0.0
      %872 = vmatpush1.msra.mxu0 0.0
      %873 = vmatprep.subr.mxu0 0.0
      %874 = vmatpush1.msra.mxu0 0.0
      %875 = vmatprep.subr.mxu0 0.0
      %876 = vmatpush1.msra.mxu0 0.0
      %877 = vmatprep.subr.mxu0 0.0
      %878 = vmatpush1.msra.mxu0 0.0
      %879 = vmatprep.subr.mxu0 0.0
      %880 = vmatpush1.msra.mxu0 0.0
      %881 = vmatprep.subr.mxu0 0.0
      %882 = vmatpush1.msra.mxu0 0.0
      %883 = vmatprep.subr.mxu0 0.0
      %884 = vmatpush1.msra.mxu0 0.0
      %885 = vmatprep.subr.mxu0 0.0
      %886 = vmatpush1.msra.mxu0 0.0
      %887 = vmatprep.subr.mxu0 0.0
      %888 = vmatpush1.msra.mxu0 0.0
      %889 = vmatprep.subr.mxu0 0.0
      %890 = vmatpush1.msra.mxu0 0.0
      %891 = vmatprep.subr.mxu0 0.0
      %892 = vmatpush1.msra.mxu0 0.0
      %893 = vmatprep.subr.mxu0 0.0
      %894 = vmatpush1.msra.mxu0 0.0
      %895 = vmatprep.subr.mxu0 0.0
      %896 = vmatpush1.msra.mxu0 0.0
      %897 = vmatprep.subr.mxu0 0.0
      %898 = vmatpush1.msra.mxu0 0.0
      %899 = vmatprep.subr.mxu0 0.0
      %900 = vmatpush1.msra.mxu0 0.0
      %901 = vmatprep.subr.mxu0 0.0
      %902 = vmatpush1.msra.mxu0 0.0
      %903 = vmatprep.subr.mxu0 0.0
      %904 = vmatpush1.msra.mxu0 0.0
      %905 = vmatprep.subr.mxu0 0.0
      %906 = vmatpush1.msra.mxu0 0.0
      %907 = vmatprep.subr.mxu0 0.0
      %908 = vmatpush1.msra.mxu0 0.0
      %909 = vmatprep.subr.mxu0 0.0
      %910 = vmatpush1.msra.mxu0 0.0
      %911 = vmatprep.mubr.f32.mxu0 0.0
      %912 = vmatmul.mubr.f32.gmra.mrb[0].mxu0 %v845
      %v913 = vpop.f32.mrb[0].mxu0
      %v914 = vadd.f32 0.0, %v913
      %v915 = vpop.f32.mrb[0].mxu0
      %v916 = vadd.f32 0.0, %v915
      %917 = vdwg.mxu0
      %v918 = vadd.f32 %v832, %v914
      %v919 = vadd.f32 %v833, %v916
      %v920 = vld [vmem:[%s2] sm:$0xff]
      %922 = vset.pattern.permute.xlu0 0
      %923 = vperm.xlu0 %922, %v920
      %v924 = vpop.permute.xlu0 %923
      %v926 = vadd.f32 %v918, %v924
      %v927 = vadd.f32 %v919, %v924
      %s928 = scalar_lea.vmem %s205, 16
      %929 = vst [vmem:[%s928] sm:$0xff] %v926
      %930 = vst [vmem:[%s928 + $0x8] sm:$0xff] %v927
      %v931 = vxor.u32 %v926, 2147483648
      %v932 = vxor.u32 %v927, 2147483648
      %v933 = vmul.f32 %v931, 1.442695
      %v934 = vpow.pop %v933
      %v935 = vmul.f32 %v932, 1.442695
      %v936 = vpow.pop %v935
      %v937 = vadd.f32 %v934, 1.0
      %v938 = vadd.f32 %v936, 1.0
      %v939 = vrcp.pop %v937
      %v940 = vmul.f32 1.0, %v939
      %v941 = vrcp.pop %v938
      %v942 = vmul.f32 1.0, %v941
      %s943 = scalar_lea.vmem %s210, 16
      %944 = vst [vmem:[%s943] sm:$0xff] %v940
      %945 = vst [vmem:[%s943 + $0x8] sm:$0xff] %v942
      %s946 = scalar_lea.vmem %s1, 64
      %v947 = vld [vmem:[%s946] sm:$0xff]
      %s948 = scalar_lea.vmem %s200, 448
      %v949 = vld [vmem:[%s948] sm:$0xff]
      %v950 = vld [vmem:[%s948 + $0x8] sm:$0xff]
      %v951 = vld [vmem:[%s948 + $0x10] sm:$0xff]
      %v952 = vld [vmem:[%s948 + $0x18] sm:$0xff]
      %v953 = vld [vmem:[%s948 + $0x20] sm:$0xff]
      %v954 = vld [vmem:[%s948 + $0x28] sm:$0xff]
      %v955 = vld [vmem:[%s948 + $0x30] sm:$0xff]
      %v956 = vld [vmem:[%s948 + $0x38] sm:$0xff]
      %s957 = scalar_lea.vmem %s1, 72
      %v958 = vld [vmem:[%s957] sm:$0xff]
      %s959 = scalar_lea.vmem %s200, 384
      %v960 = vld [vmem:[%s959] sm:$0xff]
      %v961 = vld [vmem:[%s959 + $0x8] sm:$0xff]
      %v962 = vld [vmem:[%s959 + $0x10] sm:$0xff]
      %v963 = vld [vmem:[%s959 + $0x18] sm:$0xff]
      %v964 = vld [vmem:[%s959 + $0x20] sm:$0xff]
      %v965 = vld [vmem:[%s959 + $0x28] sm:$0xff]
      %v966 = vld [vmem:[%s959 + $0x30] sm:$0xff]
      %v967 = vld [vmem:[%s959 + $0x38] sm:$0xff]
      %v969 = vsel %vm232, %v958, 0
      %971 = vmatprep.subr.mxu0 %v961
      %972 = vmatpush1.msra.mxu0 %v960
      %973 = vmatprep.subr.mxu0 %v963
      %974 = vmatpush1.msra.mxu0 %v962
      %975 = vmatprep.subr.mxu0 %v965
      %976 = vmatpush1.msra.mxu0 %v964
      %977 = vmatprep.subr.mxu0 %v967
      %978 = vmatpush1.msra.mxu0 %v966
      %979 = vmatprep.subr.mxu0 0.0
      %980 = vmatpush1.msra.mxu0 0.0
      %981 = vmatprep.subr.mxu0 0.0
      %982 = vmatpush1.msra.mxu0 0.0
      %983 = vmatprep.subr.mxu0 0.0
      %984 = vmatpush1.msra.mxu0 0.0
      %985 = vmatprep.subr.mxu0 0.0
      %986 = vmatpush1.msra.mxu0 0.0
      %987 = vmatprep.subr.mxu0 0.0
      %988 = vmatpush1.msra.mxu0 0.0
      %989 = vmatprep.subr.mxu0 0.0
      %990 = vmatpush1.msra.mxu0 0.0
      %991 = vmatprep.subr.mxu0 0.0
      %992 = vmatpush1.msra.mxu0 0.0
      %993 = vmatprep.subr.mxu0 0.0
      %994 = vmatpush1.msra.mxu0 0.0
      %995 = vmatprep.subr.mxu0 0.0
      %996 = vmatpush1.msra.mxu0 0.0
      %997 = vmatprep.subr.mxu0 0.0
      %998 = vmatpush1.msra.mxu0 0.0
      %999 = vmatprep.subr.mxu0 0.0
      %1000 = vmatpush1.msra.mxu0 0.0
      %1001 = vmatprep.subr.mxu0 0.0
      %1002 = vmatpush1.msra.mxu0 0.0
      %1003 = vmatprep.subr.mxu0 0.0
      %1004 = vmatpush1.msra.mxu0 0.0
      %1005 = vmatprep.subr.mxu0 0.0
      %1006 = vmatpush1.msra.mxu0 0.0
      %1007 = vmatprep.subr.mxu0 0.0
      %1008 = vmatpush1.msra.mxu0 0.0
      %1009 = vmatprep.subr.mxu0 0.0
      %1010 = vmatpush1.msra.mxu0 0.0
      %1011 = vmatprep.subr.mxu0 0.0
      %1012 = vmatpush1.msra.mxu0 0.0
      %1013 = vmatprep.subr.mxu0 0.0
      %1014 = vmatpush1.msra.mxu0 0.0
      %1015 = vmatprep.subr.mxu0 0.0
      %1016 = vmatpush1.msra.mxu0 0.0
      %1017 = vmatprep.subr.mxu0 0.0
      %1018 = vmatpush1.msra.mxu0 0.0
      %1019 = vmatprep.subr.mxu0 0.0
      %1020 = vmatpush1.msra.mxu0 0.0
      %1021 = vmatprep.subr.mxu0 0.0
      %1022 = vmatpush1.msra.mxu0 0.0
      %1023 = vmatprep.subr.mxu0 0.0
      %1024 = vmatpush1.msra.mxu0 0.0
      %1025 = vmatprep.subr.mxu0 0.0
      %1026 = vmatpush1.msra.mxu0 0.0
      %1027 = vmatprep.subr.mxu0 0.0
      %1028 = vmatpush1.msra.mxu0 0.0
      %1029 = vmatprep.subr.mxu0 0.0
      %1030 = vmatpush1.msra.mxu0 0.0
      %1031 = vmatprep.subr.mxu0 0.0
      %1032 = vmatpush1.msra.mxu0 0.0
      %1033 = vmatprep.subr.mxu0 0.0
      %1034 = vmatpush1.msra.mxu0 0.0
      %1035 = vmatprep.mubr.f32.mxu0 0.0
      %1036 = vmatmul.mubr.f32.gmra.mrb[0].mxu0 %v969
      %v1037 = vpop.f32.mrb[0].mxu0
      %v1038 = vadd.f32 0.0, %v1037
      %v1039 = vpop.f32.mrb[0].mxu0
      %v1040 = vadd.f32 0.0, %v1039
      %1041 = vdwg.mxu0
      %v1043 = vsel %vm232, %v947, 0
      %1045 = vmatprep.subr.mxu0 %v950
      %1046 = vmatpush1.msra.mxu0 %v949
      %1047 = vmatprep.subr.mxu0 %v952
      %1048 = vmatpush1.msra.mxu0 %v951
      %1049 = vmatprep.subr.mxu0 %v954
      %1050 = vmatpush1.msra.mxu0 %v953
      %1051 = vmatprep.subr.mxu0 %v956
      %1052 = vmatpush1.msra.mxu0 %v955
      %1053 = vmatprep.subr.mxu0 0.0
      %1054 = vmatpush1.msra.mxu0 0.0
      %1055 = vmatprep.subr.mxu0 0.0
      %1056 = vmatpush1.msra.mxu0 0.0
      %1057 = vmatprep.subr.mxu0 0.0
      %1058 = vmatpush1.msra.mxu0 0.0
      %1059 = vmatprep.subr.mxu0 0.0
      %1060 = vmatpush1.msra.mxu0 0.0
      %1061 = vmatprep.subr.mxu0 0.0
      %1062 = vmatpush1.msra.mxu0 0.0
      %1063 = vmatprep.subr.mxu0 0.0
      %1064 = vmatpush1.msra.mxu0 0.0
      %1065 = vmatprep.subr.mxu0 0.0
      %1066 = vmatpush1.msra.mxu0 0.0
      %1067 = vmatprep.subr.mxu0 0.0
      %1068 = vmatpush1.msra.mxu0 0.0
      %1069 = vmatprep.subr.mxu0 0.0
      %1070 = vmatpush1.msra.mxu0 0.0
      %1071 = vmatprep.subr.mxu0 0.0
      %1072 = vmatpush1.msra.mxu0 0.0
      %1073 = vmatprep.subr.mxu0 0.0
      %1074 = vmatpush1.msra.mxu0 0.0
      %1075 = vmatprep.subr.mxu0 0.0
      %1076 = vmatpush1.msra.mxu0 0.0
      %1077 = vmatprep.subr.mxu0 0.0
      %1078 = vmatpush1.msra.mxu0 0.0
      %1079 = vmatprep.subr.mxu0 0.0
      %1080 = vmatpush1.msra.mxu0 0.0
      %1081 = vmatprep.subr.mxu0 0.0
      %1082 = vmatpush1.msra.mxu0 0.0
      %1083 = vmatprep.subr.mxu0 0.0
      %1084 = vmatpush1.msra.mxu0 0.0
      %1085 = vmatprep.subr.mxu0 0.0
      %1086 = vmatpush1.msra.mxu0 0.0
      %1087 = vmatprep.subr.mxu0 0.0
      %1088 = vmatpush1.msra.mxu0 0.0
      %1089 = vmatprep.subr.mxu0 0.0
      %1090 = vmatpush1.msra.mxu0 0.0
      %1091 = vmatprep.subr.mxu0 0.0
      %1092 = vmatpush1.msra.mxu0 0.0
      %1093 = vmatprep.subr.mxu0 0.0
      %1094 = vmatpush1.msra.mxu0 0.0
      %1095 = vmatprep.subr.mxu0 0.0
      %1096 = vmatpush1.msra.mxu0 0.0
      %1097 = vmatprep.subr.mxu0 0.0
      %1098 = vmatpush1.msra.mxu0 0.0
      %1099 = vmatprep.subr.mxu0 0.0
      %1100 = vmatpush1.msra.mxu0 0.0
      %1101 = vmatprep.subr.mxu0 0.0
      %1102 = vmatpush1.msra.mxu0 0.0
      %1103 = vmatprep.subr.mxu0 0.0
      %1104 = vmatpush1.msra.mxu0 0.0
      %1105 = vmatprep.subr.mxu0 0.0
      %1106 = vmatpush1.msra.mxu0 0.0
      %1107 = vmatprep.subr.mxu0 0.0
      %1108 = vmatpush1.msra.mxu0 0.0
      %1109 = vmatprep.mubr.f32.mxu0 0.0
      %1110 = vmatmul.mubr.f32.gmra.mrb[0].mxu0 %v1043
      %v1111 = vpop.f32.mrb[0].mxu0
      %v1112 = vadd.f32 %v1038, %v1111
      %v1113 = vpop.f32.mrb[0].mxu0
      %v1114 = vadd.f32 %v1040, %v1113
      %1115 = vdwg.mxu0
      %s1116 = scalar_lea.vmem %s1, 80
      %v1117 = vld [vmem:[%s1116] sm:$0xff]
      %v1118 = vld [vmem:[%s212] sm:$0xff]
      %v1119 = vld [vmem:[%s212 + $0x8] sm:$0xff]
      %v1120 = vld [vmem:[%s212 + $0x10] sm:$0xff]
      %v1121 = vld [vmem:[%s212 + $0x18] sm:$0xff]
      %v1122 = vld [vmem:[%s212 + $0x20] sm:$0xff]
      %v1123 = vld [vmem:[%s212 + $0x28] sm:$0xff]
      %v1124 = vld [vmem:[%s212 + $0x30] sm:$0xff]
      %v1125 = vld [vmem:[%s212 + $0x38] sm:$0xff]
      %v1127 = vsel %vm232, %v1117, 0
      %1129 = vmatprep.subr.mxu0 %v1119
      %1130 = vmatpush1.msra.mxu0 %v1118
      %1131 = vmatprep.subr.mxu0 %v1121
      %1132 = vmatpush1.msra.mxu0 %v1120
      %1133 = vmatprep.subr.mxu0 %v1123
      %1134 = vmatpush1.msra.mxu0 %v1122
      %1135 = vmatprep.subr.mxu0 %v1125
      %1136 = vmatpush1.msra.mxu0 %v1124
      %1137 = vmatprep.subr.mxu0 0.0
      %1138 = vmatpush1.msra.mxu0 0.0
      %1139 = vmatprep.subr.mxu0 0.0
      %1140 = vmatpush1.msra.mxu0 0.0
      %1141 = vmatprep.subr.mxu0 0.0
      %1142 = vmatpush1.msra.mxu0 0.0
      %1143 = vmatprep.subr.mxu0 0.0
      %1144 = vmatpush1.msra.mxu0 0.0
      %1145 = vmatprep.subr.mxu0 0.0
      %1146 = vmatpush1.msra.mxu0 0.0
      %1147 = vmatprep.subr.mxu0 0.0
      %1148 = vmatpush1.msra.mxu0 0.0
      %1149 = vmatprep.subr.mxu0 0.0
      %1150 = vmatpush1.msra.mxu0 0.0
      %1151 = vmatprep.subr.mxu0 0.0
      %1152 = vmatpush1.msra.mxu0 0.0
      %1153 = vmatprep.subr.mxu0 0.0
      %1154 = vmatpush1.msra.mxu0 0.0
      %1155 = vmatprep.subr.mxu0 0.0
      %1156 = vmatpush1.msra.mxu0 0.0
      %1157 = vmatprep.subr.mxu0 0.0
      %1158 = vmatpush1.msra.mxu0 0.0
      %1159 = vmatprep.subr.mxu0 0.0
      %1160 = vmatpush1.msra.mxu0 0.0
      %1161 = vmatprep.subr.mxu0 0.0
      %1162 = vmatpush1.msra.mxu0 0.0
      %1163 = vmatprep.subr.mxu0 0.0
      %1164 = vmatpush1.msra.mxu0 0.0
      %1165 = vmatprep.subr.mxu0 0.0
      %1166 = vmatpush1.msra.mxu0 0.0
      %1167 = vmatprep.subr.mxu0 0.0
      %1168 = vmatpush1.msra.mxu0 0.0
      %1169 = vmatprep.subr.mxu0 0.0
      %1170 = vmatpush1.msra.mxu0 0.0
      %1171 = vmatprep.subr.mxu0 0.0
      %1172 = vmatpush1.msra.mxu0 0.0
      %1173 = vmatprep.subr.mxu0 0.0
      %1174 = vmatpush1.msra.mxu0 0.0
      %1175 = vmatprep.subr.mxu0 0.0
      %1176 = vmatpush1.msra.mxu0 0.0
      %1177 = vmatprep.subr.mxu0 0.0
      %1178 = vmatpush1.msra.mxu0 0.0
      %1179 = vmatprep.subr.mxu0 0.0
      %1180 = vmatpush1.msra.mxu0 0.0
      %1181 = vmatprep.subr.mxu0 0.0
      %1182 = vmatpush1.msra.mxu0 0.0
      %1183 = vmatprep.subr.mxu0 0.0
      %1184 = vmatpush1.msra.mxu0 0.0
      %1185 = vmatprep.subr.mxu0 0.0
      %1186 = vmatpush1.msra.mxu0 0.0
      %1187 = vmatprep.subr.mxu0 0.0
      %1188 = vmatpush1.msra.mxu0 0.0
      %1189 = vmatprep.subr.mxu0 0.0
      %1190 = vmatpush1.msra.mxu0 0.0
      %1191 = vmatprep.subr.mxu0 0.0
      %1192 = vmatpush1.msra.mxu0 0.0
      %1193 = vmatprep.mubr.f32.mxu0 0.0
      %1194 = vmatmul.mubr.f32.gmra.mrb[0].mxu0 %v1127
      %v1195 = vpop.f32.mrb[0].mxu0
      %v1196 = vadd.f32 0.0, %v1195
      %v1197 = vpop.f32.mrb[0].mxu0
      %v1198 = vadd.f32 0.0, %v1197
      %1199 = vdwg.mxu0
      %v1200 = vadd.f32 %v1112, %v1196
      %v1201 = vadd.f32 %v1114, %v1198
      %s1202 = scalar_lea.vmem %s1, 88
      %v1203 = vld [vmem:[%s1202] sm:$0xff]
      %v1204 = vld [vmem:[%s223] sm:$0xff]
      %v1205 = vld [vmem:[%s223 + $0x8] sm:$0xff]
      %v1206 = vld [vmem:[%s223 + $0x10] sm:$0xff]
      %v1207 = vld [vmem:[%s223 + $0x18] sm:$0xff]
      %v1208 = vld [vmem:[%s223 + $0x20] sm:$0xff]
      %v1209 = vld [vmem:[%s223 + $0x28] sm:$0xff]
      %v1210 = vld [vmem:[%s223 + $0x30] sm:$0xff]
      %v1211 = vld [vmem:[%s223 + $0x38] sm:$0xff]
      %v1213 = vsel %vm232, %v1203, 0
      %1215 = vmatprep.subr.mxu0 %v1205
      %1216 = vmatpush1.msra.mxu0 %v1204
      %1217 = vmatprep.subr.mxu0 %v1207
      %1218 = vmatpush1.msra.mxu0 %v1206
      %1219 = vmatprep.subr.mxu0 %v1209
      %1220 = vmatpush1.msra.mxu0 %v1208
      %1221 = vmatprep.subr.mxu0 %v1211
      %1222 = vmatpush1.msra.mxu0 %v1210
      %1223 = vmatprep.subr.mxu0 0.0
      %1224 = vmatpush1.msra.mxu0 0.0
      %1225 = vmatprep.subr.mxu0 0.0
      %1226 = vmatpush1.msra.mxu0 0.0
      %1227 = vmatprep.subr.mxu0 0.0
      %1228 = vmatpush1.msra.mxu0 0.0
      %1229 = vmatprep.subr.mxu0 0.0
      %1230 = vmatpush1.msra.mxu0 0.0
      %1231 = vmatprep.subr.mxu0 0.0
      %1232 = vmatpush1.msra.mxu0 0.0
      %1233 = vmatprep.subr.mxu0 0.0
      %1234 = vmatpush1.msra.mxu0 0.0
      %1235 = vmatprep.subr.mxu0 0.0
      %1236 = vmatpush1.msra.mxu0 0.0
      %1237 = vmatprep.subr.mxu0 0.0
      %1238 = vmatpush1.msra.mxu0 0.0
      %1239 = vmatprep.subr.mxu0 0.0
      %1240 = vmatpush1.msra.mxu0 0.0
      %1241 = vmatprep.subr.mxu0 0.0
      %1242 = vmatpush1.msra.mxu0 0.0
      %1243 = vmatprep.subr.mxu0 0.0
      %1244 = vmatpush1.msra.mxu0 0.0
      %1245 = vmatprep.subr.mxu0 0.0
      %1246 = vmatpush1.msra.mxu0 0.0
      %1247 = vmatprep.subr.mxu0 0.0
      %1248 = vmatpush1.msra.mxu0 0.0
      %1249 = vmatprep.subr.mxu0 0.0
      %1250 = vmatpush1.msra.mxu0 0.0
      %1251 = vmatprep.subr.mxu0 0.0
      %1252 = vmatpush1.msra.mxu0 0.0
      %1253 = vmatprep.subr.mxu0 0.0
      %1254 = vmatpush1.msra.mxu0 0.0
      %1255 = vmatprep.subr.mxu0 0.0
      %1256 = vmatpush1.msra.mxu0 0.0
      %1257 = vmatprep.subr.mxu0 0.0
      %1258 = vmatpush1.msra.mxu0 0.0
      %1259 = vmatprep.subr.mxu0 0.0
      %1260 = vmatpush1.msra.mxu0 0.0
      %1261 = vmatprep.subr.mxu0 0.0
      %1262 = vmatpush1.msra.mxu0 0.0
      %1263 = vmatprep.subr.mxu0 0.0
      %1264 = vmatpush1.msra.mxu0 0.0
      %1265 = vmatprep.subr.mxu0 0.0
      %1266 = vmatpush1.msra.mxu0 0.0
      %1267 = vmatprep.subr.mxu0 0.0
      %1268 = vmatpush1.msra.mxu0 0.0
      %1269 = vmatprep.subr.mxu0 0.0
      %1270 = vmatpush1.msra.mxu0 0.0
      %1271 = vmatprep.subr.mxu0 0.0
      %1272 = vmatpush1.msra.mxu0 0.0
      %1273 = vmatprep.subr.mxu0 0.0
      %1274 = vmatpush1.msra.mxu0 0.0
      %1275 = vmatprep.subr.mxu0 0.0
      %1276 = vmatpush1.msra.mxu0 0.0
      %1277 = vmatprep.subr.mxu0 0.0
      %1278 = vmatpush1.msra.mxu0 0.0
      %1279 = vmatprep.mubr.f32.mxu0 0.0
      %1280 = vmatmul.mubr.f32.gmra.mrb[0].mxu0 %v1213
      %v1281 = vpop.f32.mrb[0].mxu0
      %v1282 = vadd.f32 0.0, %v1281
      %v1283 = vpop.f32.mrb[0].mxu0
      %v1284 = vadd.f32 0.0, %v1283
      %1285 = vdwg.mxu0
      %v1286 = vadd.f32 %v1200, %v1282
      %v1287 = vadd.f32 %v1201, %v1284
      %v1288 = vld [vmem:[%s2] sm:$0xff]
      %1290 = vset.pattern.permute.xlu0 0
      %1291 = vperm.xlu0 %1290, %v1288
      %v1292 = vpop.permute.xlu0 %1291
      %v1294 = vadd.f32 %v1286, %v1292
      %v1295 = vadd.f32 %v1287, %v1292
      %s1296 = scalar_lea.vmem %s205, 32
      %1297 = vst [vmem:[%s1296] sm:$0xff] %v1294
      %1298 = vst [vmem:[%s1296 + $0x8] sm:$0xff] %v1295
      %v1299 = vxor.u32 %v1294, 2147483648
      %v1300 = vxor.u32 %v1295, 2147483648
      %v1301 = vmul.f32 %v1299, 1.442695
      %v1302 = vpow.pop %v1301
      %v1303 = vmul.f32 %v1300, 1.442695
      %v1304 = vpow.pop %v1303
      %v1305 = vadd.f32 %v1302, 1.0
      %v1306 = vadd.f32 %v1304, 1.0
      %v1307 = vrcp.pop %v1305
      %v1308 = vmul.f32 1.0, %v1307
      %v1309 = vrcp.pop %v1306
      %v1310 = vmul.f32 1.0, %v1309
      %s1311 = scalar_lea.vmem %s210, 32
      %1312 = vst [vmem:[%s1311] sm:$0xff] %v1308
      %1313 = vst [vmem:[%s1311 + $0x8] sm:$0xff] %v1310
      %s1314 = scalar_lea.vmem %s1, 96
      %v1315 = vld [vmem:[%s1314] sm:$0xff]
      %s1316 = scalar_lea.vmem %s200, 512
      %v1317 = vld [vmem:[%s1316] sm:$0xff]
      %v1318 = vld [vmem:[%s1316 + $0x8] sm:$0xff]
      %v1319 = vld [vmem:[%s1316 + $0x10] sm:$0xff]
      %v1320 = vld [vmem:[%s1316 + $0x18] sm:$0xff]
      %v1321 = vld [vmem:[%s1316 + $0x20] sm:$0xff]
      %v1322 = vld [vmem:[%s1316 + $0x28] sm:$0xff]
      %v1323 = vld [vmem:[%s1316 + $0x30] sm:$0xff]
      %v1324 = vld [vmem:[%s1316 + $0x38] sm:$0xff]
      %s1325 = scalar_lea.vmem %s1, 104
      %v1326 = vld [vmem:[%s1325] sm:$0xff]
      %v1327 = vld [vmem:[%s948] sm:$0xff]
      %v1328 = vld [vmem:[%s948 + $0x8] sm:$0xff]
      %v1329 = vld [vmem:[%s948 + $0x10] sm:$0xff]
      %v1330 = vld [vmem:[%s948 + $0x18] sm:$0xff]
      %v1331 = vld [vmem:[%s948 + $0x20] sm:$0xff]
      %v1332 = vld [vmem:[%s948 + $0x28] sm:$0xff]
      %v1333 = vld [vmem:[%s948 + $0x30] sm:$0xff]
      %v1334 = vld [vmem:[%s948 + $0x38] sm:$0xff]
      %v1336 = vsel %vm232, %v1326, 0
      %1338 = vmatprep.subr.mxu0 %v1328
      %1339 = vmatpush1.msra.mxu0 %v1327
      %1340 = vmatprep.subr.mxu0 %v1330
      %1341 = vmatpush1.msra.mxu0 %v1329
      %1342 = vmatprep.subr.mxu0 %v1332
      %1343 = vmatpush1.msra.mxu0 %v1331
      %1344 = vmatprep.subr.mxu0 %v1334
      %1345 = vmatpush1.msra.mxu0 %v1333
      %1346 = vmatprep.subr.mxu0 0.0
      %1347 = vmatpush1.msra.mxu0 0.0
      %1348 = vmatprep.subr.mxu0 0.0
      %1349 = vmatpush1.msra.mxu0 0.0
      %1350 = vmatprep.subr.mxu0 0.0
      %1351 = vmatpush1.msra.mxu0 0.0
      %1352 = vmatprep.subr.mxu0 0.0
      %1353 = vmatpush1.msra.mxu0 0.0
      %1354 = vmatprep.subr.mxu0 0.0
      %1355 = vmatpush1.msra.mxu0 0.0
      %1356 = vmatprep.subr.mxu0 0.0
      %1357 = vmatpush1.msra.mxu0 0.0
      %1358 = vmatprep.subr.mxu0 0.0
      %1359 = vmatpush1.msra.mxu0 0.0
      %1360 = vmatprep.subr.mxu0 0.0
      %1361 = vmatpush1.msra.mxu0 0.0
      %1362 = vmatprep.subr.mxu0 0.0
      %1363 = vmatpush1.msra.mxu0 0.0
      %1364 = vmatprep.subr.mxu0 0.0
      %1365 = vmatpush1.msra.mxu0 0.0
      %1366 = vmatprep.subr.mxu0 0.0
      %1367 = vmatpush1.msra.mxu0 0.0
      %1368 = vmatprep.subr.mxu0 0.0
      %1369 = vmatpush1.msra.mxu0 0.0
      %1370 = vmatprep.subr.mxu0 0.0
      %1371 = vmatpush1.msra.mxu0 0.0
      %1372 = vmatprep.subr.mxu0 0.0
      %1373 = vmatpush1.msra.mxu0 0.0
      %1374 = vmatprep.subr.mxu0 0.0
      %1375 = vmatpush1.msra.mxu0 0.0
      %1376 = vmatprep.subr.mxu0 0.0
      %1377 = vmatpush1.msra.mxu0 0.0
      %1378 = vmatprep.subr.mxu0 0.0
      %1379 = vmatpush1.msra.mxu0 0.0
      %1380 = vmatprep.subr.mxu0 0.0
      %1381 = vmatpush1.msra.mxu0 0.0
      %1382 = vmatprep.subr.mxu0 0.0
      %1383 = vmatpush1.msra.mxu0 0.0
      %1384 = vmatprep.subr.mxu0 0.0
      %1385 = vmatpush1.msra.mxu0 0.0
      %1386 = vmatprep.subr.mxu0 0.0
      %1387 = vmatpush1.msra.mxu0 0.0
      %1388 = vmatprep.subr.mxu0 0.0
      %1389 = vmatpush1.msra.mxu0 0.0
      %1390 = vmatprep.subr.mxu0 0.0
      %1391 = vmatpush1.msra.mxu0 0.0
      %1392 = vmatprep.subr.mxu0 0.0
      %1393 = vmatpush1.msra.mxu0 0.0
      %1394 = vmatprep.subr.mxu0 0.0
      %1395 = vmatpush1.msra.mxu0 0.0
      %1396 = vmatprep.subr.mxu0 0.0
      %1397 = vmatpush1.msra.mxu0 0.0
      %1398 = vmatprep.subr.mxu0 0.0
      %1399 = vmatpush1.msra.mxu0 0.0
      %1400 = vmatprep.subr.mxu0 0.0
      %1401 = vmatpush1.msra.mxu0 0.0
      %1402 = vmatprep.mubr.f32.mxu0 0.0
      %1403 = vmatmul.mubr.f32.gmra.mrb[0].mxu0 %v1336
      %v1404 = vpop.f32.mrb[0].mxu0
      %v1405 = vadd.f32 0.0, %v1404
      %v1406 = vpop.f32.mrb[0].mxu0
      %v1407 = vadd.f32 0.0, %v1406
      %1408 = vdwg.mxu0
      %v1410 = vsel %vm232, %v1315, 0
      %1412 = vmatprep.subr.mxu0 %v1318
      %1413 = vmatpush1.msra.mxu0 %v1317
      %1414 = vmatprep.subr.mxu0 %v1320
      %1415 = vmatpush1.msra.mxu0 %v1319
      %1416 = vmatprep.subr.mxu0 %v1322
      %1417 = vmatpush1.msra.mxu0 %v1321
      %1418 = vmatprep.subr.mxu0 %v1324
      %1419 = vmatpush1.msra.mxu0 %v1323
      %1420 = vmatprep.subr.mxu0 0.0
      %1421 = vmatpush1.msra.mxu0 0.0
      %1422 = vmatprep.subr.mxu0 0.0
      %1423 = vmatpush1.msra.mxu0 0.0
      %1424 = vmatprep.subr.mxu0 0.0
      %1425 = vmatpush1.msra.mxu0 0.0
      %1426 = vmatprep.subr.mxu0 0.0
      %1427 = vmatpush1.msra.mxu0 0.0
      %1428 = vmatprep.subr.mxu0 0.0
      %1429 = vmatpush1.msra.mxu0 0.0
      %1430 = vmatprep.subr.mxu0 0.0
      %1431 = vmatpush1.msra.mxu0 0.0
      %1432 = vmatprep.subr.mxu0 0.0
      %1433 = vmatpush1.msra.mxu0 0.0
      %1434 = vmatprep.subr.mxu0 0.0
      %1435 = vmatpush1.msra.mxu0 0.0
      %1436 = vmatprep.subr.mxu0 0.0
      %1437 = vmatpush1.msra.mxu0 0.0
      %1438 = vmatprep.subr.mxu0 0.0
      %1439 = vmatpush1.msra.mxu0 0.0
      %1440 = vmatprep.subr.mxu0 0.0
      %1441 = vmatpush1.msra.mxu0 0.0
      %1442 = vmatprep.subr.mxu0 0.0
      %1443 = vmatpush1.msra.mxu0 0.0
      %1444 = vmatprep.subr.mxu0 0.0
      %1445 = vmatpush1.msra.mxu0 0.0
      %1446 = vmatprep.subr.mxu0 0.0
      %1447 = vmatpush1.msra.mxu0 0.0
      %1448 = vmatprep.subr.mxu0 0.0
      %1449 = vmatpush1.msra.mxu0 0.0
      %1450 = vmatprep.subr.mxu0 0.0
      %1451 = vmatpush1.msra.mxu0 0.0
      %1452 = vmatprep.subr.mxu0 0.0
      %1453 = vmatpush1.msra.mxu0 0.0
      %1454 = vmatprep.subr.mxu0 0.0
      %1455 = vmatpush1.msra.mxu0 0.0
      %1456 = vmatprep.subr.mxu0 0.0
      %1457 = vmatpush1.msra.mxu0 0.0
      %1458 = vmatprep.subr.mxu0 0.0
      %1459 = vmatpush1.msra.mxu0 0.0
      %1460 = vmatprep.subr.mxu0 0.0
      %1461 = vmatpush1.msra.mxu0 0.0
      %1462 = vmatprep.subr.mxu0 0.0
      %1463 = vmatpush1.msra.mxu0 0.0
      %1464 = vmatprep.subr.mxu0 0.0
      %1465 = vmatpush1.msra.mxu0 0.0
      %1466 = vmatprep.subr.mxu0 0.0
      %1467 = vmatpush1.msra.mxu0 0.0
      %1468 = vmatprep.subr.mxu0 0.0
      %1469 = vmatpush1.msra.mxu0 0.0
      %1470 = vmatprep.subr.mxu0 0.0
      %1471 = vmatpush1.msra.mxu0 0.0
      %1472 = vmatprep.subr.mxu0 0.0
      %1473 = vmatpush1.msra.mxu0 0.0
      %1474 = vmatprep.subr.mxu0 0.0
      %1475 = vmatpush1.msra.mxu0 0.0
      %1476 = vmatprep.mubr.f32.mxu0 0.0
      %1477 = vmatmul.mubr.f32.gmra.mrb[0].mxu0 %v1410
      %v1478 = vpop.f32.mrb[0].mxu0
      %v1479 = vadd.f32 %v1405, %v1478
      %v1480 = vpop.f32.mrb[0].mxu0
      %v1481 = vadd.f32 %v1407, %v1480
      %1482 = vdwg.mxu0
      %s1483 = scalar_lea.vmem %s1, 112
      %v1484 = vld [vmem:[%s1483] sm:$0xff]
      %v1485 = vld [vmem:[%s580] sm:$0xff]
      %v1486 = vld [vmem:[%s580 + $0x8] sm:$0xff]
      %v1487 = vld [vmem:[%s580 + $0x10] sm:$0xff]
      %v1488 = vld [vmem:[%s580 + $0x18] sm:$0xff]
      %v1489 = vld [vmem:[%s580 + $0x20] sm:$0xff]
      %v1490 = vld [vmem:[%s580 + $0x28] sm:$0xff]
      %v1491 = vld [vmem:[%s580 + $0x30] sm:$0xff]
      %v1492 = vld [vmem:[%s580 + $0x38] sm:$0xff]
      %v1494 = vsel %vm232, %v1484, 0
      %1496 = vmatprep.subr.mxu0 %v1486
      %1497 = vmatpush1.msra.mxu0 %v1485
      %1498 = vmatprep.subr.mxu0 %v1488
      %1499 = vmatpush1.msra.mxu0 %v1487
      %1500 = vmatprep.subr.mxu0 %v1490
      %1501 = vmatpush1.msra.mxu0 %v1489
      %1502 = vmatprep.subr.mxu0 %v1492
      %1503 = vmatpush1.msra.mxu0 %v1491
      %1504 = vmatprep.subr.mxu0 0.0
      %1505 = vmatpush1.msra.mxu0 0.0
      %1506 = vmatprep.subr.mxu0 0.0
      %1507 = vmatpush1.msra.mxu0 0.0
      %1508 = vmatprep.subr.mxu0 0.0
      %1509 = vmatpush1.msra.mxu0 0.0
      %1510 = vmatprep.subr.mxu0 0.0
      %1511 = vmatpush1.msra.mxu0 0.0
      %1512 = vmatprep.subr.mxu0 0.0
      %1513 = vmatpush1.msra.mxu0 0.0
      %1514 = vmatprep.subr.mxu0 0.0
      %1515 = vmatpush1.msra.mxu0 0.0
      %1516 = vmatprep.subr.mxu0 0.0
      %1517 = vmatpush1.msra.mxu0 0.0
      %1518 = vmatprep.subr.mxu0 0.0
      %1519 = vmatpush1.msra.mxu0 0.0
      %1520 = vmatprep.subr.mxu0 0.0
      %1521 = vmatpush1.msra.mxu0 0.0
      %1522 = vmatprep.subr.mxu0 0.0
      %1523 = vmatpush1.msra.mxu0 0.0
      %1524 = vmatprep.subr.mxu0 0.0
      %1525 = vmatpush1.msra.mxu0 0.0
      %1526 = vmatprep.subr.mxu0 0.0
      %1527 = vmatpush1.msra.mxu0 0.0
      %1528 = vmatprep.subr.mxu0 0.0
      %1529 = vmatpush1.msra.mxu0 0.0
      %1530 = vmatprep.subr.mxu0 0.0
      %1531 = vmatpush1.msra.mxu0 0.0
      %1532 = vmatprep.subr.mxu0 0.0
      %1533 = vmatpush1.msra.mxu0 0.0
      %1534 = vmatprep.subr.mxu0 0.0
      %1535 = vmatpush1.msra.mxu0 0.0
      %1536 = vmatprep.subr.mxu0 0.0
      %1537 = vmatpush1.msra.mxu0 0.0
      %1538 = vmatprep.subr.mxu0 0.0
      %1539 = vmatpush1.msra.mxu0 0.0
      %1540 = vmatprep.subr.mxu0 0.0
      %1541 = vmatpush1.msra.mxu0 0.0
      %1542 = vmatprep.subr.mxu0 0.0
      %1543 = vmatpush1.msra.mxu0 0.0
      %1544 = vmatprep.subr.mxu0 0.0
      %1545 = vmatpush1.msra.mxu0 0.0
      %1546 = vmatprep.subr.mxu0 0.0
      %1547 = vmatpush1.msra.mxu0 0.0
      %1548 = vmatprep.subr.mxu0 0.0
      %1549 = vmatpush1.msra.mxu0 0.0
      %1550 = vmatprep.subr.mxu0 0.0
      %1551 = vmatpush1.msra.mxu0 0.0
      %1552 = vmatprep.subr.mxu0 0.0
      %1553 = vmatpush1.msra.mxu0 0.0
      %1554 = vmatprep.subr.mxu0 0.0
      %1555 = vmatpush1.msra.mxu0 0.0
      %1556 = vmatprep.subr.mxu0 0.0
      %1557 = vmatpush1.msra.mxu0 0.0
      %1558 = vmatprep.subr.mxu0 0.0
      %1559 = vmatpush1.msra.mxu0 0.0
      %1560 = vmatprep.mubr.f32.mxu0 0.0
      %1561 = vmatmul.mubr.f32.gmra.mrb[0].mxu0 %v1494
      %v1562 = vpop.f32.mrb[0].mxu0
      %v1563 = vadd.f32 0.0, %v1562
      %v1564 = vpop.f32.mrb[0].mxu0
      %v1565 = vadd.f32 0.0, %v1564
      %1566 = vdwg.mxu0
      %v1567 = vadd.f32 %v1479, %v1563
      %v1568 = vadd.f32 %v1481, %v1565
      %s1569 = scalar_lea.vmem %s1, 120
      %v1570 = vld [vmem:[%s1569] sm:$0xff]
      %v1571 = vld [vmem:[%s212] sm:$0xff]
      %v1572 = vld [vmem:[%s212 + $0x8] sm:$0xff]
      %v1573 = vld [vmem:[%s212 + $0x10] sm:$0xff]
      %v1574 = vld [vmem:[%s212 + $0x18] sm:$0xff]
      %v1575 = vld [vmem:[%s212 + $0x20] sm:$0xff]
      %v1576 = vld [vmem:[%s212 + $0x28] sm:$0xff]
      %v1577 = vld [vmem:[%s212 + $0x30] sm:$0xff]
      %v1578 = vld [vmem:[%s212 + $0x38] sm:$0xff]
      %v1580 = vsel %vm232, %v1570, 0
      %1582 = vmatprep.subr.mxu0 %v1572
      %1583 = vmatpush1.msra.mxu0 %v1571
      %1584 = vmatprep.subr.mxu0 %v1574
      %1585 = vmatpush1.msra.mxu0 %v1573
      %1586 = vmatprep.subr.mxu0 %v1576
      %1587 = vmatpush1.msra.mxu0 %v1575
      %1588 = vmatprep.subr.mxu0 %v1578
      %1589 = vmatpush1.msra.mxu0 %v1577
      %1590 = vmatprep.subr.mxu0 0.0
      %1591 = vmatpush1.msra.mxu0 0.0
      %1592 = vmatprep.subr.mxu0 0.0
      %1593 = vmatpush1.msra.mxu0 0.0
      %1594 = vmatprep.subr.mxu0 0.0
      %1595 = vmatpush1.msra.mxu0 0.0
      %1596 = vmatprep.subr.mxu0 0.0
      %1597 = vmatpush1.msra.mxu0 0.0
      %1598 = vmatprep.subr.mxu0 0.0
      %1599 = vmatpush1.msra.mxu0 0.0
      %1600 = vmatprep.subr.mxu0 0.0
      %1601 = vmatpush1.msra.mxu0 0.0
      %1602 = vmatprep.subr.mxu0 0.0
      %1603 = vmatpush1.msra.mxu0 0.0
      %1604 = vmatprep.subr.mxu0 0.0
      %1605 = vmatpush1.msra.mxu0 0.0
      %1606 = vmatprep.subr.mxu0 0.0
      %1607 = vmatpush1.msra.mxu0 0.0
      %1608 = vmatprep.subr.mxu0 0.0
      %1609 = vmatpush1.msra.mxu0 0.0
      %1610 = vmatprep.subr.mxu0 0.0
      %1611 = vmatpush1.msra.mxu0 0.0
      %1612 = vmatprep.subr.mxu0 0.0
      %1613 = vmatpush1.msra.mxu0 0.0
      %1614 = vmatprep.subr.mxu0 0.0
      %1615 = vmatpush1.msra.mxu0 0.0
      %1616 = vmatprep.subr.mxu0 0.0
      %1617 = vmatpush1.msra.mxu0 0.0
      %1618 = vmatprep.subr.mxu0 0.0
      %1619 = vmatpush1.msra.mxu0 0.0
      %1620 = vmatprep.subr.mxu0 0.0
      %1621 = vmatpush1.msra.mxu0 0.0
      %1622 = vmatprep.subr.mxu0 0.0
      %1623 = vmatpush1.msra.mxu0 0.0
      %1624 = vmatprep.subr.mxu0 0.0
      %1625 = vmatpush1.msra.mxu0 0.0
      %1626 = vmatprep.subr.mxu0 0.0
      %1627 = vmatpush1.msra.mxu0 0.0
      %1628 = vmatprep.subr.mxu0 0.0
      %1629 = vmatpush1.msra.mxu0 0.0
      %1630 = vmatprep.subr.mxu0 0.0
      %1631 = vmatpush1.msra.mxu0 0.0
      %1632 = vmatprep.subr.mxu0 0.0
      %1633 = vmatpush1.msra.mxu0 0.0
      %1634 = vmatprep.subr.mxu0 0.0
      %1635 = vmatpush1.msra.mxu0 0.0
      %1636 = vmatprep.subr.mxu0 0.0
      %1637 = vmatpush1.msra.mxu0 0.0
      %1638 = vmatprep.subr.mxu0 0.0
      %1639 = vmatpush1.msra.mxu0 0.0
      %1640 = vmatprep.subr.mxu0 0.0
      %1641 = vmatpush1.msra.mxu0 0.0
      %1642 = vmatprep.subr.mxu0 0.0
      %1643 = vmatpush1.msra.mxu0 0.0
      %1644 = vmatprep.subr.mxu0 0.0
      %1645 = vmatpush1.msra.mxu0 0.0
      %1646 = vmatprep.mubr.f32.mxu0 0.0
      %1647 = vmatmul.mubr.f32.gmra.mrb[0].mxu0 %v1580
      %v1648 = vpop.f32.mrb[0].mxu0
      %v1649 = vadd.f32 0.0, %v1648
      %v1650 = vpop.f32.mrb[0].mxu0
      %v1651 = vadd.f32 0.0, %v1650
      %1652 = vdwg.mxu0
      %v1653 = vadd.f32 %v1567, %v1649
      %v1654 = vadd.f32 %v1568, %v1651
      %v1655 = vld [vmem:[%s2] sm:$0xff]
      %1657 = vset.pattern.permute.xlu0 0
      %1658 = vperm.xlu0 %1657, %v1655
      %v1659 = vpop.permute.xlu0 %1658
      %v1661 = vadd.f32 %v1653, %v1659
      %v1662 = vadd.f32 %v1654, %v1659
      %s1663 = scalar_lea.vmem %s205, 48
      %1664 = vst [vmem:[%s1663] sm:$0xff] %v1661
      %1665 = vst [vmem:[%s1663 + $0x8] sm:$0xff] %v1662
      %v1666 = vxor.u32 %v1661, 2147483648
      %v1667 = vxor.u32 %v1662, 2147483648
      %v1668 = vmul.f32 %v1666, 1.442695
      %v1669 = vpow.pop %v1668
      %v1670 = vmul.f32 %v1667, 1.442695
      %v1671 = vpow.pop %v1670
      %v1672 = vadd.f32 %v1669, 1.0
      %v1673 = vadd.f32 %v1671, 1.0
      %v1674 = vrcp.pop %v1672
      %v1675 = vmul.f32 1.0, %v1674
      %v1676 = vrcp.pop %v1673
      %v1677 = vmul.f32 1.0, %v1676
      %s1678 = scalar_lea.vmem %s210, 48
      %1679 = vst [vmem:[%s1678] sm:$0xff] %v1675
      %1680 = vst [vmem:[%s1678 + $0x8] sm:$0xff] %v1677
      %p1681 = scmp.lt.s32.totalorder %s16, 1
      %s1682 = scalar_select %p1681, %s16, 1
      %s1683 = smul.addr %s1682, 8
      %s1684 = smul.addr %s1683, 8
      %s1685 = scalar_lea.vmem %s3, %s1684
      %p1686 = scmp.lt.s32.totalorder %s16, 1
      %s1687 = scalar_select %p1686, %s16, 1
      %s1688 = smul.addr %s1687, 8
      %s1689 = smul.addr %s1688, 8
      %s1690 = scalar_lea.vmem %s4, %s1689
      // Predicated region
      $region33: #{decoder_burgess_forward.7} parent=31 // pred_check
        %p1691 = pneg %p102
      $region34: #{decoder_burgess_forward.7} parent=31 // pred_check_branch
        %1693 = sbr.rel (%p1691) target = $region36
      $region35: #{decoder_burgess_forward.7} parent=31 // pred_region
        _
      $region36: #{decoder_burgess_forward.7} parent=31 // pred_fallthru
        _
      // Predicated region
      $region37: #{decoder_burgess_forward.7} parent=31 // pred_check
        %p1694 = pneg %p128
      $region38: #{decoder_burgess_forward.7} parent=31 // pred_check_branch
        %1696 = sbr.rel (%p1694) target = $region40
      $region39: #{decoder_burgess_forward.7} parent=31 // pred_region
        _
      $region40: #{decoder_burgess_forward.7} parent=31 // pred_fallthru
        _
    $region32: #{decoder_burgess_forward.7} parent=5 // pred_fallthru
      _
    %p1697 = scmp.le.s32.totalorder 2, %s11
    // Predicated region
    $region41: #{decoder_burgess_forward.7} parent=5 // pred_check
      %p1698 = pneg %p1697
    $region42: #{decoder_burgess_forward.7} parent=5 // pred_check_branch
      %1700 = sbr.rel (%p1698) target = $region44
    $region43: #{decoder_burgess_forward.7} parent=5 // pred_region
      %s1701 = ssub.s32 %s11, 2
      // Predicated region
      $region45: #{decoder_burgess_forward.7} parent=43 // pred_check
        %p1702 = pneg %p108
      $region46: #{decoder_burgess_forward.7} parent=43 // pred_check_branch
        %1704 = sbr.rel (%p1702) target = $region48
      $region47: #{decoder_burgess_forward.7} parent=43 // pred_region
        %p1705 = scmp.lt.s32.totalorder %s17, 1
        %s1706 = scalar_select %p1705, %s17, 1
        %s1707 = smul.addr %s1706, 8
        %s1708 = smul.addr %s1707, 8
        %s1709 = scalar_lea.vmem %s3, %s1708
      $region48: #{decoder_burgess_forward.7} parent=43 // pred_fallthru
        _
      // Predicated region
      $region49: #{decoder_burgess_forward.7} parent=43 // pred_check
        %p1710 = pneg %p134
      $region50: #{decoder_burgess_forward.7} parent=43 // pred_check_branch
        %1712 = sbr.rel (%p1710) target = $region52
      $region51: #{decoder_burgess_forward.7} parent=43 // pred_region
        %p1713 = scmp.lt.s32.totalorder %s17, 1
        %s1714 = scalar_select %p1713, %s17, 1
        %s1715 = smul.addr %s1714, 8
        %s1716 = smul.addr %s1715, 8
        %s1717 = scalar_lea.vmem %s4, %s1716
      $region52: #{decoder_burgess_forward.7} parent=43 // pred_fallthru
        _
    $region44: #{decoder_burgess_forward.7} parent=5 // pred_fallthru
      _
  $region6: #{decoder_burgess_forward.7} parent=0 // loop_footer
    %s15 = sadd.s32 1, %s11
  $region7: #{decoder_burgess_forward.7} parent=0 // loop_footer_branch
    %10 = sbr.rel target = $region3
  $region8: #{decoder_burgess_forward.7} parent=0 // loop_exit
    _

</llo_original>
